<compile_context>
chip_gen: v7x
topology: tpu7x:2x2x1
jax: 0.10.0
libtpu: 0.0.40
codegen_flags: <defaults>
</compile_context>

<pallas_src>
import numpy as np
import jax
import jax.numpy as jnp
from jax.experimental import pallas as pl
from jax.experimental.pallas import tpu as pltpu


T_PAD = 128   # padded per-channel time extent for conv2's kept positions


# ----------------------------------------------------------------------------
# Parameter setup (glue, plain numpy / JAX)
# ----------------------------------------------------------------------------

def _uniform(key, shape, fan_in):
    bound = 1.0 / np.sqrt(fan_in)
    return jax.random.uniform(key, shape, jnp.float32, -bound, bound)


def init_params(key):
    ks = jax.random.split(key, 12)
    p = {}
    # linear_decoder: Linear(128,256) -> Linear(256,512) -> Linear(512,640)
    p["W1"] = _uniform(ks[0], (128, 256), 128)
    p["b1"] = _uniform(ks[1], (256,), 128)
    p["W2"] = _uniform(ks[2], (256, 512), 256)
    p["b2"] = _uniform(ks[3], (512,), 256)
    p["W3"] = _uniform(ks[4], (512, 640), 512)
    p["b3"] = _uniform(ks[5], (640,), 512)
    # cnn_decoder (PyTorch ConvTranspose1d weight layout: (C_in, C_out, K))
    p["cw1"] = _uniform(ks[6], (32, 16, 1), 32 * 1)
    p["cb1"] = _uniform(ks[7], (16,), 32 * 1)
    p["cw2"] = _uniform(ks[8], (16, 8, 4), 16 * 4)
    p["cb2"] = _uniform(ks[9], (8,), 16 * 4)
    p["cw3"] = _uniform(ks[10], (8, 3, 10), 8 * 10)
    p["cb3"] = _uniform(ks[11], (3,), 8 * 10)
    return {k: np.asarray(v) for k, v in p.items()}


def convt_out_len(L_in, K, stride, padding, dilation):
    return (L_in - 1) * stride - 2 * padding + dilation * (K - 1) + 1


def _convt_matrix(w, L_in, stride, padding, dilation, keep_out=None, pad_to=None):
    """Dense (C_in*L_in, C_out*n) lowering of ConvTranspose1d.

    Channel-major flat layouts on both sides.  `keep_out` optionally selects
    which output time positions to keep; `pad_to` pads the per-channel output
    width (extra columns are zero) so later slices are 128-lane aligned."""
    C_in, C_out, K = w.shape
    L_out = convt_out_len(L_in, K, stride, padding, dilation)
    keep = list(range(L_out)) if keep_out is None else list(keep_out)
    n = len(keep) if pad_to is None else pad_to
    pos = {o: i for i, o in enumerate(keep)}
    M = np.zeros((C_in, L_in, C_out, n), dtype=np.float32)
    for t in range(L_in):
        for k in range(K):
            o = t * stride + k * dilation - padding
            if o in pos:
                M[:, t, :, pos[o]] += w[:, :, k]
    return M.reshape(C_in * L_in, C_out * n)


def _round_up(a, m):
    return (a + m - 1) // m * m


# ----------------------------------------------------------------------------
# Pallas kernel: 5 bf16 MXU matmuls (f32 accum) + structured final ConvT
# ----------------------------------------------------------------------------

def _decoder_kernel(x_ref, w1_ref, b1_ref, w2_ref, b2_ref, w3_ref, b3_ref,
                    a1_ref, c1_ref, a2_ref, c2_ref, tab_ref, o_ref):
    f32 = jnp.float32
    bf16 = jnp.bfloat16

    def dense_relu(h, w_ref, b_ref):
        # bf16 x bf16 MXU matmul (full-rate path), f32 accumulation,
        # f32 bias + ReLU.
        y = jnp.dot(h.astype(bf16), w_ref[...], preferred_element_type=f32)
        return jnp.maximum(y + b_ref[...], 0.0)

    h = x_ref[...]                       # (TB, 128) f32
    h = dense_relu(h, w1_ref, b1_ref)    # Linear(128,256) + ReLU (+ReLU no-op)
    h = dense_relu(h, w2_ref, b2_ref)    # Linear(256,512) + ReLU
    h = dense_relu(h, w3_ref, b3_ref)    # Linear(512,640) + ReLU  -> (32,20) c-major
    h = dense_relu(h, a1_ref, c1_ref)    # ConvT(32->16,k=1,d=4) + ReLU -> (16,20)
    h = dense_relu(h, a2_ref, c2_ref)    # ConvT(16->8,k=4,s=5,d=2) + ReLU,
                                         # times 1..100 kept, padded to 128 lanes
                                         # per channel -> (TB, 8*128) f32

    # ConvT(8->3,k=10,s=10,p=10), structured: output position 10*t+k of channel
    # c_out only reads conv2 time t+1; tab_ref[c_in, j] = w3[c_in, c_out, k]
    # with j = c_out*10 + k; tab_ref[8, j] = bias[c_out].
    # All slices / stores below are 128-lane aligned (full-vreg accesses).
    hs = [h[:, c * T_PAD:(c + 1) * T_PAD] for c in range(8)]
    for j in range(30):
        acc = hs[0] * tab_ref[0, j]
        for c in range(1, 8):
            acc = acc + hs[c] * tab_ref[c, j]
        # output column layout: j*128 + t   (sliced/rearranged to NCW in wrapper)
        o_ref[:, j * T_PAD:(j + 1) * T_PAD] = acc + tab_ref[8, j]


def build_decoder(params, block_b=128):
    """Returns a jitted forward(x: (B,128) f32) -> (B, 3, 1000) f32."""
    block_b = _round_up(max(block_b, 8), 8)

    # --- lower the transposed convolutions (setup-time numpy glue) ---------
    A1 = _convt_matrix(params["cw1"], 20, 1, 0, 4)                        # (640, 320)
    C1 = np.repeat(params["cb1"].astype(np.float32), 20)                  # (320,)
    A2 = _convt_matrix(params["cw2"], 20, 5, 0, 2,
                       keep_out=range(1, 101), pad_to=T_PAD)              # (320, 1024)
    C2 = np.zeros((8, T_PAD), np.float32)                                 # (1024,)
    C2[:, :100] = params["cb2"].astype(np.float32)[:, None]
    C2 = C2.reshape(-1)

    tab = np.zeros((9, 30), np.float32)                  # conv3 weights + bias
    tab[:8] = params["cw3"].reshape(8, 30)               # row c_in, col c_out*10+k
    tab[8] = np.repeat(params["cb3"].astype(np.float32), 10)

    bf16 = jnp.bfloat16

    def as_row(v):
        return jnp.asarray(np.asarray(v, np.float32).reshape(1, -1), jnp.float32)

    # bf16 weights (MXU fast path + halved weight DMA), f32 biases, f32 SMEM table.
    wargs = (
        jnp.asarray(params["W1"], bf16), as_row(params["b1"]),
        jnp.asarray(params["W2"], bf16), as_row(params["b2"]),
        jnp.asarray(params["W3"], bf16), as_row(params["b3"]),
        jnp.asarray(A1, bf16), as_row(C1),
        jnp.asarray(A2, bf16), as_row(C2),
        jnp.asarray(tab, jnp.float32),
    )

    @jax.jit
    def forward(x):
        B = x.shape[0]
        tb = min(block_b, _round_up(B, 8))
        bp = _round_up(B, tb)
        xp = x if bp == B else jnp.pad(x, ((0, bp - B), (0, 0)))

        in_specs = [pl.BlockSpec((tb, 128), lambda i: (i, 0))]          # x: batched
        for w in wargs[:-1]:                                            # weights/biases:
            in_specs.append(pl.BlockSpec(w.shape, lambda i: (0, 0)))    # VMEM-resident
        in_specs.append(pl.BlockSpec(memory_space=pltpu.MemorySpace.SMEM))  # conv3 table

        out_flat = pl.pallas_call(
            _decoder_kernel,
            out_shape=jax.ShapeDtypeStruct((bp, 30 * T_PAD), jnp.float32),
            grid=(bp // tb,),
            in_specs=in_specs,
            out_specs=pl.BlockSpec((tb, 30 * T_PAD), lambda i: (i, 0)),
            compiler_params=pltpu.CompilerParams(
                dimension_semantics=("parallel",),          # split batch on v7x's 2 TCs
                vmem_limit_bytes=32 * 1024 * 1024),
        )(xp, *wargs)

        y = out_flat[:B]
        # kernel column layout (c_out*10 + k)*128 + t  ->  NCW with l = 10*t + k
        y = y.reshape(B, 3, 10, T_PAD)[:, :, :, :100]
        return y.transpose(0, 1, 3, 2).reshape(B, 3, 1000)

    return forward


# ----------------------------------------------------------------------------
# Independent numpy reference (direct ConvTranspose1d scatter form)
# ----------------------------------------------------------------------------

def _convt1d_ref(x, w, b, stride, padding, dilation):
    B, C_in, L_in = x.shape
    _, C_out, K = w.shape
    L_out = convt_out_len(L_in, K, stride, padding, dilation)
    y = np.zeros((B, C_out, L_out), dtype=np.float64)
    for t in range(L_in):
        for k in range(K):
            o = t * stride + k * dilation - padding
            if 0 <= o < L_out:
                y[:, :, o] += x[:, :, t] @ w[:, :, k]
    return y + b[None, :, None]


def ref_forward(x, p):
    h = np.maximum(x.astype(np.float64) @ p["W1"] + p["b1"], 0.0)
    h = np.maximum(h @ p["W2"] + p["b2"], 0.0)
    h = np.maximum(h @ p["W3"] + p["b3"], 0.0)
    h = h.reshape(h.shape[0], 32, 20)                       # Unflatten
    h = np.maximum(_convt1d_ref(h, p["cw1"], p["cb1"], 1, 0, 4), 0.0)
    h = np.maximum(_convt1d_ref(h, p["cw2"], p["cb2"], 5, 0, 2), 0.0)
    h = _convt1d_ref(h, p["cw3"], p["cb3"], 10, 10, 1)
    return h


# ----------------------------------------------------------------------------

if __name__ == "__main__":
    key = jax.random.PRNGKey(0)
    pkey, xkey = jax.random.split(key)
    params = init_params(pkey)

    B = 16                                  # small test batch
    x = jax.random.normal(xkey, (B, 128), jnp.float32)

    # block_b=8 keeps blocks tiny for this test batch while still exercising a
    # multi-step batch grid (grid=(2,)) with VMEM-resident weights; use the
    # default block_b=128 (or 256) for real serving batches.
    forward = build_decoder(params, block_b=8)
    out = jax.block_until_ready(forward(x))

    assert out.shape == (B, 3, 1000), out.shape
    ref = ref_forward(np.asarray(x), params)
    if not np.allclose(np.asarray(out), ref, rtol=2e-2, atol=2e-2):
        err = float(np.max(np.abs(np.asarray(out) - ref)))
        raise AssertionError(
            f"Pallas kernel output does not match reference (max abs err {err})")
    print("KERNEL_OK")
</pallas_src>

<mosaic_0001>
module attributes {stable_mosaic.version = 11 : i64} {
  func.func @_decoder_kernel(%arg0: i32, %arg1: memref<8x128xf32, #tpu.memory_space<vmem>>, %arg2: memref<128x256xbf16, #tpu.memory_space<vmem>>, %arg3: memref<1x256xf32, #tpu.memory_space<vmem>>, %arg4: memref<256x512xbf16, #tpu.memory_space<vmem>>, %arg5: memref<1x512xf32, #tpu.memory_space<vmem>>, %arg6: memref<512x640xbf16, #tpu.memory_space<vmem>>, %arg7: memref<1x640xf32, #tpu.memory_space<vmem>>, %arg8: memref<640x320xbf16, #tpu.memory_space<vmem>>, %arg9: memref<1x320xf32, #tpu.memory_space<vmem>>, %arg10: memref<320x1024xbf16, #tpu.memory_space<vmem>>, %arg11: memref<1x1024xf32, #tpu.memory_space<vmem>>, %arg12: memref<9x30xf32, #tpu.memory_space<smem>>, %arg13: memref<8x3840xf32, #tpu.memory_space<vmem>>) attributes {dimension_semantics = [#tpu.dimension_semantics<parallel>], iteration_bounds = array<i64: 2>, scalar_prefetch = 0 : i64, scratch_operands = 0 : i64, tpu.core_type = #tpu.core_type<tc>, window_params = [{transform_indices = @transform_0, window_bounds = array<i64: 8, 128>}, {pipeline_mode = #tpu.pipeline_mode<synchronous>, transform_indices = @transform_1, window_bounds = array<i64: 128, 256>}, {pipeline_mode = #tpu.pipeline_mode<synchronous>, transform_indices = @transform_2, window_bounds = array<i64: 1, 256>}, {pipeline_mode = #tpu.pipeline_mode<synchronous>, transform_indices = @transform_3, window_bounds = array<i64: 256, 512>}, {pipeline_mode = #tpu.pipeline_mode<synchronous>, transform_indices = @transform_4, window_bounds = array<i64: 1, 512>}, {pipeline_mode = #tpu.pipeline_mode<synchronous>, transform_indices = @transform_5, window_bounds = array<i64: 512, 640>}, {pipeline_mode = #tpu.pipeline_mode<synchronous>, transform_indices = @transform_6, window_bounds = array<i64: 1, 640>}, {pipeline_mode = #tpu.pipeline_mode<synchronous>, transform_indices = @transform_7, window_bounds = array<i64: 640, 320>}, {pipeline_mode = #tpu.pipeline_mode<synchronous>, transform_indices = @transform_8, window_bounds = array<i64: 1, 320>}, {pipeline_mode = #tpu.pipeline_mode<synchronous>, transform_indices = @transform_9, window_bounds = array<i64: 320, 1024>}, {pipeline_mode = #tpu.pipeline_mode<synchronous>, transform_indices = @transform_10, window_bounds = array<i64: 1, 1024>}, {transform_indices = @transform_11, window_bounds = array<i64: 9, 30>}, {transform_indices = @transform_12, window_bounds = array<i64: 8, 3840>}]} {
    %c0 = arith.constant 0 : index
    %c0_0 = arith.constant 0 : index
    %0 = vector.load %arg1[%c0, %c0_0] : memref<8x128xf32, #tpu.memory_space<vmem>>, vector<8x128xf32>
    %1 = arith.truncf %0 : vector<8x128xf32> to vector<8x128xbf16>
    %c0_1 = arith.constant 0 : index
    %c0_2 = arith.constant 0 : index
    %2 = vector.load %arg2[%c0_1, %c0_2] : memref<128x256xbf16, #tpu.memory_space<vmem>>, vector<128x256xbf16>
    %cst = arith.constant dense<0.000000e+00> : vector<8x256xf32>
    %3 = tpu.matmul %1, %2, %cst {dimension_numbers = #tpu.dot_dimension_numbers<[1], [0], [0], [1], [0, 0, 1, 1], [], []>} : vector<8x128xbf16>, vector<128x256xbf16>, vector<8x256xf32> -> vector<8x256xf32>
    %c0_3 = arith.constant 0 : index
    %c0_4 = arith.constant 0 : index
    %4 = vector.load %arg3[%c0_3, %c0_4] : memref<1x256xf32, #tpu.memory_space<vmem>>, vector<1x256xf32>
    %5 = vector.broadcast %4 : vector<1x256xf32> to vector<8x256xf32>
    %6 = arith.addf %3, %5 : vector<8x256xf32>
    %cst_5 = arith.constant 0.000000e+00 : f32
    %7 = vector.broadcast %cst_5 : f32 to vector<8x256xf32>
    %8 = arith.maximumf %6, %7 : vector<8x256xf32>
    %9 = arith.truncf %8 : vector<8x256xf32> to vector<8x256xbf16>
    %c0_6 = arith.constant 0 : index
    %c0_7 = arith.constant 0 : index
    %10 = vector.load %arg4[%c0_6, %c0_7] : memref<256x512xbf16, #tpu.memory_space<vmem>>, vector<256x512xbf16>
    %cst_8 = arith.constant dense<0.000000e+00> : vector<8x512xf32>
    %11 = tpu.matmul %9, %10, %cst_8 {dimension_numbers = #tpu.dot_dimension_numbers<[1], [0], [0], [1], [0, 0, 1, 1], [], []>} : vector<8x256xbf16>, vector<256x512xbf16>, vector<8x512xf32> -> vector<8x512xf32>
    %c0_9 = arith.constant 0 : index
    %c0_10 = arith.constant 0 : index
    %12 = vector.load %arg5[%c0_9, %c0_10] : memref<1x512xf32, #tpu.memory_space<vmem>>, vector<1x512xf32>
    %13 = vector.broadcast %12 : vector<1x512xf32> to vector<8x512xf32>
    %14 = arith.addf %11, %13 : vector<8x512xf32>
    %cst_11 = arith.constant 0.000000e+00 : f32
    %15 = vector.broadcast %cst_11 : f32 to vector<8x512xf32>
    %16 = arith.maximumf %14, %15 : vector<8x512xf32>
    %17 = arith.truncf %16 : vector<8x512xf32> to vector<8x512xbf16>
    %c0_12 = arith.constant 0 : index
    %c0_13 = arith.constant 0 : index
    %18 = vector.load %arg6[%c0_12, %c0_13] : memref<512x640xbf16, #tpu.memory_space<vmem>>, vector<512x640xbf16>
    %cst_14 = arith.constant dense<0.000000e+00> : vector<8x640xf32>
    %19 = tpu.matmul %17, %18, %cst_14 {dimension_numbers = #tpu.dot_dimension_numbers<[1], [0], [0], [1], [0, 0, 1, 1], [], []>} : vector<8x512xbf16>, vector<512x640xbf16>, vector<8x640xf32> -> vector<8x640xf32>
    %c0_15 = arith.constant 0 : index
    %c0_16 = arith.constant 0 : index
    %20 = vector.load %arg7[%c0_15, %c0_16] : memref<1x640xf32, #tpu.memory_space<vmem>>, vector<1x640xf32>
    %21 = vector.broadcast %20 : vector<1x640xf32> to vector<8x640xf32>
    %22 = arith.addf %19, %21 : vector<8x640xf32>
    %cst_17 = arith.constant 0.000000e+00 : f32
    %23 = vector.broadcast %cst_17 : f32 to vector<8x640xf32>
    %24 = arith.maximumf %22, %23 : vector<8x640xf32>
    %25 = arith.truncf %24 : vector<8x640xf32> to vector<8x640xbf16>
    %c0_18 = arith.constant 0 : index
    %c0_19 = arith.constant 0 : index
    %26 = vector.load %arg8[%c0_18, %c0_19] : memref<640x320xbf16, #tpu.memory_space<vmem>>, vector<640x320xbf16>
    %cst_20 = arith.constant dense<0.000000e+00> : vector<8x320xf32>
    %27 = tpu.matmul %25, %26, %cst_20 {dimension_numbers = #tpu.dot_dimension_numbers<[1], [0], [0], [1], [0, 0, 1, 1], [], []>} : vector<8x640xbf16>, vector<640x320xbf16>, vector<8x320xf32> -> vector<8x320xf32>
    %c0_21 = arith.constant 0 : index
    %c0_22 = arith.constant 0 : index
    %28 = vector.load %arg9[%c0_21, %c0_22] : memref<1x320xf32, #tpu.memory_space<vmem>>, vector<1x320xf32>
    %29 = vector.broadcast %28 : vector<1x320xf32> to vector<8x320xf32>
    %30 = arith.addf %27, %29 : vector<8x320xf32>
    %cst_23 = arith.constant 0.000000e+00 : f32
    %31 = vector.broadcast %cst_23 : f32 to vector<8x320xf32>
    %32 = arith.maximumf %30, %31 : vector<8x320xf32>
    %33 = arith.truncf %32 : vector<8x320xf32> to vector<8x320xbf16>
    %c0_24 = arith.constant 0 : index
    %c0_25 = arith.constant 0 : index
    %34 = vector.load %arg10[%c0_24, %c0_25] : memref<320x1024xbf16, #tpu.memory_space<vmem>>, vector<320x1024xbf16>
    %cst_26 = arith.constant dense<0.000000e+00> : vector<8x1024xf32>
    %35 = tpu.matmul %33, %34, %cst_26 {dimension_numbers = #tpu.dot_dimension_numbers<[1], [0], [0], [1], [0, 0, 1, 1], [], []>} : vector<8x320xbf16>, vector<320x1024xbf16>, vector<8x1024xf32> -> vector<8x1024xf32>
    %c0_27 = arith.constant 0 : index
    %c0_28 = arith.constant 0 : index
    %36 = vector.load %arg11[%c0_27, %c0_28] : memref<1x1024xf32, #tpu.memory_space<vmem>>, vector<1x1024xf32>
    %37 = vector.broadcast %36 : vector<1x1024xf32> to vector<8x1024xf32>
    %38 = arith.addf %35, %37 : vector<8x1024xf32>
    %cst_29 = arith.constant 0.000000e+00 : f32
    %39 = vector.broadcast %cst_29 : f32 to vector<8x1024xf32>
    %40 = arith.maximumf %38, %39 : vector<8x1024xf32>
    %41 = vector.extract_strided_slice %40 {offsets = [0, 0], sizes = [8, 128], strides = [1, 1]} : vector<8x1024xf32> to vector<8x128xf32>
    %42 = vector.extract_strided_slice %40 {offsets = [0, 128], sizes = [8, 128], strides = [1, 1]} : vector<8x1024xf32> to vector<8x128xf32>
    %43 = vector.extract_strided_slice %40 {offsets = [0, 256], sizes = [8, 128], strides = [1, 1]} : vector<8x1024xf32> to vector<8x128xf32>
    %44 = vector.extract_strided_slice %40 {offsets = [0, 384], sizes = [8, 128], strides = [1, 1]} : vector<8x1024xf32> to vector<8x128xf32>
    %45 = vector.extract_strided_slice %40 {offsets = [0, 512], sizes = [8, 128], strides = [1, 1]} : vector<8x1024xf32> to vector<8x128xf32>
    %46 = vector.extract_strided_slice %40 {offsets = [0, 640], sizes = [8, 128], strides = [1, 1]} : vector<8x1024xf32> to vector<8x128xf32>
    %47 = vector.extract_strided_slice %40 {offsets = [0, 768], sizes = [8, 128], strides = [1, 1]} : vector<8x1024xf32> to vector<8x128xf32>
    %48 = vector.extract_strided_slice %40 {offsets = [0, 896], sizes = [8, 128], strides = [1, 1]} : vector<8x1024xf32> to vector<8x128xf32>
    %c0_30 = arith.constant 0 : index
    %c0_31 = arith.constant 0 : index
    %49 = memref.load %arg12[%c0_30, %c0_31] : memref<9x30xf32, #tpu.memory_space<smem>>
    %50 = vector.broadcast %49 : f32 to vector<8x128xf32>
    %51 = arith.mulf %41, %50 : vector<8x128xf32>
    %c1 = arith.constant 1 : index
    %c0_32 = arith.constant 0 : index
    %52 = memref.load %arg12[%c1, %c0_32] : memref<9x30xf32, #tpu.memory_space<smem>>
    %53 = vector.broadcast %52 : f32 to vector<8x128xf32>
    %54 = arith.mulf %42, %53 : vector<8x128xf32>
    %55 = arith.addf %51, %54 : vector<8x128xf32>
    %c2 = arith.constant 2 : index
    %c0_33 = arith.constant 0 : index
    %56 = memref.load %arg12[%c2, %c0_33] : memref<9x30xf32, #tpu.memory_space<smem>>
    %57 = vector.broadcast %56 : f32 to vector<8x128xf32>
    %58 = arith.mulf %43, %57 : vector<8x128xf32>
    %59 = arith.addf %55, %58 : vector<8x128xf32>
    %c3 = arith.constant 3 : index
    %c0_34 = arith.constant 0 : index
    %60 = memref.load %arg12[%c3, %c0_34] : memref<9x30xf32, #tpu.memory_space<smem>>
    %61 = vector.broadcast %60 : f32 to vector<8x128xf32>
    %62 = arith.mulf %44, %61 : vector<8x128xf32>
    %63 = arith.addf %59, %62 : vector<8x128xf32>
    %c4 = arith.constant 4 : index
    %c0_35 = arith.constant 0 : index
    %64 = memref.load %arg12[%c4, %c0_35] : memref<9x30xf32, #tpu.memory_space<smem>>
    %65 = vector.broadcast %64 : f32 to vector<8x128xf32>
    %66 = arith.mulf %45, %65 : vector<8x128xf32>
    %67 = arith.addf %63, %66 : vector<8x128xf32>
    %c5 = arith.constant 5 : index
    %c0_36 = arith.constant 0 : index
    %68 = memref.load %arg12[%c5, %c0_36] : memref<9x30xf32, #tpu.memory_space<smem>>
    %69 = vector.broadcast %68 : f32 to vector<8x128xf32>
    %70 = arith.mulf %46, %69 : vector<8x128xf32>
    %71 = arith.addf %67, %70 : vector<8x128xf32>
    %c6 = arith.constant 6 : index
    %c0_37 = arith.constant 0 : index
    %72 = memref.load %arg12[%c6, %c0_37] : memref<9x30xf32, #tpu.memory_space<smem>>
    %73 = vector.broadcast %72 : f32 to vector<8x128xf32>
    %74 = arith.mulf %47, %73 : vector<8x128xf32>
    %75 = arith.addf %71, %74 : vector<8x128xf32>
    %c7 = arith.constant 7 : index
    %c0_38 = arith.constant 0 : index
    %76 = memref.load %arg12[%c7, %c0_38] : memref<9x30xf32, #tpu.memory_space<smem>>
    %77 = vector.broadcast %76 : f32 to vector<8x128xf32>
    %78 = arith.mulf %48, %77 : vector<8x128xf32>
    %79 = arith.addf %75, %78 : vector<8x128xf32>
    %c8 = arith.constant 8 : index
    %c0_39 = arith.constant 0 : index
    %80 = memref.load %arg12[%c8, %c0_39] : memref<9x30xf32, #tpu.memory_space<smem>>
    %81 = vector.broadcast %80 : f32 to vector<8x128xf32>
    %82 = arith.addf %79, %81 : vector<8x128xf32>
    %c0_40 = arith.constant 0 : index
    %c0_41 = arith.constant 0 : index
    %83 = vector.load %arg13[%c0_40, %c0_41] : memref<8x3840xf32, #tpu.memory_space<vmem>>, vector<8x128xf32>
    tpu.vector_store %arg13[%c0_40, %c0_41], %82 {strides = array<i32>} : memref<8x3840xf32, #tpu.memory_space<vmem>>, vector<8x128xf32>,
    %c0_42 = arith.constant 0 : index
    %c1_43 = arith.constant 1 : index
    %84 = memref.load %arg12[%c0_42, %c1_43] : memref<9x30xf32, #tpu.memory_space<smem>>
    %85 = vector.broadcast %84 : f32 to vector<8x128xf32>
    %86 = arith.mulf %41, %85 : vector<8x128xf32>
    %c1_44 = arith.constant 1 : index
    %c1_45 = arith.constant 1 : index
    %87 = memref.load %arg12[%c1_44, %c1_45] : memref<9x30xf32, #tpu.memory_space<smem>>
    %88 = vector.broadcast %87 : f32 to vector<8x128xf32>
    %89 = arith.mulf %42, %88 : vector<8x128xf32>
    %90 = arith.addf %86, %89 : vector<8x128xf32>
    %c2_46 = arith.constant 2 : index
    %c1_47 = arith.constant 1 : index
    %91 = memref.load %arg12[%c2_46, %c1_47] : memref<9x30xf32, #tpu.memory_space<smem>>
    %92 = vector.broadcast %91 : f32 to vector<8x128xf32>
    %93 = arith.mulf %43, %92 : vector<8x128xf32>
    %94 = arith.addf %90, %93 : vector<8x128xf32>
    %c3_48 = arith.constant 3 : index
    %c1_49 = arith.constant 1 : index
    %95 = memref.load %arg12[%c3_48, %c1_49] : memref<9x30xf32, #tpu.memory_space<smem>>
    %96 = vector.broadcast %95 : f32 to vector<8x128xf32>
    %97 = arith.mulf %44, %96 : vector<8x128xf32>
    %98 = arith.addf %94, %97 : vector<8x128xf32>
    %c4_50 = arith.constant 4 : index
    %c1_51 = arith.constant 1 : index
    %99 = memref.load %arg12[%c4_50, %c1_51] : memref<9x30xf32, #tpu.memory_space<smem>>
    %100 = vector.broadcast %99 : f32 to vector<8x128xf32>
    %101 = arith.mulf %45, %100 : vector<8x128xf32>
    %102 = arith.addf %98, %101 : vector<8x128xf32>
    %c5_52 = arith.constant 5 : index
    %c1_53 = arith.constant 1 : index
    %103 = memref.load %arg12[%c5_52, %c1_53] : memref<9x30xf32, #tpu.memory_space<smem>>
    %104 = vector.broadcast %103 : f32 to vector<8x128xf32>
    %105 = arith.mulf %46, %104 : vector<8x128xf32>
    %106 = arith.addf %102, %105 : vector<8x128xf32>
    %c6_54 = arith.constant 6 : index
    %c1_55 = arith.constant 1 : index
    %107 = memref.load %arg12[%c6_54, %c1_55] : memref<9x30xf32, #tpu.memory_space<smem>>
    %108 = vector.broadcast %107 : f32 to vector<8x128xf32>
    %109 = arith.mulf %47, %108 : vector<8x128xf32>
    %110 = arith.addf %106, %109 : vector<8x128xf32>
    %c7_56 = arith.constant 7 : index
    %c1_57 = arith.constant 1 : index
    %111 = memref.load %arg12[%c7_56, %c1_57] : memref<9x30xf32, #tpu.memory_space<smem>>
    %112 = vector.broadcast %111 : f32 to vector<8x128xf32>
    %113 = arith.mulf %48, %112 : vector<8x128xf32>
    %114 = arith.addf %110, %113 : vector<8x128xf32>
    %c8_58 = arith.constant 8 : index
    %c1_59 = arith.constant 1 : index
    %115 = memref.load %arg12[%c8_58, %c1_59] : memref<9x30xf32, #tpu.memory_space<smem>>
    %116 = vector.broadcast %115 : f32 to vector<8x128xf32>
    %117 = arith.addf %114, %116 : vector<8x128xf32>
    %c0_60 = arith.constant 0 : index
    %c128 = arith.constant 128 : index
    %118 = vector.load %arg13[%c0_60, %c128] : memref<8x3840xf32, #tpu.memory_space<vmem>>, vector<8x128xf32>
    tpu.vector_store %arg13[%c0_60, %c128], %117 {strides = array<i32>} : memref<8x3840xf32, #tpu.memory_space<vmem>>, vector<8x128xf32>,
    %c0_61 = arith.constant 0 : index
    %c2_62 = arith.constant 2 : index
    %119 = memref.load %arg12[%c0_61, %c2_62] : memref<9x30xf32, #tpu.memory_space<smem>>
    %120 = vector.broadcast %119 : f32 to vector<8x128xf32>
    %121 = arith.mulf %41, %120 : vector<8x128xf32>
    %c1_63 = arith.constant 1 : index
    %c2_64 = arith.constant 2 : index
    %122 = memref.load %arg12[%c1_63, %c2_64] : memref<9x30xf32, #tpu.memory_space<smem>>
    %123 = vector.broadcast %122 : f32 to vector<8x128xf32>
    %124 = arith.mulf %42, %123 : vector<8x128xf32>
    %125 = arith.addf %121, %124 : vector<8x128xf32>
    %c2_65 = arith.constant 2 : index
    %c2_66 = arith.constant 2 : index
    %126 = memref.load %arg12[%c2_65, %c2_66] : memref<9x30xf32, #tpu.memory_space<smem>>
    %127 = vector.broadcast %126 : f32 to vector<8x128xf32>
    %128 = arith.mulf %43, %127 : vector<8x128xf32>
    %129 = arith.addf %125, %128 : vector<8x128xf32>
    %c3_67 = arith.constant 3 : index
    %c2_68 = arith.constant 2 : index
    %130 = memref.load %arg12[%c3_67, %c2_68] : memref<9x30xf32, #tpu.memory_space<smem>>
    %131 = vector.broadcast %130 : f32 to vector<8x128xf32>
    %132 = arith.mulf %44, %131 : vector<8x128xf32>
    %133 = arith.addf %129, %132 : vector<8x128xf32>
    %c4_69 = arith.constant 4 : index
    %c2_70 = arith.constant 2 : index
    %134 = memref.load %arg12[%c4_69, %c2_70] : memref<9x30xf32, #tpu.memory_space<smem>>
    %135 = vector.broadcast %134 : f32 to vector<8x128xf32>
    %136 = arith.mulf %45, %135 : vector<8x128xf32>
    %137 = arith.addf %133, %136 : vector<8x128xf32>
    %c5_71 = arith.constant 5 : index
    %c2_72 = arith.constant 2 : index
    %138 = memref.load %arg12[%c5_71, %c2_72] : memref<9x30xf32, #tpu.memory_space<smem>>
    %139 = vector.broadcast %138 : f32 to vector<8x128xf32>
    %140 = arith.mulf %46, %139 : vector<8x128xf32>
    %141 = arith.addf %137, %140 : vector<8x128xf32>
    %c6_73 = arith.constant 6 : index
    %c2_74 = arith.constant 2 : index
    %142 = memref.load %arg12[%c6_73, %c2_74] : memref<9x30xf32, #tpu.memory_space<smem>>
    %143 = vector.broadcast %142 : f32 to vector<8x128xf32>
    %144 = arith.mulf %47, %143 : vector<8x128xf32>
    %145 = arith.addf %141, %144 : vector<8x128xf32>
    %c7_75 = arith.constant 7 : index
    %c2_76 = arith.constant 2 : index
    %146 = memref.load %arg12[%c7_75, %c2_76] : memref<9x30xf32, #tpu.memory_space<smem>>
    %147 = vector.broadcast %146 : f32 to vector<8x128xf32>
    %148 = arith.mulf %48, %147 : vector<8x128xf32>
    %149 = arith.addf %145, %148 : vector<8x128xf32>
    %c8_77 = arith.constant 8 : index
    %c2_78 = arith.constant 2 : index
    %150 = memref.load %arg12[%c8_77, %c2_78] : memref<9x30xf32, #tpu.memory_space<smem>>
    %151 = vector.broadcast %150 : f32 to vector<8x128xf32>
    %152 = arith.addf %149, %151 : vector<8x128xf32>
    %c0_79 = arith.constant 0 : index
    %c256 = arith.constant 256 : index
    %153 = vector.load %arg13[%c0_79, %c256] : memref<8x3840xf32, #tpu.memory_space<vmem>>, vector<8x128xf32>
    tpu.vector_store %arg13[%c0_79, %c256], %152 {strides = array<i32>} : memref<8x3840xf32, #tpu.memory_space<vmem>>, vector<8x128xf32>,
    %c0_80 = arith.constant 0 : index
    %c3_81 = arith.constant 3 : index
    %154 = memref.load %arg12[%c0_80, %c3_81] : memref<9x30xf32, #tpu.memory_space<smem>>
    %155 = vector.broadcast %154 : f32 to vector<8x128xf32>
    %156 = arith.mulf %41, %155 : vector<8x128xf32>
    %c1_82 = arith.constant 1 : index
    %c3_83 = arith.constant 3 : index
    %157 = memref.load %arg12[%c1_82, %c3_83] : memref<9x30xf32, #tpu.memory_space<smem>>
    %158 = vector.broadcast %157 : f32 to vector<8x128xf32>
    %159 = arith.mulf %42, %158 : vector<8x128xf32>
    %160 = arith.addf %156, %159 : vector<8x128xf32>
    %c2_84 = arith.constant 2 : index
    %c3_85 = arith.constant 3 : index
    %161 = memref.load %arg12[%c2_84, %c3_85] : memref<9x30xf32, #tpu.memory_space<smem>>
    %162 = vector.broadcast %161 : f32 to vector<8x128xf32>
    %163 = arith.mulf %43, %162 : vector<8x128xf32>
    %164 = arith.addf %160, %163 : vector<8x128xf32>
    %c3_86 = arith.constant 3 : index
    %c3_87 = arith.constant 3 : index
    %165 = memref.load %arg12[%c3_86, %c3_87] : memref<9x30xf32, #tpu.memory_space<smem>>
    %166 = vector.broadcast %165 : f32 to vector<8x128xf32>
    %167 = arith.mulf %44, %166 : vector<8x128xf32>
    %168 = arith.addf %164, %167 : vector<8x128xf32>
    %c4_88 = arith.constant 4 : index
    %c3_89 = arith.constant 3 : index
    %169 = memref.load %arg12[%c4_88, %c3_89] : memref<9x30xf32, #tpu.memory_space<smem>>
    %170 = vector.broadcast %169 : f32 to vector<8x128xf32>
    %171 = arith.mulf %45, %170 : vector<8x128xf32>
    %172 = arith.addf %168, %171 : vector<8x128xf32>
    %c5_90 = arith.constant 5 : index
    %c3_91 = arith.constant 3 : index
    %173 = memref.load %arg12[%c5_90, %c3_91] : memref<9x30xf32, #tpu.memory_space<smem>>
    %174 = vector.broadcast %173 : f32 to vector<8x128xf32>
    %175 = arith.mulf %46, %174 : vector<8x128xf32>
    %176 = arith.addf %172, %175 : vector<8x128xf32>
    %c6_92 = arith.constant 6 : index
    %c3_93 = arith.constant 3 : index
    %177 = memref.load %arg12[%c6_92, %c3_93] : memref<9x30xf32, #tpu.memory_space<smem>>
    %178 = vector.broadcast %177 : f32 to vector<8x128xf32>
    %179 = arith.mulf %47, %178 : vector<8x128xf32>
    %180 = arith.addf %176, %179 : vector<8x128xf32>
    %c7_94 = arith.constant 7 : index
    %c3_95 = arith.constant 3 : index
    %181 = memref.load %arg12[%c7_94, %c3_95] : memref<9x30xf32, #tpu.memory_space<smem>>
    %182 = vector.broadcast %181 : f32 to vector<8x128xf32>
    %183 = arith.mulf %48, %182 : vector<8x128xf32>
    %184 = arith.addf %180, %183 : vector<8x128xf32>
    %c8_96 = arith.constant 8 : index
    %c3_97 = arith.constant 3 : index
    %185 = memref.load %arg12[%c8_96, %c3_97] : memref<9x30xf32, #tpu.memory_space<smem>>
    %186 = vector.broadcast %185 : f32 to vector<8x128xf32>
    %187 = arith.addf %184, %186 : vector<8x128xf32>
    %c0_98 = arith.constant 0 : index
    %c384 = arith.constant 384 : index
    %188 = vector.load %arg13[%c0_98, %c384] : memref<8x3840xf32, #tpu.memory_space<vmem>>, vector<8x128xf32>
    tpu.vector_store %arg13[%c0_98, %c384], %187 {strides = array<i32>} : memref<8x3840xf32, #tpu.memory_space<vmem>>, vector<8x128xf32>,
    %c0_99 = arith.constant 0 : index
    %c4_100 = arith.constant 4 : index
    %189 = memref.load %arg12[%c0_99, %c4_100] : memref<9x30xf32, #tpu.memory_space<smem>>
    %190 = vector.broadcast %189 : f32 to vector<8x128xf32>
    %191 = arith.mulf %41, %190 : vector<8x128xf32>
    %c1_101 = arith.constant 1 : index
    %c4_102 = arith.constant 4 : index
    %192 = memref.load %arg12[%c1_101, %c4_102] : memref<9x30xf32, #tpu.memory_space<smem>>
    %193 = vector.broadcast %192 : f32 to vector<8x128xf32>
    %194 = arith.mulf %42, %193 : vector<8x128xf32>
    %195 = arith.addf %191, %194 : vector<8x128xf32>
    %c2_103 = arith.constant 2 : index
    %c4_104 = arith.constant 4 : index
    %196 = memref.load %arg12[%c2_103, %c4_104] : memref<9x30xf32, #tpu.memory_space<smem>>
    %197 = vector.broadcast %196 : f32 to vector<8x128xf32>
    %198 = arith.mulf %43, %197 : vector<8x128xf32>
    %199 = arith.addf %195, %198 : vector<8x128xf32>
    %c3_105 = arith.constant 3 : index
    %c4_106 = arith.constant 4 : index
    %200 = memref.load %arg12[%c3_105, %c4_106] : memref<9x30xf32, #tpu.memory_space<smem>>
    %201 = vector.broadcast %200 : f32 to vector<8x128xf32>
    %202 = arith.mulf %44, %201 : vector<8x128xf32>
    %203 = arith.addf %199, %202 : vector<8x128xf32>
    %c4_107 = arith.constant 4 : index
    %c4_108 = arith.constant 4 : index
    %204 = memref.load %arg12[%c4_107, %c4_108] : memref<9x30xf32, #tpu.memory_space<smem>>
    %205 = vector.broadcast %204 : f32 to vector<8x128xf32>
    %206 = arith.mulf %45, %205 : vector<8x128xf32>
    %207 = arith.addf %203, %206 : vector<8x128xf32>
    %c5_109 = arith.constant 5 : index
    %c4_110 = arith.constant 4 : index
    %208 = memref.load %arg12[%c5_109, %c4_110] : memref<9x30xf32, #tpu.memory_space<smem>>
    %209 = vector.broadcast %208 : f32 to vector<8x128xf32>
    %210 = arith.mulf %46, %209 : vector<8x128xf32>
    %211 = arith.addf %207, %210 : vector<8x128xf32>
    %c6_111 = arith.constant 6 : index
    %c4_112 = arith.constant 4 : index
    %212 = memref.load %arg12[%c6_111, %c4_112] : memref<9x30xf32, #tpu.memory_space<smem>>
    %213 = vector.broadcast %212 : f32 to vector<8x128xf32>
    %214 = arith.mulf %47, %213 : vector<8x128xf32>
    %215 = arith.addf %211, %214 : vector<8x128xf32>
    %c7_113 = arith.constant 7 : index
    %c4_114 = arith.constant 4 : index
    %216 = memref.load %arg12[%c7_113, %c4_114] : memref<9x30xf32, #tpu.memory_space<smem>>
    %217 = vector.broadcast %216 : f32 to vector<8x128xf32>
    %218 = arith.mulf %48, %217 : vector<8x128xf32>
    %219 = arith.addf %215, %218 : vector<8x128xf32>
    %c8_115 = arith.constant 8 : index
    %c4_116 = arith.constant 4 : index
    %220 = memref.load %arg12[%c8_115, %c4_116] : memref<9x30xf32, #tpu.memory_space<smem>>
    %221 = vector.broadcast %220 : f32 to vector<8x128xf32>
    %222 = arith.addf %219, %221 : vector<8x128xf32>
    %c0_117 = arith.constant 0 : index
    %c512 = arith.constant 512 : index
    %223 = vector.load %arg13[%c0_117, %c512] : memref<8x3840xf32, #tpu.memory_space<vmem>>, vector<8x128xf32>
    tpu.vector_store %arg13[%c0_117, %c512], %222 {strides = array<i32>} : memref<8x3840xf32, #tpu.memory_space<vmem>>, vector<8x128xf32>,
    %c0_118 = arith.constant 0 : index
    %c5_119 = arith.constant 5 : index
    %224 = memref.load %arg12[%c0_118, %c5_119] : memref<9x30xf32, #tpu.memory_space<smem>>
    %225 = vector.broadcast %224 : f32 to vector<8x128xf32>
    %226 = arith.mulf %41, %225 : vector<8x128xf32>
    %c1_120 = arith.constant 1 : index
    %c5_121 = arith.constant 5 : index
    %227 = memref.load %arg12[%c1_120, %c5_121] : memref<9x30xf32, #tpu.memory_space<smem>>
    %228 = vector.broadcast %227 : f32 to vector<8x128xf32>
    %229 = arith.mulf %42, %228 : vector<8x128xf32>
    %230 = arith.addf %226, %229 : vector<8x128xf32>
    %c2_122 = arith.constant 2 : index
    %c5_123 = arith.constant 5 : index
    %231 = memref.load %arg12[%c2_122, %c5_123] : memref<9x30xf32, #tpu.memory_space<smem>>
    %232 = vector.broadcast %231 : f32 to vector<8x128xf32>
    %233 = arith.mulf %43, %232 : vector<8x128xf32>
    %234 = arith.addf %230, %233 : vector<8x128xf32>
    %c3_124 = arith.constant 3 : index
    %c5_125 = arith.constant 5 : index
    %235 = memref.load %arg12[%c3_124, %c5_125] : memref<9x30xf32, #tpu.memory_space<smem>>
    %236 = vector.broadcast %235 : f32 to vector<8x128xf32>
    %237 = arith.mulf %44, %236 : vector<8x128xf32>
    %238 = arith.addf %234, %237 : vector<8x128xf32>
    %c4_126 = arith.constant 4 : index
    %c5_127 = arith.constant 5 : index
    %239 = memref.load %arg12[%c4_126, %c5_127] : memref<9x30xf32, #tpu.memory_space<smem>>
    %240 = vector.broadcast %239 : f32 to vector<8x128xf32>
    %241 = arith.mulf %45, %240 : vector<8x128xf32>
    %242 = arith.addf %238, %241 : vector<8x128xf32>
    %c5_128 = arith.constant 5 : index
    %c5_129 = arith.constant 5 : index
    %243 = memref.load %arg12[%c5_128, %c5_129] : memref<9x30xf32, #tpu.memory_space<smem>>
    %244 = vector.broadcast %243 : f32 to vector<8x128xf32>
    %245 = arith.mulf %46, %244 : vector<8x128xf32>
    %246 = arith.addf %242, %245 : vector<8x128xf32>
    %c6_130 = arith.constant 6 : index
    %c5_131 = arith.constant 5 : index
    %247 = memref.load %arg12[%c6_130, %c5_131] : memref<9x30xf32, #tpu.memory_space<smem>>
    %248 = vector.broadcast %247 : f32 to vector<8x128xf32>
    %249 = arith.mulf %47, %248 : vector<8x128xf32>
    %250 = arith.addf %246, %249 : vector<8x128xf32>
    %c7_132 = arith.constant 7 : index
    %c5_133 = arith.constant 5 : index
    %251 = memref.load %arg12[%c7_132, %c5_133] : memref<9x30xf32, #tpu.memory_space<smem>>
    %252 = vector.broadcast %251 : f32 to vector<8x128xf32>
    %253 = arith.mulf %48, %252 : vector<8x128xf32>
    %254 = arith.addf %250, %253 : vector<8x128xf32>
    %c8_134 = arith.constant 8 : index
    %c5_135 = arith.constant 5 : index
    %255 = memref.load %arg12[%c8_134, %c5_135] : memref<9x30xf32, #tpu.memory_space<smem>>
    %256 = vector.broadcast %255 : f32 to vector<8x128xf32>
    %257 = arith.addf %254, %256 : vector<8x128xf32>
    %c0_136 = arith.constant 0 : index
    %c640 = arith.constant 640 : index
    %258 = vector.load %arg13[%c0_136, %c640] : memref<8x3840xf32, #tpu.memory_space<vmem>>, vector<8x128xf32>
    tpu.vector_store %arg13[%c0_136, %c640], %257 {strides = array<i32>} : memref<8x3840xf32, #tpu.memory_space<vmem>>, vector<8x128xf32>,
    %c0_137 = arith.constant 0 : index
    %c6_138 = arith.constant 6 : index
    %259 = memref.load %arg12[%c0_137, %c6_138] : memref<9x30xf32, #tpu.memory_space<smem>>
    %260 = vector.broadcast %259 : f32 to vector<8x128xf32>
    %261 = arith.mulf %41, %260 : vector<8x128xf32>
    %c1_139 = arith.constant 1 : index
    %c6_140 = arith.constant 6 : index
    %262 = memref.load %arg12[%c1_139, %c6_140] : memref<9x30xf32, #tpu.memory_space<smem>>
    %263 = vector.broadcast %262 : f32 to vector<8x128xf32>
    %264 = arith.mulf %42, %263 : vector<8x128xf32>
    %265 = arith.addf %261, %264 : vector<8x128xf32>
    %c2_141 = arith.constant 2 : index
    %c6_142 = arith.constant 6 : index
    %266 = memref.load %arg12[%c2_141, %c6_142] : memref<9x30xf32, #tpu.memory_space<smem>>
    %267 = vector.broadcast %266 : f32 to vector<8x128xf32>
    %268 = arith.mulf %43, %267 : vector<8x128xf32>
    %269 = arith.addf %265, %268 : vector<8x128xf32>
    %c3_143 = arith.constant 3 : index
    %c6_144 = arith.constant 6 : index
    %270 = memref.load %arg12[%c3_143, %c6_144] : memref<9x30xf32, #tpu.memory_space<smem>>
    %271 = vector.broadcast %270 : f32 to vector<8x128xf32>
    %272 = arith.mulf %44, %271 : vector<8x128xf32>
    %273 = arith.addf %269, %272 : vector<8x128xf32>
    %c4_145 = arith.constant 4 : index
    %c6_146 = arith.constant 6 : index
    %274 = memref.load %arg12[%c4_145, %c6_146] : memref<9x30xf32, #tpu.memory_space<smem>>
    %275 = vector.broadcast %274 : f32 to vector<8x128xf32>
    %276 = arith.mulf %45, %275 : vector<8x128xf32>
    %277 = arith.addf %273, %276 : vector<8x128xf32>
    %c5_147 = arith.constant 5 : index
    %c6_148 = arith.constant 6 : index
    %278 = memref.load %arg12[%c5_147, %c6_148] : memref<9x30xf32, #tpu.memory_space<smem>>
    %279 = vector.broadcast %278 : f32 to vector<8x128xf32>
    %280 = arith.mulf %46, %279 : vector<8x128xf32>
    %281 = arith.addf %277, %280 : vector<8x128xf32>
    %c6_149 = arith.constant 6 : index
    %c6_150 = arith.constant 6 : index
    %282 = memref.load %arg12[%c6_149, %c6_150] : memref<9x30xf32, #tpu.memory_space<smem>>
    %283 = vector.broadcast %282 : f32 to vector<8x128xf32>
    %284 = arith.mulf %47, %283 : vector<8x128xf32>
    %285 = arith.addf %281, %284 : vector<8x128xf32>
    %c7_151 = arith.constant 7 : index
    %c6_152 = arith.constant 6 : index
    %286 = memref.load %arg12[%c7_151, %c6_152] : memref<9x30xf32, #tpu.memory_space<smem>>
    %287 = vector.broadcast %286 : f32 to vector<8x128xf32>
    %288 = arith.mulf %48, %287 : vector<8x128xf32>
    %289 = arith.addf %285, %288 : vector<8x128xf32>
    %c8_153 = arith.constant 8 : index
    %c6_154 = arith.constant 6 : index
    %290 = memref.load %arg12[%c8_153, %c6_154] : memref<9x30xf32, #tpu.memory_space<smem>>
    %291 = vector.broadcast %290 : f32 to vector<8x128xf32>
    %292 = arith.addf %289, %291 : vector<8x128xf32>
    %c0_155 = arith.constant 0 : index
    %c768 = arith.constant 768 : index
    %293 = vector.load %arg13[%c0_155, %c768] : memref<8x3840xf32, #tpu.memory_space<vmem>>, vector<8x128xf32>
    tpu.vector_store %arg13[%c0_155, %c768], %292 {strides = array<i32>} : memref<8x3840xf32, #tpu.memory_space<vmem>>, vector<8x128xf32>,
    %c0_156 = arith.constant 0 : index
    %c7_157 = arith.constant 7 : index
    %294 = memref.load %arg12[%c0_156, %c7_157] : memref<9x30xf32, #tpu.memory_space<smem>>
    %295 = vector.broadcast %294 : f32 to vector<8x128xf32>
    %296 = arith.mulf %41, %295 : vector<8x128xf32>
    %c1_158 = arith.constant 1 : index
    %c7_159 = arith.constant 7 : index
    %297 = memref.load %arg12[%c1_158, %c7_159] : memref<9x30xf32, #tpu.memory_space<smem>>
    %298 = vector.broadcast %297 : f32 to vector<8x128xf32>
    %299 = arith.mulf %42, %298 : vector<8x128xf32>
    %300 = arith.addf %296, %299 : vector<8x128xf32>
    %c2_160 = arith.constant 2 : index
    %c7_161 = arith.constant 7 : index
    %301 = memref.load %arg12[%c2_160, %c7_161] : memref<9x30xf32, #tpu.memory_space<smem>>
    %302 = vector.broadcast %301 : f32 to vector<8x128xf32>
    %303 = arith.mulf %43, %302 : vector<8x128xf32>
    %304 = arith.addf %300, %303 : vector<8x128xf32>
    %c3_162 = arith.constant 3 : index
    %c7_163 = arith.constant 7 : index
    %305 = memref.load %arg12[%c3_162, %c7_163] : memref<9x30xf32, #tpu.memory_space<smem>>
    %306 = vector.broadcast %305 : f32 to vector<8x128xf32>
    %307 = arith.mulf %44, %306 : vector<8x128xf32>
    %308 = arith.addf %304, %307 : vector<8x128xf32>
    %c4_164 = arith.constant 4 : index
    %c7_165 = arith.constant 7 : index
    %309 = memref.load %arg12[%c4_164, %c7_165] : memref<9x30xf32, #tpu.memory_space<smem>>
    %310 = vector.broadcast %309 : f32 to vector<8x128xf32>
    %311 = arith.mulf %45, %310 : vector<8x128xf32>
    %312 = arith.addf %308, %311 : vector<8x128xf32>
    %c5_166 = arith.constant 5 : index
    %c7_167 = arith.constant 7 : index
    %313 = memref.load %arg12[%c5_166, %c7_167] : memref<9x30xf32, #tpu.memory_space<smem>>
    %314 = vector.broadcast %313 : f32 to vector<8x128xf32>
    %315 = arith.mulf %46, %314 : vector<8x128xf32>
    %316 = arith.addf %312, %315 : vector<8x128xf32>
    %c6_168 = arith.constant 6 : index
    %c7_169 = arith.constant 7 : index
    %317 = memref.load %arg12[%c6_168, %c7_169] : memref<9x30xf32, #tpu.memory_space<smem>>
    %318 = vector.broadcast %317 : f32 to vector<8x128xf32>
    %319 = arith.mulf %47, %318 : vector<8x128xf32>
    %320 = arith.addf %316, %319 : vector<8x128xf32>
    %c7_170 = arith.constant 7 : index
    %c7_171 = arith.constant 7 : index
    %321 = memref.load %arg12[%c7_170, %c7_171] : memref<9x30xf32, #tpu.memory_space<smem>>
    %322 = vector.broadcast %321 : f32 to vector<8x128xf32>
    %323 = arith.mulf %48, %322 : vector<8x128xf32>
    %324 = arith.addf %320, %323 : vector<8x128xf32>
    %c8_172 = arith.constant 8 : index
    %c7_173 = arith.constant 7 : index
    %325 = memref.load %arg12[%c8_172, %c7_173] : memref<9x30xf32, #tpu.memory_space<smem>>
    %326 = vector.broadcast %325 : f32 to vector<8x128xf32>
    %327 = arith.addf %324, %326 : vector<8x128xf32>
    %c0_174 = arith.constant 0 : index
    %c896 = arith.constant 896 : index
    %328 = vector.load %arg13[%c0_174, %c896] : memref<8x3840xf32, #tpu.memory_space<vmem>>, vector<8x128xf32>
    tpu.vector_store %arg13[%c0_174, %c896], %327 {strides = array<i32>} : memref<8x3840xf32, #tpu.memory_space<vmem>>, vector<8x128xf32>,
    %c0_175 = arith.constant 0 : index
    %c8_176 = arith.constant 8 : index
    %329 = memref.load %arg12[%c0_175, %c8_176] : memref<9x30xf32, #tpu.memory_space<smem>>
    %330 = vector.broadcast %329 : f32 to vector<8x128xf32>
    %331 = arith.mulf %41, %330 : vector<8x128xf32>
    %c1_177 = arith.constant 1 : index
    %c8_178 = arith.constant 8 : index
    %332 = memref.load %arg12[%c1_177, %c8_178] : memref<9x30xf32, #tpu.memory_space<smem>>
    %333 = vector.broadcast %332 : f32 to vector<8x128xf32>
    %334 = arith.mulf %42, %333 : vector<8x128xf32>
    %335 = arith.addf %331, %334 : vector<8x128xf32>
    %c2_179 = arith.constant 2 : index
    %c8_180 = arith.constant 8 : index
    %336 = memref.load %arg12[%c2_179, %c8_180] : memref<9x30xf32, #tpu.memory_space<smem>>
    %337 = vector.broadcast %336 : f32 to vector<8x128xf32>
    %338 = arith.mulf %43, %337 : vector<8x128xf32>
    %339 = arith.addf %335, %338 : vector<8x128xf32>
    %c3_181 = arith.constant 3 : index
    %c8_182 = arith.constant 8 : index
    %340 = memref.load %arg12[%c3_181, %c8_182] : memref<9x30xf32, #tpu.memory_space<smem>>
    %341 = vector.broadcast %340 : f32 to vector<8x128xf32>
    %342 = arith.mulf %44, %341 : vector<8x128xf32>
    %343 = arith.addf %339, %342 : vector<8x128xf32>
    %c4_183 = arith.constant 4 : index
    %c8_184 = arith.constant 8 : index
    %344 = memref.load %arg12[%c4_183, %c8_184] : memref<9x30xf32, #tpu.memory_space<smem>>
    %345 = vector.broadcast %344 : f32 to vector<8x128xf32>
    %346 = arith.mulf %45, %345 : vector<8x128xf32>
    %347 = arith.addf %343, %346 : vector<8x128xf32>
    %c5_185 = arith.constant 5 : index
    %c8_186 = arith.constant 8 : index
    %348 = memref.load %arg12[%c5_185, %c8_186] : memref<9x30xf32, #tpu.memory_space<smem>>
    %349 = vector.broadcast %348 : f32 to vector<8x128xf32>
    %350 = arith.mulf %46, %349 : vector<8x128xf32>
    %351 = arith.addf %347, %350 : vector<8x128xf32>
    %c6_187 = arith.constant 6 : index
    %c8_188 = arith.constant 8 : index
    %352 = memref.load %arg12[%c6_187, %c8_188] : memref<9x30xf32, #tpu.memory_space<smem>>
    %353 = vector.broadcast %352 : f32 to vector<8x128xf32>
    %354 = arith.mulf %47, %353 : vector<8x128xf32>
    %355 = arith.addf %351, %354 : vector<8x128xf32>
    %c7_189 = arith.constant 7 : index
    %c8_190 = arith.constant 8 : index
    %356 = memref.load %arg12[%c7_189, %c8_190] : memref<9x30xf32, #tpu.memory_space<smem>>
    %357 = vector.broadcast %356 : f32 to vector<8x128xf32>
    %358 = arith.mulf %48, %357 : vector<8x128xf32>
    %359 = arith.addf %355, %358 : vector<8x128xf32>
    %c8_191 = arith.constant 8 : index
    %c8_192 = arith.constant 8 : index
    %360 = memref.load %arg12[%c8_191, %c8_192] : memref<9x30xf32, #tpu.memory_space<smem>>
    %361 = vector.broadcast %360 : f32 to vector<8x128xf32>
    %362 = arith.addf %359, %361 : vector<8x128xf32>
    %c0_193 = arith.constant 0 : index
    %c1024 = arith.constant 1024 : index
    %363 = vector.load %arg13[%c0_193, %c1024] : memref<8x3840xf32, #tpu.memory_space<vmem>>, vector<8x128xf32>
    tpu.vector_store %arg13[%c0_193, %c1024], %362 {strides = array<i32>} : memref<8x3840xf32, #tpu.memory_space<vmem>>, vector<8x128xf32>,
    %c0_194 = arith.constant 0 : index
    %c9 = arith.constant 9 : index
    %364 = memref.load %arg12[%c0_194, %c9] : memref<9x30xf32, #tpu.memory_space<smem>>
    %365 = vector.broadcast %364 : f32 to vector<8x128xf32>
    %366 = arith.mulf %41, %365 : vector<8x128xf32>
    %c1_195 = arith.constant 1 : index
    %c9_196 = arith.constant 9 : index
    %367 = memref.load %arg12[%c1_195, %c9_196] : memref<9x30xf32, #tpu.memory_space<smem>>
    %368 = vector.broadcast %367 : f32 to vector<8x128xf32>
    %369 = arith.mulf %42, %368 : vector<8x128xf32>
    %370 = arith.addf %366, %369 : vector<8x128xf32>
    %c2_197 = arith.constant 2 : index
    %c9_198 = arith.constant 9 : index
    %371 = memref.load %arg12[%c2_197, %c9_198] : memref<9x30xf32, #tpu.memory_space<smem>>
    %372 = vector.broadcast %371 : f32 to vector<8x128xf32>
    %373 = arith.mulf %43, %372 : vector<8x128xf32>
    %374 = arith.addf %370, %373 : vector<8x128xf32>
    %c3_199 = arith.constant 3 : index
    %c9_200 = arith.constant 9 : index
    %375 = memref.load %arg12[%c3_199, %c9_200] : memref<9x30xf32, #tpu.memory_space<smem>>
    %376 = vector.broadcast %375 : f32 to vector<8x128xf32>
    %377 = arith.mulf %44, %376 : vector<8x128xf32>
    %378 = arith.addf %374, %377 : vector<8x128xf32>
    %c4_201 = arith.constant 4 : index
    %c9_202 = arith.constant 9 : index
    %379 = memref.load %arg12[%c4_201, %c9_202] : memref<9x30xf32, #tpu.memory_space<smem>>
    %380 = vector.broadcast %379 : f32 to vector<8x128xf32>
    %381 = arith.mulf %45, %380 : vector<8x128xf32>
    %382 = arith.addf %378, %381 : vector<8x128xf32>
    %c5_203 = arith.constant 5 : index
    %c9_204 = arith.constant 9 : index
    %383 = memref.load %arg12[%c5_203, %c9_204] : memref<9x30xf32, #tpu.memory_space<smem>>
    %384 = vector.broadcast %383 : f32 to vector<8x128xf32>
    %385 = arith.mulf %46, %384 : vector<8x128xf32>
    %386 = arith.addf %382, %385 : vector<8x128xf32>
    %c6_205 = arith.constant 6 : index
    %c9_206 = arith.constant 9 : index
    %387 = memref.load %arg12[%c6_205, %c9_206] : memref<9x30xf32, #tpu.memory_space<smem>>
    %388 = vector.broadcast %387 : f32 to vector<8x128xf32>
    %389 = arith.mulf %47, %388 : vector<8x128xf32>
    %390 = arith.addf %386, %389 : vector<8x128xf32>
    %c7_207 = arith.constant 7 : index
    %c9_208 = arith.constant 9 : index
    %391 = memref.load %arg12[%c7_207, %c9_208] : memref<9x30xf32, #tpu.memory_space<smem>>
    %392 = vector.broadcast %391 : f32 to vector<8x128xf32>
    %393 = arith.mulf %48, %392 : vector<8x128xf32>
    %394 = arith.addf %390, %393 : vector<8x128xf32>
    %c8_209 = arith.constant 8 : index
    %c9_210 = arith.constant 9 : index
    %395 = memref.load %arg12[%c8_209, %c9_210] : memref<9x30xf32, #tpu.memory_space<smem>>
    %396 = vector.broadcast %395 : f32 to vector<8x128xf32>
    %397 = arith.addf %394, %396 : vector<8x128xf32>
    %c0_211 = arith.constant 0 : index
    %c1152 = arith.constant 1152 : index
    %398 = vector.load %arg13[%c0_211, %c1152] : memref<8x3840xf32, #tpu.memory_space<vmem>>, vector<8x128xf32>
    tpu.vector_store %arg13[%c0_211, %c1152], %397 {strides = array<i32>} : memref<8x3840xf32, #tpu.memory_space<vmem>>, vector<8x128xf32>,
    %c0_212 = arith.constant 0 : index
    %c10 = arith.constant 10 : index
    %399 = memref.load %arg12[%c0_212, %c10] : memref<9x30xf32, #tpu.memory_space<smem>>
    %400 = vector.broadcast %399 : f32 to vector<8x128xf32>
    %401 = arith.mulf %41, %400 : vector<8x128xf32>
    %c1_213 = arith.constant 1 : index
    %c10_214 = arith.constant 10 : index
    %402 = memref.load %arg12[%c1_213, %c10_214] : memref<9x30xf32, #tpu.memory_space<smem>>
    %403 = vector.broadcast %402 : f32 to vector<8x128xf32>
    %404 = arith.mulf %42, %403 : vector<8x128xf32>
    %405 = arith.addf %401, %404 : vector<8x128xf32>
    %c2_215 = arith.constant 2 : index
    %c10_216 = arith.constant 10 : index
    %406 = memref.load %arg12[%c2_215, %c10_216] : memref<9x30xf32, #tpu.memory_space<smem>>
    %407 = vector.broadcast %406 : f32 to vector<8x128xf32>
    %408 = arith.mulf %43, %407 : vector<8x128xf32>
    %409 = arith.addf %405, %408 : vector<8x128xf32>
    %c3_217 = arith.constant 3 : index
    %c10_218 = arith.constant 10 : index
    %410 = memref.load %arg12[%c3_217, %c10_218] : memref<9x30xf32, #tpu.memory_space<smem>>
    %411 = vector.broadcast %410 : f32 to vector<8x128xf32>
    %412 = arith.mulf %44, %411 : vector<8x128xf32>
    %413 = arith.addf %409, %412 : vector<8x128xf32>
    %c4_219 = arith.constant 4 : index
    %c10_220 = arith.constant 10 : index
    %414 = memref.load %arg12[%c4_219, %c10_220] : memref<9x30xf32, #tpu.memory_space<smem>>
    %415 = vector.broadcast %414 : f32 to vector<8x128xf32>
    %416 = arith.mulf %45, %415 : vector<8x128xf32>
    %417 = arith.addf %413, %416 : vector<8x128xf32>
    %c5_221 = arith.constant 5 : index
    %c10_222 = arith.constant 10 : index
    %418 = memref.load %arg12[%c5_221, %c10_222] : memref<9x30xf32, #tpu.memory_space<smem>>
    %419 = vector.broadcast %418 : f32 to vector<8x128xf32>
    %420 = arith.mulf %46, %419 : vector<8x128xf32>
    %421 = arith.addf %417, %420 : vector<8x128xf32>
    %c6_223 = arith.constant 6 : index
    %c10_224 = arith.constant 10 : index
    %422 = memref.load %arg12[%c6_223, %c10_224] : memref<9x30xf32, #tpu.memory_space<smem>>
    %423 = vector.broadcast %422 : f32 to vector<8x128xf32>
    %424 = arith.mulf %47, %423 : vector<8x128xf32>
    %425 = arith.addf %421, %424 : vector<8x128xf32>
    %c7_225 = arith.constant 7 : index
    %c10_226 = arith.constant 10 : index
    %426 = memref.load %arg12[%c7_225, %c10_226] : memref<9x30xf32, #tpu.memory_space<smem>>
    %427 = vector.broadcast %426 : f32 to vector<8x128xf32>
    %428 = arith.mulf %48, %427 : vector<8x128xf32>
    %429 = arith.addf %425, %428 : vector<8x128xf32>
    %c8_227 = arith.constant 8 : index
    %c10_228 = arith.constant 10 : index
    %430 = memref.load %arg12[%c8_227, %c10_228] : memref<9x30xf32, #tpu.memory_space<smem>>
    %431 = vector.broadcast %430 : f32 to vector<8x128xf32>
    %432 = arith.addf %429, %431 : vector<8x128xf32>
    %c0_229 = arith.constant 0 : index
    %c1280 = arith.constant 1280 : index
    %433 = vector.load %arg13[%c0_229, %c1280] : memref<8x3840xf32, #tpu.memory_space<vmem>>, vector<8x128xf32>
    tpu.vector_store %arg13[%c0_229, %c1280], %432 {strides = array<i32>} : memref<8x3840xf32, #tpu.memory_space<vmem>>, vector<8x128xf32>,
    %c0_230 = arith.constant 0 : index
    %c11 = arith.constant 11 : index
    %434 = memref.load %arg12[%c0_230, %c11] : memref<9x30xf32, #tpu.memory_space<smem>>
    %435 = vector.broadcast %434 : f32 to vector<8x128xf32>
    %436 = arith.mulf %41, %435 : vector<8x128xf32>
    %c1_231 = arith.constant 1 : index
    %c11_232 = arith.constant 11 : index
    %437 = memref.load %arg12[%c1_231, %c11_232] : memref<9x30xf32, #tpu.memory_space<smem>>
    %438 = vector.broadcast %437 : f32 to vector<8x128xf32>
    %439 = arith.mulf %42, %438 : vector<8x128xf32>
    %440 = arith.addf %436, %439 : vector<8x128xf32>
    %c2_233 = arith.constant 2 : index
    %c11_234 = arith.constant 11 : index
    %441 = memref.load %arg12[%c2_233, %c11_234] : memref<9x30xf32, #tpu.memory_space<smem>>
    %442 = vector.broadcast %441 : f32 to vector<8x128xf32>
    %443 = arith.mulf %43, %442 : vector<8x128xf32>
    %444 = arith.addf %440, %443 : vector<8x128xf32>
    %c3_235 = arith.constant 3 : index
    %c11_236 = arith.constant 11 : index
    %445 = memref.load %arg12[%c3_235, %c11_236] : memref<9x30xf32, #tpu.memory_space<smem>>
    %446 = vector.broadcast %445 : f32 to vector<8x128xf32>
    %447 = arith.mulf %44, %446 : vector<8x128xf32>
    %448 = arith.addf %444, %447 : vector<8x128xf32>
    %c4_237 = arith.constant 4 : index
    %c11_238 = arith.constant 11 : index
    %449 = memref.load %arg12[%c4_237, %c11_238] : memref<9x30xf32, #tpu.memory_space<smem>>
    %450 = vector.broadcast %449 : f32 to vector<8x128xf32>
    %451 = arith.mulf %45, %450 : vector<8x128xf32>
    %452 = arith.addf %448, %451 : vector<8x128xf32>
    %c5_239 = arith.constant 5 : index
    %c11_240 = arith.constant 11 : index
    %453 = memref.load %arg12[%c5_239, %c11_240] : memref<9x30xf32, #tpu.memory_space<smem>>
    %454 = vector.broadcast %453 : f32 to vector<8x128xf32>
    %455 = arith.mulf %46, %454 : vector<8x128xf32>
    %456 = arith.addf %452, %455 : vector<8x128xf32>
    %c6_241 = arith.constant 6 : index
    %c11_242 = arith.constant 11 : index
    %457 = memref.load %arg12[%c6_241, %c11_242] : memref<9x30xf32, #tpu.memory_space<smem>>
    %458 = vector.broadcast %457 : f32 to vector<8x128xf32>
    %459 = arith.mulf %47, %458 : vector<8x128xf32>
    %460 = arith.addf %456, %459 : vector<8x128xf32>
    %c7_243 = arith.constant 7 : index
    %c11_244 = arith.constant 11 : index
    %461 = memref.load %arg12[%c7_243, %c11_244] : memref<9x30xf32, #tpu.memory_space<smem>>
    %462 = vector.broadcast %461 : f32 to vector<8x128xf32>
    %463 = arith.mulf %48, %462 : vector<8x128xf32>
    %464 = arith.addf %460, %463 : vector<8x128xf32>
    %c8_245 = arith.constant 8 : index
    %c11_246 = arith.constant 11 : index
    %465 = memref.load %arg12[%c8_245, %c11_246] : memref<9x30xf32, #tpu.memory_space<smem>>
    %466 = vector.broadcast %465 : f32 to vector<8x128xf32>
    %467 = arith.addf %464, %466 : vector<8x128xf32>
    %c0_247 = arith.constant 0 : index
    %c1408 = arith.constant 1408 : index
    %468 = vector.load %arg13[%c0_247, %c1408] : memref<8x3840xf32, #tpu.memory_space<vmem>>, vector<8x128xf32>
    tpu.vector_store %arg13[%c0_247, %c1408], %467 {strides = array<i32>} : memref<8x3840xf32, #tpu.memory_space<vmem>>, vector<8x128xf32>,
    %c0_248 = arith.constant 0 : index
    %c12 = arith.constant 12 : index
    %469 = memref.load %arg12[%c0_248, %c12] : memref<9x30xf32, #tpu.memory_space<smem>>
    %470 = vector.broadcast %469 : f32 to vector<8x128xf32>
    %471 = arith.mulf %41, %470 : vector<8x128xf32>
    %c1_249 = arith.constant 1 : index
    %c12_250 = arith.constant 12 : index
    %472 = memref.load %arg12[%c1_249, %c12_250] : memref<9x30xf32, #tpu.memory_space<smem>>
    %473 = vector.broadcast %472 : f32 to vector<8x128xf32>
    %474 = arith.mulf %42, %473 : vector<8x128xf32>
    %475 = arith.addf %471, %474 : vector<8x128xf32>
    %c2_251 = arith.constant 2 : index
    %c12_252 = arith.constant 12 : index
    %476 = memref.load %arg12[%c2_251, %c12_252] : memref<9x30xf32, #tpu.memory_space<smem>>
    %477 = vector.broadcast %476 : f32 to vector<8x128xf32>
    %478 = arith.mulf %43, %477 : vector<8x128xf32>
    %479 = arith.addf %475, %478 : vector<8x128xf32>
    %c3_253 = arith.constant 3 : index
    %c12_254 = arith.constant 12 : index
    %480 = memref.load %arg12[%c3_253, %c12_254] : memref<9x30xf32, #tpu.memory_space<smem>>
    %481 = vector.broadcast %480 : f32 to vector<8x128xf32>
    %482 = arith.mulf %44, %481 : vector<8x128xf32>
    %483 = arith.addf %479, %482 : vector<8x128xf32>
    %c4_255 = arith.constant 4 : index
    %c12_256 = arith.constant 12 : index
    %484 = memref.load %arg12[%c4_255, %c12_256] : memref<9x30xf32, #tpu.memory_space<smem>>
    %485 = vector.broadcast %484 : f32 to vector<8x128xf32>
    %486 = arith.mulf %45, %485 : vector<8x128xf32>
    %487 = arith.addf %483, %486 : vector<8x128xf32>
    %c5_257 = arith.constant 5 : index
    %c12_258 = arith.constant 12 : index
    %488 = memref.load %arg12[%c5_257, %c12_258] : memref<9x30xf32, #tpu.memory_space<smem>>
    %489 = vector.broadcast %488 : f32 to vector<8x128xf32>
    %490 = arith.mulf %46, %489 : vector<8x128xf32>
    %491 = arith.addf %487, %490 : vector<8x128xf32>
    %c6_259 = arith.constant 6 : index
    %c12_260 = arith.constant 12 : index
    %492 = memref.load %arg12[%c6_259, %c12_260] : memref<9x30xf32, #tpu.memory_space<smem>>
    %493 = vector.broadcast %492 : f32 to vector<8x128xf32>
    %494 = arith.mulf %47, %493 : vector<8x128xf32>
    %495 = arith.addf %491, %494 : vector<8x128xf32>
    %c7_261 = arith.constant 7 : index
    %c12_262 = arith.constant 12 : index
    %496 = memref.load %arg12[%c7_261, %c12_262] : memref<9x30xf32, #tpu.memory_space<smem>>
    %497 = vector.broadcast %496 : f32 to vector<8x128xf32>
    %498 = arith.mulf %48, %497 : vector<8x128xf32>
    %499 = arith.addf %495, %498 : vector<8x128xf32>
    %c8_263 = arith.constant 8 : index
    %c12_264 = arith.constant 12 : index
    %500 = memref.load %arg12[%c8_263, %c12_264] : memref<9x30xf32, #tpu.memory_space<smem>>
    %501 = vector.broadcast %500 : f32 to vector<8x128xf32>
    %502 = arith.addf %499, %501 : vector<8x128xf32>
    %c0_265 = arith.constant 0 : index
    %c1536 = arith.constant 1536 : index
    %503 = vector.load %arg13[%c0_265, %c1536] : memref<8x3840xf32, #tpu.memory_space<vmem>>, vector<8x128xf32>
    tpu.vector_store %arg13[%c0_265, %c1536], %502 {strides = array<i32>} : memref<8x3840xf32, #tpu.memory_space<vmem>>, vector<8x128xf32>,
    %c0_266 = arith.constant 0 : index
    %c13 = arith.constant 13 : index
    %504 = memref.load %arg12[%c0_266, %c13] : memref<9x30xf32, #tpu.memory_space<smem>>
    %505 = vector.broadcast %504 : f32 to vector<8x128xf32>
    %506 = arith.mulf %41, %505 : vector<8x128xf32>
    %c1_267 = arith.constant 1 : index
    %c13_268 = arith.constant 13 : index
    %507 = memref.load %arg12[%c1_267, %c13_268] : memref<9x30xf32, #tpu.memory_space<smem>>
    %508 = vector.broadcast %507 : f32 to vector<8x128xf32>
    %509 = arith.mulf %42, %508 : vector<8x128xf32>
    %510 = arith.addf %506, %509 : vector<8x128xf32>
    %c2_269 = arith.constant 2 : index
    %c13_270 = arith.constant 13 : index
    %511 = memref.load %arg12[%c2_269, %c13_270] : memref<9x30xf32, #tpu.memory_space<smem>>
    %512 = vector.broadcast %511 : f32 to vector<8x128xf32>
    %513 = arith.mulf %43, %512 : vector<8x128xf32>
    %514 = arith.addf %510, %513 : vector<8x128xf32>
    %c3_271 = arith.constant 3 : index
    %c13_272 = arith.constant 13 : index
    %515 = memref.load %arg12[%c3_271, %c13_272] : memref<9x30xf32, #tpu.memory_space<smem>>
    %516 = vector.broadcast %515 : f32 to vector<8x128xf32>
    %517 = arith.mulf %44, %516 : vector<8x128xf32>
    %518 = arith.addf %514, %517 : vector<8x128xf32>
    %c4_273 = arith.constant 4 : index
    %c13_274 = arith.constant 13 : index
    %519 = memref.load %arg12[%c4_273, %c13_274] : memref<9x30xf32, #tpu.memory_space<smem>>
    %520 = vector.broadcast %519 : f32 to vector<8x128xf32>
    %521 = arith.mulf %45, %520 : vector<8x128xf32>
    %522 = arith.addf %518, %521 : vector<8x128xf32>
    %c5_275 = arith.constant 5 : index
    %c13_276 = arith.constant 13 : index
    %523 = memref.load %arg12[%c5_275, %c13_276] : memref<9x30xf32, #tpu.memory_space<smem>>
    %524 = vector.broadcast %523 : f32 to vector<8x128xf32>
    %525 = arith.mulf %46, %524 : vector<8x128xf32>
    %526 = arith.addf %522, %525 : vector<8x128xf32>
    %c6_277 = arith.constant 6 : index
    %c13_278 = arith.constant 13 : index
    %527 = memref.load %arg12[%c6_277, %c13_278] : memref<9x30xf32, #tpu.memory_space<smem>>
    %528 = vector.broadcast %527 : f32 to vector<8x128xf32>
    %529 = arith.mulf %47, %528 : vector<8x128xf32>
    %530 = arith.addf %526, %529 : vector<8x128xf32>
    %c7_279 = arith.constant 7 : index
    %c13_280 = arith.constant 13 : index
    %531 = memref.load %arg12[%c7_279, %c13_280] : memref<9x30xf32, #tpu.memory_space<smem>>
    %532 = vector.broadcast %531 : f32 to vector<8x128xf32>
    %533 = arith.mulf %48, %532 : vector<8x128xf32>
    %534 = arith.addf %530, %533 : vector<8x128xf32>
    %c8_281 = arith.constant 8 : index
    %c13_282 = arith.constant 13 : index
    %535 = memref.load %arg12[%c8_281, %c13_282] : memref<9x30xf32, #tpu.memory_space<smem>>
    %536 = vector.broadcast %535 : f32 to vector<8x128xf32>
    %537 = arith.addf %534, %536 : vector<8x128xf32>
    %c0_283 = arith.constant 0 : index
    %c1664 = arith.constant 1664 : index
    %538 = vector.load %arg13[%c0_283, %c1664] : memref<8x3840xf32, #tpu.memory_space<vmem>>, vector<8x128xf32>
    tpu.vector_store %arg13[%c0_283, %c1664], %537 {strides = array<i32>} : memref<8x3840xf32, #tpu.memory_space<vmem>>, vector<8x128xf32>,
    %c0_284 = arith.constant 0 : index
    %c14 = arith.constant 14 : index
    %539 = memref.load %arg12[%c0_284, %c14] : memref<9x30xf32, #tpu.memory_space<smem>>
    %540 = vector.broadcast %539 : f32 to vector<8x128xf32>
    %541 = arith.mulf %41, %540 : vector<8x128xf32>
    %c1_285 = arith.constant 1 : index
    %c14_286 = arith.constant 14 : index
    %542 = memref.load %arg12[%c1_285, %c14_286] : memref<9x30xf32, #tpu.memory_space<smem>>
    %543 = vector.broadcast %542 : f32 to vector<8x128xf32>
    %544 = arith.mulf %42, %543 : vector<8x128xf32>
    %545 = arith.addf %541, %544 : vector<8x128xf32>
    %c2_287 = arith.constant 2 : index
    %c14_288 = arith.constant 14 : index
    %546 = memref.load %arg12[%c2_287, %c14_288] : memref<9x30xf32, #tpu.memory_space<smem>>
    %547 = vector.broadcast %546 : f32 to vector<8x128xf32>
    %548 = arith.mulf %43, %547 : vector<8x128xf32>
    %549 = arith.addf %545, %548 : vector<8x128xf32>
    %c3_289 = arith.constant 3 : index
    %c14_290 = arith.constant 14 : index
    %550 = memref.load %arg12[%c3_289, %c14_290] : memref<9x30xf32, #tpu.memory_space<smem>>
    %551 = vector.broadcast %550 : f32 to vector<8x128xf32>
    %552 = arith.mulf %44, %551 : vector<8x128xf32>
    %553 = arith.addf %549, %552 : vector<8x128xf32>
    %c4_291 = arith.constant 4 : index
    %c14_292 = arith.constant 14 : index
    %554 = memref.load %arg12[%c4_291, %c14_292] : memref<9x30xf32, #tpu.memory_space<smem>>
    %555 = vector.broadcast %554 : f32 to vector<8x128xf32>
    %556 = arith.mulf %45, %555 : vector<8x128xf32>
    %557 = arith.addf %553, %556 : vector<8x128xf32>
    %c5_293 = arith.constant 5 : index
    %c14_294 = arith.constant 14 : index
    %558 = memref.load %arg12[%c5_293, %c14_294] : memref<9x30xf32, #tpu.memory_space<smem>>
    %559 = vector.broadcast %558 : f32 to vector<8x128xf32>
    %560 = arith.mulf %46, %559 : vector<8x128xf32>
    %561 = arith.addf %557, %560 : vector<8x128xf32>
    %c6_295 = arith.constant 6 : index
    %c14_296 = arith.constant 14 : index
    %562 = memref.load %arg12[%c6_295, %c14_296] : memref<9x30xf32, #tpu.memory_space<smem>>
    %563 = vector.broadcast %562 : f32 to vector<8x128xf32>
    %564 = arith.mulf %47, %563 : vector<8x128xf32>
    %565 = arith.addf %561, %564 : vector<8x128xf32>
    %c7_297 = arith.constant 7 : index
    %c14_298 = arith.constant 14 : index
    %566 = memref.load %arg12[%c7_297, %c14_298] : memref<9x30xf32, #tpu.memory_space<smem>>
    %567 = vector.broadcast %566 : f32 to vector<8x128xf32>
    %568 = arith.mulf %48, %567 : vector<8x128xf32>
    %569 = arith.addf %565, %568 : vector<8x128xf32>
    %c8_299 = arith.constant 8 : index
    %c14_300 = arith.constant 14 : index
    %570 = memref.load %arg12[%c8_299, %c14_300] : memref<9x30xf32, #tpu.memory_space<smem>>
    %571 = vector.broadcast %570 : f32 to vector<8x128xf32>
    %572 = arith.addf %569, %571 : vector<8x128xf32>
    %c0_301 = arith.constant 0 : index
    %c1792 = arith.constant 1792 : index
    %573 = vector.load %arg13[%c0_301, %c1792] : memref<8x3840xf32, #tpu.memory_space<vmem>>, vector<8x128xf32>
    tpu.vector_store %arg13[%c0_301, %c1792], %572 {strides = array<i32>} : memref<8x3840xf32, #tpu.memory_space<vmem>>, vector<8x128xf32>,
    %c0_302 = arith.constant 0 : index
    %c15 = arith.constant 15 : index
    %574 = memref.load %arg12[%c0_302, %c15] : memref<9x30xf32, #tpu.memory_space<smem>>
    %575 = vector.broadcast %574 : f32 to vector<8x128xf32>
    %576 = arith.mulf %41, %575 : vector<8x128xf32>
    %c1_303 = arith.constant 1 : index
    %c15_304 = arith.constant 15 : index
    %577 = memref.load %arg12[%c1_303, %c15_304] : memref<9x30xf32, #tpu.memory_space<smem>>
    %578 = vector.broadcast %577 : f32 to vector<8x128xf32>
    %579 = arith.mulf %42, %578 : vector<8x128xf32>
    %580 = arith.addf %576, %579 : vector<8x128xf32>
    %c2_305 = arith.constant 2 : index
    %c15_306 = arith.constant 15 : index
    %581 = memref.load %arg12[%c2_305, %c15_306] : memref<9x30xf32, #tpu.memory_space<smem>>
    %582 = vector.broadcast %581 : f32 to vector<8x128xf32>
    %583 = arith.mulf %43, %582 : vector<8x128xf32>
    %584 = arith.addf %580, %583 : vector<8x128xf32>
    %c3_307 = arith.constant 3 : index
    %c15_308 = arith.constant 15 : index
    %585 = memref.load %arg12[%c3_307, %c15_308] : memref<9x30xf32, #tpu.memory_space<smem>>
    %586 = vector.broadcast %585 : f32 to vector<8x128xf32>
    %587 = arith.mulf %44, %586 : vector<8x128xf32>
    %588 = arith.addf %584, %587 : vector<8x128xf32>
    %c4_309 = arith.constant 4 : index
    %c15_310 = arith.constant 15 : index
    %589 = memref.load %arg12[%c4_309, %c15_310] : memref<9x30xf32, #tpu.memory_space<smem>>
    %590 = vector.broadcast %589 : f32 to vector<8x128xf32>
    %591 = arith.mulf %45, %590 : vector<8x128xf32>
    %592 = arith.addf %588, %591 : vector<8x128xf32>
    %c5_311 = arith.constant 5 : index
    %c15_312 = arith.constant 15 : index
    %593 = memref.load %arg12[%c5_311, %c15_312] : memref<9x30xf32, #tpu.memory_space<smem>>
    %594 = vector.broadcast %593 : f32 to vector<8x128xf32>
    %595 = arith.mulf %46, %594 : vector<8x128xf32>
    %596 = arith.addf %592, %595 : vector<8x128xf32>
    %c6_313 = arith.constant 6 : index
    %c15_314 = arith.constant 15 : index
    %597 = memref.load %arg12[%c6_313, %c15_314] : memref<9x30xf32, #tpu.memory_space<smem>>
    %598 = vector.broadcast %597 : f32 to vector<8x128xf32>
    %599 = arith.mulf %47, %598 : vector<8x128xf32>
    %600 = arith.addf %596, %599 : vector<8x128xf32>
    %c7_315 = arith.constant 7 : index
    %c15_316 = arith.constant 15 : index
    %601 = memref.load %arg12[%c7_315, %c15_316] : memref<9x30xf32, #tpu.memory_space<smem>>
    %602 = vector.broadcast %601 : f32 to vector<8x128xf32>
    %603 = arith.mulf %48, %602 : vector<8x128xf32>
    %604 = arith.addf %600, %603 : vector<8x128xf32>
    %c8_317 = arith.constant 8 : index
    %c15_318 = arith.constant 15 : index
    %605 = memref.load %arg12[%c8_317, %c15_318] : memref<9x30xf32, #tpu.memory_space<smem>>
    %606 = vector.broadcast %605 : f32 to vector<8x128xf32>
    %607 = arith.addf %604, %606 : vector<8x128xf32>
    %c0_319 = arith.constant 0 : index
    %c1920 = arith.constant 1920 : index
    %608 = vector.load %arg13[%c0_319, %c1920] : memref<8x3840xf32, #tpu.memory_space<vmem>>, vector<8x128xf32>
    tpu.vector_store %arg13[%c0_319, %c1920], %607 {strides = array<i32>} : memref<8x3840xf32, #tpu.memory_space<vmem>>, vector<8x128xf32>,
    %c0_320 = arith.constant 0 : index
    %c16 = arith.constant 16 : index
    %609 = memref.load %arg12[%c0_320, %c16] : memref<9x30xf32, #tpu.memory_space<smem>>
    %610 = vector.broadcast %609 : f32 to vector<8x128xf32>
    %611 = arith.mulf %41, %610 : vector<8x128xf32>
    %c1_321 = arith.constant 1 : index
    %c16_322 = arith.constant 16 : index
    %612 = memref.load %arg12[%c1_321, %c16_322] : memref<9x30xf32, #tpu.memory_space<smem>>
    %613 = vector.broadcast %612 : f32 to vector<8x128xf32>
    %614 = arith.mulf %42, %613 : vector<8x128xf32>
    %615 = arith.addf %611, %614 : vector<8x128xf32>
    %c2_323 = arith.constant 2 : index
    %c16_324 = arith.constant 16 : index
    %616 = memref.load %arg12[%c2_323, %c16_324] : memref<9x30xf32, #tpu.memory_space<smem>>
    %617 = vector.broadcast %616 : f32 to vector<8x128xf32>
    %618 = arith.mulf %43, %617 : vector<8x128xf32>
    %619 = arith.addf %615, %618 : vector<8x128xf32>
    %c3_325 = arith.constant 3 : index
    %c16_326 = arith.constant 16 : index
    %620 = memref.load %arg12[%c3_325, %c16_326] : memref<9x30xf32, #tpu.memory_space<smem>>
    %621 = vector.broadcast %620 : f32 to vector<8x128xf32>
    %622 = arith.mulf %44, %621 : vector<8x128xf32>
    %623 = arith.addf %619, %622 : vector<8x128xf32>
    %c4_327 = arith.constant 4 : index
    %c16_328 = arith.constant 16 : index
    %624 = memref.load %arg12[%c4_327, %c16_328] : memref<9x30xf32, #tpu.memory_space<smem>>
    %625 = vector.broadcast %624 : f32 to vector<8x128xf32>
    %626 = arith.mulf %45, %625 : vector<8x128xf32>
    %627 = arith.addf %623, %626 : vector<8x128xf32>
    %c5_329 = arith.constant 5 : index
    %c16_330 = arith.constant 16 : index
    %628 = memref.load %arg12[%c5_329, %c16_330] : memref<9x30xf32, #tpu.memory_space<smem>>
    %629 = vector.broadcast %628 : f32 to vector<8x128xf32>
    %630 = arith.mulf %46, %629 : vector<8x128xf32>
    %631 = arith.addf %627, %630 : vector<8x128xf32>
    %c6_331 = arith.constant 6 : index
    %c16_332 = arith.constant 16 : index
    %632 = memref.load %arg12[%c6_331, %c16_332] : memref<9x30xf32, #tpu.memory_space<smem>>
    %633 = vector.broadcast %632 : f32 to vector<8x128xf32>
    %634 = arith.mulf %47, %633 : vector<8x128xf32>
    %635 = arith.addf %631, %634 : vector<8x128xf32>
    %c7_333 = arith.constant 7 : index
    %c16_334 = arith.constant 16 : index
    %636 = memref.load %arg12[%c7_333, %c16_334] : memref<9x30xf32, #tpu.memory_space<smem>>
    %637 = vector.broadcast %636 : f32 to vector<8x128xf32>
    %638 = arith.mulf %48, %637 : vector<8x128xf32>
    %639 = arith.addf %635, %638 : vector<8x128xf32>
    %c8_335 = arith.constant 8 : index
    %c16_336 = arith.constant 16 : index
    %640 = memref.load %arg12[%c8_335, %c16_336] : memref<9x30xf32, #tpu.memory_space<smem>>
    %641 = vector.broadcast %640 : f32 to vector<8x128xf32>
    %642 = arith.addf %639, %641 : vector<8x128xf32>
    %c0_337 = arith.constant 0 : index
    %c2048 = arith.constant 2048 : index
    %643 = vector.load %arg13[%c0_337, %c2048] : memref<8x3840xf32, #tpu.memory_space<vmem>>, vector<8x128xf32>
    tpu.vector_store %arg13[%c0_337, %c2048], %642 {strides = array<i32>} : memref<8x3840xf32, #tpu.memory_space<vmem>>, vector<8x128xf32>,
    %c0_338 = arith.constant 0 : index
    %c17 = arith.constant 17 : index
    %644 = memref.load %arg12[%c0_338, %c17] : memref<9x30xf32, #tpu.memory_space<smem>>
    %645 = vector.broadcast %644 : f32 to vector<8x128xf32>
    %646 = arith.mulf %41, %645 : vector<8x128xf32>
    %c1_339 = arith.constant 1 : index
    %c17_340 = arith.constant 17 : index
    %647 = memref.load %arg12[%c1_339, %c17_340] : memref<9x30xf32, #tpu.memory_space<smem>>
    %648 = vector.broadcast %647 : f32 to vector<8x128xf32>
    %649 = arith.mulf %42, %648 : vector<8x128xf32>
    %650 = arith.addf %646, %649 : vector<8x128xf32>
    %c2_341 = arith.constant 2 : index
    %c17_342 = arith.constant 17 : index
    %651 = memref.load %arg12[%c2_341, %c17_342] : memref<9x30xf32, #tpu.memory_space<smem>>
    %652 = vector.broadcast %651 : f32 to vector<8x128xf32>
    %653 = arith.mulf %43, %652 : vector<8x128xf32>
    %654 = arith.addf %650, %653 : vector<8x128xf32>
    %c3_343 = arith.constant 3 : index
    %c17_344 = arith.constant 17 : index
    %655 = memref.load %arg12[%c3_343, %c17_344] : memref<9x30xf32, #tpu.memory_space<smem>>
    %656 = vector.broadcast %655 : f32 to vector<8x128xf32>
    %657 = arith.mulf %44, %656 : vector<8x128xf32>
    %658 = arith.addf %654, %657 : vector<8x128xf32>
    %c4_345 = arith.constant 4 : index
    %c17_346 = arith.constant 17 : index
    %659 = memref.load %arg12[%c4_345, %c17_346] : memref<9x30xf32, #tpu.memory_space<smem>>
    %660 = vector.broadcast %659 : f32 to vector<8x128xf32>
    %661 = arith.mulf %45, %660 : vector<8x128xf32>
    %662 = arith.addf %658, %661 : vector<8x128xf32>
    %c5_347 = arith.constant 5 : index
    %c17_348 = arith.constant 17 : index
    %663 = memref.load %arg12[%c5_347, %c17_348] : memref<9x30xf32, #tpu.memory_space<smem>>
    %664 = vector.broadcast %663 : f32 to vector<8x128xf32>
    %665 = arith.mulf %46, %664 : vector<8x128xf32>
    %666 = arith.addf %662, %665 : vector<8x128xf32>
    %c6_349 = arith.constant 6 : index
    %c17_350 = arith.constant 17 : index
    %667 = memref.load %arg12[%c6_349, %c17_350] : memref<9x30xf32, #tpu.memory_space<smem>>
    %668 = vector.broadcast %667 : f32 to vector<8x128xf32>
    %669 = arith.mulf %47, %668 : vector<8x128xf32>
    %670 = arith.addf %666, %669 : vector<8x128xf32>
    %c7_351 = arith.constant 7 : index
    %c17_352 = arith.constant 17 : index
    %671 = memref.load %arg12[%c7_351, %c17_352] : memref<9x30xf32, #tpu.memory_space<smem>>
    %672 = vector.broadcast %671 : f32 to vector<8x128xf32>
    %673 = arith.mulf %48, %672 : vector<8x128xf32>
    %674 = arith.addf %670, %673 : vector<8x128xf32>
    %c8_353 = arith.constant 8 : index
    %c17_354 = arith.constant 17 : index
    %675 = memref.load %arg12[%c8_353, %c17_354] : memref<9x30xf32, #tpu.memory_space<smem>>
    %676 = vector.broadcast %675 : f32 to vector<8x128xf32>
    %677 = arith.addf %674, %676 : vector<8x128xf32>
    %c0_355 = arith.constant 0 : index
    %c2176 = arith.constant 2176 : index
    %678 = vector.load %arg13[%c0_355, %c2176] : memref<8x3840xf32, #tpu.memory_space<vmem>>, vector<8x128xf32>
    tpu.vector_store %arg13[%c0_355, %c2176], %677 {strides = array<i32>} : memref<8x3840xf32, #tpu.memory_space<vmem>>, vector<8x128xf32>,
    %c0_356 = arith.constant 0 : index
    %c18 = arith.constant 18 : index
    %679 = memref.load %arg12[%c0_356, %c18] : memref<9x30xf32, #tpu.memory_space<smem>>
    %680 = vector.broadcast %679 : f32 to vector<8x128xf32>
    %681 = arith.mulf %41, %680 : vector<8x128xf32>
    %c1_357 = arith.constant 1 : index
    %c18_358 = arith.constant 18 : index
    %682 = memref.load %arg12[%c1_357, %c18_358] : memref<9x30xf32, #tpu.memory_space<smem>>
    %683 = vector.broadcast %682 : f32 to vector<8x128xf32>
    %684 = arith.mulf %42, %683 : vector<8x128xf32>
    %685 = arith.addf %681, %684 : vector<8x128xf32>
    %c2_359 = arith.constant 2 : index
    %c18_360 = arith.constant 18 : index
    %686 = memref.load %arg12[%c2_359, %c18_360] : memref<9x30xf32, #tpu.memory_space<smem>>
    %687 = vector.broadcast %686 : f32 to vector<8x128xf32>
    %688 = arith.mulf %43, %687 : vector<8x128xf32>
    %689 = arith.addf %685, %688 : vector<8x128xf32>
    %c3_361 = arith.constant 3 : index
    %c18_362 = arith.constant 18 : index
    %690 = memref.load %arg12[%c3_361, %c18_362] : memref<9x30xf32, #tpu.memory_space<smem>>
    %691 = vector.broadcast %690 : f32 to vector<8x128xf32>
    %692 = arith.mulf %44, %691 : vector<8x128xf32>
    %693 = arith.addf %689, %692 : vector<8x128xf32>
    %c4_363 = arith.constant 4 : index
    %c18_364 = arith.constant 18 : index
    %694 = memref.load %arg12[%c4_363, %c18_364] : memref<9x30xf32, #tpu.memory_space<smem>>
    %695 = vector.broadcast %694 : f32 to vector<8x128xf32>
    %696 = arith.mulf %45, %695 : vector<8x128xf32>
    %697 = arith.addf %693, %696 : vector<8x128xf32>
    %c5_365 = arith.constant 5 : index
    %c18_366 = arith.constant 18 : index
    %698 = memref.load %arg12[%c5_365, %c18_366] : memref<9x30xf32, #tpu.memory_space<smem>>
    %699 = vector.broadcast %698 : f32 to vector<8x128xf32>
    %700 = arith.mulf %46, %699 : vector<8x128xf32>
    %701 = arith.addf %697, %700 : vector<8x128xf32>
    %c6_367 = arith.constant 6 : index
    %c18_368 = arith.constant 18 : index
    %702 = memref.load %arg12[%c6_367, %c18_368] : memref<9x30xf32, #tpu.memory_space<smem>>
    %703 = vector.broadcast %702 : f32 to vector<8x128xf32>
    %704 = arith.mulf %47, %703 : vector<8x128xf32>
    %705 = arith.addf %701, %704 : vector<8x128xf32>
    %c7_369 = arith.constant 7 : index
    %c18_370 = arith.constant 18 : index
    %706 = memref.load %arg12[%c7_369, %c18_370] : memref<9x30xf32, #tpu.memory_space<smem>>
    %707 = vector.broadcast %706 : f32 to vector<8x128xf32>
    %708 = arith.mulf %48, %707 : vector<8x128xf32>
    %709 = arith.addf %705, %708 : vector<8x128xf32>
    %c8_371 = arith.constant 8 : index
    %c18_372 = arith.constant 18 : index
    %710 = memref.load %arg12[%c8_371, %c18_372] : memref<9x30xf32, #tpu.memory_space<smem>>
    %711 = vector.broadcast %710 : f32 to vector<8x128xf32>
    %712 = arith.addf %709, %711 : vector<8x128xf32>
    %c0_373 = arith.constant 0 : index
    %c2304 = arith.constant 2304 : index
    %713 = vector.load %arg13[%c0_373, %c2304] : memref<8x3840xf32, #tpu.memory_space<vmem>>, vector<8x128xf32>
    tpu.vector_store %arg13[%c0_373, %c2304], %712 {strides = array<i32>} : memref<8x3840xf32, #tpu.memory_space<vmem>>, vector<8x128xf32>,
    %c0_374 = arith.constant 0 : index
    %c19 = arith.constant 19 : index
    %714 = memref.load %arg12[%c0_374, %c19] : memref<9x30xf32, #tpu.memory_space<smem>>
    %715 = vector.broadcast %714 : f32 to vector<8x128xf32>
    %716 = arith.mulf %41, %715 : vector<8x128xf32>
    %c1_375 = arith.constant 1 : index
    %c19_376 = arith.constant 19 : index
    %717 = memref.load %arg12[%c1_375, %c19_376] : memref<9x30xf32, #tpu.memory_space<smem>>
    %718 = vector.broadcast %717 : f32 to vector<8x128xf32>
    %719 = arith.mulf %42, %718 : vector<8x128xf32>
    %720 = arith.addf %716, %719 : vector<8x128xf32>
    %c2_377 = arith.constant 2 : index
    %c19_378 = arith.constant 19 : index
    %721 = memref.load %arg12[%c2_377, %c19_378] : memref<9x30xf32, #tpu.memory_space<smem>>
    %722 = vector.broadcast %721 : f32 to vector<8x128xf32>
    %723 = arith.mulf %43, %722 : vector<8x128xf32>
    %724 = arith.addf %720, %723 : vector<8x128xf32>
    %c3_379 = arith.constant 3 : index
    %c19_380 = arith.constant 19 : index
    %725 = memref.load %arg12[%c3_379, %c19_380] : memref<9x30xf32, #tpu.memory_space<smem>>
    %726 = vector.broadcast %725 : f32 to vector<8x128xf32>
    %727 = arith.mulf %44, %726 : vector<8x128xf32>
    %728 = arith.addf %724, %727 : vector<8x128xf32>
    %c4_381 = arith.constant 4 : index
    %c19_382 = arith.constant 19 : index
    %729 = memref.load %arg12[%c4_381, %c19_382] : memref<9x30xf32, #tpu.memory_space<smem>>
    %730 = vector.broadcast %729 : f32 to vector<8x128xf32>
    %731 = arith.mulf %45, %730 : vector<8x128xf32>
    %732 = arith.addf %728, %731 : vector<8x128xf32>
    %c5_383 = arith.constant 5 : index
    %c19_384 = arith.constant 19 : index
    %733 = memref.load %arg12[%c5_383, %c19_384] : memref<9x30xf32, #tpu.memory_space<smem>>
    %734 = vector.broadcast %733 : f32 to vector<8x128xf32>
    %735 = arith.mulf %46, %734 : vector<8x128xf32>
    %736 = arith.addf %732, %735 : vector<8x128xf32>
    %c6_385 = arith.constant 6 : index
    %c19_386 = arith.constant 19 : index
    %737 = memref.load %arg12[%c6_385, %c19_386] : memref<9x30xf32, #tpu.memory_space<smem>>
    %738 = vector.broadcast %737 : f32 to vector<8x128xf32>
    %739 = arith.mulf %47, %738 : vector<8x128xf32>
    %740 = arith.addf %736, %739 : vector<8x128xf32>
    %c7_387 = arith.constant 7 : index
    %c19_388 = arith.constant 19 : index
    %741 = memref.load %arg12[%c7_387, %c19_388] : memref<9x30xf32, #tpu.memory_space<smem>>
    %742 = vector.broadcast %741 : f32 to vector<8x128xf32>
    %743 = arith.mulf %48, %742 : vector<8x128xf32>
    %744 = arith.addf %740, %743 : vector<8x128xf32>
    %c8_389 = arith.constant 8 : index
    %c19_390 = arith.constant 19 : index
    %745 = memref.load %arg12[%c8_389, %c19_390] : memref<9x30xf32, #tpu.memory_space<smem>>
    %746 = vector.broadcast %745 : f32 to vector<8x128xf32>
    %747 = arith.addf %744, %746 : vector<8x128xf32>
    %c0_391 = arith.constant 0 : index
    %c2432 = arith.constant 2432 : index
    %748 = vector.load %arg13[%c0_391, %c2432] : memref<8x3840xf32, #tpu.memory_space<vmem>>, vector<8x128xf32>
    tpu.vector_store %arg13[%c0_391, %c2432], %747 {strides = array<i32>} : memref<8x3840xf32, #tpu.memory_space<vmem>>, vector<8x128xf32>,
    %c0_392 = arith.constant 0 : index
    %c20 = arith.constant 20 : index
    %749 = memref.load %arg12[%c0_392, %c20] : memref<9x30xf32, #tpu.memory_space<smem>>
    %750 = vector.broadcast %749 : f32 to vector<8x128xf32>
    %751 = arith.mulf %41, %750 : vector<8x128xf32>
    %c1_393 = arith.constant 1 : index
    %c20_394 = arith.constant 20 : index
    %752 = memref.load %arg12[%c1_393, %c20_394] : memref<9x30xf32, #tpu.memory_space<smem>>
    %753 = vector.broadcast %752 : f32 to vector<8x128xf32>
    %754 = arith.mulf %42, %753 : vector<8x128xf32>
    %755 = arith.addf %751, %754 : vector<8x128xf32>
    %c2_395 = arith.constant 2 : index
    %c20_396 = arith.constant 20 : index
    %756 = memref.load %arg12[%c2_395, %c20_396] : memref<9x30xf32, #tpu.memory_space<smem>>
    %757 = vector.broadcast %756 : f32 to vector<8x128xf32>
    %758 = arith.mulf %43, %757 : vector<8x128xf32>
    %759 = arith.addf %755, %758 : vector<8x128xf32>
    %c3_397 = arith.constant 3 : index
    %c20_398 = arith.constant 20 : index
    %760 = memref.load %arg12[%c3_397, %c20_398] : memref<9x30xf32, #tpu.memory_space<smem>>
    %761 = vector.broadcast %760 : f32 to vector<8x128xf32>
    %762 = arith.mulf %44, %761 : vector<8x128xf32>
    %763 = arith.addf %759, %762 : vector<8x128xf32>
    %c4_399 = arith.constant 4 : index
    %c20_400 = arith.constant 20 : index
    %764 = memref.load %arg12[%c4_399, %c20_400] : memref<9x30xf32, #tpu.memory_space<smem>>
    %765 = vector.broadcast %764 : f32 to vector<8x128xf32>
    %766 = arith.mulf %45, %765 : vector<8x128xf32>
    %767 = arith.addf %763, %766 : vector<8x128xf32>
    %c5_401 = arith.constant 5 : index
    %c20_402 = arith.constant 20 : index
    %768 = memref.load %arg12[%c5_401, %c20_402] : memref<9x30xf32, #tpu.memory_space<smem>>
    %769 = vector.broadcast %768 : f32 to vector<8x128xf32>
    %770 = arith.mulf %46, %769 : vector<8x128xf32>
    %771 = arith.addf %767, %770 : vector<8x128xf32>
    %c6_403 = arith.constant 6 : index
    %c20_404 = arith.constant 20 : index
    %772 = memref.load %arg12[%c6_403, %c20_404] : memref<9x30xf32, #tpu.memory_space<smem>>
    %773 = vector.broadcast %772 : f32 to vector<8x128xf32>
    %774 = arith.mulf %47, %773 : vector<8x128xf32>
    %775 = arith.addf %771, %774 : vector<8x128xf32>
    %c7_405 = arith.constant 7 : index
    %c20_406 = arith.constant 20 : index
    %776 = memref.load %arg12[%c7_405, %c20_406] : memref<9x30xf32, #tpu.memory_space<smem>>
    %777 = vector.broadcast %776 : f32 to vector<8x128xf32>
    %778 = arith.mulf %48, %777 : vector<8x128xf32>
    %779 = arith.addf %775, %778 : vector<8x128xf32>
    %c8_407 = arith.constant 8 : index
    %c20_408 = arith.constant 20 : index
    %780 = memref.load %arg12[%c8_407, %c20_408] : memref<9x30xf32, #tpu.memory_space<smem>>
    %781 = vector.broadcast %780 : f32 to vector<8x128xf32>
    %782 = arith.addf %779, %781 : vector<8x128xf32>
    %c0_409 = arith.constant 0 : index
    %c2560 = arith.constant 2560 : index
    %783 = vector.load %arg13[%c0_409, %c2560] : memref<8x3840xf32, #tpu.memory_space<vmem>>, vector<8x128xf32>
    tpu.vector_store %arg13[%c0_409, %c2560], %782 {strides = array<i32>} : memref<8x3840xf32, #tpu.memory_space<vmem>>, vector<8x128xf32>,
    %c0_410 = arith.constant 0 : index
    %c21 = arith.constant 21 : index
    %784 = memref.load %arg12[%c0_410, %c21] : memref<9x30xf32, #tpu.memory_space<smem>>
    %785 = vector.broadcast %784 : f32 to vector<8x128xf32>
    %786 = arith.mulf %41, %785 : vector<8x128xf32>
    %c1_411 = arith.constant 1 : index
    %c21_412 = arith.constant 21 : index
    %787 = memref.load %arg12[%c1_411, %c21_412] : memref<9x30xf32, #tpu.memory_space<smem>>
    %788 = vector.broadcast %787 : f32 to vector<8x128xf32>
    %789 = arith.mulf %42, %788 : vector<8x128xf32>
    %790 = arith.addf %786, %789 : vector<8x128xf32>
    %c2_413 = arith.constant 2 : index
    %c21_414 = arith.constant 21 : index
    %791 = memref.load %arg12[%c2_413, %c21_414] : memref<9x30xf32, #tpu.memory_space<smem>>
    %792 = vector.broadcast %791 : f32 to vector<8x128xf32>
    %793 = arith.mulf %43, %792 : vector<8x128xf32>
    %794 = arith.addf %790, %793 : vector<8x128xf32>
    %c3_415 = arith.constant 3 : index
    %c21_416 = arith.constant 21 : index
    %795 = memref.load %arg12[%c3_415, %c21_416] : memref<9x30xf32, #tpu.memory_space<smem>>
    %796 = vector.broadcast %795 : f32 to vector<8x128xf32>
    %797 = arith.mulf %44, %796 : vector<8x128xf32>
    %798 = arith.addf %794, %797 : vector<8x128xf32>
    %c4_417 = arith.constant 4 : index
    %c21_418 = arith.constant 21 : index
    %799 = memref.load %arg12[%c4_417, %c21_418] : memref<9x30xf32, #tpu.memory_space<smem>>
    %800 = vector.broadcast %799 : f32 to vector<8x128xf32>
    %801 = arith.mulf %45, %800 : vector<8x128xf32>
    %802 = arith.addf %798, %801 : vector<8x128xf32>
    %c5_419 = arith.constant 5 : index
    %c21_420 = arith.constant 21 : index
    %803 = memref.load %arg12[%c5_419, %c21_420] : memref<9x30xf32, #tpu.memory_space<smem>>
    %804 = vector.broadcast %803 : f32 to vector<8x128xf32>
    %805 = arith.mulf %46, %804 : vector<8x128xf32>
    %806 = arith.addf %802, %805 : vector<8x128xf32>
    %c6_421 = arith.constant 6 : index
    %c21_422 = arith.constant 21 : index
    %807 = memref.load %arg12[%c6_421, %c21_422] : memref<9x30xf32, #tpu.memory_space<smem>>
    %808 = vector.broadcast %807 : f32 to vector<8x128xf32>
    %809 = arith.mulf %47, %808 : vector<8x128xf32>
    %810 = arith.addf %806, %809 : vector<8x128xf32>
    %c7_423 = arith.constant 7 : index
    %c21_424 = arith.constant 21 : index
    %811 = memref.load %arg12[%c7_423, %c21_424] : memref<9x30xf32, #tpu.memory_space<smem>>
    %812 = vector.broadcast %811 : f32 to vector<8x128xf32>
    %813 = arith.mulf %48, %812 : vector<8x128xf32>
    %814 = arith.addf %810, %813 : vector<8x128xf32>
    %c8_425 = arith.constant 8 : index
    %c21_426 = arith.constant 21 : index
    %815 = memref.load %arg12[%c8_425, %c21_426] : memref<9x30xf32, #tpu.memory_space<smem>>
    %816 = vector.broadcast %815 : f32 to vector<8x128xf32>
    %817 = arith.addf %814, %816 : vector<8x128xf32>
    %c0_427 = arith.constant 0 : index
    %c2688 = arith.constant 2688 : index
    %818 = vector.load %arg13[%c0_427, %c2688] : memref<8x3840xf32, #tpu.memory_space<vmem>>, vector<8x128xf32>
    tpu.vector_store %arg13[%c0_427, %c2688], %817 {strides = array<i32>} : memref<8x3840xf32, #tpu.memory_space<vmem>>, vector<8x128xf32>,
    %c0_428 = arith.constant 0 : index
    %c22 = arith.constant 22 : index
    %819 = memref.load %arg12[%c0_428, %c22] : memref<9x30xf32, #tpu.memory_space<smem>>
    %820 = vector.broadcast %819 : f32 to vector<8x128xf32>
    %821 = arith.mulf %41, %820 : vector<8x128xf32>
    %c1_429 = arith.constant 1 : index
    %c22_430 = arith.constant 22 : index
    %822 = memref.load %arg12[%c1_429, %c22_430] : memref<9x30xf32, #tpu.memory_space<smem>>
    %823 = vector.broadcast %822 : f32 to vector<8x128xf32>
    %824 = arith.mulf %42, %823 : vector<8x128xf32>
    %825 = arith.addf %821, %824 : vector<8x128xf32>
    %c2_431 = arith.constant 2 : index
    %c22_432 = arith.constant 22 : index
    %826 = memref.load %arg12[%c2_431, %c22_432] : memref<9x30xf32, #tpu.memory_space<smem>>
    %827 = vector.broadcast %826 : f32 to vector<8x128xf32>
    %828 = arith.mulf %43, %827 : vector<8x128xf32>
    %829 = arith.addf %825, %828 : vector<8x128xf32>
    %c3_433 = arith.constant 3 : index
    %c22_434 = arith.constant 22 : index
    %830 = memref.load %arg12[%c3_433, %c22_434] : memref<9x30xf32, #tpu.memory_space<smem>>
    %831 = vector.broadcast %830 : f32 to vector<8x128xf32>
    %832 = arith.mulf %44, %831 : vector<8x128xf32>
    %833 = arith.addf %829, %832 : vector<8x128xf32>
    %c4_435 = arith.constant 4 : index
    %c22_436 = arith.constant 22 : index
    %834 = memref.load %arg12[%c4_435, %c22_436] : memref<9x30xf32, #tpu.memory_space<smem>>
    %835 = vector.broadcast %834 : f32 to vector<8x128xf32>
    %836 = arith.mulf %45, %835 : vector<8x128xf32>
    %837 = arith.addf %833, %836 : vector<8x128xf32>
    %c5_437 = arith.constant 5 : index
    %c22_438 = arith.constant 22 : index
    %838 = memref.load %arg12[%c5_437, %c22_438] : memref<9x30xf32, #tpu.memory_space<smem>>
    %839 = vector.broadcast %838 : f32 to vector<8x128xf32>
    %840 = arith.mulf %46, %839 : vector<8x128xf32>
    %841 = arith.addf %837, %840 : vector<8x128xf32>
    %c6_439 = arith.constant 6 : index
    %c22_440 = arith.constant 22 : index
    %842 = memref.load %arg12[%c6_439, %c22_440] : memref<9x30xf32, #tpu.memory_space<smem>>
    %843 = vector.broadcast %842 : f32 to vector<8x128xf32>
    %844 = arith.mulf %47, %843 : vector<8x128xf32>
    %845 = arith.addf %841, %844 : vector<8x128xf32>
    %c7_441 = arith.constant 7 : index
    %c22_442 = arith.constant 22 : index
    %846 = memref.load %arg12[%c7_441, %c22_442] : memref<9x30xf32, #tpu.memory_space<smem>>
    %847 = vector.broadcast %846 : f32 to vector<8x128xf32>
    %848 = arith.mulf %48, %847 : vector<8x128xf32>
    %849 = arith.addf %845, %848 : vector<8x128xf32>
    %c8_443 = arith.constant 8 : index
    %c22_444 = arith.constant 22 : index
    %850 = memref.load %arg12[%c8_443, %c22_444] : memref<9x30xf32, #tpu.memory_space<smem>>
    %851 = vector.broadcast %850 : f32 to vector<8x128xf32>
    %852 = arith.addf %849, %851 : vector<8x128xf32>
    %c0_445 = arith.constant 0 : index
    %c2816 = arith.constant 2816 : index
    %853 = vector.load %arg13[%c0_445, %c2816] : memref<8x3840xf32, #tpu.memory_space<vmem>>, vector<8x128xf32>
    tpu.vector_store %arg13[%c0_445, %c2816], %852 {strides = array<i32>} : memref<8x3840xf32, #tpu.memory_space<vmem>>, vector<8x128xf32>,
    %c0_446 = arith.constant 0 : index
    %c23 = arith.constant 23 : index
    %854 = memref.load %arg12[%c0_446, %c23] : memref<9x30xf32, #tpu.memory_space<smem>>
    %855 = vector.broadcast %854 : f32 to vector<8x128xf32>
    %856 = arith.mulf %41, %855 : vector<8x128xf32>
    %c1_447 = arith.constant 1 : index
    %c23_448 = arith.constant 23 : index
    %857 = memref.load %arg12[%c1_447, %c23_448] : memref<9x30xf32, #tpu.memory_space<smem>>
    %858 = vector.broadcast %857 : f32 to vector<8x128xf32>
    %859 = arith.mulf %42, %858 : vector<8x128xf32>
    %860 = arith.addf %856, %859 : vector<8x128xf32>
    %c2_449 = arith.constant 2 : index
    %c23_450 = arith.constant 23 : index
    %861 = memref.load %arg12[%c2_449, %c23_450] : memref<9x30xf32, #tpu.memory_space<smem>>
    %862 = vector.broadcast %861 : f32 to vector<8x128xf32>
    %863 = arith.mulf %43, %862 : vector<8x128xf32>
    %864 = arith.addf %860, %863 : vector<8x128xf32>
    %c3_451 = arith.constant 3 : index
    %c23_452 = arith.constant 23 : index
    %865 = memref.load %arg12[%c3_451, %c23_452] : memref<9x30xf32, #tpu.memory_space<smem>>
    %866 = vector.broadcast %865 : f32 to vector<8x128xf32>
    %867 = arith.mulf %44, %866 : vector<8x128xf32>
    %868 = arith.addf %864, %867 : vector<8x128xf32>
    %c4_453 = arith.constant 4 : index
    %c23_454 = arith.constant 23 : index
    %869 = memref.load %arg12[%c4_453, %c23_454] : memref<9x30xf32, #tpu.memory_space<smem>>
    %870 = vector.broadcast %869 : f32 to vector<8x128xf32>
    %871 = arith.mulf %45, %870 : vector<8x128xf32>
    %872 = arith.addf %868, %871 : vector<8x128xf32>
    %c5_455 = arith.constant 5 : index
    %c23_456 = arith.constant 23 : index
    %873 = memref.load %arg12[%c5_455, %c23_456] : memref<9x30xf32, #tpu.memory_space<smem>>
    %874 = vector.broadcast %873 : f32 to vector<8x128xf32>
    %875 = arith.mulf %46, %874 : vector<8x128xf32>
    %876 = arith.addf %872, %875 : vector<8x128xf32>
    %c6_457 = arith.constant 6 : index
    %c23_458 = arith.constant 23 : index
    %877 = memref.load %arg12[%c6_457, %c23_458] : memref<9x30xf32, #tpu.memory_space<smem>>
    %878 = vector.broadcast %877 : f32 to vector<8x128xf32>
    %879 = arith.mulf %47, %878 : vector<8x128xf32>
    %880 = arith.addf %876, %879 : vector<8x128xf32>
    %c7_459 = arith.constant 7 : index
    %c23_460 = arith.constant 23 : index
    %881 = memref.load %arg12[%c7_459, %c23_460] : memref<9x30xf32, #tpu.memory_space<smem>>
    %882 = vector.broadcast %881 : f32 to vector<8x128xf32>
    %883 = arith.mulf %48, %882 : vector<8x128xf32>
    %884 = arith.addf %880, %883 : vector<8x128xf32>
    %c8_461 = arith.constant 8 : index
    %c23_462 = arith.constant 23 : index
    %885 = memref.load %arg12[%c8_461, %c23_462] : memref<9x30xf32, #tpu.memory_space<smem>>
    %886 = vector.broadcast %885 : f32 to vector<8x128xf32>
    %887 = arith.addf %884, %886 : vector<8x128xf32>
    %c0_463 = arith.constant 0 : index
    %c2944 = arith.constant 2944 : index
    %888 = vector.load %arg13[%c0_463, %c2944] : memref<8x3840xf32, #tpu.memory_space<vmem>>, vector<8x128xf32>
    tpu.vector_store %arg13[%c0_463, %c2944], %887 {strides = array<i32>} : memref<8x3840xf32, #tpu.memory_space<vmem>>, vector<8x128xf32>,
    %c0_464 = arith.constant 0 : index
    %c24 = arith.constant 24 : index
    %889 = memref.load %arg12[%c0_464, %c24] : memref<9x30xf32, #tpu.memory_space<smem>>
    %890 = vector.broadcast %889 : f32 to vector<8x128xf32>
    %891 = arith.mulf %41, %890 : vector<8x128xf32>
    %c1_465 = arith.constant 1 : index
    %c24_466 = arith.constant 24 : index
    %892 = memref.load %arg12[%c1_465, %c24_466] : memref<9x30xf32, #tpu.memory_space<smem>>
    %893 = vector.broadcast %892 : f32 to vector<8x128xf32>
    %894 = arith.mulf %42, %893 : vector<8x128xf32>
    %895 = arith.addf %891, %894 : vector<8x128xf32>
    %c2_467 = arith.constant 2 : index
    %c24_468 = arith.constant 24 : index
    %896 = memref.load %arg12[%c2_467, %c24_468] : memref<9x30xf32, #tpu.memory_space<smem>>
    %897 = vector.broadcast %896 : f32 to vector<8x128xf32>
    %898 = arith.mulf %43, %897 : vector<8x128xf32>
    %899 = arith.addf %895, %898 : vector<8x128xf32>
    %c3_469 = arith.constant 3 : index
    %c24_470 = arith.constant 24 : index
    %900 = memref.load %arg12[%c3_469, %c24_470] : memref<9x30xf32, #tpu.memory_space<smem>>
    %901 = vector.broadcast %900 : f32 to vector<8x128xf32>
    %902 = arith.mulf %44, %901 : vector<8x128xf32>
    %903 = arith.addf %899, %902 : vector<8x128xf32>
    %c4_471 = arith.constant 4 : index
    %c24_472 = arith.constant 24 : index
    %904 = memref.load %arg12[%c4_471, %c24_472] : memref<9x30xf32, #tpu.memory_space<smem>>
    %905 = vector.broadcast %904 : f32 to vector<8x128xf32>
    %906 = arith.mulf %45, %905 : vector<8x128xf32>
    %907 = arith.addf %903, %906 : vector<8x128xf32>
    %c5_473 = arith.constant 5 : index
    %c24_474 = arith.constant 24 : index
    %908 = memref.load %arg12[%c5_473, %c24_474] : memref<9x30xf32, #tpu.memory_space<smem>>
    %909 = vector.broadcast %908 : f32 to vector<8x128xf32>
    %910 = arith.mulf %46, %909 : vector<8x128xf32>
    %911 = arith.addf %907, %910 : vector<8x128xf32>
    %c6_475 = arith.constant 6 : index
    %c24_476 = arith.constant 24 : index
    %912 = memref.load %arg12[%c6_475, %c24_476] : memref<9x30xf32, #tpu.memory_space<smem>>
    %913 = vector.broadcast %912 : f32 to vector<8x128xf32>
    %914 = arith.mulf %47, %913 : vector<8x128xf32>
    %915 = arith.addf %911, %914 : vector<8x128xf32>
    %c7_477 = arith.constant 7 : index
    %c24_478 = arith.constant 24 : index
    %916 = memref.load %arg12[%c7_477, %c24_478] : memref<9x30xf32, #tpu.memory_space<smem>>
    %917 = vector.broadcast %916 : f32 to vector<8x128xf32>
    %918 = arith.mulf %48, %917 : vector<8x128xf32>
    %919 = arith.addf %915, %918 : vector<8x128xf32>
    %c8_479 = arith.constant 8 : index
    %c24_480 = arith.constant 24 : index
    %920 = memref.load %arg12[%c8_479, %c24_480] : memref<9x30xf32, #tpu.memory_space<smem>>
    %921 = vector.broadcast %920 : f32 to vector<8x128xf32>
    %922 = arith.addf %919, %921 : vector<8x128xf32>
    %c0_481 = arith.constant 0 : index
    %c3072 = arith.constant 3072 : index
    %923 = vector.load %arg13[%c0_481, %c3072] : memref<8x3840xf32, #tpu.memory_space<vmem>>, vector<8x128xf32>
    tpu.vector_store %arg13[%c0_481, %c3072], %922 {strides = array<i32>} : memref<8x3840xf32, #tpu.memory_space<vmem>>, vector<8x128xf32>,
    %c0_482 = arith.constant 0 : index
    %c25 = arith.constant 25 : index
    %924 = memref.load %arg12[%c0_482, %c25] : memref<9x30xf32, #tpu.memory_space<smem>>
    %925 = vector.broadcast %924 : f32 to vector<8x128xf32>
    %926 = arith.mulf %41, %925 : vector<8x128xf32>
    %c1_483 = arith.constant 1 : index
    %c25_484 = arith.constant 25 : index
    %927 = memref.load %arg12[%c1_483, %c25_484] : memref<9x30xf32, #tpu.memory_space<smem>>
    %928 = vector.broadcast %927 : f32 to vector<8x128xf32>
    %929 = arith.mulf %42, %928 : vector<8x128xf32>
    %930 = arith.addf %926, %929 : vector<8x128xf32>
    %c2_485 = arith.constant 2 : index
    %c25_486 = arith.constant 25 : index
    %931 = memref.load %arg12[%c2_485, %c25_486] : memref<9x30xf32, #tpu.memory_space<smem>>
    %932 = vector.broadcast %931 : f32 to vector<8x128xf32>
    %933 = arith.mulf %43, %932 : vector<8x128xf32>
    %934 = arith.addf %930, %933 : vector<8x128xf32>
    %c3_487 = arith.constant 3 : index
    %c25_488 = arith.constant 25 : index
    %935 = memref.load %arg12[%c3_487, %c25_488] : memref<9x30xf32, #tpu.memory_space<smem>>
    %936 = vector.broadcast %935 : f32 to vector<8x128xf32>
    %937 = arith.mulf %44, %936 : vector<8x128xf32>
    %938 = arith.addf %934, %937 : vector<8x128xf32>
    %c4_489 = arith.constant 4 : index
    %c25_490 = arith.constant 25 : index
    %939 = memref.load %arg12[%c4_489, %c25_490] : memref<9x30xf32, #tpu.memory_space<smem>>
    %940 = vector.broadcast %939 : f32 to vector<8x128xf32>
    %941 = arith.mulf %45, %940 : vector<8x128xf32>
    %942 = arith.addf %938, %941 : vector<8x128xf32>
    %c5_491 = arith.constant 5 : index
    %c25_492 = arith.constant 25 : index
    %943 = memref.load %arg12[%c5_491, %c25_492] : memref<9x30xf32, #tpu.memory_space<smem>>
    %944 = vector.broadcast %943 : f32 to vector<8x128xf32>
    %945 = arith.mulf %46, %944 : vector<8x128xf32>
    %946 = arith.addf %942, %945 : vector<8x128xf32>
    %c6_493 = arith.constant 6 : index
    %c25_494 = arith.constant 25 : index
    %947 = memref.load %arg12[%c6_493, %c25_494] : memref<9x30xf32, #tpu.memory_space<smem>>
    %948 = vector.broadcast %947 : f32 to vector<8x128xf32>
    %949 = arith.mulf %47, %948 : vector<8x128xf32>
    %950 = arith.addf %946, %949 : vector<8x128xf32>
    %c7_495 = arith.constant 7 : index
    %c25_496 = arith.constant 25 : index
    %951 = memref.load %arg12[%c7_495, %c25_496] : memref<9x30xf32, #tpu.memory_space<smem>>
    %952 = vector.broadcast %951 : f32 to vector<8x128xf32>
    %953 = arith.mulf %48, %952 : vector<8x128xf32>
    %954 = arith.addf %950, %953 : vector<8x128xf32>
    %c8_497 = arith.constant 8 : index
    %c25_498 = arith.constant 25 : index
    %955 = memref.load %arg12[%c8_497, %c25_498] : memref<9x30xf32, #tpu.memory_space<smem>>
    %956 = vector.broadcast %955 : f32 to vector<8x128xf32>
    %957 = arith.addf %954, %956 : vector<8x128xf32>
    %c0_499 = arith.constant 0 : index
    %c3200 = arith.constant 3200 : index
    %958 = vector.load %arg13[%c0_499, %c3200] : memref<8x3840xf32, #tpu.memory_space<vmem>>, vector<8x128xf32>
    tpu.vector_store %arg13[%c0_499, %c3200], %957 {strides = array<i32>} : memref<8x3840xf32, #tpu.memory_space<vmem>>, vector<8x128xf32>,
    %c0_500 = arith.constant 0 : index
    %c26 = arith.constant 26 : index
    %959 = memref.load %arg12[%c0_500, %c26] : memref<9x30xf32, #tpu.memory_space<smem>>
    %960 = vector.broadcast %959 : f32 to vector<8x128xf32>
    %961 = arith.mulf %41, %960 : vector<8x128xf32>
    %c1_501 = arith.constant 1 : index
    %c26_502 = arith.constant 26 : index
    %962 = memref.load %arg12[%c1_501, %c26_502] : memref<9x30xf32, #tpu.memory_space<smem>>
    %963 = vector.broadcast %962 : f32 to vector<8x128xf32>
    %964 = arith.mulf %42, %963 : vector<8x128xf32>
    %965 = arith.addf %961, %964 : vector<8x128xf32>
    %c2_503 = arith.constant 2 : index
    %c26_504 = arith.constant 26 : index
    %966 = memref.load %arg12[%c2_503, %c26_504] : memref<9x30xf32, #tpu.memory_space<smem>>
    %967 = vector.broadcast %966 : f32 to vector<8x128xf32>
    %968 = arith.mulf %43, %967 : vector<8x128xf32>
    %969 = arith.addf %965, %968 : vector<8x128xf32>
    %c3_505 = arith.constant 3 : index
    %c26_506 = arith.constant 26 : index
    %970 = memref.load %arg12[%c3_505, %c26_506] : memref<9x30xf32, #tpu.memory_space<smem>>
    %971 = vector.broadcast %970 : f32 to vector<8x128xf32>
    %972 = arith.mulf %44, %971 : vector<8x128xf32>
    %973 = arith.addf %969, %972 : vector<8x128xf32>
    %c4_507 = arith.constant 4 : index
    %c26_508 = arith.constant 26 : index
    %974 = memref.load %arg12[%c4_507, %c26_508] : memref<9x30xf32, #tpu.memory_space<smem>>
    %975 = vector.broadcast %974 : f32 to vector<8x128xf32>
    %976 = arith.mulf %45, %975 : vector<8x128xf32>
    %977 = arith.addf %973, %976 : vector<8x128xf32>
    %c5_509 = arith.constant 5 : index
    %c26_510 = arith.constant 26 : index
    %978 = memref.load %arg12[%c5_509, %c26_510] : memref<9x30xf32, #tpu.memory_space<smem>>
    %979 = vector.broadcast %978 : f32 to vector<8x128xf32>
    %980 = arith.mulf %46, %979 : vector<8x128xf32>
    %981 = arith.addf %977, %980 : vector<8x128xf32>
    %c6_511 = arith.constant 6 : index
    %c26_512 = arith.constant 26 : index
    %982 = memref.load %arg12[%c6_511, %c26_512] : memref<9x30xf32, #tpu.memory_space<smem>>
    %983 = vector.broadcast %982 : f32 to vector<8x128xf32>
    %984 = arith.mulf %47, %983 : vector<8x128xf32>
    %985 = arith.addf %981, %984 : vector<8x128xf32>
    %c7_513 = arith.constant 7 : index
    %c26_514 = arith.constant 26 : index
    %986 = memref.load %arg12[%c7_513, %c26_514] : memref<9x30xf32, #tpu.memory_space<smem>>
    %987 = vector.broadcast %986 : f32 to vector<8x128xf32>
    %988 = arith.mulf %48, %987 : vector<8x128xf32>
    %989 = arith.addf %985, %988 : vector<8x128xf32>
    %c8_515 = arith.constant 8 : index
    %c26_516 = arith.constant 26 : index
    %990 = memref.load %arg12[%c8_515, %c26_516] : memref<9x30xf32, #tpu.memory_space<smem>>
    %991 = vector.broadcast %990 : f32 to vector<8x128xf32>
    %992 = arith.addf %989, %991 : vector<8x128xf32>
    %c0_517 = arith.constant 0 : index
    %c3328 = arith.constant 3328 : index
    %993 = vector.load %arg13[%c0_517, %c3328] : memref<8x3840xf32, #tpu.memory_space<vmem>>, vector<8x128xf32>
    tpu.vector_store %arg13[%c0_517, %c3328], %992 {strides = array<i32>} : memref<8x3840xf32, #tpu.memory_space<vmem>>, vector<8x128xf32>,
    %c0_518 = arith.constant 0 : index
    %c27 = arith.constant 27 : index
    %994 = memref.load %arg12[%c0_518, %c27] : memref<9x30xf32, #tpu.memory_space<smem>>
    %995 = vector.broadcast %994 : f32 to vector<8x128xf32>
    %996 = arith.mulf %41, %995 : vector<8x128xf32>
    %c1_519 = arith.constant 1 : index
    %c27_520 = arith.constant 27 : index
    %997 = memref.load %arg12[%c1_519, %c27_520] : memref<9x30xf32, #tpu.memory_space<smem>>
    %998 = vector.broadcast %997 : f32 to vector<8x128xf32>
    %999 = arith.mulf %42, %998 : vector<8x128xf32>
    %1000 = arith.addf %996, %999 : vector<8x128xf32>
    %c2_521 = arith.constant 2 : index
    %c27_522 = arith.constant 27 : index
    %1001 = memref.load %arg12[%c2_521, %c27_522] : memref<9x30xf32, #tpu.memory_space<smem>>
    %1002 = vector.broadcast %1001 : f32 to vector<8x128xf32>
    %1003 = arith.mulf %43, %1002 : vector<8x128xf32>
    %1004 = arith.addf %1000, %1003 : vector<8x128xf32>
    %c3_523 = arith.constant 3 : index
    %c27_524 = arith.constant 27 : index
    %1005 = memref.load %arg12[%c3_523, %c27_524] : memref<9x30xf32, #tpu.memory_space<smem>>
    %1006 = vector.broadcast %1005 : f32 to vector<8x128xf32>
    %1007 = arith.mulf %44, %1006 : vector<8x128xf32>
    %1008 = arith.addf %1004, %1007 : vector<8x128xf32>
    %c4_525 = arith.constant 4 : index
    %c27_526 = arith.constant 27 : index
    %1009 = memref.load %arg12[%c4_525, %c27_526] : memref<9x30xf32, #tpu.memory_space<smem>>
    %1010 = vector.broadcast %1009 : f32 to vector<8x128xf32>
    %1011 = arith.mulf %45, %1010 : vector<8x128xf32>
    %1012 = arith.addf %1008, %1011 : vector<8x128xf32>
    %c5_527 = arith.constant 5 : index
    %c27_528 = arith.constant 27 : index
    %1013 = memref.load %arg12[%c5_527, %c27_528] : memref<9x30xf32, #tpu.memory_space<smem>>
    %1014 = vector.broadcast %1013 : f32 to vector<8x128xf32>
    %1015 = arith.mulf %46, %1014 : vector<8x128xf32>
    %1016 = arith.addf %1012, %1015 : vector<8x128xf32>
    %c6_529 = arith.constant 6 : index
    %c27_530 = arith.constant 27 : index
    %1017 = memref.load %arg12[%c6_529, %c27_530] : memref<9x30xf32, #tpu.memory_space<smem>>
    %1018 = vector.broadcast %1017 : f32 to vector<8x128xf32>
    %1019 = arith.mulf %47, %1018 : vector<8x128xf32>
    %1020 = arith.addf %1016, %1019 : vector<8x128xf32>
    %c7_531 = arith.constant 7 : index
    %c27_532 = arith.constant 27 : index
    %1021 = memref.load %arg12[%c7_531, %c27_532] : memref<9x30xf32, #tpu.memory_space<smem>>
    %1022 = vector.broadcast %1021 : f32 to vector<8x128xf32>
    %1023 = arith.mulf %48, %1022 : vector<8x128xf32>
    %1024 = arith.addf %1020, %1023 : vector<8x128xf32>
    %c8_533 = arith.constant 8 : index
    %c27_534 = arith.constant 27 : index
    %1025 = memref.load %arg12[%c8_533, %c27_534] : memref<9x30xf32, #tpu.memory_space<smem>>
    %1026 = vector.broadcast %1025 : f32 to vector<8x128xf32>
    %1027 = arith.addf %1024, %1026 : vector<8x128xf32>
    %c0_535 = arith.constant 0 : index
    %c3456 = arith.constant 3456 : index
    %1028 = vector.load %arg13[%c0_535, %c3456] : memref<8x3840xf32, #tpu.memory_space<vmem>>, vector<8x128xf32>
    tpu.vector_store %arg13[%c0_535, %c3456], %1027 {strides = array<i32>} : memref<8x3840xf32, #tpu.memory_space<vmem>>, vector<8x128xf32>,
    %c0_536 = arith.constant 0 : index
    %c28 = arith.constant 28 : index
    %1029 = memref.load %arg12[%c0_536, %c28] : memref<9x30xf32, #tpu.memory_space<smem>>
    %1030 = vector.broadcast %1029 : f32 to vector<8x128xf32>
    %1031 = arith.mulf %41, %1030 : vector<8x128xf32>
    %c1_537 = arith.constant 1 : index
    %c28_538 = arith.constant 28 : index
    %1032 = memref.load %arg12[%c1_537, %c28_538] : memref<9x30xf32, #tpu.memory_space<smem>>
    %1033 = vector.broadcast %1032 : f32 to vector<8x128xf32>
    %1034 = arith.mulf %42, %1033 : vector<8x128xf32>
    %1035 = arith.addf %1031, %1034 : vector<8x128xf32>
    %c2_539 = arith.constant 2 : index
    %c28_540 = arith.constant 28 : index
    %1036 = memref.load %arg12[%c2_539, %c28_540] : memref<9x30xf32, #tpu.memory_space<smem>>
    %1037 = vector.broadcast %1036 : f32 to vector<8x128xf32>
    %1038 = arith.mulf %43, %1037 : vector<8x128xf32>
    %1039 = arith.addf %1035, %1038 : vector<8x128xf32>
    %c3_541 = arith.constant 3 : index
    %c28_542 = arith.constant 28 : index
    %1040 = memref.load %arg12[%c3_541, %c28_542] : memref<9x30xf32, #tpu.memory_space<smem>>
    %1041 = vector.broadcast %1040 : f32 to vector<8x128xf32>
    %1042 = arith.mulf %44, %1041 : vector<8x128xf32>
    %1043 = arith.addf %1039, %1042 : vector<8x128xf32>
    %c4_543 = arith.constant 4 : index
    %c28_544 = arith.constant 28 : index
    %1044 = memref.load %arg12[%c4_543, %c28_544] : memref<9x30xf32, #tpu.memory_space<smem>>
    %1045 = vector.broadcast %1044 : f32 to vector<8x128xf32>
    %1046 = arith.mulf %45, %1045 : vector<8x128xf32>
    %1047 = arith.addf %1043, %1046 : vector<8x128xf32>
    %c5_545 = arith.constant 5 : index
    %c28_546 = arith.constant 28 : index
    %1048 = memref.load %arg12[%c5_545, %c28_546] : memref<9x30xf32, #tpu.memory_space<smem>>
    %1049 = vector.broadcast %1048 : f32 to vector<8x128xf32>
    %1050 = arith.mulf %46, %1049 : vector<8x128xf32>
    %1051 = arith.addf %1047, %1050 : vector<8x128xf32>
    %c6_547 = arith.constant 6 : index
    %c28_548 = arith.constant 28 : index
    %1052 = memref.load %arg12[%c6_547, %c28_548] : memref<9x30xf32, #tpu.memory_space<smem>>
    %1053 = vector.broadcast %1052 : f32 to vector<8x128xf32>
    %1054 = arith.mulf %47, %1053 : vector<8x128xf32>
    %1055 = arith.addf %1051, %1054 : vector<8x128xf32>
    %c7_549 = arith.constant 7 : index
    %c28_550 = arith.constant 28 : index
    %1056 = memref.load %arg12[%c7_549, %c28_550] : memref<9x30xf32, #tpu.memory_space<smem>>
    %1057 = vector.broadcast %1056 : f32 to vector<8x128xf32>
    %1058 = arith.mulf %48, %1057 : vector<8x128xf32>
    %1059 = arith.addf %1055, %1058 : vector<8x128xf32>
    %c8_551 = arith.constant 8 : index
    %c28_552 = arith.constant 28 : index
    %1060 = memref.load %arg12[%c8_551, %c28_552] : memref<9x30xf32, #tpu.memory_space<smem>>
    %1061 = vector.broadcast %1060 : f32 to vector<8x128xf32>
    %1062 = arith.addf %1059, %1061 : vector<8x128xf32>
    %c0_553 = arith.constant 0 : index
    %c3584 = arith.constant 3584 : index
    %1063 = vector.load %arg13[%c0_553, %c3584] : memref<8x3840xf32, #tpu.memory_space<vmem>>, vector<8x128xf32>
    tpu.vector_store %arg13[%c0_553, %c3584], %1062 {strides = array<i32>} : memref<8x3840xf32, #tpu.memory_space<vmem>>, vector<8x128xf32>,
    %c0_554 = arith.constant 0 : index
    %c29 = arith.constant 29 : index
    %1064 = memref.load %arg12[%c0_554, %c29] : memref<9x30xf32, #tpu.memory_space<smem>>
    %1065 = vector.broadcast %1064 : f32 to vector<8x128xf32>
    %1066 = arith.mulf %41, %1065 : vector<8x128xf32>
    %c1_555 = arith.constant 1 : index
    %c29_556 = arith.constant 29 : index
    %1067 = memref.load %arg12[%c1_555, %c29_556] : memref<9x30xf32, #tpu.memory_space<smem>>
    %1068 = vector.broadcast %1067 : f32 to vector<8x128xf32>
    %1069 = arith.mulf %42, %1068 : vector<8x128xf32>
    %1070 = arith.addf %1066, %1069 : vector<8x128xf32>
    %c2_557 = arith.constant 2 : index
    %c29_558 = arith.constant 29 : index
    %1071 = memref.load %arg12[%c2_557, %c29_558] : memref<9x30xf32, #tpu.memory_space<smem>>
    %1072 = vector.broadcast %1071 : f32 to vector<8x128xf32>
    %1073 = arith.mulf %43, %1072 : vector<8x128xf32>
    %1074 = arith.addf %1070, %1073 : vector<8x128xf32>
    %c3_559 = arith.constant 3 : index
    %c29_560 = arith.constant 29 : index
    %1075 = memref.load %arg12[%c3_559, %c29_560] : memref<9x30xf32, #tpu.memory_space<smem>>
    %1076 = vector.broadcast %1075 : f32 to vector<8x128xf32>
    %1077 = arith.mulf %44, %1076 : vector<8x128xf32>
    %1078 = arith.addf %1074, %1077 : vector<8x128xf32>
    %c4_561 = arith.constant 4 : index
    %c29_562 = arith.constant 29 : index
    %1079 = memref.load %arg12[%c4_561, %c29_562] : memref<9x30xf32, #tpu.memory_space<smem>>
    %1080 = vector.broadcast %1079 : f32 to vector<8x128xf32>
    %1081 = arith.mulf %45, %1080 : vector<8x128xf32>
    %1082 = arith.addf %1078, %1081 : vector<8x128xf32>
    %c5_563 = arith.constant 5 : index
    %c29_564 = arith.constant 29 : index
    %1083 = memref.load %arg12[%c5_563, %c29_564] : memref<9x30xf32, #tpu.memory_space<smem>>
    %1084 = vector.broadcast %1083 : f32 to vector<8x128xf32>
    %1085 = arith.mulf %46, %1084 : vector<8x128xf32>
    %1086 = arith.addf %1082, %1085 : vector<8x128xf32>
    %c6_565 = arith.constant 6 : index
    %c29_566 = arith.constant 29 : index
    %1087 = memref.load %arg12[%c6_565, %c29_566] : memref<9x30xf32, #tpu.memory_space<smem>>
    %1088 = vector.broadcast %1087 : f32 to vector<8x128xf32>
    %1089 = arith.mulf %47, %1088 : vector<8x128xf32>
    %1090 = arith.addf %1086, %1089 : vector<8x128xf32>
    %c7_567 = arith.constant 7 : index
    %c29_568 = arith.constant 29 : index
    %1091 = memref.load %arg12[%c7_567, %c29_568] : memref<9x30xf32, #tpu.memory_space<smem>>
    %1092 = vector.broadcast %1091 : f32 to vector<8x128xf32>
    %1093 = arith.mulf %48, %1092 : vector<8x128xf32>
    %1094 = arith.addf %1090, %1093 : vector<8x128xf32>
    %c8_569 = arith.constant 8 : index
    %c29_570 = arith.constant 29 : index
    %1095 = memref.load %arg12[%c8_569, %c29_570] : memref<9x30xf32, #tpu.memory_space<smem>>
    %1096 = vector.broadcast %1095 : f32 to vector<8x128xf32>
    %1097 = arith.addf %1094, %1096 : vector<8x128xf32>
    %c0_571 = arith.constant 0 : index
    %c3712 = arith.constant 3712 : index
    %1098 = vector.load %arg13[%c0_571, %c3712] : memref<8x3840xf32, #tpu.memory_space<vmem>>, vector<8x128xf32>
    tpu.vector_store %arg13[%c0_571, %c3712], %1097 {strides = array<i32>} : memref<8x3840xf32, #tpu.memory_space<vmem>>, vector<8x128xf32>,
    return
  }
  func.func @transform_0(%arg0: i32) -> (i32, i32) {
    %c0_i32 = arith.constant 0 : i32
    %c0_i32_0 = arith.constant 0 : i32
    return %arg0, %c0_i32 : i32, i32
  }
  func.func @transform_1(%arg0: i32) -> (i32, i32) {
    %c0_i32 = arith.constant 0 : i32
    %c0_i32_0 = arith.constant 0 : i32
    %c0_i32_1 = arith.constant 0 : i32
    return %c0_i32, %c0_i32_0 : i32, i32
  }
  func.func @transform_2(%arg0: i32) -> (i32, i32) {
    %c0_i32 = arith.constant 0 : i32
    %c0_i32_0 = arith.constant 0 : i32
    %c0_i32_1 = arith.constant 0 : i32
    return %c0_i32, %c0_i32_0 : i32, i32
  }
  func.func @transform_3(%arg0: i32) -> (i32, i32) {
    %c0_i32 = arith.constant 0 : i32
    %c0_i32_0 = arith.constant 0 : i32
    %c0_i32_1 = arith.constant 0 : i32
    return %c0_i32, %c0_i32_0 : i32, i32
  }
  func.func @transform_4(%arg0: i32) -> (i32, i32) {
    %c0_i32 = arith.constant 0 : i32
    %c0_i32_0 = arith.constant 0 : i32
    %c0_i32_1 = arith.constant 0 : i32
    return %c0_i32, %c0_i32_0 : i32, i32
  }
  func.func @transform_5(%arg0: i32) -> (i32, i32) {
    %c0_i32 = arith.constant 0 : i32
    %c0_i32_0 = arith.constant 0 : i32
    %c0_i32_1 = arith.constant 0 : i32
    return %c0_i32, %c0_i32_0 : i32, i32
  }
  func.func @transform_6(%arg0: i32) -> (i32, i32) {
    %c0_i32 = arith.constant 0 : i32
    %c0_i32_0 = arith.constant 0 : i32
    %c0_i32_1 = arith.constant 0 : i32
    return %c0_i32, %c0_i32_0 : i32, i32
  }
  func.func @transform_7(%arg0: i32) -> (i32, i32) {
    %c0_i32 = arith.constant 0 : i32
    %c0_i32_0 = arith.constant 0 : i32
    %c0_i32_1 = arith.constant 0 : i32
    return %c0_i32, %c0_i32_0 : i32, i32
  }
  func.func @transform_8(%arg0: i32) -> (i32, i32) {
    %c0_i32 = arith.constant 0 : i32
    %c0_i32_0 = arith.constant 0 : i32
    %c0_i32_1 = arith.constant 0 : i32
    return %c0_i32, %c0_i32_0 : i32, i32
  }
  func.func @transform_9(%arg0: i32) -> (i32, i32) {
    %c0_i32 = arith.constant 0 : i32
    %c0_i32_0 = arith.constant 0 : i32
    %c0_i32_1 = arith.constant 0 : i32
    return %c0_i32, %c0_i32_0 : i32, i32
  }
  func.func @transform_10(%arg0: i32) -> (i32, i32) {
    %c0_i32 = arith.constant 0 : i32
    %c0_i32_0 = arith.constant 0 : i32
    %c0_i32_1 = arith.constant 0 : i32
    return %c0_i32, %c0_i32_0 : i32, i32
  }
  func.func @transform_11(%arg0: i32) -> (i32, i32) {
    %c0_i32 = arith.constant 0 : i32
    %c0_i32_0 = arith.constant 0 : i32
    %c0_i32_1 = arith.constant 0 : i32
    return %c0_i32, %c0_i32_0 : i32, i32
  }
  func.func @transform_12(%arg0: i32) -> (i32, i32) {
    %c0_i32 = arith.constant 0 : i32
    %c0_i32_0 = arith.constant 0 : i32
    return %arg0, %c0_i32 : i32, i32
  }
}

</mosaic_0001>

<llo_original>
// kernel: forward.1
$region0: #{forward.1}
  #allocation0 [shape = 'u32[]', space=smem, size = 0x4, offset = 0x4, fixed_abs, tag = 'smem constant byte address 0x4 - core index']
  #allocation1 [shape = 'u32[144,128]{1,0:T(1,128)}', space=vmem, size = 0x12000, scoped, tag = 'internal scratch']
  %s0 = inlined_call_operand.vmem [shape: f32[16,128], index: 0, kind: input, shape index: {}]
  %s1 = inlined_call_operand.vmem [shape: bf16[128,256], index: 1, kind: input, shape index: {}]
  %s2 = inlined_call_operand.vmem [shape: f32[1,256], index: 2, kind: input, shape index: {}]
  %s3 = inlined_call_operand.vmem [shape: bf16[256,512], index: 3, kind: input, shape index: {}]
  %s4 = inlined_call_operand.vmem [shape: f32[1,512], index: 4, kind: input, shape index: {}]
  %s5 = inlined_call_operand.vmem [shape: bf16[512,640], index: 5, kind: input, shape index: {}]
  %s6 = inlined_call_operand.vmem [shape: f32[1,640], index: 6, kind: input, shape index: {}]
  %s7 = inlined_call_operand.vmem [shape: bf16[640,320], index: 7, kind: input, shape index: {}]
  %s8 = inlined_call_operand.vmem [shape: f32[1,320], index: 8, kind: input, shape index: {}]
  %s9 = inlined_call_operand.vmem [shape: bf16[320,1024], index: 9, kind: input, shape index: {}]
  %s10 = inlined_call_operand.vmem [shape: f32[1,1024], index: 10, kind: input, shape index: {}]
  %s11 = inlined_call_operand.vmem [shape: f32[9,30], index: 11, kind: input, shape index: {}]
  %s12 = inlined_call_operand.vmem [shape: f32[16,3840], index: 12, kind: output, shape index: {}]
  %s13 = sld [smem:[#allocation0]]
  $region85: #{forward.1} parent=0
    _
  %s15 = ssub.s32 1, %s13
  %s16 = scalar_select 0, %s15, %s13
  $region1: #{forward.1} parent=0
    #allocation2 [shape = 'u8[8192]{0}', space=smem, size = 0x2000, scoped, tag = 'input window, operand 11, single buffered']
    #allocation3 [shape = 's32[2]{0}', space=sflag, size = 0x8, scoped, tag = 'scoped memory for forward.1']
    %17 = vsyncpa [#allocation3], 0
    loop: start=0, step=1, limit=4
    $region2: #{forward.1} parent=1 // loop_pre_header
      _
    $region3: #{forward.1} parent=1 // loop_header
      %s19 = sphi 0, %s23
      %p20 = scmp.ge.s32.totalorder %s19, 4
      %s29 = sphi 0, %s31
      %s32 = sphi 0, %s29
      %s33 = sphi 0, %s32
      %s49 = sphi 0, %s33
      %s53 = sphi 0, %s53
      %s55 = sphi 0, %s53
      %s56 = sphi 0, %s55
      %s70 = sphi 0, %s56
      %s74 = sphi 0, %s74
      %s76 = sphi 0, %s74
      %s77 = sphi 0, %s76
      %s91 = sphi 0, %s77
      %s95 = sphi 0, %s95
      %s97 = sphi 0, %s95
      %s98 = sphi 0, %s97
      %s112 = sphi 0, %s98
      %s116 = sphi 0, %s116
      %s118 = sphi 0, %s116
      %s119 = sphi 0, %s118
      %s133 = sphi 0, %s119
      %s137 = sphi 0, %s137
      %s139 = sphi 0, %s137
      %s140 = sphi 0, %s139
      %s154 = sphi 0, %s140
      %s158 = sphi 0, %s158
      %s160 = sphi 0, %s158
      %s161 = sphi 0, %s160
      %s175 = sphi 0, %s161
      %s179 = sphi 0, %s179
      %s181 = sphi 0, %s179
      %s182 = sphi 0, %s181
      %s196 = sphi 0, %s182
      %s200 = sphi 0, %s200
      %s202 = sphi 0, %s200
      %s203 = sphi 0, %s202
      %s217 = sphi 0, %s203
      %s221 = sphi 0, %s221
      %s223 = sphi 0, %s221
      %s224 = sphi 0, %s223
      %s238 = sphi 0, %s224
      %s242 = sphi 0, %s242
      %s244 = sphi 0, %s242
      %s245 = sphi 0, %s244
      %s259 = sphi 0, %s245
      %s263 = sphi 0, %s263
      %s265 = sphi 0, %s263
      %s266 = sphi 0, %s265
      %s280 = sphi 0, %s266
      %s286 = sphi 0, %s288
      %s289 = sphi 0, %s286
      %s290 = sphi 0, %s289
      %s306 = sphi 0, %s290
    $region4: #{forward.1} parent=1 // loop_header_branch
      %22 = sbr.rel (%p20) target = $region8
    $region5: #{forward.1} parent=1 // loop_body
      %s24 = ssub.s32 %s19, 1
      %s25 = ssub.s32 %s19, 2
      %s26 = sadd.s32 %s19, 1
      %s27 = ssub.s32 %s19, %s26
      %p28 = scmp.eq.s32.totalorder %s27, 0
      %s30 = sadd.s32 %s29, 1
      %s31 = scalar_select %p28, %s29, %s30
      %p34 = pneg %p28
      %p35 = scmp.eq.s32.totalorder %s19, 1
      %p36 = por %p34, %p35
      %p37 = scmp.ne.s32.totalorder %s29, %s32
      %p38 = scmp.eq.s32.totalorder %s19, 0
      %p39 = por %p37, %p38
      %p40 = scmp.ne.s32.totalorder %s29, %s32
      %p41 = scmp.eq.s32.totalorder %s24, 1
      %p42 = por %p40, %p41
      %p43 = scmp.ne.s32.totalorder %s32, %s33
      %p44 = scmp.eq.s32.totalorder %s24, 0
      %p45 = por %p43, %p44
      %p46 = scmp.ne.s32.totalorder %s32, %s33
      %p47 = scmp.eq.s32.totalorder %s25, 1
      %p48 = por %p46, %p47
      %p50 = scmp.ne.s32.totalorder %s33, %s49
      %p51 = scmp.eq.s32.totalorder %s25, 0
      %p52 = por %p50, %p51
      %s54 = sadd.s32 %s53, 1
      %p57 = scmp.eq.s32.totalorder %s19, 1
      %p58 = scmp.ne.s32.totalorder %s53, %s55
      %p59 = scmp.eq.s32.totalorder %s19, 0
      %p60 = por %p58, %p59
      %p61 = scmp.ne.s32.totalorder %s53, %s55
      %p62 = scmp.eq.s32.totalorder %s24, 1
      %p63 = por %p61, %p62
      %p64 = scmp.ne.s32.totalorder %s55, %s56
      %p65 = scmp.eq.s32.totalorder %s24, 0
      %p66 = por %p64, %p65
      %p67 = scmp.ne.s32.totalorder %s55, %s56
      %p68 = scmp.eq.s32.totalorder %s25, 1
      %p69 = por %p67, %p68
      %p71 = scmp.ne.s32.totalorder %s56, %s70
      %p72 = scmp.eq.s32.totalorder %s25, 0
      %p73 = por %p71, %p72
      %s75 = sadd.s32 %s74, 1
      %p78 = scmp.eq.s32.totalorder %s19, 1
      %p79 = scmp.ne.s32.totalorder %s74, %s76
      %p80 = scmp.eq.s32.totalorder %s19, 0
      %p81 = por %p79, %p80
      %p82 = scmp.ne.s32.totalorder %s74, %s76
      %p83 = scmp.eq.s32.totalorder %s24, 1
      %p84 = por %p82, %p83
      %p85 = scmp.ne.s32.totalorder %s76, %s77
      %p86 = scmp.eq.s32.totalorder %s24, 0
      %p87 = por %p85, %p86
      %p88 = scmp.ne.s32.totalorder %s76, %s77
      %p89 = scmp.eq.s32.totalorder %s25, 1
      %p90 = por %p88, %p89
      %p92 = scmp.ne.s32.totalorder %s77, %s91
      %p93 = scmp.eq.s32.totalorder %s25, 0
      %p94 = por %p92, %p93
      %s96 = sadd.s32 %s95, 1
      %p99 = scmp.eq.s32.totalorder %s19, 1
      %p100 = scmp.ne.s32.totalorder %s95, %s97
      %p101 = scmp.eq.s32.totalorder %s19, 0
      %p102 = por %p100, %p101
      %p103 = scmp.ne.s32.totalorder %s95, %s97
      %p104 = scmp.eq.s32.totalorder %s24, 1
      %p105 = por %p103, %p104
      %p106 = scmp.ne.s32.totalorder %s97, %s98
      %p107 = scmp.eq.s32.totalorder %s24, 0
      %p108 = por %p106, %p107
      %p109 = scmp.ne.s32.totalorder %s97, %s98
      %p110 = scmp.eq.s32.totalorder %s25, 1
      %p111 = por %p109, %p110
      %p113 = scmp.ne.s32.totalorder %s98, %s112
      %p114 = scmp.eq.s32.totalorder %s25, 0
      %p115 = por %p113, %p114
      %s117 = sadd.s32 %s116, 1
      %p120 = scmp.eq.s32.totalorder %s19, 1
      %p121 = scmp.ne.s32.totalorder %s116, %s118
      %p122 = scmp.eq.s32.totalorder %s19, 0
      %p123 = por %p121, %p122
      %p124 = scmp.ne.s32.totalorder %s116, %s118
      %p125 = scmp.eq.s32.totalorder %s24, 1
      %p126 = por %p124, %p125
      %p127 = scmp.ne.s32.totalorder %s118, %s119
      %p128 = scmp.eq.s32.totalorder %s24, 0
      %p129 = por %p127, %p128
      %p130 = scmp.ne.s32.totalorder %s118, %s119
      %p131 = scmp.eq.s32.totalorder %s25, 1
      %p132 = por %p130, %p131
      %p134 = scmp.ne.s32.totalorder %s119, %s133
      %p135 = scmp.eq.s32.totalorder %s25, 0
      %p136 = por %p134, %p135
      %s138 = sadd.s32 %s137, 1
      %p141 = scmp.eq.s32.totalorder %s19, 1
      %p142 = scmp.ne.s32.totalorder %s137, %s139
      %p143 = scmp.eq.s32.totalorder %s19, 0
      %p144 = por %p142, %p143
      %p145 = scmp.ne.s32.totalorder %s137, %s139
      %p146 = scmp.eq.s32.totalorder %s24, 1
      %p147 = por %p145, %p146
      %p148 = scmp.ne.s32.totalorder %s139, %s140
      %p149 = scmp.eq.s32.totalorder %s24, 0
      %p150 = por %p148, %p149
      %p151 = scmp.ne.s32.totalorder %s139, %s140
      %p152 = scmp.eq.s32.totalorder %s25, 1
      %p153 = por %p151, %p152
      %p155 = scmp.ne.s32.totalorder %s140, %s154
      %p156 = scmp.eq.s32.totalorder %s25, 0
      %p157 = por %p155, %p156
      %s159 = sadd.s32 %s158, 1
      %p162 = scmp.eq.s32.totalorder %s19, 1
      %p163 = scmp.ne.s32.totalorder %s158, %s160
      %p164 = scmp.eq.s32.totalorder %s19, 0
      %p165 = por %p163, %p164
      %p166 = scmp.ne.s32.totalorder %s158, %s160
      %p167 = scmp.eq.s32.totalorder %s24, 1
      %p168 = por %p166, %p167
      %p169 = scmp.ne.s32.totalorder %s160, %s161
      %p170 = scmp.eq.s32.totalorder %s24, 0
      %p171 = por %p169, %p170
      %p172 = scmp.ne.s32.totalorder %s160, %s161
      %p173 = scmp.eq.s32.totalorder %s25, 1
      %p174 = por %p172, %p173
      %p176 = scmp.ne.s32.totalorder %s161, %s175
      %p177 = scmp.eq.s32.totalorder %s25, 0
      %p178 = por %p176, %p177
      %s180 = sadd.s32 %s179, 1
      %p183 = scmp.eq.s32.totalorder %s19, 1
      %p184 = scmp.ne.s32.totalorder %s179, %s181
      %p185 = scmp.eq.s32.totalorder %s19, 0
      %p186 = por %p184, %p185
      %p187 = scmp.ne.s32.totalorder %s179, %s181
      %p188 = scmp.eq.s32.totalorder %s24, 1
      %p189 = por %p187, %p188
      %p190 = scmp.ne.s32.totalorder %s181, %s182
      %p191 = scmp.eq.s32.totalorder %s24, 0
      %p192 = por %p190, %p191
      %p193 = scmp.ne.s32.totalorder %s181, %s182
      %p194 = scmp.eq.s32.totalorder %s25, 1
      %p195 = por %p193, %p194
      %p197 = scmp.ne.s32.totalorder %s182, %s196
      %p198 = scmp.eq.s32.totalorder %s25, 0
      %p199 = por %p197, %p198
      %s201 = sadd.s32 %s200, 1
      %p204 = scmp.eq.s32.totalorder %s19, 1
      %p205 = scmp.ne.s32.totalorder %s200, %s202
      %p206 = scmp.eq.s32.totalorder %s19, 0
      %p207 = por %p205, %p206
      %p208 = scmp.ne.s32.totalorder %s200, %s202
      %p209 = scmp.eq.s32.totalorder %s24, 1
      %p210 = por %p208, %p209
      %p211 = scmp.ne.s32.totalorder %s202, %s203
      %p212 = scmp.eq.s32.totalorder %s24, 0
      %p213 = por %p211, %p212
      %p214 = scmp.ne.s32.totalorder %s202, %s203
      %p215 = scmp.eq.s32.totalorder %s25, 1
      %p216 = por %p214, %p215
      %p218 = scmp.ne.s32.totalorder %s203, %s217
      %p219 = scmp.eq.s32.totalorder %s25, 0
      %p220 = por %p218, %p219
      %s222 = sadd.s32 %s221, 1
      %p225 = scmp.eq.s32.totalorder %s19, 1
      %p226 = scmp.ne.s32.totalorder %s221, %s223
      %p227 = scmp.eq.s32.totalorder %s19, 0
      %p228 = por %p226, %p227
      %p229 = scmp.ne.s32.totalorder %s221, %s223
      %p230 = scmp.eq.s32.totalorder %s24, 1
      %p231 = por %p229, %p230
      %p232 = scmp.ne.s32.totalorder %s223, %s224
      %p233 = scmp.eq.s32.totalorder %s24, 0
      %p234 = por %p232, %p233
      %p235 = scmp.ne.s32.totalorder %s223, %s224
      %p236 = scmp.eq.s32.totalorder %s25, 1
      %p237 = por %p235, %p236
      %p239 = scmp.ne.s32.totalorder %s224, %s238
      %p240 = scmp.eq.s32.totalorder %s25, 0
      %p241 = por %p239, %p240
      %s243 = sadd.s32 %s242, 1
      %p246 = scmp.eq.s32.totalorder %s19, 1
      %p247 = scmp.ne.s32.totalorder %s242, %s244
      %p248 = scmp.eq.s32.totalorder %s19, 0
      %p249 = por %p247, %p248
      %p250 = scmp.ne.s32.totalorder %s242, %s244
      %p251 = scmp.eq.s32.totalorder %s24, 1
      %p252 = por %p250, %p251
      %p253 = scmp.ne.s32.totalorder %s244, %s245
      %p254 = scmp.eq.s32.totalorder %s24, 0
      %p255 = por %p253, %p254
      %p256 = scmp.ne.s32.totalorder %s244, %s245
      %p257 = scmp.eq.s32.totalorder %s25, 1
      %p258 = por %p256, %p257
      %p260 = scmp.ne.s32.totalorder %s245, %s259
      %p261 = scmp.eq.s32.totalorder %s25, 0
      %p262 = por %p260, %p261
      %s264 = sadd.s32 %s263, 1
      %p267 = scmp.eq.s32.totalorder %s19, 1
      %p268 = scmp.ne.s32.totalorder %s263, %s265
      %p269 = scmp.eq.s32.totalorder %s19, 0
      %p270 = por %p268, %p269
      %p271 = scmp.ne.s32.totalorder %s263, %s265
      %p272 = scmp.eq.s32.totalorder %s24, 1
      %p273 = por %p271, %p272
      %p274 = scmp.ne.s32.totalorder %s265, %s266
      %p275 = scmp.eq.s32.totalorder %s24, 0
      %p276 = por %p274, %p275
      %p277 = scmp.ne.s32.totalorder %s265, %s266
      %p278 = scmp.eq.s32.totalorder %s25, 1
      %p279 = por %p277, %p278
      %p281 = scmp.ne.s32.totalorder %s266, %s280
      %p282 = scmp.eq.s32.totalorder %s25, 0
      %p283 = por %p281, %p282
      %s284 = ssub.s32 %s19, %s26
      %p285 = scmp.eq.s32.totalorder %s284, 0
      %s287 = sadd.s32 %s286, 1
      %s288 = scalar_select %p285, %s286, %s287
      %p291 = pneg %p285
      %p292 = scmp.eq.s32.totalorder %s19, 1
      %p293 = por %p291, %p292
      %p294 = scmp.ne.s32.totalorder %s286, %s289
      %p295 = scmp.eq.s32.totalorder %s19, 0
      %p296 = por %p294, %p295
      %p297 = scmp.ne.s32.totalorder %s286, %s289
      %p298 = scmp.eq.s32.totalorder %s24, 1
      %p299 = por %p297, %p298
      %p300 = scmp.ne.s32.totalorder %s289, %s290
      %p301 = scmp.eq.s32.totalorder %s24, 0
      %p302 = por %p300, %p301
      %p303 = scmp.ne.s32.totalorder %s289, %s290
      %p304 = scmp.eq.s32.totalorder %s25, 1
      %p305 = por %p303, %p304
      %p307 = scmp.ne.s32.totalorder %s290, %s306
      %p308 = scmp.eq.s32.totalorder %s25, 0
      %p309 = por %p307, %p308
      %p310 = scmp.le.s32.totalorder 1, %s19
      %p311 = scmp.lt.s32.totalorder %s19, 3
      %p312 = pnand %p310, %p311
      %p313 = pneg %p312
      // Predicated region
      $region9: #{forward.1} parent=5 // pred_check
        _
      $region10: #{forward.1} parent=5 // pred_check_branch
        %315 = sbr.rel (%p312) target = $region12
      $region11: #{forward.1} parent=5 // pred_region
        %s316 = ssub.s32 %s19, 1
        // Predicated region
        $region13: #{forward.1} parent=11 // pred_check
          %p317 = pneg %p66
        $region14: #{forward.1} parent=11 // pred_check_branch
          %319 = sbr.rel (%p317) target = $region16
        $region15: #{forward.1} parent=11 // pred_region
          _
        $region16: #{forward.1} parent=11 // pred_fallthru
          _
        // Predicated region
        $region17: #{forward.1} parent=11 // pred_check
          %p320 = pneg %p87
        $region18: #{forward.1} parent=11 // pred_check_branch
          %322 = sbr.rel (%p320) target = $region20
        $region19: #{forward.1} parent=11 // pred_region
          _
        $region20: #{forward.1} parent=11 // pred_fallthru
          _
        // Predicated region
        $region21: #{forward.1} parent=11 // pred_check
          %p323 = pneg %p108
        $region22: #{forward.1} parent=11 // pred_check_branch
          %325 = sbr.rel (%p323) target = $region24
        $region23: #{forward.1} parent=11 // pred_region
          _
        $region24: #{forward.1} parent=11 // pred_fallthru
          _
        // Predicated region
        $region25: #{forward.1} parent=11 // pred_check
          %p326 = pneg %p129
        $region26: #{forward.1} parent=11 // pred_check_branch
          %328 = sbr.rel (%p326) target = $region28
        $region27: #{forward.1} parent=11 // pred_region
          _
        $region28: #{forward.1} parent=11 // pred_fallthru
          _
        // Predicated region
        $region29: #{forward.1} parent=11 // pred_check
          %p329 = pneg %p150
        $region30: #{forward.1} parent=11 // pred_check_branch
          %331 = sbr.rel (%p329) target = $region32
        $region31: #{forward.1} parent=11 // pred_region
          _
        $region32: #{forward.1} parent=11 // pred_fallthru
          _
        // Predicated region
        $region33: #{forward.1} parent=11 // pred_check
          %p332 = pneg %p171
        $region34: #{forward.1} parent=11 // pred_check_branch
          %334 = sbr.rel (%p332) target = $region36
        $region35: #{forward.1} parent=11 // pred_region
          _
        $region36: #{forward.1} parent=11 // pred_fallthru
          _
        // Predicated region
        $region37: #{forward.1} parent=11 // pred_check
          %p335 = pneg %p192
        $region38: #{forward.1} parent=11 // pred_check_branch
          %337 = sbr.rel (%p335) target = $region40
        $region39: #{forward.1} parent=11 // pred_region
          _
        $region40: #{forward.1} parent=11 // pred_fallthru
          _
        // Predicated region
        $region41: #{forward.1} parent=11 // pred_check
          %p338 = pneg %p213
        $region42: #{forward.1} parent=11 // pred_check_branch
          %340 = sbr.rel (%p338) target = $region44
        $region43: #{forward.1} parent=11 // pred_region
          _
        $region44: #{forward.1} parent=11 // pred_fallthru
          _
        // Predicated region
        $region45: #{forward.1} parent=11 // pred_check
          %p341 = pneg %p234
        $region46: #{forward.1} parent=11 // pred_check_branch
          %343 = sbr.rel (%p341) target = $region48
        $region47: #{forward.1} parent=11 // pred_region
          _
        $region48: #{forward.1} parent=11 // pred_fallthru
          _
        // Predicated region
        $region49: #{forward.1} parent=11 // pred_check
          %p344 = pneg %p255
        $region50: #{forward.1} parent=11 // pred_check_branch
          %346 = sbr.rel (%p344) target = $region52
        $region51: #{forward.1} parent=11 // pred_region
          _
        $region52: #{forward.1} parent=11 // pred_fallthru
          _
        // Predicated region
        $region53: #{forward.1} parent=11 // pred_check
          %p347 = pneg %p276
        $region54: #{forward.1} parent=11 // pred_check_branch
          %349 = sbr.rel (%p347) target = $region56
        $region55: #{forward.1} parent=11 // pred_region
          %s351 = ssub.s32 256, 256
          %352 = vsyncadd [#allocation3], %s351
          %s353 = sshll.u32 %s11, 4
          %s354 = int_to_ptr.vmem [resolvable:$true] %s353
          %359 = dma.vmem_to_smem %s354, 256, [#allocation2], [#allocation3], 128, 128, 8
        $region56: #{forward.1} parent=11 // pred_fallthru
          _
      $region12: #{forward.1} parent=5 // pred_fallthru
        _
      %p360 = scmp.lt.s32.totalorder %s19, 2
      // Predicated region
      $region57: #{forward.1} parent=5 // pred_check
        %p361 = pneg %p360
      $region58: #{forward.1} parent=5 // pred_check_branch
        %363 = sbr.rel (%p361) target = $region60
      $region59: #{forward.1} parent=5 // pred_region
        // Predicated region
        $region61: #{forward.1} parent=59 // pred_check
          %p364 = pneg %p39
        $region62: #{forward.1} parent=59 // pred_check_branch
          %366 = sbr.rel (%p364) target = $region64
        $region63: #{forward.1} parent=59 // pred_region
          %p367 = scmp.lt.s32.totalorder %s19, 1
          %s368 = scalar_select %p367, %s19, 1
          %s369 = smul.addr %s368, 8
          %s370 = scalar_lea.vmem %s0, %s369
        $region64: #{forward.1} parent=59 // pred_fallthru
          _
      $region60: #{forward.1} parent=5 // pred_fallthru
        _
      %p371 = scmp.le.s32.totalorder 1, %s19
      %p372 = scmp.lt.s32.totalorder %s19, 3
      %p373 = pnand %p371, %p372
      %p374 = pneg %p373
      // Predicated region
      $region65: #{forward.1} parent=5 // pred_check
        _
      $region66: #{forward.1} parent=5 // pred_check_branch
        %376 = sbr.rel (%p373) target = $region68
      $region67: #{forward.1} parent=5 // pred_region
        %s377 = ssub.s32 %s19, 1
        // Predicated region
        $region69: #{forward.1} parent=67 // pred_check
          %p378 = pneg %p276
        $region70: #{forward.1} parent=67 // pred_check_branch
          %380 = sbr.rel (%p378) target = $region72
        $region71: #{forward.1} parent=67 // pred_region
          %381 = dma.done [#allocation3], 256
        $region72: #{forward.1} parent=67 // pred_fallthru
          _
        %382 = sfence
        %p383 = scmp.lt.s32.totalorder %s24, 1
        %s384 = scalar_select %p383, %s24, 1
        %s385 = smul.addr %s384, 8
        %s386 = scalar_lea.vmem %s0, %s385
        %p387 = pneg %p45
        %p388 = pneg %p42
        %p389 = pneg %p66
        %p390 = pneg %p63
        %p391 = pneg %p87
        %p392 = pneg %p84
        %p393 = pneg %p108
        %p394 = pneg %p105
        %p395 = pneg %p129
        %p396 = pneg %p126
        %p397 = pneg %p150
        %p398 = pneg %p147
        %p399 = pneg %p171
        %p400 = pneg %p168
        %p401 = pneg %p192
        %p402 = pneg %p189
        %p403 = pneg %p213
        %p404 = pneg %p210
        %p405 = pneg %p234
        %p406 = pneg %p231
        %p407 = pneg %p255
        %p408 = pneg %p252
        %p409 = pneg %p276
        %p410 = pneg %p273
        %p411 = pneg %p302
        %p412 = pneg %p299
        %p413 = scmp.lt.s32.totalorder %s24, 1
        %s414 = scalar_select %p413, %s24, 1
        %s415 = smul.addr %s414, 30
        %s416 = smul.addr %s415, 8
        %s417 = scalar_lea.vmem %s12, %s416
        %p418 = scmp.lt.s32.totalorder %s24, 1
        %s419 = scalar_select %p418, %s24, 1
        %s420 = smul.addr %s419, 8
        %s421 = scalar_lea.vmem %s0, %s420
        %p422 = scmp.lt.s32.totalorder %s24, 1
        %s423 = scalar_select %p422, %s24, 1
        %s424 = smul.addr %s423, 30
        %s425 = smul.addr %s424, 8
        %s426 = scalar_lea.vmem %s12, %s425
        %v428 = vld [vmem:[%s421] sm:$0xff]
        %v429 = vpack.c.bf16 %v428, %v428
        %v430 = vld [vmem:[%s1] sm:$0xff]
        %v431 = vld [vmem:[%s1 + $0x8] sm:$0xff]
        %v432 = vld [vmem:[%s1 + $0x10] sm:$0xff]
        %v433 = vld [vmem:[%s1 + $0x18] sm:$0xff]
        %v434 = vld [vmem:[%s1 + $0x20] sm:$0xff]
        %v435 = vld [vmem:[%s1 + $0x28] sm:$0xff]
        %v436 = vld [vmem:[%s1 + $0x30] sm:$0xff]
        %v437 = vld [vmem:[%s1 + $0x38] sm:$0xff]
        %v438 = vld [vmem:[%s1 + $0x40] sm:$0xff]
        %v439 = vld [vmem:[%s1 + $0x48] sm:$0xff]
        %v440 = vld [vmem:[%s1 + $0x50] sm:$0xff]
        %v441 = vld [vmem:[%s1 + $0x58] sm:$0xff]
        %v442 = vld [vmem:[%s1 + $0x60] sm:$0xff]
        %v443 = vld [vmem:[%s1 + $0x68] sm:$0xff]
        %v444 = vld [vmem:[%s1 + $0x70] sm:$0xff]
        %v445 = vld [vmem:[%s1 + $0x78] sm:$0xff]
        %v446 = vld [vmem:[%s2] sm:$0x3]
        %v448 = vlaneseq
        %v449 = vshrl.u32 %v448, 7
        %v450 = vsub.s32 0, %v449
        %v451 = vrot.slane %v446, %v450
        %v452 = vlaneseq
        %v453 = vshrl.u32 %v452, 7
        %v454 = vsub.s32 1, %v453
        %v455 = vrot.slane %v446, %v454
        %v474 = vunpack.c.l.b16 %v430
        %v475 = vunpack.c.h.b16 %v430
        %v476 = vunpack.c.l.b16 %v431
        %v477 = vunpack.c.h.b16 %v431
        %v478 = vunpack.c.l.b16 %v432
        %v479 = vunpack.c.h.b16 %v432
        %v480 = vunpack.c.l.b16 %v433
        %v481 = vunpack.c.h.b16 %v433
        %v482 = vunpack.c.l.b16 %v434
        %v483 = vunpack.c.h.b16 %v434
        %v484 = vunpack.c.l.b16 %v435
        %v485 = vunpack.c.h.b16 %v435
        %v486 = vunpack.c.l.b16 %v436
        %v487 = vunpack.c.h.b16 %v436
        %v488 = vunpack.c.l.b16 %v437
        %v489 = vunpack.c.h.b16 %v437
        %v490 = vunpack.c.l.b16 %v438
        %v491 = vunpack.c.h.b16 %v438
        %v492 = vunpack.c.l.b16 %v439
        %v493 = vunpack.c.h.b16 %v439
        %v494 = vunpack.c.l.b16 %v440
        %v495 = vunpack.c.h.b16 %v440
        %v496 = vunpack.c.l.b16 %v441
        %v497 = vunpack.c.h.b16 %v441
        %v498 = vunpack.c.l.b16 %v442
        %v499 = vunpack.c.h.b16 %v442
        %v500 = vunpack.c.l.b16 %v443
        %v501 = vunpack.c.h.b16 %v443
        %v502 = vunpack.c.l.b16 %v444
        %v503 = vunpack.c.h.b16 %v444
        %v504 = vunpack.c.l.b16 %v445
        %v505 = vunpack.c.h.b16 %v445
        %v506 = vpack.c.b16 %v476, %v474
        %v507 = vpack.c.b16 %v477, %v475
        %v508 = vpack.c.b16 %v480, %v478
        %v509 = vpack.c.b16 %v481, %v479
        %v510 = vpack.c.b16 %v484, %v482
        %v511 = vpack.c.b16 %v485, %v483
        %v512 = vpack.c.b16 %v488, %v486
        %v513 = vpack.c.b16 %v489, %v487
        %v514 = vpack.c.b16 %v492, %v490
        %v515 = vpack.c.b16 %v493, %v491
        %v516 = vpack.c.b16 %v496, %v494
        %v517 = vpack.c.b16 %v497, %v495
        %v518 = vpack.c.b16 %v500, %v498
        %v519 = vpack.c.b16 %v501, %v499
        %v520 = vpack.c.b16 %v504, %v502
        %v521 = vpack.c.b16 %v505, %v503
        %538 = vmatprep.subr.bf16.mxu0 %v507
        %539 = vmatpush1.bf16.msra.mxu0 %v506
        %540 = vmatprep.subr.bf16.mxu0 %v509
        %541 = vmatpush1.bf16.msra.mxu0 %v508
        %542 = vmatprep.subr.bf16.mxu0 %v511
        %543 = vmatpush1.bf16.msra.mxu0 %v510
        %544 = vmatprep.subr.bf16.mxu0 %v513
        %545 = vmatpush1.bf16.msra.mxu0 %v512
        %546 = vmatprep.subr.bf16.mxu0 %v515
        %547 = vmatpush1.bf16.msra.mxu0 %v514
        %548 = vmatprep.subr.bf16.mxu0 %v517
        %549 = vmatpush1.bf16.msra.mxu0 %v516
        %550 = vmatprep.subr.bf16.mxu0 %v519
        %551 = vmatpush1.bf16.msra.mxu0 %v518
        %552 = vmatprep.subr.bf16.mxu0 %v521
        %553 = vmatpush1.bf16.msra.mxu0 %v520
        %554 = vmatprep.subr.bf16.mxu0 0
        %555 = vmatpush1.bf16.msra.mxu0 0
        %556 = vmatprep.subr.bf16.mxu0 0
        %557 = vmatpush1.bf16.msra.mxu0 0
        %558 = vmatprep.subr.bf16.mxu0 0
        %559 = vmatpush1.bf16.msra.mxu0 0
        %560 = vmatprep.subr.bf16.mxu0 0
        %561 = vmatpush1.bf16.msra.mxu0 0
        %562 = vmatprep.subr.bf16.mxu0 0
        %563 = vmatpush1.bf16.msra.mxu0 0
        %564 = vmatprep.subr.bf16.mxu0 0
        %565 = vmatpush1.bf16.msra.mxu0 0
        %566 = vmatprep.subr.bf16.mxu0 0
        %567 = vmatpush1.bf16.msra.mxu0 0
        %568 = vmatprep.subr.bf16.mxu0 0
        %569 = vmatpush1.bf16.msra.mxu0 0
        %570 = vmatprep.mubr.bf16.mxu0 0
        %571 = vmatmul.mubr.bf16.gmra.mrb[0].mxu0 %v429
        %v572 = vpop.f32.mrb[0].mxu0
        %v573 = vadd.f32 %v451, %v572
        %v574 = vpop.f32.mrb[0].mxu0
        %v575 = vadd.f32 %v455, %v574
        %v576 = vpop.f32.mrb[0].mxu0
        %v577 = vpop.f32.mrb[0].mxu0
        %578 = vdwg.mxu0
        %v579 = vmax.f32 %v573, 0.0
        %v580 = vmax.f32 %v575, 0.0
        %v581 = vpack.c.bf16 %v579, %v579
        %v582 = vpack.c.bf16 %v580, %v580
        %v583 = vld [vmem:[%s3] sm:$0xff]
        %v584 = vld [vmem:[%s3 + $0x8] sm:$0xff]
        %v585 = vld [vmem:[%s3 + $0x10] sm:$0xff]
        %v586 = vld [vmem:[%s3 + $0x18] sm:$0xff]
        %v587 = vld [vmem:[%s3 + $0x20] sm:$0xff]
        %v588 = vld [vmem:[%s3 + $0x28] sm:$0xff]
        %v589 = vld [vmem:[%s3 + $0x30] sm:$0xff]
        %v590 = vld [vmem:[%s3 + $0x38] sm:$0xff]
        %v591 = vld [vmem:[%s3 + $0x40] sm:$0xff]
        %v592 = vld [vmem:[%s3 + $0x48] sm:$0xff]
        %v593 = vld [vmem:[%s3 + $0x50] sm:$0xff]
        %v594 = vld [vmem:[%s3 + $0x58] sm:$0xff]
        %v595 = vld [vmem:[%s3 + $0x60] sm:$0xff]
        %v596 = vld [vmem:[%s3 + $0x68] sm:$0xff]
        %v597 = vld [vmem:[%s3 + $0x70] sm:$0xff]
        %v598 = vld [vmem:[%s3 + $0x78] sm:$0xff]
        %v599 = vld [vmem:[%s3 + $0x80] sm:$0xff]
        %v600 = vld [vmem:[%s3 + $0x88] sm:$0xff]
        %v601 = vld [vmem:[%s3 + $0x90] sm:$0xff]
        %v602 = vld [vmem:[%s3 + $0x98] sm:$0xff]
        %v603 = vld [vmem:[%s3 + $0xa0] sm:$0xff]
        %v604 = vld [vmem:[%s3 + $0xa8] sm:$0xff]
        %v605 = vld [vmem:[%s3 + $0xb0] sm:$0xff]
        %v606 = vld [vmem:[%s3 + $0xb8] sm:$0xff]
        %v607 = vld [vmem:[%s3 + $0xc0] sm:$0xff]
        %v608 = vld [vmem:[%s3 + $0xc8] sm:$0xff]
        %v609 = vld [vmem:[%s3 + $0xd0] sm:$0xff]
        %v610 = vld [vmem:[%s3 + $0xd8] sm:$0xff]
        %v611 = vld [vmem:[%s3 + $0xe0] sm:$0xff]
        %v612 = vld [vmem:[%s3 + $0xe8] sm:$0xff]
        %v613 = vld [vmem:[%s3 + $0xf0] sm:$0xff]
        %v614 = vld [vmem:[%s3 + $0xf8] sm:$0xff]
        %v615 = vld [vmem:[%s3 + $0x100] sm:$0xff]
        %v616 = vld [vmem:[%s3 + $0x108] sm:$0xff]
        %v617 = vld [vmem:[%s3 + $0x110] sm:$0xff]
        %v618 = vld [vmem:[%s3 + $0x118] sm:$0xff]
        %v619 = vld [vmem:[%s3 + $0x120] sm:$0xff]
        %v620 = vld [vmem:[%s3 + $0x128] sm:$0xff]
        %v621 = vld [vmem:[%s3 + $0x130] sm:$0xff]
        %v622 = vld [vmem:[%s3 + $0x138] sm:$0xff]
        %v623 = vld [vmem:[%s3 + $0x140] sm:$0xff]
        %v624 = vld [vmem:[%s3 + $0x148] sm:$0xff]
        %v625 = vld [vmem:[%s3 + $0x150] sm:$0xff]
        %v626 = vld [vmem:[%s3 + $0x158] sm:$0xff]
        %v627 = vld [vmem:[%s3 + $0x160] sm:$0xff]
        %v628 = vld [vmem:[%s3 + $0x168] sm:$0xff]
        %v629 = vld [vmem:[%s3 + $0x170] sm:$0xff]
        %v630 = vld [vmem:[%s3 + $0x178] sm:$0xff]
        %v631 = vld [vmem:[%s3 + $0x180] sm:$0xff]
        %v632 = vld [vmem:[%s3 + $0x188] sm:$0xff]
        %v633 = vld [vmem:[%s3 + $0x190] sm:$0xff]
        %v634 = vld [vmem:[%s3 + $0x198] sm:$0xff]
        %v635 = vld [vmem:[%s3 + $0x1a0] sm:$0xff]
        %v636 = vld [vmem:[%s3 + $0x1a8] sm:$0xff]
        %v637 = vld [vmem:[%s3 + $0x1b0] sm:$0xff]
        %v638 = vld [vmem:[%s3 + $0x1b8] sm:$0xff]
        %v639 = vld [vmem:[%s3 + $0x1c0] sm:$0xff]
        %v640 = vld [vmem:[%s3 + $0x1c8] sm:$0xff]
        %v641 = vld [vmem:[%s3 + $0x1d0] sm:$0xff]
        %v642 = vld [vmem:[%s3 + $0x1d8] sm:$0xff]
        %v643 = vld [vmem:[%s3 + $0x1e0] sm:$0xff]
        %v644 = vld [vmem:[%s3 + $0x1e8] sm:$0xff]
        %v645 = vld [vmem:[%s3 + $0x1f0] sm:$0xff]
        %v646 = vld [vmem:[%s3 + $0x1f8] sm:$0xff]
        %v647 = vld [vmem:[%s4] sm:$0xf]
        %v649 = vlaneseq
        %v650 = vshrl.u32 %v649, 7
        %v651 = vsub.s32 0, %v650
        %v652 = vrot.slane %v647, %v651
        %v653 = vlaneseq
        %v654 = vshrl.u32 %v653, 7
        %v655 = vsub.s32 1, %v654
        %v656 = vrot.slane %v647, %v655
        %v657 = vlaneseq
        %v658 = vshrl.u32 %v657, 7
        %v659 = vsub.s32 2, %v658
        %v660 = vrot.slane %v647, %v659
        %v661 = vlaneseq
        %v662 = vshrl.u32 %v661, 7
        %v663 = vsub.s32 3, %v662
        %v664 = vrot.slane %v647, %v663
        %v733 = vunpack.c.l.b16 %v583
        %v734 = vunpack.c.h.b16 %v583
        %v735 = vunpack.c.l.b16 %v584
        %v736 = vunpack.c.h.b16 %v584
        %v737 = vunpack.c.l.b16 %v585
        %v738 = vunpack.c.h.b16 %v585
        %v739 = vunpack.c.l.b16 %v586
        %v740 = vunpack.c.h.b16 %v586
        %v741 = vunpack.c.l.b16 %v587
        %v742 = vunpack.c.h.b16 %v587
        %v743 = vunpack.c.l.b16 %v588
        %v744 = vunpack.c.h.b16 %v588
        %v745 = vunpack.c.l.b16 %v589
        %v746 = vunpack.c.h.b16 %v589
        %v747 = vunpack.c.l.b16 %v590
        %v748 = vunpack.c.h.b16 %v590
        %v749 = vunpack.c.l.b16 %v591
        %v750 = vunpack.c.h.b16 %v591
        %v751 = vunpack.c.l.b16 %v592
        %v752 = vunpack.c.h.b16 %v592
        %v753 = vunpack.c.l.b16 %v593
        %v754 = vunpack.c.h.b16 %v593
        %v755 = vunpack.c.l.b16 %v594
        %v756 = vunpack.c.h.b16 %v594
        %v757 = vunpack.c.l.b16 %v595
        %v758 = vunpack.c.h.b16 %v595
        %v759 = vunpack.c.l.b16 %v596
        %v760 = vunpack.c.h.b16 %v596
        %v761 = vunpack.c.l.b16 %v597
        %v762 = vunpack.c.h.b16 %v597
        %v763 = vunpack.c.l.b16 %v598
        %v764 = vunpack.c.h.b16 %v598
        %v765 = vunpack.c.l.b16 %v599
        %v766 = vunpack.c.h.b16 %v599
        %v767 = vunpack.c.l.b16 %v600
        %v768 = vunpack.c.h.b16 %v600
        %v769 = vunpack.c.l.b16 %v601
        %v770 = vunpack.c.h.b16 %v601
        %v771 = vunpack.c.l.b16 %v602
        %v772 = vunpack.c.h.b16 %v602
        %v773 = vunpack.c.l.b16 %v603
        %v774 = vunpack.c.h.b16 %v603
        %v775 = vunpack.c.l.b16 %v604
        %v776 = vunpack.c.h.b16 %v604
        %v777 = vunpack.c.l.b16 %v605
        %v778 = vunpack.c.h.b16 %v605
        %v779 = vunpack.c.l.b16 %v606
        %v780 = vunpack.c.h.b16 %v606
        %v781 = vunpack.c.l.b16 %v607
        %v782 = vunpack.c.h.b16 %v607
        %v783 = vunpack.c.l.b16 %v608
        %v784 = vunpack.c.h.b16 %v608
        %v785 = vunpack.c.l.b16 %v609
        %v786 = vunpack.c.h.b16 %v609
        %v787 = vunpack.c.l.b16 %v610
        %v788 = vunpack.c.h.b16 %v610
        %v789 = vunpack.c.l.b16 %v611
        %v790 = vunpack.c.h.b16 %v611
        %v791 = vunpack.c.l.b16 %v612
        %v792 = vunpack.c.h.b16 %v612
        %v793 = vunpack.c.l.b16 %v613
        %v794 = vunpack.c.h.b16 %v613
        %v795 = vunpack.c.l.b16 %v614
        %v796 = vunpack.c.h.b16 %v614
        %v797 = vunpack.c.l.b16 %v615
        %v798 = vunpack.c.h.b16 %v615
        %v799 = vunpack.c.l.b16 %v616
        %v800 = vunpack.c.h.b16 %v616
        %v801 = vunpack.c.l.b16 %v617
        %v802 = vunpack.c.h.b16 %v617
        %v803 = vunpack.c.l.b16 %v618
        %v804 = vunpack.c.h.b16 %v618
        %v805 = vunpack.c.l.b16 %v619
        %v806 = vunpack.c.h.b16 %v619
        %v807 = vunpack.c.l.b16 %v620
        %v808 = vunpack.c.h.b16 %v620
        %v809 = vunpack.c.l.b16 %v621
        %v810 = vunpack.c.h.b16 %v621
        %v811 = vunpack.c.l.b16 %v622
        %v812 = vunpack.c.h.b16 %v622
        %v813 = vunpack.c.l.b16 %v623
        %v814 = vunpack.c.h.b16 %v623
        %v815 = vunpack.c.l.b16 %v624
        %v816 = vunpack.c.h.b16 %v624
        %v817 = vunpack.c.l.b16 %v625
        %v818 = vunpack.c.h.b16 %v625
        %v819 = vunpack.c.l.b16 %v626
        %v820 = vunpack.c.h.b16 %v626
        %v821 = vunpack.c.l.b16 %v627
        %v822 = vunpack.c.h.b16 %v627
        %v823 = vunpack.c.l.b16 %v628
        %v824 = vunpack.c.h.b16 %v628
        %v825 = vunpack.c.l.b16 %v629
        %v826 = vunpack.c.h.b16 %v629
        %v827 = vunpack.c.l.b16 %v630
        %v828 = vunpack.c.h.b16 %v630
        %v829 = vunpack.c.l.b16 %v631
        %v830 = vunpack.c.h.b16 %v631
        %v831 = vunpack.c.l.b16 %v632
        %v832 = vunpack.c.h.b16 %v632
        %v833 = vunpack.c.l.b16 %v633
        %v834 = vunpack.c.h.b16 %v633
        %v835 = vunpack.c.l.b16 %v634
        %v836 = vunpack.c.h.b16 %v634
        %v837 = vunpack.c.l.b16 %v635
        %v838 = vunpack.c.h.b16 %v635
        %v839 = vunpack.c.l.b16 %v636
        %v840 = vunpack.c.h.b16 %v636
        %v841 = vunpack.c.l.b16 %v637
        %v842 = vunpack.c.h.b16 %v637
        %v843 = vunpack.c.l.b16 %v638
        %v844 = vunpack.c.h.b16 %v638
        %v845 = vunpack.c.l.b16 %v639
        %v846 = vunpack.c.h.b16 %v639
        %v847 = vunpack.c.l.b16 %v640
        %v848 = vunpack.c.h.b16 %v640
        %v849 = vunpack.c.l.b16 %v641
        %v850 = vunpack.c.h.b16 %v641
        %v851 = vunpack.c.l.b16 %v642
        %v852 = vunpack.c.h.b16 %v642
        %v853 = vunpack.c.l.b16 %v643
        %v854 = vunpack.c.h.b16 %v643
        %v855 = vunpack.c.l.b16 %v644
        %v856 = vunpack.c.h.b16 %v644
        %v857 = vunpack.c.l.b16 %v645
        %v858 = vunpack.c.h.b16 %v645
        %v859 = vunpack.c.l.b16 %v646
        %v860 = vunpack.c.h.b16 %v646
        %v861 = vpack.c.b16 %v737, %v733
        %v862 = vpack.c.b16 %v738, %v734
        %v863 = vpack.c.b16 %v739, %v735
        %v864 = vpack.c.b16 %v740, %v736
        %v865 = vpack.c.b16 %v745, %v741
        %v866 = vpack.c.b16 %v746, %v742
        %v867 = vpack.c.b16 %v747, %v743
        %v868 = vpack.c.b16 %v748, %v744
        %v869 = vpack.c.b16 %v753, %v749
        %v870 = vpack.c.b16 %v754, %v750
        %v871 = vpack.c.b16 %v755, %v751
        %v872 = vpack.c.b16 %v756, %v752
        %v873 = vpack.c.b16 %v761, %v757
        %v874 = vpack.c.b16 %v762, %v758
        %v875 = vpack.c.b16 %v763, %v759
        %v876 = vpack.c.b16 %v764, %v760
        %v877 = vpack.c.b16 %v769, %v765
        %v878 = vpack.c.b16 %v770, %v766
        %v879 = vpack.c.b16 %v771, %v767
        %v880 = vpack.c.b16 %v772, %v768
        %v881 = vpack.c.b16 %v777, %v773
        %v882 = vpack.c.b16 %v778, %v774
        %v883 = vpack.c.b16 %v779, %v775
        %v884 = vpack.c.b16 %v780, %v776
        %v885 = vpack.c.b16 %v785, %v781
        %v886 = vpack.c.b16 %v786, %v782
        %v887 = vpack.c.b16 %v787, %v783
        %v888 = vpack.c.b16 %v788, %v784
        %v889 = vpack.c.b16 %v793, %v789
        %v890 = vpack.c.b16 %v794, %v790
        %v891 = vpack.c.b16 %v795, %v791
        %v892 = vpack.c.b16 %v796, %v792
        %v893 = vpack.c.b16 %v801, %v797
        %v894 = vpack.c.b16 %v802, %v798
        %v895 = vpack.c.b16 %v803, %v799
        %v896 = vpack.c.b16 %v804, %v800
        %v897 = vpack.c.b16 %v809, %v805
        %v898 = vpack.c.b16 %v810, %v806
        %v899 = vpack.c.b16 %v811, %v807
        %v900 = vpack.c.b16 %v812, %v808
        %v901 = vpack.c.b16 %v817, %v813
        %v902 = vpack.c.b16 %v818, %v814
        %v903 = vpack.c.b16 %v819, %v815
        %v904 = vpack.c.b16 %v820, %v816
        %v905 = vpack.c.b16 %v825, %v821
        %v906 = vpack.c.b16 %v826, %v822
        %v907 = vpack.c.b16 %v827, %v823
        %v908 = vpack.c.b16 %v828, %v824
        %v909 = vpack.c.b16 %v833, %v829
        %v910 = vpack.c.b16 %v834, %v830
        %v911 = vpack.c.b16 %v835, %v831
        %v912 = vpack.c.b16 %v836, %v832
        %v913 = vpack.c.b16 %v841, %v837
        %v914 = vpack.c.b16 %v842, %v838
        %v915 = vpack.c.b16 %v843, %v839
        %v916 = vpack.c.b16 %v844, %v840
        %v917 = vpack.c.b16 %v849, %v845
        %v918 = vpack.c.b16 %v850, %v846
        %v919 = vpack.c.b16 %v851, %v847
        %v920 = vpack.c.b16 %v852, %v848
        %v921 = vpack.c.b16 %v857, %v853
        %v922 = vpack.c.b16 %v858, %v854
        %v923 = vpack.c.b16 %v859, %v855
        %v924 = vpack.c.b16 %v860, %v856
        %989 = vmatprep.subr.bf16.mxu0 %v862
        %990 = vmatpush1.bf16.msra.mxu0 %v861
        %991 = vmatprep.subr.bf16.mxu0 %v866
        %992 = vmatpush1.bf16.msra.mxu0 %v865
        %993 = vmatprep.subr.bf16.mxu0 %v870
        %994 = vmatpush1.bf16.msra.mxu0 %v869
        %995 = vmatprep.subr.bf16.mxu0 %v874
        %996 = vmatpush1.bf16.msra.mxu0 %v873
        %997 = vmatprep.subr.bf16.mxu0 %v878
        %998 = vmatpush1.bf16.msra.mxu0 %v877
        %999 = vmatprep.subr.bf16.mxu0 %v882
        %1000 = vmatpush1.bf16.msra.mxu0 %v881
        %1001 = vmatprep.subr.bf16.mxu0 %v886
        %1002 = vmatpush1.bf16.msra.mxu0 %v885
        %1003 = vmatprep.subr.bf16.mxu0 %v890
        %1004 = vmatpush1.bf16.msra.mxu0 %v889
        %1005 = vmatprep.subr.bf16.mxu0 %v894
        %1006 = vmatpush1.bf16.msra.mxu0 %v893
        %1007 = vmatprep.subr.bf16.mxu0 %v898
        %1008 = vmatpush1.bf16.msra.mxu0 %v897
        %1009 = vmatprep.subr.bf16.mxu0 %v902
        %1010 = vmatpush1.bf16.msra.mxu0 %v901
        %1011 = vmatprep.subr.bf16.mxu0 %v906
        %1012 = vmatpush1.bf16.msra.mxu0 %v905
        %1013 = vmatprep.subr.bf16.mxu0 %v910
        %1014 = vmatpush1.bf16.msra.mxu0 %v909
        %1015 = vmatprep.subr.bf16.mxu0 %v914
        %1016 = vmatpush1.bf16.msra.mxu0 %v913
        %1017 = vmatprep.subr.bf16.mxu0 %v918
        %1018 = vmatpush1.bf16.msra.mxu0 %v917
        %1019 = vmatprep.subr.bf16.mxu0 %v922
        %1020 = vmatpush1.bf16.msra.mxu0 %v921
        %1021 = vmatprep.mubr.bf16.mxu0 %v582
        %1022 = vmatmul.mubr.bf16.gmra.mrb[0].mxu0 %v581
        %v1023 = vpop.f32.mrb[0].mxu0
        %v1024 = vadd.f32 %v652, %v1023
        %v1025 = vpop.f32.mrb[0].mxu0
        %v1026 = vadd.f32 %v656, %v1025
        %v1027 = vpop.f32.mrb[0].mxu0
        %v1028 = vpop.f32.mrb[0].mxu0
        %1029 = vdwg.mxu0
        %1030 = vmatprep.subr.bf16.mxu0 %v864
        %1031 = vmatpush1.bf16.msra.mxu0 %v863
        %1032 = vmatprep.subr.bf16.mxu0 %v868
        %1033 = vmatpush1.bf16.msra.mxu0 %v867
        %1034 = vmatprep.subr.bf16.mxu0 %v872
        %1035 = vmatpush1.bf16.msra.mxu0 %v871
        %1036 = vmatprep.subr.bf16.mxu0 %v876
        %1037 = vmatpush1.bf16.msra.mxu0 %v875
        %1038 = vmatprep.subr.bf16.mxu0 %v880
        %1039 = vmatpush1.bf16.msra.mxu0 %v879
        %1040 = vmatprep.subr.bf16.mxu0 %v884
        %1041 = vmatpush1.bf16.msra.mxu0 %v883
        %1042 = vmatprep.subr.bf16.mxu0 %v888
        %1043 = vmatpush1.bf16.msra.mxu0 %v887
        %1044 = vmatprep.subr.bf16.mxu0 %v892
        %1045 = vmatpush1.bf16.msra.mxu0 %v891
        %1046 = vmatprep.subr.bf16.mxu0 %v896
        %1047 = vmatpush1.bf16.msra.mxu0 %v895
        %1048 = vmatprep.subr.bf16.mxu0 %v900
        %1049 = vmatpush1.bf16.msra.mxu0 %v899
        %1050 = vmatprep.subr.bf16.mxu0 %v904
        %1051 = vmatpush1.bf16.msra.mxu0 %v903
        %1052 = vmatprep.subr.bf16.mxu0 %v908
        %1053 = vmatpush1.bf16.msra.mxu0 %v907
        %1054 = vmatprep.subr.bf16.mxu0 %v912
        %1055 = vmatpush1.bf16.msra.mxu0 %v911
        %1056 = vmatprep.subr.bf16.mxu0 %v916
        %1057 = vmatpush1.bf16.msra.mxu0 %v915
        %1058 = vmatprep.subr.bf16.mxu0 %v920
        %1059 = vmatpush1.bf16.msra.mxu0 %v919
        %1060 = vmatprep.subr.bf16.mxu0 %v924
        %1061 = vmatpush1.bf16.msra.mxu0 %v923
        %1062 = vmatprep.mubr.bf16.mxu0 %v582
        %1063 = vmatmul.mubr.bf16.gmra.mrb[0].mxu0 %v581
        %v1064 = vpop.f32.mrb[0].mxu0
        %v1065 = vadd.f32 %v660, %v1064
        %v1066 = vpop.f32.mrb[0].mxu0
        %v1067 = vadd.f32 %v664, %v1066
        %v1068 = vpop.f32.mrb[0].mxu0
        %v1069 = vpop.f32.mrb[0].mxu0
        %1070 = vdwg.mxu0
        %v1071 = vmax.f32 %v1024, 0.0
        %v1072 = vmax.f32 %v1026, 0.0
        %v1073 = vmax.f32 %v1065, 0.0
        %v1074 = vmax.f32 %v1067, 0.0
        %v1075 = vpack.c.bf16 %v1071, %v1071
        %v1076 = vpack.c.bf16 %v1072, %v1072
        %v1077 = vpack.c.bf16 %v1073, %v1073
        %v1078 = vpack.c.bf16 %v1074, %v1074
        %v1079 = vld [vmem:[%s5] sm:$0xff]
        %v1080 = vld [vmem:[%s5 + $0x8] sm:$0xff]
        %v1081 = vld [vmem:[%s5 + $0x10] sm:$0xf]
        %v1082 = vld [vmem:[%s5 + $0x14] sm:$0xff]
        %v1083 = vld [vmem:[%s5 + $0x1c] sm:$0xff]
        %v1084 = vld [vmem:[%s5 + $0x24] sm:$0xf]
        %v1085 = vld [vmem:[%s5 + $0x28] sm:$0xff]
        %v1086 = vld [vmem:[%s5 + $0x30] sm:$0xff]
        %v1087 = vld [vmem:[%s5 + $0x38] sm:$0xf]
        %v1088 = vld [vmem:[%s5 + $0x3c] sm:$0xff]
        %v1089 = vld [vmem:[%s5 + $0x44] sm:$0xff]
        %v1090 = vld [vmem:[%s5 + $0x4c] sm:$0xf]
        %v1091 = vld [vmem:[%s5 + $0x50] sm:$0xff]
        %v1092 = vld [vmem:[%s5 + $0x58] sm:$0xff]
        %v1093 = vld [vmem:[%s5 + $0x60] sm:$0xf]
        %v1094 = vld [vmem:[%s5 + $0x64] sm:$0xff]
        %v1095 = vld [vmem:[%s5 + $0x6c] sm:$0xff]
        %v1096 = vld [vmem:[%s5 + $0x74] sm:$0xf]
        %v1097 = vld [vmem:[%s5 + $0x78] sm:$0xff]
        %v1098 = vld [vmem:[%s5 + $0x80] sm:$0xff]
        %v1099 = vld [vmem:[%s5 + $0x88] sm:$0xf]
        %v1100 = vld [vmem:[%s5 + $0x8c] sm:$0xff]
        %v1101 = vld [vmem:[%s5 + $0x94] sm:$0xff]
        %v1102 = vld [vmem:[%s5 + $0x9c] sm:$0xf]
        %v1103 = vld [vmem:[%s5 + $0xa0] sm:$0xff]
        %v1104 = vld [vmem:[%s5 + $0xa8] sm:$0xff]
        %v1105 = vld [vmem:[%s5 + $0xb0] sm:$0xf]
        %v1106 = vld [vmem:[%s5 + $0xb4] sm:$0xff]
        %v1107 = vld [vmem:[%s5 + $0xbc] sm:$0xff]
        %v1108 = vld [vmem:[%s5 + $0xc4] sm:$0xf]
        %v1109 = vld [vmem:[%s5 + $0xc8] sm:$0xff]
        %v1110 = vld [vmem:[%s5 + $0xd0] sm:$0xff]
        %v1111 = vld [vmem:[%s5 + $0xd8] sm:$0xf]
        %v1112 = vld [vmem:[%s5 + $0xdc] sm:$0xff]
        %v1113 = vld [vmem:[%s5 + $0xe4] sm:$0xff]
        %v1114 = vld [vmem:[%s5 + $0xec] sm:$0xf]
        %v1115 = vld [vmem:[%s5 + $0xf0] sm:$0xff]
        %v1116 = vld [vmem:[%s5 + $0xf8] sm:$0xff]
        %v1117 = vld [vmem:[%s5 + $0x100] sm:$0xf]
        %v1118 = vld [vmem:[%s5 + $0x104] sm:$0xff]
        %v1119 = vld [vmem:[%s5 + $0x10c] sm:$0xff]
        %v1120 = vld [vmem:[%s5 + $0x114] sm:$0xf]
        %v1121 = vld [vmem:[%s5 + $0x118] sm:$0xff]
        %v1122 = vld [vmem:[%s5 + $0x120] sm:$0xff]
        %v1123 = vld [vmem:[%s5 + $0x128] sm:$0xf]
        %v1124 = vld [vmem:[%s5 + $0x12c] sm:$0xff]
        %v1125 = vld [vmem:[%s5 + $0x134] sm:$0xff]
        %v1126 = vld [vmem:[%s5 + $0x13c] sm:$0xf]
        %v1127 = vld [vmem:[%s5 + $0x140] sm:$0xff]
        %v1128 = vld [vmem:[%s5 + $0x148] sm:$0xff]
        %v1129 = vld [vmem:[%s5 + $0x150] sm:$0xf]
        %v1130 = vld [vmem:[%s5 + $0x154] sm:$0xff]
        %v1131 = vld [vmem:[%s5 + $0x15c] sm:$0xff]
        %v1132 = vld [vmem:[%s5 + $0x164] sm:$0xf]
        %v1133 = vld [vmem:[%s5 + $0x168] sm:$0xff]
        %v1134 = vld [vmem:[%s5 + $0x170] sm:$0xff]
        %v1135 = vld [vmem:[%s5 + $0x178] sm:$0xf]
        %v1136 = vld [vmem:[%s5 + $0x17c] sm:$0xff]
        %v1137 = vld [vmem:[%s5 + $0x184] sm:$0xff]
        %v1138 = vld [vmem:[%s5 + $0x18c] sm:$0xf]
        %v1139 = vld [vmem:[%s5 + $0x190] sm:$0xff]
        %v1140 = vld [vmem:[%s5 + $0x198] sm:$0xff]
        %v1141 = vld [vmem:[%s5 + $0x1a0] sm:$0xf]
        %v1142 = vld [vmem:[%s5 + $0x1a4] sm:$0xff]
        %v1143 = vld [vmem:[%s5 + $0x1ac] sm:$0xff]
        %v1144 = vld [vmem:[%s5 + $0x1b4] sm:$0xf]
        %v1145 = vld [vmem:[%s5 + $0x1b8] sm:$0xff]
        %v1146 = vld [vmem:[%s5 + $0x1c0] sm:$0xff]
        %v1147 = vld [vmem:[%s5 + $0x1c8] sm:$0xf]
        %v1148 = vld [vmem:[%s5 + $0x1cc] sm:$0xff]
        %v1149 = vld [vmem:[%s5 + $0x1d4] sm:$0xff]
        %v1150 = vld [vmem:[%s5 + $0x1dc] sm:$0xf]
        %v1151 = vld [vmem:[%s5 + $0x1e0] sm:$0xff]
        %v1152 = vld [vmem:[%s5 + $0x1e8] sm:$0xff]
        %v1153 = vld [vmem:[%s5 + $0x1f0] sm:$0xf]
        %v1154 = vld [vmem:[%s5 + $0x1f4] sm:$0xff]
        %v1155 = vld [vmem:[%s5 + $0x1fc] sm:$0xff]
        %v1156 = vld [vmem:[%s5 + $0x204] sm:$0xf]
        %v1157 = vld [vmem:[%s5 + $0x208] sm:$0xff]
        %v1158 = vld [vmem:[%s5 + $0x210] sm:$0xff]
        %v1159 = vld [vmem:[%s5 + $0x218] sm:$0xf]
        %v1160 = vld [vmem:[%s5 + $0x21c] sm:$0xff]
        %v1161 = vld [vmem:[%s5 + $0x224] sm:$0xff]
        %v1162 = vld [vmem:[%s5 + $0x22c] sm:$0xf]
        %v1163 = vld [vmem:[%s5 + $0x230] sm:$0xff]
        %v1164 = vld [vmem:[%s5 + $0x238] sm:$0xff]
        %v1165 = vld [vmem:[%s5 + $0x240] sm:$0xf]
        %v1166 = vld [vmem:[%s5 + $0x244] sm:$0xff]
        %v1167 = vld [vmem:[%s5 + $0x24c] sm:$0xff]
        %v1168 = vld [vmem:[%s5 + $0x254] sm:$0xf]
        %v1169 = vld [vmem:[%s5 + $0x258] sm:$0xff]
        %v1170 = vld [vmem:[%s5 + $0x260] sm:$0xff]
        %v1171 = vld [vmem:[%s5 + $0x268] sm:$0xf]
        %v1172 = vld [vmem:[%s5 + $0x26c] sm:$0xff]
        %v1173 = vld [vmem:[%s5 + $0x274] sm:$0xff]
        %v1174 = vld [vmem:[%s5 + $0x27c] sm:$0xf]
        %v1175 = vld [vmem:[%s5 + $0x280] sm:$0xff]
        %v1176 = vld [vmem:[%s5 + $0x288] sm:$0xff]
        %v1177 = vld [vmem:[%s5 + $0x290] sm:$0xf]
        %v1178 = vld [vmem:[%s5 + $0x294] sm:$0xff]
        %v1179 = vld [vmem:[%s5 + $0x29c] sm:$0xff]
        %v1180 = vld [vmem:[%s5 + $0x2a4] sm:$0xf]
        %v1181 = vld [vmem:[%s5 + $0x2a8] sm:$0xff]
        %v1182 = vld [vmem:[%s5 + $0x2b0] sm:$0xff]
        %v1183 = vld [vmem:[%s5 + $0x2b8] sm:$0xf]
        %v1184 = vld [vmem:[%s5 + $0x2bc] sm:$0xff]
        %v1185 = vld [vmem:[%s5 + $0x2c4] sm:$0xff]
        %v1186 = vld [vmem:[%s5 + $0x2cc] sm:$0xf]
        %v1187 = vld [vmem:[%s5 + $0x2d0] sm:$0xff]
        %v1188 = vld [vmem:[%s5 + $0x2d8] sm:$0xff]
        %v1189 = vld [vmem:[%s5 + $0x2e0] sm:$0xf]
        %v1190 = vld [vmem:[%s5 + $0x2e4] sm:$0xff]
        %v1191 = vld [vmem:[%s5 + $0x2ec] sm:$0xff]
        %v1192 = vld [vmem:[%s5 + $0x2f4] sm:$0xf]
        %v1193 = vld [vmem:[%s5 + $0x2f8] sm:$0xff]
        %v1194 = vld [vmem:[%s5 + $0x300] sm:$0xff]
        %v1195 = vld [vmem:[%s5 + $0x308] sm:$0xf]
        %v1196 = vld [vmem:[%s5 + $0x30c] sm:$0xff]
        %v1197 = vld [vmem:[%s5 + $0x314] sm:$0xff]
        %v1198 = vld [vmem:[%s5 + $0x31c] sm:$0xf]
        %v1199 = vld [vmem:[%s5 + $0x320] sm:$0xff]
        %v1200 = vld [vmem:[%s5 + $0x328] sm:$0xff]
        %v1201 = vld [vmem:[%s5 + $0x330] sm:$0xf]
        %v1202 = vld [vmem:[%s5 + $0x334] sm:$0xff]
        %v1203 = vld [vmem:[%s5 + $0x33c] sm:$0xff]
        %v1204 = vld [vmem:[%s5 + $0x344] sm:$0xf]
        %v1205 = vld [vmem:[%s5 + $0x348] sm:$0xff]
        %v1206 = vld [vmem:[%s5 + $0x350] sm:$0xff]
        %v1207 = vld [vmem:[%s5 + $0x358] sm:$0xf]
        %v1208 = vld [vmem:[%s5 + $0x35c] sm:$0xff]
        %v1209 = vld [vmem:[%s5 + $0x364] sm:$0xff]
        %v1210 = vld [vmem:[%s5 + $0x36c] sm:$0xf]
        %v1211 = vld [vmem:[%s5 + $0x370] sm:$0xff]
        %v1212 = vld [vmem:[%s5 + $0x378] sm:$0xff]
        %v1213 = vld [vmem:[%s5 + $0x380] sm:$0xf]
        %v1214 = vld [vmem:[%s5 + $0x384] sm:$0xff]
        %v1215 = vld [vmem:[%s5 + $0x38c] sm:$0xff]
        %v1216 = vld [vmem:[%s5 + $0x394] sm:$0xf]
        %v1217 = vld [vmem:[%s5 + $0x398] sm:$0xff]
        %v1218 = vld [vmem:[%s5 + $0x3a0] sm:$0xff]
        %v1219 = vld [vmem:[%s5 + $0x3a8] sm:$0xf]
        %v1220 = vld [vmem:[%s5 + $0x3ac] sm:$0xff]
        %v1221 = vld [vmem:[%s5 + $0x3b4] sm:$0xff]
        %v1222 = vld [vmem:[%s5 + $0x3bc] sm:$0xf]
        %v1223 = vld [vmem:[%s5 + $0x3c0] sm:$0xff]
        %v1224 = vld [vmem:[%s5 + $0x3c8] sm:$0xff]
        %v1225 = vld [vmem:[%s5 + $0x3d0] sm:$0xf]
        %v1226 = vld [vmem:[%s5 + $0x3d4] sm:$0xff]
        %v1227 = vld [vmem:[%s5 + $0x3dc] sm:$0xff]
        %v1228 = vld [vmem:[%s5 + $0x3e4] sm:$0xf]
        %v1229 = vld [vmem:[%s5 + $0x3e8] sm:$0xff]
        %v1230 = vld [vmem:[%s5 + $0x3f0] sm:$0xff]
        %v1231 = vld [vmem:[%s5 + $0x3f8] sm:$0xf]
        %v1232 = vld [vmem:[%s5 + $0x3fc] sm:$0xff]
        %v1233 = vld [vmem:[%s5 + $0x404] sm:$0xff]
        %v1234 = vld [vmem:[%s5 + $0x40c] sm:$0xf]
        %v1235 = vld [vmem:[%s5 + $0x410] sm:$0xff]
        %v1236 = vld [vmem:[%s5 + $0x418] sm:$0xff]
        %v1237 = vld [vmem:[%s5 + $0x420] sm:$0xf]
        %v1238 = vld [vmem:[%s5 + $0x424] sm:$0xff]
        %v1239 = vld [vmem:[%s5 + $0x42c] sm:$0xff]
        %v1240 = vld [vmem:[%s5 + $0x434] sm:$0xf]
        %v1241 = vld [vmem:[%s5 + $0x438] sm:$0xff]
        %v1242 = vld [vmem:[%s5 + $0x440] sm:$0xff]
        %v1243 = vld [vmem:[%s5 + $0x448] sm:$0xf]
        %v1244 = vld [vmem:[%s5 + $0x44c] sm:$0xff]
        %v1245 = vld [vmem:[%s5 + $0x454] sm:$0xff]
        %v1246 = vld [vmem:[%s5 + $0x45c] sm:$0xf]
        %v1247 = vld [vmem:[%s5 + $0x460] sm:$0xff]
        %v1248 = vld [vmem:[%s5 + $0x468] sm:$0xff]
        %v1249 = vld [vmem:[%s5 + $0x470] sm:$0xf]
        %v1250 = vld [vmem:[%s5 + $0x474] sm:$0xff]
        %v1251 = vld [vmem:[%s5 + $0x47c] sm:$0xff]
        %v1252 = vld [vmem:[%s5 + $0x484] sm:$0xf]
        %v1253 = vld [vmem:[%s5 + $0x488] sm:$0xff]
        %v1254 = vld [vmem:[%s5 + $0x490] sm:$0xff]
        %v1255 = vld [vmem:[%s5 + $0x498] sm:$0xf]
        %v1256 = vld [vmem:[%s5 + $0x49c] sm:$0xff]
        %v1257 = vld [vmem:[%s5 + $0x4a4] sm:$0xff]
        %v1258 = vld [vmem:[%s5 + $0x4ac] sm:$0xf]
        %v1259 = vld [vmem:[%s5 + $0x4b0] sm:$0xff]
        %v1260 = vld [vmem:[%s5 + $0x4b8] sm:$0xff]
        %v1261 = vld [vmem:[%s5 + $0x4c0] sm:$0xf]
        %v1262 = vld [vmem:[%s5 + $0x4c4] sm:$0xff]
        %v1263 = vld [vmem:[%s5 + $0x4cc] sm:$0xff]
        %v1264 = vld [vmem:[%s5 + $0x4d4] sm:$0xf]
        %v1265 = vld [vmem:[%s5 + $0x4d8] sm:$0xff]
        %v1266 = vld [vmem:[%s5 + $0x4e0] sm:$0xff]
        %v1267 = vld [vmem:[%s5 + $0x4e8] sm:$0xf]
        %v1268 = vld [vmem:[%s5 + $0x4ec] sm:$0xff]
        %v1269 = vld [vmem:[%s5 + $0x4f4] sm:$0xff]
        %v1270 = vld [vmem:[%s5 + $0x4fc] sm:$0xf]
        %v1271 = vld [vmem:[%s6] sm:$0x1f]
        %v1273 = vlaneseq
        %v1274 = vshrl.u32 %v1273, 7
        %v1275 = vsub.s32 0, %v1274
        %v1276 = vrot.slane %v1271, %v1275
        %v1277 = vlaneseq
        %v1278 = vshrl.u32 %v1277, 7
        %v1279 = vsub.s32 1, %v1278
        %v1280 = vrot.slane %v1271, %v1279
        %v1281 = vlaneseq
        %v1282 = vshrl.u32 %v1281, 7
        %v1283 = vsub.s32 2, %v1282
        %v1284 = vrot.slane %v1271, %v1283
        %v1285 = vlaneseq
        %v1286 = vshrl.u32 %v1285, 7
        %v1287 = vsub.s32 3, %v1286
        %v1288 = vrot.slane %v1271, %v1287
        %v1289 = vlaneseq
        %v1290 = vshrl.u32 %v1289, 7
        %v1291 = vsub.s32 4, %v1290
        %v1292 = vrot.slane %v1271, %v1291
        %v1490 = vunpack.c.l.b16 %v1079
        %v1491 = vunpack.c.h.b16 %v1079
        %v1492 = vunpack.c.l.b16 %v1080
        %v1493 = vunpack.c.h.b16 %v1080
        %v1494 = vunpack.c.l.b16 %v1081
        %v1495 = vunpack.c.l.b16 %v1082
        %v1496 = vunpack.c.h.b16 %v1082
        %v1497 = vunpack.c.l.b16 %v1083
        %v1498 = vunpack.c.h.b16 %v1083
        %v1499 = vunpack.c.l.b16 %v1084
        %v1500 = vunpack.c.l.b16 %v1085
        %v1501 = vunpack.c.h.b16 %v1085
        %v1502 = vunpack.c.l.b16 %v1086
        %v1503 = vunpack.c.h.b16 %v1086
        %v1504 = vunpack.c.l.b16 %v1087
        %v1505 = vunpack.c.l.b16 %v1088
        %v1506 = vunpack.c.h.b16 %v1088
        %v1507 = vunpack.c.l.b16 %v1089
        %v1508 = vunpack.c.h.b16 %v1089
        %v1509 = vunpack.c.l.b16 %v1090
        %v1510 = vunpack.c.l.b16 %v1091
        %v1511 = vunpack.c.h.b16 %v1091
        %v1512 = vunpack.c.l.b16 %v1092
        %v1513 = vunpack.c.h.b16 %v1092
        %v1514 = vunpack.c.l.b16 %v1093
        %v1515 = vunpack.c.l.b16 %v1094
        %v1516 = vunpack.c.h.b16 %v1094
        %v1517 = vunpack.c.l.b16 %v1095
        %v1518 = vunpack.c.h.b16 %v1095
        %v1519 = vunpack.c.l.b16 %v1096
        %v1520 = vunpack.c.l.b16 %v1097
        %v1521 = vunpack.c.h.b16 %v1097
        %v1522 = vunpack.c.l.b16 %v1098
        %v1523 = vunpack.c.h.b16 %v1098
        %v1524 = vunpack.c.l.b16 %v1099
        %v1525 = vunpack.c.l.b16 %v1100
        %v1526 = vunpack.c.h.b16 %v1100
        %v1527 = vunpack.c.l.b16 %v1101
        %v1528 = vunpack.c.h.b16 %v1101
        %v1529 = vunpack.c.l.b16 %v1102
        %v1530 = vunpack.c.l.b16 %v1103
        %v1531 = vunpack.c.h.b16 %v1103
        %v1532 = vunpack.c.l.b16 %v1104
        %v1533 = vunpack.c.h.b16 %v1104
        %v1534 = vunpack.c.l.b16 %v1105
        %v1535 = vunpack.c.l.b16 %v1106
        %v1536 = vunpack.c.h.b16 %v1106
        %v1537 = vunpack.c.l.b16 %v1107
        %v1538 = vunpack.c.h.b16 %v1107
        %v1539 = vunpack.c.l.b16 %v1108
        %v1540 = vunpack.c.l.b16 %v1109
        %v1541 = vunpack.c.h.b16 %v1109
        %v1542 = vunpack.c.l.b16 %v1110
        %v1543 = vunpack.c.h.b16 %v1110
        %v1544 = vunpack.c.l.b16 %v1111
        %v1545 = vunpack.c.l.b16 %v1112
        %v1546 = vunpack.c.h.b16 %v1112
        %v1547 = vunpack.c.l.b16 %v1113
        %v1548 = vunpack.c.h.b16 %v1113
        %v1549 = vunpack.c.l.b16 %v1114
        %v1550 = vunpack.c.l.b16 %v1115
        %v1551 = vunpack.c.h.b16 %v1115
        %v1552 = vunpack.c.l.b16 %v1116
        %v1553 = vunpack.c.h.b16 %v1116
        %v1554 = vunpack.c.l.b16 %v1117
        %v1555 = vunpack.c.l.b16 %v1118
        %v1556 = vunpack.c.h.b16 %v1118
        %v1557 = vunpack.c.l.b16 %v1119
        %v1558 = vunpack.c.h.b16 %v1119
        %v1559 = vunpack.c.l.b16 %v1120
        %v1560 = vunpack.c.l.b16 %v1121
        %v1561 = vunpack.c.h.b16 %v1121
        %v1562 = vunpack.c.l.b16 %v1122
        %v1563 = vunpack.c.h.b16 %v1122
        %v1564 = vunpack.c.l.b16 %v1123
        %v1565 = vunpack.c.l.b16 %v1124
        %v1566 = vunpack.c.h.b16 %v1124
        %v1567 = vunpack.c.l.b16 %v1125
        %v1568 = vunpack.c.h.b16 %v1125
        %v1569 = vunpack.c.l.b16 %v1126
        %v1570 = vunpack.c.l.b16 %v1127
        %v1571 = vunpack.c.h.b16 %v1127
        %v1572 = vunpack.c.l.b16 %v1128
        %v1573 = vunpack.c.h.b16 %v1128
        %v1574 = vunpack.c.l.b16 %v1129
        %v1575 = vunpack.c.l.b16 %v1130
        %v1576 = vunpack.c.h.b16 %v1130
        %v1577 = vunpack.c.l.b16 %v1131
        %v1578 = vunpack.c.h.b16 %v1131
        %v1579 = vunpack.c.l.b16 %v1132
        %v1580 = vunpack.c.l.b16 %v1133
        %v1581 = vunpack.c.h.b16 %v1133
        %v1582 = vunpack.c.l.b16 %v1134
        %v1583 = vunpack.c.h.b16 %v1134
        %v1584 = vunpack.c.l.b16 %v1135
        %v1585 = vunpack.c.l.b16 %v1136
        %v1586 = vunpack.c.h.b16 %v1136
        %v1587 = vunpack.c.l.b16 %v1137
        %v1588 = vunpack.c.h.b16 %v1137
        %v1589 = vunpack.c.l.b16 %v1138
        %v1590 = vunpack.c.l.b16 %v1139
        %v1591 = vunpack.c.h.b16 %v1139
        %v1592 = vunpack.c.l.b16 %v1140
        %v1593 = vunpack.c.h.b16 %v1140
        %v1594 = vunpack.c.l.b16 %v1141
        %v1595 = vunpack.c.l.b16 %v1142
        %v1596 = vunpack.c.h.b16 %v1142
        %v1597 = vunpack.c.l.b16 %v1143
        %v1598 = vunpack.c.h.b16 %v1143
        %v1599 = vunpack.c.l.b16 %v1144
        %v1600 = vunpack.c.l.b16 %v1145
        %v1601 = vunpack.c.h.b16 %v1145
        %v1602 = vunpack.c.l.b16 %v1146
        %v1603 = vunpack.c.h.b16 %v1146
        %v1604 = vunpack.c.l.b16 %v1147
        %v1605 = vunpack.c.l.b16 %v1148
        %v1606 = vunpack.c.h.b16 %v1148
        %v1607 = vunpack.c.l.b16 %v1149
        %v1608 = vunpack.c.h.b16 %v1149
        %v1609 = vunpack.c.l.b16 %v1150
        %v1610 = vunpack.c.l.b16 %v1151
        %v1611 = vunpack.c.h.b16 %v1151
        %v1612 = vunpack.c.l.b16 %v1152
        %v1613 = vunpack.c.h.b16 %v1152
        %v1614 = vunpack.c.l.b16 %v1153
        %v1615 = vunpack.c.l.b16 %v1154
        %v1616 = vunpack.c.h.b16 %v1154
        %v1617 = vunpack.c.l.b16 %v1155
        %v1618 = vunpack.c.h.b16 %v1155
        %v1619 = vunpack.c.l.b16 %v1156
        %v1620 = vunpack.c.l.b16 %v1157
        %v1621 = vunpack.c.h.b16 %v1157
        %v1622 = vunpack.c.l.b16 %v1158
        %v1623 = vunpack.c.h.b16 %v1158
        %v1624 = vunpack.c.l.b16 %v1159
        %v1625 = vunpack.c.l.b16 %v1160
        %v1626 = vunpack.c.h.b16 %v1160
        %v1627 = vunpack.c.l.b16 %v1161
        %v1628 = vunpack.c.h.b16 %v1161
        %v1629 = vunpack.c.l.b16 %v1162
        %v1630 = vunpack.c.l.b16 %v1163
        %v1631 = vunpack.c.h.b16 %v1163
        %v1632 = vunpack.c.l.b16 %v1164
        %v1633 = vunpack.c.h.b16 %v1164
        %v1634 = vunpack.c.l.b16 %v1165
        %v1635 = vunpack.c.l.b16 %v1166
        %v1636 = vunpack.c.h.b16 %v1166
        %v1637 = vunpack.c.l.b16 %v1167
        %v1638 = vunpack.c.h.b16 %v1167
        %v1639 = vunpack.c.l.b16 %v1168
        %v1640 = vunpack.c.l.b16 %v1169
        %v1641 = vunpack.c.h.b16 %v1169
        %v1642 = vunpack.c.l.b16 %v1170
        %v1643 = vunpack.c.h.b16 %v1170
        %v1644 = vunpack.c.l.b16 %v1171
        %v1645 = vunpack.c.l.b16 %v1172
        %v1646 = vunpack.c.h.b16 %v1172
        %v1647 = vunpack.c.l.b16 %v1173
        %v1648 = vunpack.c.h.b16 %v1173
        %v1649 = vunpack.c.l.b16 %v1174
        %v1650 = vunpack.c.l.b16 %v1175
        %v1651 = vunpack.c.h.b16 %v1175
        %v1652 = vunpack.c.l.b16 %v1176
        %v1653 = vunpack.c.h.b16 %v1176
        %v1654 = vunpack.c.l.b16 %v1177
        %v1655 = vunpack.c.l.b16 %v1178
        %v1656 = vunpack.c.h.b16 %v1178
        %v1657 = vunpack.c.l.b16 %v1179
        %v1658 = vunpack.c.h.b16 %v1179
        %v1659 = vunpack.c.l.b16 %v1180
        %v1660 = vunpack.c.l.b16 %v1181
        %v1661 = vunpack.c.h.b16 %v1181
        %v1662 = vunpack.c.l.b16 %v1182
        %v1663 = vunpack.c.h.b16 %v1182
        %v1664 = vunpack.c.l.b16 %v1183
        %v1665 = vunpack.c.l.b16 %v1184
        %v1666 = vunpack.c.h.b16 %v1184
        %v1667 = vunpack.c.l.b16 %v1185
        %v1668 = vunpack.c.h.b16 %v1185
        %v1669 = vunpack.c.l.b16 %v1186
        %v1670 = vunpack.c.l.b16 %v1187
        %v1671 = vunpack.c.h.b16 %v1187
        %v1672 = vunpack.c.l.b16 %v1188
        %v1673 = vunpack.c.h.b16 %v1188
        %v1674 = vunpack.c.l.b16 %v1189
        %v1675 = vunpack.c.l.b16 %v1190
        %v1676 = vunpack.c.h.b16 %v1190
        %v1677 = vunpack.c.l.b16 %v1191
        %v1678 = vunpack.c.h.b16 %v1191
        %v1679 = vunpack.c.l.b16 %v1192
        %v1680 = vunpack.c.l.b16 %v1193
        %v1681 = vunpack.c.h.b16 %v1193
        %v1682 = vunpack.c.l.b16 %v1194
        %v1683 = vunpack.c.h.b16 %v1194
        %v1684 = vunpack.c.l.b16 %v1195
        %v1685 = vunpack.c.l.b16 %v1196
        %v1686 = vunpack.c.h.b16 %v1196
        %v1687 = vunpack.c.l.b16 %v1197
        %v1688 = vunpack.c.h.b16 %v1197
        %v1689 = vunpack.c.l.b16 %v1198
        %v1690 = vunpack.c.l.b16 %v1199
        %v1691 = vunpack.c.h.b16 %v1199
        %v1692 = vunpack.c.l.b16 %v1200
        %v1693 = vunpack.c.h.b16 %v1200
        %v1694 = vunpack.c.l.b16 %v1201
        %v1695 = vunpack.c.l.b16 %v1202
        %v1696 = vunpack.c.h.b16 %v1202
        %v1697 = vunpack.c.l.b16 %v1203
        %v1698 = vunpack.c.h.b16 %v1203
        %v1699 = vunpack.c.l.b16 %v1204
        %v1700 = vunpack.c.l.b16 %v1205
        %v1701 = vunpack.c.h.b16 %v1205
        %v1702 = vunpack.c.l.b16 %v1206
        %v1703 = vunpack.c.h.b16 %v1206
        %v1704 = vunpack.c.l.b16 %v1207
        %v1705 = vunpack.c.l.b16 %v1208
        %v1706 = vunpack.c.h.b16 %v1208
        %v1707 = vunpack.c.l.b16 %v1209
        %v1708 = vunpack.c.h.b16 %v1209
        %v1709 = vunpack.c.l.b16 %v1210
        %v1710 = vunpack.c.l.b16 %v1211
        %v1711 = vunpack.c.h.b16 %v1211
        %v1712 = vunpack.c.l.b16 %v1212
        %v1713 = vunpack.c.h.b16 %v1212
        %v1714 = vunpack.c.l.b16 %v1213
        %v1715 = vunpack.c.l.b16 %v1214
        %v1716 = vunpack.c.h.b16 %v1214
        %v1717 = vunpack.c.l.b16 %v1215
        %v1718 = vunpack.c.h.b16 %v1215
        %v1719 = vunpack.c.l.b16 %v1216
        %v1720 = vunpack.c.l.b16 %v1217
        %v1721 = vunpack.c.h.b16 %v1217
        %v1722 = vunpack.c.l.b16 %v1218
        %v1723 = vunpack.c.h.b16 %v1218
        %v1724 = vunpack.c.l.b16 %v1219
        %v1725 = vunpack.c.l.b16 %v1220
        %v1726 = vunpack.c.h.b16 %v1220
        %v1727 = vunpack.c.l.b16 %v1221
        %v1728 = vunpack.c.h.b16 %v1221
        %v1729 = vunpack.c.l.b16 %v1222
        %v1730 = vunpack.c.l.b16 %v1223
        %v1731 = vunpack.c.h.b16 %v1223
        %v1732 = vunpack.c.l.b16 %v1224
        %v1733 = vunpack.c.h.b16 %v1224
        %v1734 = vunpack.c.l.b16 %v1225
        %v1735 = vunpack.c.l.b16 %v1226
        %v1736 = vunpack.c.h.b16 %v1226
        %v1737 = vunpack.c.l.b16 %v1227
        %v1738 = vunpack.c.h.b16 %v1227
        %v1739 = vunpack.c.l.b16 %v1228
        %v1740 = vunpack.c.l.b16 %v1229
        %v1741 = vunpack.c.h.b16 %v1229
        %v1742 = vunpack.c.l.b16 %v1230
        %v1743 = vunpack.c.h.b16 %v1230
        %v1744 = vunpack.c.l.b16 %v1231
        %v1745 = vunpack.c.l.b16 %v1232
        %v1746 = vunpack.c.h.b16 %v1232
        %v1747 = vunpack.c.l.b16 %v1233
        %v1748 = vunpack.c.h.b16 %v1233
        %v1749 = vunpack.c.l.b16 %v1234
        %v1750 = vunpack.c.l.b16 %v1235
        %v1751 = vunpack.c.h.b16 %v1235
        %v1752 = vunpack.c.l.b16 %v1236
        %v1753 = vunpack.c.h.b16 %v1236
        %v1754 = vunpack.c.l.b16 %v1237
        %v1755 = vunpack.c.l.b16 %v1238
        %v1756 = vunpack.c.h.b16 %v1238
        %v1757 = vunpack.c.l.b16 %v1239
        %v1758 = vunpack.c.h.b16 %v1239
        %v1759 = vunpack.c.l.b16 %v1240
        %v1760 = vunpack.c.l.b16 %v1241
        %v1761 = vunpack.c.h.b16 %v1241
        %v1762 = vunpack.c.l.b16 %v1242
        %v1763 = vunpack.c.h.b16 %v1242
        %v1764 = vunpack.c.l.b16 %v1243
        %v1765 = vunpack.c.l.b16 %v1244
        %v1766 = vunpack.c.h.b16 %v1244
        %v1767 = vunpack.c.l.b16 %v1245
        %v1768 = vunpack.c.h.b16 %v1245
        %v1769 = vunpack.c.l.b16 %v1246
        %v1770 = vunpack.c.l.b16 %v1247
        %v1771 = vunpack.c.h.b16 %v1247
        %v1772 = vunpack.c.l.b16 %v1248
        %v1773 = vunpack.c.h.b16 %v1248
        %v1774 = vunpack.c.l.b16 %v1249
        %v1775 = vunpack.c.l.b16 %v1250
        %v1776 = vunpack.c.h.b16 %v1250
        %v1777 = vunpack.c.l.b16 %v1251
        %v1778 = vunpack.c.h.b16 %v1251
        %v1779 = vunpack.c.l.b16 %v1252
        %v1780 = vunpack.c.l.b16 %v1253
        %v1781 = vunpack.c.h.b16 %v1253
        %v1782 = vunpack.c.l.b16 %v1254
        %v1783 = vunpack.c.h.b16 %v1254
        %v1784 = vunpack.c.l.b16 %v1255
        %v1785 = vunpack.c.l.b16 %v1256
        %v1786 = vunpack.c.h.b16 %v1256
        %v1787 = vunpack.c.l.b16 %v1257
        %v1788 = vunpack.c.h.b16 %v1257
        %v1789 = vunpack.c.l.b16 %v1258
        %v1790 = vunpack.c.l.b16 %v1259
        %v1791 = vunpack.c.h.b16 %v1259
        %v1792 = vunpack.c.l.b16 %v1260
        %v1793 = vunpack.c.h.b16 %v1260
        %v1794 = vunpack.c.l.b16 %v1261
        %v1795 = vunpack.c.l.b16 %v1262
        %v1796 = vunpack.c.h.b16 %v1262
        %v1797 = vunpack.c.l.b16 %v1263
        %v1798 = vunpack.c.h.b16 %v1263
        %v1799 = vunpack.c.l.b16 %v1264
        %v1800 = vunpack.c.l.b16 %v1265
        %v1801 = vunpack.c.h.b16 %v1265
        %v1802 = vunpack.c.l.b16 %v1266
        %v1803 = vunpack.c.h.b16 %v1266
        %v1804 = vunpack.c.l.b16 %v1267
        %v1805 = vunpack.c.l.b16 %v1268
        %v1806 = vunpack.c.h.b16 %v1268
        %v1807 = vunpack.c.l.b16 %v1269
        %v1808 = vunpack.c.h.b16 %v1269
        %v1809 = vunpack.c.l.b16 %v1270
        %v1810 = vpack.c.b16 %v1495, %v1490
        %v1811 = vpack.c.b16 %v1496, %v1491
        %v1812 = vpack.c.b16 %v1497, %v1492
        %v1813 = vpack.c.b16 %v1498, %v1493
        %v1814 = vpack.c.b16 %v1499, %v1494
        %v1815 = vpack.c.b16 %v1505, %v1500
        %v1816 = vpack.c.b16 %v1506, %v1501
        %v1817 = vpack.c.b16 %v1507, %v1502
        %v1818 = vpack.c.b16 %v1508, %v1503
        %v1819 = vpack.c.b16 %v1509, %v1504
        %v1820 = vpack.c.b16 %v1515, %v1510
        %v1821 = vpack.c.b16 %v1516, %v1511
        %v1822 = vpack.c.b16 %v1517, %v1512
        %v1823 = vpack.c.b16 %v1518, %v1513
        %v1824 = vpack.c.b16 %v1519, %v1514
        %v1825 = vpack.c.b16 %v1525, %v1520
        %v1826 = vpack.c.b16 %v1526, %v1521
        %v1827 = vpack.c.b16 %v1527, %v1522
        %v1828 = vpack.c.b16 %v1528, %v1523
        %v1829 = vpack.c.b16 %v1529, %v1524
        %v1830 = vpack.c.b16 %v1535, %v1530
        %v1831 = vpack.c.b16 %v1536, %v1531
        %v1832 = vpack.c.b16 %v1537, %v1532
        %v1833 = vpack.c.b16 %v1538, %v1533
        %v1834 = vpack.c.b16 %v1539, %v1534
        %v1835 = vpack.c.b16 %v1545, %v1540
        %v1836 = vpack.c.b16 %v1546, %v1541
        %v1837 = vpack.c.b16 %v1547, %v1542
        %v1838 = vpack.c.b16 %v1548, %v1543
        %v1839 = vpack.c.b16 %v1549, %v1544
        %v1840 = vpack.c.b16 %v1555, %v1550
        %v1841 = vpack.c.b16 %v1556, %v1551
        %v1842 = vpack.c.b16 %v1557, %v1552
        %v1843 = vpack.c.b16 %v1558, %v1553
        %v1844 = vpack.c.b16 %v1559, %v1554
        %v1845 = vpack.c.b16 %v1565, %v1560
        %v1846 = vpack.c.b16 %v1566, %v1561
        %v1847 = vpack.c.b16 %v1567, %v1562
        %v1848 = vpack.c.b16 %v1568, %v1563
        %v1849 = vpack.c.b16 %v1569, %v1564
        %v1850 = vpack.c.b16 %v1575, %v1570
        %v1851 = vpack.c.b16 %v1576, %v1571
        %v1852 = vpack.c.b16 %v1577, %v1572
        %v1853 = vpack.c.b16 %v1578, %v1573
        %v1854 = vpack.c.b16 %v1579, %v1574
        %v1855 = vpack.c.b16 %v1585, %v1580
        %v1856 = vpack.c.b16 %v1586, %v1581
        %v1857 = vpack.c.b16 %v1587, %v1582
        %v1858 = vpack.c.b16 %v1588, %v1583
        %v1859 = vpack.c.b16 %v1589, %v1584
        %v1860 = vpack.c.b16 %v1595, %v1590
        %v1861 = vpack.c.b16 %v1596, %v1591
        %v1862 = vpack.c.b16 %v1597, %v1592
        %v1863 = vpack.c.b16 %v1598, %v1593
        %v1864 = vpack.c.b16 %v1599, %v1594
        %v1865 = vpack.c.b16 %v1605, %v1600
        %v1866 = vpack.c.b16 %v1606, %v1601
        %v1867 = vpack.c.b16 %v1607, %v1602
        %v1868 = vpack.c.b16 %v1608, %v1603
        %v1869 = vpack.c.b16 %v1609, %v1604
        %v1870 = vpack.c.b16 %v1615, %v1610
        %v1871 = vpack.c.b16 %v1616, %v1611
        %v1872 = vpack.c.b16 %v1617, %v1612
        %v1873 = vpack.c.b16 %v1618, %v1613
        %v1874 = vpack.c.b16 %v1619, %v1614
        %v1875 = vpack.c.b16 %v1625, %v1620
        %v1876 = vpack.c.b16 %v1626, %v1621
        %v1877 = vpack.c.b16 %v1627, %v1622
        %v1878 = vpack.c.b16 %v1628, %v1623
        %v1879 = vpack.c.b16 %v1629, %v1624
        %v1880 = vpack.c.b16 %v1635, %v1630
        %v1881 = vpack.c.b16 %v1636, %v1631
        %v1882 = vpack.c.b16 %v1637, %v1632
        %v1883 = vpack.c.b16 %v1638, %v1633
        %v1884 = vpack.c.b16 %v1639, %v1634
        %v1885 = vpack.c.b16 %v1645, %v1640
        %v1886 = vpack.c.b16 %v1646, %v1641
        %v1887 = vpack.c.b16 %v1647, %v1642
        %v1888 = vpack.c.b16 %v1648, %v1643
        %v1889 = vpack.c.b16 %v1649, %v1644
        %v1890 = vpack.c.b16 %v1655, %v1650
        %v1891 = vpack.c.b16 %v1656, %v1651
        %v1892 = vpack.c.b16 %v1657, %v1652
        %v1893 = vpack.c.b16 %v1658, %v1653
        %v1894 = vpack.c.b16 %v1659, %v1654
        %v1895 = vpack.c.b16 %v1665, %v1660
        %v1896 = vpack.c.b16 %v1666, %v1661
        %v1897 = vpack.c.b16 %v1667, %v1662
        %v1898 = vpack.c.b16 %v1668, %v1663
        %v1899 = vpack.c.b16 %v1669, %v1664
        %v1900 = vpack.c.b16 %v1675, %v1670
        %v1901 = vpack.c.b16 %v1676, %v1671
        %v1902 = vpack.c.b16 %v1677, %v1672
        %v1903 = vpack.c.b16 %v1678, %v1673
        %v1904 = vpack.c.b16 %v1679, %v1674
        %v1905 = vpack.c.b16 %v1685, %v1680
        %v1906 = vpack.c.b16 %v1686, %v1681
        %v1907 = vpack.c.b16 %v1687, %v1682
        %v1908 = vpack.c.b16 %v1688, %v1683
        %v1909 = vpack.c.b16 %v1689, %v1684
        %v1910 = vpack.c.b16 %v1695, %v1690
        %v1911 = vpack.c.b16 %v1696, %v1691
        %v1912 = vpack.c.b16 %v1697, %v1692
        %v1913 = vpack.c.b16 %v1698, %v1693
        %v1914 = vpack.c.b16 %v1699, %v1694
        %v1915 = vpack.c.b16 %v1705, %v1700
        %v1916 = vpack.c.b16 %v1706, %v1701
        %v1917 = vpack.c.b16 %v1707, %v1702
        %v1918 = vpack.c.b16 %v1708, %v1703
        %v1919 = vpack.c.b16 %v1709, %v1704
        %v1920 = vpack.c.b16 %v1715, %v1710
        %v1921 = vpack.c.b16 %v1716, %v1711
        %v1922 = vpack.c.b16 %v1717, %v1712
        %v1923 = vpack.c.b16 %v1718, %v1713
        %v1924 = vpack.c.b16 %v1719, %v1714
        %v1925 = vpack.c.b16 %v1725, %v1720
        %v1926 = vpack.c.b16 %v1726, %v1721
        %v1927 = vpack.c.b16 %v1727, %v1722
        %v1928 = vpack.c.b16 %v1728, %v1723
        %v1929 = vpack.c.b16 %v1729, %v1724
        %v1930 = vpack.c.b16 %v1735, %v1730
        %v1931 = vpack.c.b16 %v1736, %v1731
        %v1932 = vpack.c.b16 %v1737, %v1732
        %v1933 = vpack.c.b16 %v1738, %v1733
        %v1934 = vpack.c.b16 %v1739, %v1734
        %v1935 = vpack.c.b16 %v1745, %v1740
        %v1936 = vpack.c.b16 %v1746, %v1741
        %v1937 = vpack.c.b16 %v1747, %v1742
        %v1938 = vpack.c.b16 %v1748, %v1743
        %v1939 = vpack.c.b16 %v1749, %v1744
        %v1940 = vpack.c.b16 %v1755, %v1750
        %v1941 = vpack.c.b16 %v1756, %v1751
        %v1942 = vpack.c.b16 %v1757, %v1752
        %v1943 = vpack.c.b16 %v1758, %v1753
        %v1944 = vpack.c.b16 %v1759, %v1754
        %v1945 = vpack.c.b16 %v1765, %v1760
        %v1946 = vpack.c.b16 %v1766, %v1761
        %v1947 = vpack.c.b16 %v1767, %v1762
        %v1948 = vpack.c.b16 %v1768, %v1763
        %v1949 = vpack.c.b16 %v1769, %v1764
        %v1950 = vpack.c.b16 %v1775, %v1770
        %v1951 = vpack.c.b16 %v1776, %v1771
        %v1952 = vpack.c.b16 %v1777, %v1772
        %v1953 = vpack.c.b16 %v1778, %v1773
        %v1954 = vpack.c.b16 %v1779, %v1774
        %v1955 = vpack.c.b16 %v1785, %v1780
        %v1956 = vpack.c.b16 %v1786, %v1781
        %v1957 = vpack.c.b16 %v1787, %v1782
        %v1958 = vpack.c.b16 %v1788, %v1783
        %v1959 = vpack.c.b16 %v1789, %v1784
        %v1960 = vpack.c.b16 %v1795, %v1790
        %v1961 = vpack.c.b16 %v1796, %v1791
        %v1962 = vpack.c.b16 %v1797, %v1792
        %v1963 = vpack.c.b16 %v1798, %v1793
        %v1964 = vpack.c.b16 %v1799, %v1794
        %v1965 = vpack.c.b16 %v1805, %v1800
        %v1966 = vpack.c.b16 %v1806, %v1801
        %v1967 = vpack.c.b16 %v1807, %v1802
        %v1968 = vpack.c.b16 %v1808, %v1803
        %v1969 = vpack.c.b16 %v1809, %v1804
        %2130 = vmatprep.subr.bf16.mxu0 %v1811
        %2131 = vmatpush1.bf16.msra.mxu0 %v1810
        %2132 = vmatprep.subr.bf16.mxu0 %v1816
        %2133 = vmatpush1.bf16.msra.mxu0 %v1815
        %2134 = vmatprep.subr.bf16.mxu0 %v1821
        %2135 = vmatpush1.bf16.msra.mxu0 %v1820
        %2136 = vmatprep.subr.bf16.mxu0 %v1826
        %2137 = vmatpush1.bf16.msra.mxu0 %v1825
        %2138 = vmatprep.subr.bf16.mxu0 %v1831
        %2139 = vmatpush1.bf16.msra.mxu0 %v1830
        %2140 = vmatprep.subr.bf16.mxu0 %v1836
        %2141 = vmatpush1.bf16.msra.mxu0 %v1835
        %2142 = vmatprep.subr.bf16.mxu0 %v1841
        %2143 = vmatpush1.bf16.msra.mxu0 %v1840
        %2144 = vmatprep.subr.bf16.mxu0 %v1846
        %2145 = vmatpush1.bf16.msra.mxu0 %v1845
        %2146 = vmatprep.subr.bf16.mxu0 %v1851
        %2147 = vmatpush1.bf16.msra.mxu0 %v1850
        %2148 = vmatprep.subr.bf16.mxu0 %v1856
        %2149 = vmatpush1.bf16.msra.mxu0 %v1855
        %2150 = vmatprep.subr.bf16.mxu0 %v1861
        %2151 = vmatpush1.bf16.msra.mxu0 %v1860
        %2152 = vmatprep.subr.bf16.mxu0 %v1866
        %2153 = vmatpush1.bf16.msra.mxu0 %v1865
        %2154 = vmatprep.subr.bf16.mxu0 %v1871
        %2155 = vmatpush1.bf16.msra.mxu0 %v1870
        %2156 = vmatprep.subr.bf16.mxu0 %v1876
        %2157 = vmatpush1.bf16.msra.mxu0 %v1875
        %2158 = vmatprep.subr.bf16.mxu0 %v1881
        %2159 = vmatpush1.bf16.msra.mxu0 %v1880
        %2160 = vmatprep.subr.bf16.mxu0 %v1886
        %2161 = vmatpush1.bf16.msra.mxu0 %v1885
        %2162 = vmatprep.mubr.bf16.mxu0 %v1076
        %2163 = vmatmul.mubr.bf16.gmra.mrb[0].mxu0 %v1075
        %v2164 = vpop.f32.mrb[0].mxu0
        %v2165 = vadd.f32 %v1276, %v2164
        %v2166 = vpop.f32.mrb[0].mxu0
        %v2167 = vadd.f32 %v1280, %v2166
        %v2168 = vpop.f32.mrb[0].mxu0
        %v2169 = vpop.f32.mrb[0].mxu0
        %2170 = vdwg.mxu0
        %2171 = vmatprep.subr.bf16.mxu0 %v1891
        %2172 = vmatpush1.bf16.msra.mxu0 %v1890
        %2173 = vmatprep.subr.bf16.mxu0 %v1896
        %2174 = vmatpush1.bf16.msra.mxu0 %v1895
        %2175 = vmatprep.subr.bf16.mxu0 %v1901
        %2176 = vmatpush1.bf16.msra.mxu0 %v1900
        %2177 = vmatprep.subr.bf16.mxu0 %v1906
        %2178 = vmatpush1.bf16.msra.mxu0 %v1905
        %2179 = vmatprep.subr.bf16.mxu0 %v1911
        %2180 = vmatpush1.bf16.msra.mxu0 %v1910
        %2181 = vmatprep.subr.bf16.mxu0 %v1916
        %2182 = vmatpush1.bf16.msra.mxu0 %v1915
        %2183 = vmatprep.subr.bf16.mxu0 %v1921
        %2184 = vmatpush1.bf16.msra.mxu0 %v1920
        %2185 = vmatprep.subr.bf16.mxu0 %v1926
        %2186 = vmatpush1.bf16.msra.mxu0 %v1925
        %2187 = vmatprep.subr.bf16.mxu0 %v1931
        %2188 = vmatpush1.bf16.msra.mxu0 %v1930
        %2189 = vmatprep.subr.bf16.mxu0 %v1936
        %2190 = vmatpush1.bf16.msra.mxu0 %v1935
        %2191 = vmatprep.subr.bf16.mxu0 %v1941
        %2192 = vmatpush1.bf16.msra.mxu0 %v1940
        %2193 = vmatprep.subr.bf16.mxu0 %v1946
        %2194 = vmatpush1.bf16.msra.mxu0 %v1945
        %2195 = vmatprep.subr.bf16.mxu0 %v1951
        %2196 = vmatpush1.bf16.msra.mxu0 %v1950
        %2197 = vmatprep.subr.bf16.mxu0 %v1956
        %2198 = vmatpush1.bf16.msra.mxu0 %v1955
        %2199 = vmatprep.subr.bf16.mxu0 %v1961
        %2200 = vmatpush1.bf16.msra.mxu0 %v1960
        %2201 = vmatprep.subr.bf16.mxu0 %v1966
        %2202 = vmatpush1.bf16.msra.mxu0 %v1965
        %2203 = vmatprep.mubr.bf16.mxu0 %v1078
        %2204 = vmatmul.mubr.bf16.gmra.mrb[0].mxu0 %v1077
        %v2205 = vpop.f32.mrb[0].mxu0
        %v2206 = vadd.f32 %v2165, %v2205
        %v2207 = vpop.f32.mrb[0].mxu0
        %v2208 = vadd.f32 %v2167, %v2207
        %v2209 = vpop.f32.mrb[0].mxu0
        %v2210 = vpop.f32.mrb[0].mxu0
        %2211 = vdwg.mxu0
        %2212 = vmatprep.subr.bf16.mxu0 %v1813
        %2213 = vmatpush1.bf16.msra.mxu0 %v1812
        %2214 = vmatprep.subr.bf16.mxu0 %v1818
        %2215 = vmatpush1.bf16.msra.mxu0 %v1817
        %2216 = vmatprep.subr.bf16.mxu0 %v1823
        %2217 = vmatpush1.bf16.msra.mxu0 %v1822
        %2218 = vmatprep.subr.bf16.mxu0 %v1828
        %2219 = vmatpush1.bf16.msra.mxu0 %v1827
        %2220 = vmatprep.subr.bf16.mxu0 %v1833
        %2221 = vmatpush1.bf16.msra.mxu0 %v1832
        %2222 = vmatprep.subr.bf16.mxu0 %v1838
        %2223 = vmatpush1.bf16.msra.mxu0 %v1837
        %2224 = vmatprep.subr.bf16.mxu0 %v1843
        %2225 = vmatpush1.bf16.msra.mxu0 %v1842
        %2226 = vmatprep.subr.bf16.mxu0 %v1848
        %2227 = vmatpush1.bf16.msra.mxu0 %v1847
        %2228 = vmatprep.subr.bf16.mxu0 %v1853
        %2229 = vmatpush1.bf16.msra.mxu0 %v1852
        %2230 = vmatprep.subr.bf16.mxu0 %v1858
        %2231 = vmatpush1.bf16.msra.mxu0 %v1857
        %2232 = vmatprep.subr.bf16.mxu0 %v1863
        %2233 = vmatpush1.bf16.msra.mxu0 %v1862
        %2234 = vmatprep.subr.bf16.mxu0 %v1868
        %2235 = vmatpush1.bf16.msra.mxu0 %v1867
        %2236 = vmatprep.subr.bf16.mxu0 %v1873
        %2237 = vmatpush1.bf16.msra.mxu0 %v1872
        %2238 = vmatprep.subr.bf16.mxu0 %v1878
        %2239 = vmatpush1.bf16.msra.mxu0 %v1877
        %2240 = vmatprep.subr.bf16.mxu0 %v1883
        %2241 = vmatpush1.bf16.msra.mxu0 %v1882
        %2242 = vmatprep.subr.bf16.mxu0 %v1888
        %2243 = vmatpush1.bf16.msra.mxu0 %v1887
        %2244 = vmatprep.mubr.bf16.mxu0 %v1076
        %2245 = vmatmul.mubr.bf16.gmra.mrb[0].mxu0 %v1075
        %v2246 = vpop.f32.mrb[0].mxu0
        %v2247 = vadd.f32 %v1284, %v2246
        %v2248 = vpop.f32.mrb[0].mxu0
        %v2249 = vadd.f32 %v1288, %v2248
        %v2250 = vpop.f32.mrb[0].mxu0
        %v2251 = vpop.f32.mrb[0].mxu0
        %2252 = vdwg.mxu0
        %2253 = vmatprep.subr.bf16.mxu0 %v1893
        %2254 = vmatpush1.bf16.msra.mxu0 %v1892
        %2255 = vmatprep.subr.bf16.mxu0 %v1898
        %2256 = vmatpush1.bf16.msra.mxu0 %v1897
        %2257 = vmatprep.subr.bf16.mxu0 %v1903
        %2258 = vmatpush1.bf16.msra.mxu0 %v1902
        %2259 = vmatprep.subr.bf16.mxu0 %v1908
        %2260 = vmatpush1.bf16.msra.mxu0 %v1907
        %2261 = vmatprep.subr.bf16.mxu0 %v1913
        %2262 = vmatpush1.bf16.msra.mxu0 %v1912
        %2263 = vmatprep.subr.bf16.mxu0 %v1918
        %2264 = vmatpush1.bf16.msra.mxu0 %v1917
        %2265 = vmatprep.subr.bf16.mxu0 %v1923
        %2266 = vmatpush1.bf16.msra.mxu0 %v1922
        %2267 = vmatprep.subr.bf16.mxu0 %v1928
        %2268 = vmatpush1.bf16.msra.mxu0 %v1927
        %2269 = vmatprep.subr.bf16.mxu0 %v1933
        %2270 = vmatpush1.bf16.msra.mxu0 %v1932
        %2271 = vmatprep.subr.bf16.mxu0 %v1938
        %2272 = vmatpush1.bf16.msra.mxu0 %v1937
        %2273 = vmatprep.subr.bf16.mxu0 %v1943
        %2274 = vmatpush1.bf16.msra.mxu0 %v1942
        %2275 = vmatprep.subr.bf16.mxu0 %v1948
        %2276 = vmatpush1.bf16.msra.mxu0 %v1947
        %2277 = vmatprep.subr.bf16.mxu0 %v1953
        %2278 = vmatpush1.bf16.msra.mxu0 %v1952
        %2279 = vmatprep.subr.bf16.mxu0 %v1958
        %2280 = vmatpush1.bf16.msra.mxu0 %v1957
        %2281 = vmatprep.subr.bf16.mxu0 %v1963
        %2282 = vmatpush1.bf16.msra.mxu0 %v1962
        %2283 = vmatprep.subr.bf16.mxu0 %v1968
        %2284 = vmatpush1.bf16.msra.mxu0 %v1967
        %2285 = vmatprep.mubr.bf16.mxu0 %v1078
        %2286 = vmatmul.mubr.bf16.gmra.mrb[0].mxu0 %v1077
        %v2287 = vpop.f32.mrb[0].mxu0
        %v2288 = vadd.f32 %v2247, %v2287
        %v2289 = vpop.f32.mrb[0].mxu0
        %v2290 = vadd.f32 %v2249, %v2289
        %v2291 = vpop.f32.mrb[0].mxu0
        %v2292 = vpop.f32.mrb[0].mxu0
        %2293 = vdwg.mxu0
        %2294 = vmatprep.subr.bf16.mxu0 0
        %2295 = vmatpush1.bf16.msra.mxu0 %v1814
        %2296 = vmatprep.subr.bf16.mxu0 0
        %2297 = vmatpush1.bf16.msra.mxu0 %v1819
        %2298 = vmatprep.subr.bf16.mxu0 0
        %2299 = vmatpush1.bf16.msra.mxu0 %v1824
        %2300 = vmatprep.subr.bf16.mxu0 0
        %2301 = vmatpush1.bf16.msra.mxu0 %v1829
        %2302 = vmatprep.subr.bf16.mxu0 0
        %2303 = vmatpush1.bf16.msra.mxu0 %v1834
        %2304 = vmatprep.subr.bf16.mxu0 0
        %2305 = vmatpush1.bf16.msra.mxu0 %v1839
        %2306 = vmatprep.subr.bf16.mxu0 0
        %2307 = vmatpush1.bf16.msra.mxu0 %v1844
        %2308 = vmatprep.subr.bf16.mxu0 0
        %2309 = vmatpush1.bf16.msra.mxu0 %v1849
        %2310 = vmatprep.subr.bf16.mxu0 0
        %2311 = vmatpush1.bf16.msra.mxu0 %v1854
        %2312 = vmatprep.subr.bf16.mxu0 0
        %2313 = vmatpush1.bf16.msra.mxu0 %v1859
        %2314 = vmatprep.subr.bf16.mxu0 0
        %2315 = vmatpush1.bf16.msra.mxu0 %v1864
        %2316 = vmatprep.subr.bf16.mxu0 0
        %2317 = vmatpush1.bf16.msra.mxu0 %v1869
        %2318 = vmatprep.subr.bf16.mxu0 0
        %2319 = vmatpush1.bf16.msra.mxu0 %v1874
        %2320 = vmatprep.subr.bf16.mxu0 0
        %2321 = vmatpush1.bf16.msra.mxu0 %v1879
        %2322 = vmatprep.subr.bf16.mxu0 0
        %2323 = vmatpush1.bf16.msra.mxu0 %v1884
        %2324 = vmatprep.subr.bf16.mxu0 0
        %2325 = vmatpush1.bf16.msra.mxu0 %v1889
        %2326 = vmatprep.mubr.bf16.mxu0 %v1076
        %2327 = vmatmul.mubr.bf16.gmra.mrb[0].mxu0 %v1075
        %v2328 = vpop.f32.mrb[0].mxu0
        %v2329 = vadd.f32 %v1292, %v2328
        %v2330 = vpop.f32.mrb[0].mxu0
        %v2331 = vpop.f32.mrb[0].mxu0
        %v2332 = vpop.f32.mrb[0].mxu0
        %2333 = vdwg.mxu0
        %2334 = vmatprep.subr.bf16.mxu0 0
        %2335 = vmatpush1.bf16.msra.mxu0 %v1894
        %2336 = vmatprep.subr.bf16.mxu0 0
        %2337 = vmatpush1.bf16.msra.mxu0 %v1899
        %2338 = vmatprep.subr.bf16.mxu0 0
        %2339 = vmatpush1.bf16.msra.mxu0 %v1904
        %2340 = vmatprep.subr.bf16.mxu0 0
        %2341 = vmatpush1.bf16.msra.mxu0 %v1909
        %2342 = vmatprep.subr.bf16.mxu0 0
        %2343 = vmatpush1.bf16.msra.mxu0 %v1914
        %2344 = vmatprep.subr.bf16.mxu0 0
        %2345 = vmatpush1.bf16.msra.mxu0 %v1919
        %2346 = vmatprep.subr.bf16.mxu0 0
        %2347 = vmatpush1.bf16.msra.mxu0 %v1924
        %2348 = vmatprep.subr.bf16.mxu0 0
        %2349 = vmatpush1.bf16.msra.mxu0 %v1929
        %2350 = vmatprep.subr.bf16.mxu0 0
        %2351 = vmatpush1.bf16.msra.mxu0 %v1934
        %2352 = vmatprep.subr.bf16.mxu0 0
        %2353 = vmatpush1.bf16.msra.mxu0 %v1939
        %2354 = vmatprep.subr.bf16.mxu0 0
        %2355 = vmatpush1.bf16.msra.mxu0 %v1944
        %2356 = vmatprep.subr.bf16.mxu0 0
        %2357 = vmatpush1.bf16.msra.mxu0 %v1949
        %2358 = vmatprep.subr.bf16.mxu0 0
        %2359 = vmatpush1.bf16.msra.mxu0 %v1954
        %2360 = vmatprep.subr.bf16.mxu0 0
        %2361 = vmatpush1.bf16.msra.mxu0 %v1959
        %2362 = vmatprep.subr.bf16.mxu0 0
        %2363 = vmatpush1.bf16.msra.mxu0 %v1964
        %2364 = vmatprep.subr.bf16.mxu0 0
        %2365 = vmatpush1.bf16.msra.mxu0 %v1969
        %2366 = vmatprep.mubr.bf16.mxu0 %v1078
        %2367 = vmatmul.mubr.bf16.gmra.mrb[0].mxu0 %v1077
        %v2368 = vpop.f32.mrb[0].mxu0
        %v2369 = vadd.f32 %v2329, %v2368
        %v2370 = vpop.f32.mrb[0].mxu0
        %v2371 = vpop.f32.mrb[0].mxu0
        %v2372 = vpop.f32.mrb[0].mxu0
        %2373 = vdwg.mxu0
        %v2374 = vmax.f32 %v2206, 0.0
        %v2375 = vmax.f32 %v2208, 0.0
        %v2376 = vmax.f32 %v2288, 0.0
        %v2377 = vmax.f32 %v2290, 0.0
        %v2378 = vmax.f32 %v2369, 0.0
        %v2379 = vpack.c.bf16 %v2374, %v2374
        %v2380 = vpack.c.bf16 %v2375, %v2375
        %v2381 = vpack.c.bf16 %v2376, %v2376
        %v2382 = vpack.c.bf16 %v2377, %v2377
        %v2383 = vpack.c.bf16 %v2378, %v2378
        %v2384 = vld [vmem:[%s7] sm:$0xff]
        %v2385 = vld [vmem:[%s7 + $0x8] sm:$0xf]
        %v2386 = vld [vmem:[%s7 + $0xc] sm:$0xff]
        %v2387 = vld [vmem:[%s7 + $0x14] sm:$0xf]
        %v2388 = vld [vmem:[%s7 + $0x18] sm:$0xff]
        %v2389 = vld [vmem:[%s7 + $0x20] sm:$0xf]
        %v2390 = vld [vmem:[%s7 + $0x24] sm:$0xff]
        %v2391 = vld [vmem:[%s7 + $0x2c] sm:$0xf]
        %v2392 = vld [vmem:[%s7 + $0x30] sm:$0xff]
        %v2393 = vld [vmem:[%s7 + $0x38] sm:$0xf]
        %v2394 = vld [vmem:[%s7 + $0x3c] sm:$0xff]
        %v2395 = vld [vmem:[%s7 + $0x44] sm:$0xf]
        %v2396 = vld [vmem:[%s7 + $0x48] sm:$0xff]
        %v2397 = vld [vmem:[%s7 + $0x50] sm:$0xf]
        %v2398 = vld [vmem:[%s7 + $0x54] sm:$0xff]
        %v2399 = vld [vmem:[%s7 + $0x5c] sm:$0xf]
        %v2400 = vld [vmem:[%s7 + $0x60] sm:$0xff]
        %v2401 = vld [vmem:[%s7 + $0x68] sm:$0xf]
        %v2402 = vld [vmem:[%s7 + $0x6c] sm:$0xff]
        %v2403 = vld [vmem:[%s7 + $0x74] sm:$0xf]
        %v2404 = vld [vmem:[%s7 + $0x78] sm:$0xff]
        %v2405 = vld [vmem:[%s7 + $0x80] sm:$0xf]
        %v2406 = vld [vmem:[%s7 + $0x84] sm:$0xff]
        %v2407 = vld [vmem:[%s7 + $0x8c] sm:$0xf]
        %v2408 = vld [vmem:[%s7 + $0x90] sm:$0xff]
        %v2409 = vld [vmem:[%s7 + $0x98] sm:$0xf]
        %v2410 = vld [vmem:[%s7 + $0x9c] sm:$0xff]
        %v2411 = vld [vmem:[%s7 + $0xa4] sm:$0xf]
        %v2412 = vld [vmem:[%s7 + $0xa8] sm:$0xff]
        %v2413 = vld [vmem:[%s7 + $0xb0] sm:$0xf]
        %v2414 = vld [vmem:[%s7 + $0xb4] sm:$0xff]
        %v2415 = vld [vmem:[%s7 + $0xbc] sm:$0xf]
        %v2416 = vld [vmem:[%s7 + $0xc0] sm:$0xff]
        %v2417 = vld [vmem:[%s7 + $0xc8] sm:$0xf]
        %v2418 = vld [vmem:[%s7 + $0xcc] sm:$0xff]
        %v2419 = vld [vmem:[%s7 + $0xd4] sm:$0xf]
        %v2420 = vld [vmem:[%s7 + $0xd8] sm:$0xff]
        %v2421 = vld [vmem:[%s7 + $0xe0] sm:$0xf]
        %v2422 = vld [vmem:[%s7 + $0xe4] sm:$0xff]
        %v2423 = vld [vmem:[%s7 + $0xec] sm:$0xf]
        %v2424 = vld [vmem:[%s7 + $0xf0] sm:$0xff]
        %v2425 = vld [vmem:[%s7 + $0xf8] sm:$0xf]
        %v2426 = vld [vmem:[%s7 + $0xfc] sm:$0xff]
        %v2427 = vld [vmem:[%s7 + $0x104] sm:$0xf]
        %v2428 = vld [vmem:[%s7 + $0x108] sm:$0xff]
        %v2429 = vld [vmem:[%s7 + $0x110] sm:$0xf]
        %v2430 = vld [vmem:[%s7 + $0x114] sm:$0xff]
        %v2431 = vld [vmem:[%s7 + $0x11c] sm:$0xf]
        %v2432 = vld [vmem:[%s7 + $0x120] sm:$0xff]
        %v2433 = vld [vmem:[%s7 + $0x128] sm:$0xf]
        %v2434 = vld [vmem:[%s7 + $0x12c] sm:$0xff]
        %v2435 = vld [vmem:[%s7 + $0x134] sm:$0xf]
        %v2436 = vld [vmem:[%s7 + $0x138] sm:$0xff]
        %v2437 = vld [vmem:[%s7 + $0x140] sm:$0xf]
        %v2438 = vld [vmem:[%s7 + $0x144] sm:$0xff]
        %v2439 = vld [vmem:[%s7 + $0x14c] sm:$0xf]
        %v2440 = vld [vmem:[%s7 + $0x150] sm:$0xff]
        %v2441 = vld [vmem:[%s7 + $0x158] sm:$0xf]
        %v2442 = vld [vmem:[%s7 + $0x15c] sm:$0xff]
        %v2443 = vld [vmem:[%s7 + $0x164] sm:$0xf]
        %v2444 = vld [vmem:[%s7 + $0x168] sm:$0xff]
        %v2445 = vld [vmem:[%s7 + $0x170] sm:$0xf]
        %v2446 = vld [vmem:[%s7 + $0x174] sm:$0xff]
        %v2447 = vld [vmem:[%s7 + $0x17c] sm:$0xf]
        %v2448 = vld [vmem:[%s7 + $0x180] sm:$0xff]
        %v2449 = vld [vmem:[%s7 + $0x188] sm:$0xf]
        %v2450 = vld [vmem:[%s7 + $0x18c] sm:$0xff]
        %v2451 = vld [vmem:[%s7 + $0x194] sm:$0xf]
        %v2452 = vld [vmem:[%s7 + $0x198] sm:$0xff]
        %v2453 = vld [vmem:[%s7 + $0x1a0] sm:$0xf]
        %v2454 = vld [vmem:[%s7 + $0x1a4] sm:$0xff]
        %v2455 = vld [vmem:[%s7 + $0x1ac] sm:$0xf]
        %v2456 = vld [vmem:[%s7 + $0x1b0] sm:$0xff]
        %v2457 = vld [vmem:[%s7 + $0x1b8] sm:$0xf]
        %v2458 = vld [vmem:[%s7 + $0x1bc] sm:$0xff]
        %v2459 = vld [vmem:[%s7 + $0x1c4] sm:$0xf]
        %v2460 = vld [vmem:[%s7 + $0x1c8] sm:$0xff]
        %v2461 = vld [vmem:[%s7 + $0x1d0] sm:$0xf]
        %v2462 = vld [vmem:[%s7 + $0x1d4] sm:$0xff]
        %v2463 = vld [vmem:[%s7 + $0x1dc] sm:$0xf]
        %v2464 = vld [vmem:[%s7 + $0x1e0] sm:$0xff]
        %v2465 = vld [vmem:[%s7 + $0x1e8] sm:$0xf]
        %v2466 = vld [vmem:[%s7 + $0x1ec] sm:$0xff]
        %v2467 = vld [vmem:[%s7 + $0x1f4] sm:$0xf]
        %v2468 = vld [vmem:[%s7 + $0x1f8] sm:$0xff]
        %v2469 = vld [vmem:[%s7 + $0x200] sm:$0xf]
        %v2470 = vld [vmem:[%s7 + $0x204] sm:$0xff]
        %v2471 = vld [vmem:[%s7 + $0x20c] sm:$0xf]
        %v2472 = vld [vmem:[%s7 + $0x210] sm:$0xff]
        %v2473 = vld [vmem:[%s7 + $0x218] sm:$0xf]
        %v2474 = vld [vmem:[%s7 + $0x21c] sm:$0xff]
        %v2475 = vld [vmem:[%s7 + $0x224] sm:$0xf]
        %v2476 = vld [vmem:[%s7 + $0x228] sm:$0xff]
        %v2477 = vld [vmem:[%s7 + $0x230] sm:$0xf]
        %v2478 = vld [vmem:[%s7 + $0x234] sm:$0xff]
        %v2479 = vld [vmem:[%s7 + $0x23c] sm:$0xf]
        %v2480 = vld [vmem:[%s7 + $0x240] sm:$0xff]
        %v2481 = vld [vmem:[%s7 + $0x248] sm:$0xf]
        %v2482 = vld [vmem:[%s7 + $0x24c] sm:$0xff]
        %v2483 = vld [vmem:[%s7 + $0x254] sm:$0xf]
        %v2484 = vld [vmem:[%s7 + $0x258] sm:$0xff]
        %v2485 = vld [vmem:[%s7 + $0x260] sm:$0xf]
        %v2486 = vld [vmem:[%s7 + $0x264] sm:$0xff]
        %v2487 = vld [vmem:[%s7 + $0x26c] sm:$0xf]
        %v2488 = vld [vmem:[%s7 + $0x270] sm:$0xff]
        %v2489 = vld [vmem:[%s7 + $0x278] sm:$0xf]
        %v2490 = vld [vmem:[%s7 + $0x27c] sm:$0xff]
        %v2491 = vld [vmem:[%s7 + $0x284] sm:$0xf]
        %v2492 = vld [vmem:[%s7 + $0x288] sm:$0xff]
        %v2493 = vld [vmem:[%s7 + $0x290] sm:$0xf]
        %v2494 = vld [vmem:[%s7 + $0x294] sm:$0xff]
        %v2495 = vld [vmem:[%s7 + $0x29c] sm:$0xf]
        %v2496 = vld [vmem:[%s7 + $0x2a0] sm:$0xff]
        %v2497 = vld [vmem:[%s7 + $0x2a8] sm:$0xf]
        %v2498 = vld [vmem:[%s7 + $0x2ac] sm:$0xff]
        %v2499 = vld [vmem:[%s7 + $0x2b4] sm:$0xf]
        %v2500 = vld [vmem:[%s7 + $0x2b8] sm:$0xff]
        %v2501 = vld [vmem:[%s7 + $0x2c0] sm:$0xf]
        %v2502 = vld [vmem:[%s7 + $0x2c4] sm:$0xff]
        %v2503 = vld [vmem:[%s7 + $0x2cc] sm:$0xf]
        %v2504 = vld [vmem:[%s7 + $0x2d0] sm:$0xff]
        %v2505 = vld [vmem:[%s7 + $0x2d8] sm:$0xf]
        %v2506 = vld [vmem:[%s7 + $0x2dc] sm:$0xff]
        %v2507 = vld [vmem:[%s7 + $0x2e4] sm:$0xf]
        %v2508 = vld [vmem:[%s7 + $0x2e8] sm:$0xff]
        %v2509 = vld [vmem:[%s7 + $0x2f0] sm:$0xf]
        %v2510 = vld [vmem:[%s7 + $0x2f4] sm:$0xff]
        %v2511 = vld [vmem:[%s7 + $0x2fc] sm:$0xf]
        %v2512 = vld [vmem:[%s7 + $0x300] sm:$0xff]
        %v2513 = vld [vmem:[%s7 + $0x308] sm:$0xf]
        %v2514 = vld [vmem:[%s7 + $0x30c] sm:$0xff]
        %v2515 = vld [vmem:[%s7 + $0x314] sm:$0xf]
        %v2516 = vld [vmem:[%s7 + $0x318] sm:$0xff]
        %v2517 = vld [vmem:[%s7 + $0x320] sm:$0xf]
        %v2518 = vld [vmem:[%s7 + $0x324] sm:$0xff]
        %v2519 = vld [vmem:[%s7 + $0x32c] sm:$0xf]
        %v2520 = vld [vmem:[%s7 + $0x330] sm:$0xff]
        %v2521 = vld [vmem:[%s7 + $0x338] sm:$0xf]
        %v2522 = vld [vmem:[%s7 + $0x33c] sm:$0xff]
        %v2523 = vld [vmem:[%s7 + $0x344] sm:$0xf]
        %v2524 = vld [vmem:[%s7 + $0x348] sm:$0xff]
        %v2525 = vld [vmem:[%s7 + $0x350] sm:$0xf]
        %v2526 = vld [vmem:[%s7 + $0x354] sm:$0xff]
        %v2527 = vld [vmem:[%s7 + $0x35c] sm:$0xf]
        %v2528 = vld [vmem:[%s7 + $0x360] sm:$0xff]
        %v2529 = vld [vmem:[%s7 + $0x368] sm:$0xf]
        %v2530 = vld [vmem:[%s7 + $0x36c] sm:$0xff]
        %v2531 = vld [vmem:[%s7 + $0x374] sm:$0xf]
        %v2532 = vld [vmem:[%s7 + $0x378] sm:$0xff]
        %v2533 = vld [vmem:[%s7 + $0x380] sm:$0xf]
        %v2534 = vld [vmem:[%s7 + $0x384] sm:$0xff]
        %v2535 = vld [vmem:[%s7 + $0x38c] sm:$0xf]
        %v2536 = vld [vmem:[%s7 + $0x390] sm:$0xff]
        %v2537 = vld [vmem:[%s7 + $0x398] sm:$0xf]
        %v2538 = vld [vmem:[%s7 + $0x39c] sm:$0xff]
        %v2539 = vld [vmem:[%s7 + $0x3a4] sm:$0xf]
        %v2540 = vld [vmem:[%s7 + $0x3a8] sm:$0xff]
        %v2541 = vld [vmem:[%s7 + $0x3b0] sm:$0xf]
        %v2542 = vld [vmem:[%s7 + $0x3b4] sm:$0xff]
        %v2543 = vld [vmem:[%s7 + $0x3bc] sm:$0xf]
        %v2544 = vld [vmem:[%s8] sm:$0x7]
        %v2546 = vlaneseq
        %v2547 = vshrl.u32 %v2546, 7
        %v2548 = vsub.s32 0, %v2547
        %v2549 = vrot.slane %v2544, %v2548
        %v2550 = vlaneseq
        %v2551 = vshrl.u32 %v2550, 7
        %v2552 = vsub.s32 1, %v2551
        %v2553 = vrot.slane %v2544, %v2552
        %v2554 = vlaneseq
        %v2555 = vshrl.u32 %v2554, 7
        %v2556 = vsub.s32 2, %v2555
        %v2557 = vrot.slane %v2544, %v2556
        %v2721 = vunpack.c.l.b16 %v2384
        %v2722 = vunpack.c.h.b16 %v2384
        %v2723 = vunpack.c.l.b16 %v2385
        %v2724 = vunpack.c.l.b16 %v2386
        %v2725 = vunpack.c.h.b16 %v2386
        %v2726 = vunpack.c.l.b16 %v2387
        %v2727 = vunpack.c.l.b16 %v2388
        %v2728 = vunpack.c.h.b16 %v2388
        %v2729 = vunpack.c.l.b16 %v2389
        %v2730 = vunpack.c.l.b16 %v2390
        %v2731 = vunpack.c.h.b16 %v2390
        %v2732 = vunpack.c.l.b16 %v2391
        %v2733 = vunpack.c.l.b16 %v2392
        %v2734 = vunpack.c.h.b16 %v2392
        %v2735 = vunpack.c.l.b16 %v2393
        %v2736 = vunpack.c.l.b16 %v2394
        %v2737 = vunpack.c.h.b16 %v2394
        %v2738 = vunpack.c.l.b16 %v2395
        %v2739 = vunpack.c.l.b16 %v2396
        %v2740 = vunpack.c.h.b16 %v2396
        %v2741 = vunpack.c.l.b16 %v2397
        %v2742 = vunpack.c.l.b16 %v2398
        %v2743 = vunpack.c.h.b16 %v2398
        %v2744 = vunpack.c.l.b16 %v2399
        %v2745 = vunpack.c.l.b16 %v2400
        %v2746 = vunpack.c.h.b16 %v2400
        %v2747 = vunpack.c.l.b16 %v2401
        %v2748 = vunpack.c.l.b16 %v2402
        %v2749 = vunpack.c.h.b16 %v2402
        %v2750 = vunpack.c.l.b16 %v2403
        %v2751 = vunpack.c.l.b16 %v2404
        %v2752 = vunpack.c.h.b16 %v2404
        %v2753 = vunpack.c.l.b16 %v2405
        %v2754 = vunpack.c.l.b16 %v2406
        %v2755 = vunpack.c.h.b16 %v2406
        %v2756 = vunpack.c.l.b16 %v2407
        %v2757 = vunpack.c.l.b16 %v2408
        %v2758 = vunpack.c.h.b16 %v2408
        %v2759 = vunpack.c.l.b16 %v2409
        %v2760 = vunpack.c.l.b16 %v2410
        %v2761 = vunpack.c.h.b16 %v2410
        %v2762 = vunpack.c.l.b16 %v2411
        %v2763 = vunpack.c.l.b16 %v2412
        %v2764 = vunpack.c.h.b16 %v2412
        %v2765 = vunpack.c.l.b16 %v2413
        %v2766 = vunpack.c.l.b16 %v2414
        %v2767 = vunpack.c.h.b16 %v2414
        %v2768 = vunpack.c.l.b16 %v2415
        %v2769 = vunpack.c.l.b16 %v2416
        %v2770 = vunpack.c.h.b16 %v2416
        %v2771 = vunpack.c.l.b16 %v2417
        %v2772 = vunpack.c.l.b16 %v2418
        %v2773 = vunpack.c.h.b16 %v2418
        %v2774 = vunpack.c.l.b16 %v2419
        %v2775 = vunpack.c.l.b16 %v2420
        %v2776 = vunpack.c.h.b16 %v2420
        %v2777 = vunpack.c.l.b16 %v2421
        %v2778 = vunpack.c.l.b16 %v2422
        %v2779 = vunpack.c.h.b16 %v2422
        %v2780 = vunpack.c.l.b16 %v2423
        %v2781 = vunpack.c.l.b16 %v2424
        %v2782 = vunpack.c.h.b16 %v2424
        %v2783 = vunpack.c.l.b16 %v2425
        %v2784 = vunpack.c.l.b16 %v2426
        %v2785 = vunpack.c.h.b16 %v2426
        %v2786 = vunpack.c.l.b16 %v2427
        %v2787 = vunpack.c.l.b16 %v2428
        %v2788 = vunpack.c.h.b16 %v2428
        %v2789 = vunpack.c.l.b16 %v2429
        %v2790 = vunpack.c.l.b16 %v2430
        %v2791 = vunpack.c.h.b16 %v2430
        %v2792 = vunpack.c.l.b16 %v2431
        %v2793 = vunpack.c.l.b16 %v2432
        %v2794 = vunpack.c.h.b16 %v2432
        %v2795 = vunpack.c.l.b16 %v2433
        %v2796 = vunpack.c.l.b16 %v2434
        %v2797 = vunpack.c.h.b16 %v2434
        %v2798 = vunpack.c.l.b16 %v2435
        %v2799 = vunpack.c.l.b16 %v2436
        %v2800 = vunpack.c.h.b16 %v2436
        %v2801 = vunpack.c.l.b16 %v2437
        %v2802 = vunpack.c.l.b16 %v2438
        %v2803 = vunpack.c.h.b16 %v2438
        %v2804 = vunpack.c.l.b16 %v2439
        %v2805 = vunpack.c.l.b16 %v2440
        %v2806 = vunpack.c.h.b16 %v2440
        %v2807 = vunpack.c.l.b16 %v2441
        %v2808 = vunpack.c.l.b16 %v2442
        %v2809 = vunpack.c.h.b16 %v2442
        %v2810 = vunpack.c.l.b16 %v2443
        %v2811 = vunpack.c.l.b16 %v2444
        %v2812 = vunpack.c.h.b16 %v2444
        %v2813 = vunpack.c.l.b16 %v2445
        %v2814 = vunpack.c.l.b16 %v2446
        %v2815 = vunpack.c.h.b16 %v2446
        %v2816 = vunpack.c.l.b16 %v2447
        %v2817 = vunpack.c.l.b16 %v2448
        %v2818 = vunpack.c.h.b16 %v2448
        %v2819 = vunpack.c.l.b16 %v2449
        %v2820 = vunpack.c.l.b16 %v2450
        %v2821 = vunpack.c.h.b16 %v2450
        %v2822 = vunpack.c.l.b16 %v2451
        %v2823 = vunpack.c.l.b16 %v2452
        %v2824 = vunpack.c.h.b16 %v2452
        %v2825 = vunpack.c.l.b16 %v2453
        %v2826 = vunpack.c.l.b16 %v2454
        %v2827 = vunpack.c.h.b16 %v2454
        %v2828 = vunpack.c.l.b16 %v2455
        %v2829 = vunpack.c.l.b16 %v2456
        %v2830 = vunpack.c.h.b16 %v2456
        %v2831 = vunpack.c.l.b16 %v2457
        %v2832 = vunpack.c.l.b16 %v2458
        %v2833 = vunpack.c.h.b16 %v2458
        %v2834 = vunpack.c.l.b16 %v2459
        %v2835 = vunpack.c.l.b16 %v2460
        %v2836 = vunpack.c.h.b16 %v2460
        %v2837 = vunpack.c.l.b16 %v2461
        %v2838 = vunpack.c.l.b16 %v2462
        %v2839 = vunpack.c.h.b16 %v2462
        %v2840 = vunpack.c.l.b16 %v2463
        %v2841 = vunpack.c.l.b16 %v2464
        %v2842 = vunpack.c.h.b16 %v2464
        %v2843 = vunpack.c.l.b16 %v2465
        %v2844 = vunpack.c.l.b16 %v2466
        %v2845 = vunpack.c.h.b16 %v2466
        %v2846 = vunpack.c.l.b16 %v2467
        %v2847 = vunpack.c.l.b16 %v2468
        %v2848 = vunpack.c.h.b16 %v2468
        %v2849 = vunpack.c.l.b16 %v2469
        %v2850 = vunpack.c.l.b16 %v2470
        %v2851 = vunpack.c.h.b16 %v2470
        %v2852 = vunpack.c.l.b16 %v2471
        %v2853 = vunpack.c.l.b16 %v2472
        %v2854 = vunpack.c.h.b16 %v2472
        %v2855 = vunpack.c.l.b16 %v2473
        %v2856 = vunpack.c.l.b16 %v2474
        %v2857 = vunpack.c.h.b16 %v2474
        %v2858 = vunpack.c.l.b16 %v2475
        %v2859 = vunpack.c.l.b16 %v2476
        %v2860 = vunpack.c.h.b16 %v2476
        %v2861 = vunpack.c.l.b16 %v2477
        %v2862 = vunpack.c.l.b16 %v2478
        %v2863 = vunpack.c.h.b16 %v2478
        %v2864 = vunpack.c.l.b16 %v2479
        %v2865 = vunpack.c.l.b16 %v2480
        %v2866 = vunpack.c.h.b16 %v2480
        %v2867 = vunpack.c.l.b16 %v2481
        %v2868 = vunpack.c.l.b16 %v2482
        %v2869 = vunpack.c.h.b16 %v2482
        %v2870 = vunpack.c.l.b16 %v2483
        %v2871 = vunpack.c.l.b16 %v2484
        %v2872 = vunpack.c.h.b16 %v2484
        %v2873 = vunpack.c.l.b16 %v2485
        %v2874 = vunpack.c.l.b16 %v2486
        %v2875 = vunpack.c.h.b16 %v2486
        %v2876 = vunpack.c.l.b16 %v2487
        %v2877 = vunpack.c.l.b16 %v2488
        %v2878 = vunpack.c.h.b16 %v2488
        %v2879 = vunpack.c.l.b16 %v2489
        %v2880 = vunpack.c.l.b16 %v2490
        %v2881 = vunpack.c.h.b16 %v2490
        %v2882 = vunpack.c.l.b16 %v2491
        %v2883 = vunpack.c.l.b16 %v2492
        %v2884 = vunpack.c.h.b16 %v2492
        %v2885 = vunpack.c.l.b16 %v2493
        %v2886 = vunpack.c.l.b16 %v2494
        %v2887 = vunpack.c.h.b16 %v2494
        %v2888 = vunpack.c.l.b16 %v2495
        %v2889 = vunpack.c.l.b16 %v2496
        %v2890 = vunpack.c.h.b16 %v2496
        %v2891 = vunpack.c.l.b16 %v2497
        %v2892 = vunpack.c.l.b16 %v2498
        %v2893 = vunpack.c.h.b16 %v2498
        %v2894 = vunpack.c.l.b16 %v2499
        %v2895 = vunpack.c.l.b16 %v2500
        %v2896 = vunpack.c.h.b16 %v2500
        %v2897 = vunpack.c.l.b16 %v2501
        %v2898 = vunpack.c.l.b16 %v2502
        %v2899 = vunpack.c.h.b16 %v2502
        %v2900 = vunpack.c.l.b16 %v2503
        %v2901 = vunpack.c.l.b16 %v2504
        %v2902 = vunpack.c.h.b16 %v2504
        %v2903 = vunpack.c.l.b16 %v2505
        %v2904 = vunpack.c.l.b16 %v2506
        %v2905 = vunpack.c.h.b16 %v2506
        %v2906 = vunpack.c.l.b16 %v2507
        %v2907 = vunpack.c.l.b16 %v2508
        %v2908 = vunpack.c.h.b16 %v2508
        %v2909 = vunpack.c.l.b16 %v2509
        %v2910 = vunpack.c.l.b16 %v2510
        %v2911 = vunpack.c.h.b16 %v2510
        %v2912 = vunpack.c.l.b16 %v2511
        %v2913 = vunpack.c.l.b16 %v2512
        %v2914 = vunpack.c.h.b16 %v2512
        %v2915 = vunpack.c.l.b16 %v2513
        %v2916 = vunpack.c.l.b16 %v2514
        %v2917 = vunpack.c.h.b16 %v2514
        %v2918 = vunpack.c.l.b16 %v2515
        %v2919 = vunpack.c.l.b16 %v2516
        %v2920 = vunpack.c.h.b16 %v2516
        %v2921 = vunpack.c.l.b16 %v2517
        %v2922 = vunpack.c.l.b16 %v2518
        %v2923 = vunpack.c.h.b16 %v2518
        %v2924 = vunpack.c.l.b16 %v2519
        %v2925 = vunpack.c.l.b16 %v2520
        %v2926 = vunpack.c.h.b16 %v2520
        %v2927 = vunpack.c.l.b16 %v2521
        %v2928 = vunpack.c.l.b16 %v2522
        %v2929 = vunpack.c.h.b16 %v2522
        %v2930 = vunpack.c.l.b16 %v2523
        %v2931 = vunpack.c.l.b16 %v2524
        %v2932 = vunpack.c.h.b16 %v2524
        %v2933 = vunpack.c.l.b16 %v2525
        %v2934 = vunpack.c.l.b16 %v2526
        %v2935 = vunpack.c.h.b16 %v2526
        %v2936 = vunpack.c.l.b16 %v2527
        %v2937 = vunpack.c.l.b16 %v2528
        %v2938 = vunpack.c.h.b16 %v2528
        %v2939 = vunpack.c.l.b16 %v2529
        %v2940 = vunpack.c.l.b16 %v2530
        %v2941 = vunpack.c.h.b16 %v2530
        %v2942 = vunpack.c.l.b16 %v2531
        %v2943 = vunpack.c.l.b16 %v2532
        %v2944 = vunpack.c.h.b16 %v2532
        %v2945 = vunpack.c.l.b16 %v2533
        %v2946 = vunpack.c.l.b16 %v2534
        %v2947 = vunpack.c.h.b16 %v2534
        %v2948 = vunpack.c.l.b16 %v2535
        %v2949 = vunpack.c.l.b16 %v2536
        %v2950 = vunpack.c.h.b16 %v2536
        %v2951 = vunpack.c.l.b16 %v2537
        %v2952 = vunpack.c.l.b16 %v2538
        %v2953 = vunpack.c.h.b16 %v2538
        %v2954 = vunpack.c.l.b16 %v2539
        %v2955 = vunpack.c.l.b16 %v2540
        %v2956 = vunpack.c.h.b16 %v2540
        %v2957 = vunpack.c.l.b16 %v2541
        %v2958 = vunpack.c.l.b16 %v2542
        %v2959 = vunpack.c.h.b16 %v2542
        %v2960 = vunpack.c.l.b16 %v2543
        %v2961 = vpack.c.b16 %v2724, %v2721
        %v2962 = vpack.c.b16 %v2725, %v2722
        %v2963 = vpack.c.b16 %v2726, %v2723
        %v2964 = vpack.c.b16 %v2730, %v2727
        %v2965 = vpack.c.b16 %v2731, %v2728
        %v2966 = vpack.c.b16 %v2732, %v2729
        %v2967 = vpack.c.b16 %v2736, %v2733
        %v2968 = vpack.c.b16 %v2737, %v2734
        %v2969 = vpack.c.b16 %v2738, %v2735
        %v2970 = vpack.c.b16 %v2742, %v2739
        %v2971 = vpack.c.b16 %v2743, %v2740
        %v2972 = vpack.c.b16 %v2744, %v2741
        %v2973 = vpack.c.b16 %v2748, %v2745
        %v2974 = vpack.c.b16 %v2749, %v2746
        %v2975 = vpack.c.b16 %v2750, %v2747
        %v2976 = vpack.c.b16 %v2754, %v2751
        %v2977 = vpack.c.b16 %v2755, %v2752
        %v2978 = vpack.c.b16 %v2756, %v2753
        %v2979 = vpack.c.b16 %v2760, %v2757
        %v2980 = vpack.c.b16 %v2761, %v2758
        %v2981 = vpack.c.b16 %v2762, %v2759
        %v2982 = vpack.c.b16 %v2766, %v2763
        %v2983 = vpack.c.b16 %v2767, %v2764
        %v2984 = vpack.c.b16 %v2768, %v2765
        %v2985 = vpack.c.b16 %v2772, %v2769
        %v2986 = vpack.c.b16 %v2773, %v2770
        %v2987 = vpack.c.b16 %v2774, %v2771
        %v2988 = vpack.c.b16 %v2778, %v2775
        %v2989 = vpack.c.b16 %v2779, %v2776
        %v2990 = vpack.c.b16 %v2780, %v2777
        %v2991 = vpack.c.b16 %v2784, %v2781
        %v2992 = vpack.c.b16 %v2785, %v2782
        %v2993 = vpack.c.b16 %v2786, %v2783
        %v2994 = vpack.c.b16 %v2790, %v2787
        %v2995 = vpack.c.b16 %v2791, %v2788
        %v2996 = vpack.c.b16 %v2792, %v2789
        %v2997 = vpack.c.b16 %v2796, %v2793
        %v2998 = vpack.c.b16 %v2797, %v2794
        %v2999 = vpack.c.b16 %v2798, %v2795
        %v3000 = vpack.c.b16 %v2802, %v2799
        %v3001 = vpack.c.b16 %v2803, %v2800
        %v3002 = vpack.c.b16 %v2804, %v2801
        %v3003 = vpack.c.b16 %v2808, %v2805
        %v3004 = vpack.c.b16 %v2809, %v2806
        %v3005 = vpack.c.b16 %v2810, %v2807
        %v3006 = vpack.c.b16 %v2814, %v2811
        %v3007 = vpack.c.b16 %v2815, %v2812
        %v3008 = vpack.c.b16 %v2816, %v2813
        %v3009 = vpack.c.b16 %v2820, %v2817
        %v3010 = vpack.c.b16 %v2821, %v2818
        %v3011 = vpack.c.b16 %v2822, %v2819
        %v3012 = vpack.c.b16 %v2826, %v2823
        %v3013 = vpack.c.b16 %v2827, %v2824
        %v3014 = vpack.c.b16 %v2828, %v2825
        %v3015 = vpack.c.b16 %v2832, %v2829
        %v3016 = vpack.c.b16 %v2833, %v2830
        %v3017 = vpack.c.b16 %v2834, %v2831
        %v3018 = vpack.c.b16 %v2838, %v2835
        %v3019 = vpack.c.b16 %v2839, %v2836
        %v3020 = vpack.c.b16 %v2840, %v2837
        %v3021 = vpack.c.b16 %v2844, %v2841
        %v3022 = vpack.c.b16 %v2845, %v2842
        %v3023 = vpack.c.b16 %v2846, %v2843
        %v3024 = vpack.c.b16 %v2850, %v2847
        %v3025 = vpack.c.b16 %v2851, %v2848
        %v3026 = vpack.c.b16 %v2852, %v2849
        %v3027 = vpack.c.b16 %v2856, %v2853
        %v3028 = vpack.c.b16 %v2857, %v2854
        %v3029 = vpack.c.b16 %v2858, %v2855
        %v3030 = vpack.c.b16 %v2862, %v2859
        %v3031 = vpack.c.b16 %v2863, %v2860
        %v3032 = vpack.c.b16 %v2864, %v2861
        %v3033 = vpack.c.b16 %v2868, %v2865
        %v3034 = vpack.c.b16 %v2869, %v2866
        %v3035 = vpack.c.b16 %v2870, %v2867
        %v3036 = vpack.c.b16 %v2874, %v2871
        %v3037 = vpack.c.b16 %v2875, %v2872
        %v3038 = vpack.c.b16 %v2876, %v2873
        %v3039 = vpack.c.b16 %v2880, %v2877
        %v3040 = vpack.c.b16 %v2881, %v2878
        %v3041 = vpack.c.b16 %v2882, %v2879
        %v3042 = vpack.c.b16 %v2886, %v2883
        %v3043 = vpack.c.b16 %v2887, %v2884
        %v3044 = vpack.c.b16 %v2888, %v2885
        %v3045 = vpack.c.b16 %v2892, %v2889
        %v3046 = vpack.c.b16 %v2893, %v2890
        %v3047 = vpack.c.b16 %v2894, %v2891
        %v3048 = vpack.c.b16 %v2898, %v2895
        %v3049 = vpack.c.b16 %v2899, %v2896
        %v3050 = vpack.c.b16 %v2900, %v2897
        %v3051 = vpack.c.b16 %v2904, %v2901
        %v3052 = vpack.c.b16 %v2905, %v2902
        %v3053 = vpack.c.b16 %v2906, %v2903
        %v3054 = vpack.c.b16 %v2910, %v2907
        %v3055 = vpack.c.b16 %v2911, %v2908
        %v3056 = vpack.c.b16 %v2912, %v2909
        %v3057 = vpack.c.b16 %v2916, %v2913
        %v3058 = vpack.c.b16 %v2917, %v2914
        %v3059 = vpack.c.b16 %v2918, %v2915
        %v3060 = vpack.c.b16 %v2922, %v2919
        %v3061 = vpack.c.b16 %v2923, %v2920
        %v3062 = vpack.c.b16 %v2924, %v2921
        %v3063 = vpack.c.b16 %v2928, %v2925
        %v3064 = vpack.c.b16 %v2929, %v2926
        %v3065 = vpack.c.b16 %v2930, %v2927
        %v3066 = vpack.c.b16 %v2934, %v2931
        %v3067 = vpack.c.b16 %v2935, %v2932
        %v3068 = vpack.c.b16 %v2936, %v2933
        %v3069 = vpack.c.b16 %v2940, %v2937
        %v3070 = vpack.c.b16 %v2941, %v2938
        %v3071 = vpack.c.b16 %v2942, %v2939
        %v3072 = vpack.c.b16 %v2946, %v2943
        %v3073 = vpack.c.b16 %v2947, %v2944
        %v3074 = vpack.c.b16 %v2948, %v2945
        %v3075 = vpack.c.b16 %v2952, %v2949
        %v3076 = vpack.c.b16 %v2953, %v2950
        %v3077 = vpack.c.b16 %v2954, %v2951
        %v3078 = vpack.c.b16 %v2958, %v2955
        %v3079 = vpack.c.b16 %v2959, %v2956
        %v3080 = vpack.c.b16 %v2960, %v2957
        %3201 = vmatprep.subr.bf16.mxu0 %v2962
        %3202 = vmatpush1.bf16.msra.mxu0 %v2961
        %3203 = vmatprep.subr.bf16.mxu0 %v2965
        %3204 = vmatpush1.bf16.msra.mxu0 %v2964
        %3205 = vmatprep.subr.bf16.mxu0 %v2968
        %3206 = vmatpush1.bf16.msra.mxu0 %v2967
        %3207 = vmatprep.subr.bf16.mxu0 %v2971
        %3208 = vmatpush1.bf16.msra.mxu0 %v2970
        %3209 = vmatprep.subr.bf16.mxu0 %v2974
        %3210 = vmatpush1.bf16.msra.mxu0 %v2973
        %3211 = vmatprep.subr.bf16.mxu0 %v2977
        %3212 = vmatpush1.bf16.msra.mxu0 %v2976
        %3213 = vmatprep.subr.bf16.mxu0 %v2980
        %3214 = vmatpush1.bf16.msra.mxu0 %v2979
        %3215 = vmatprep.subr.bf16.mxu0 %v2983
        %3216 = vmatpush1.bf16.msra.mxu0 %v2982
        %3217 = vmatprep.subr.bf16.mxu0 %v2986
        %3218 = vmatpush1.bf16.msra.mxu0 %v2985
        %3219 = vmatprep.subr.bf16.mxu0 %v2989
        %3220 = vmatpush1.bf16.msra.mxu0 %v2988
        %3221 = vmatprep.subr.bf16.mxu0 %v2992
        %3222 = vmatpush1.bf16.msra.mxu0 %v2991
        %3223 = vmatprep.subr.bf16.mxu0 %v2995
        %3224 = vmatpush1.bf16.msra.mxu0 %v2994
        %3225 = vmatprep.subr.bf16.mxu0 %v2998
        %3226 = vmatpush1.bf16.msra.mxu0 %v2997
        %3227 = vmatprep.subr.bf16.mxu0 %v3001
        %3228 = vmatpush1.bf16.msra.mxu0 %v3000
        %3229 = vmatprep.subr.bf16.mxu0 %v3004
        %3230 = vmatpush1.bf16.msra.mxu0 %v3003
        %3231 = vmatprep.subr.bf16.mxu0 %v3007
        %3232 = vmatpush1.bf16.msra.mxu0 %v3006
        %3233 = vmatprep.mubr.bf16.mxu0 %v2380
        %3234 = vmatmul.mubr.bf16.gmra.mrb[0].mxu0 %v2379
        %v3235 = vpop.f32.mrb[0].mxu0
        %v3236 = vadd.f32 %v2549, %v3235
        %v3237 = vpop.f32.mrb[0].mxu0
        %v3238 = vadd.f32 %v2553, %v3237
        %v3239 = vpop.f32.mrb[0].mxu0
        %v3240 = vpop.f32.mrb[0].mxu0
        %3241 = vdwg.mxu0
        %3242 = vmatprep.subr.bf16.mxu0 %v3010
        %3243 = vmatpush1.bf16.msra.mxu0 %v3009
        %3244 = vmatprep.subr.bf16.mxu0 %v3013
        %3245 = vmatpush1.bf16.msra.mxu0 %v3012
        %3246 = vmatprep.subr.bf16.mxu0 %v3016
        %3247 = vmatpush1.bf16.msra.mxu0 %v3015
        %3248 = vmatprep.subr.bf16.mxu0 %v3019
        %3249 = vmatpush1.bf16.msra.mxu0 %v3018
        %3250 = vmatprep.subr.bf16.mxu0 %v3022
        %3251 = vmatpush1.bf16.msra.mxu0 %v3021
        %3252 = vmatprep.subr.bf16.mxu0 %v3025
        %3253 = vmatpush1.bf16.msra.mxu0 %v3024
        %3254 = vmatprep.subr.bf16.mxu0 %v3028
        %3255 = vmatpush1.bf16.msra.mxu0 %v3027
        %3256 = vmatprep.subr.bf16.mxu0 %v3031
        %3257 = vmatpush1.bf16.msra.mxu0 %v3030
        %3258 = vmatprep.subr.bf16.mxu0 %v3034
        %3259 = vmatpush1.bf16.msra.mxu0 %v3033
        %3260 = vmatprep.subr.bf16.mxu0 %v3037
        %3261 = vmatpush1.bf16.msra.mxu0 %v3036
        %3262 = vmatprep.subr.bf16.mxu0 %v3040
        %3263 = vmatpush1.bf16.msra.mxu0 %v3039
        %3264 = vmatprep.subr.bf16.mxu0 %v3043
        %3265 = vmatpush1.bf16.msra.mxu0 %v3042
        %3266 = vmatprep.subr.bf16.mxu0 %v3046
        %3267 = vmatpush1.bf16.msra.mxu0 %v3045
        %3268 = vmatprep.subr.bf16.mxu0 %v3049
        %3269 = vmatpush1.bf16.msra.mxu0 %v3048
        %3270 = vmatprep.subr.bf16.mxu0 %v3052
        %3271 = vmatpush1.bf16.msra.mxu0 %v3051
        %3272 = vmatprep.subr.bf16.mxu0 %v3055
        %3273 = vmatpush1.bf16.msra.mxu0 %v3054
        %3274 = vmatprep.mubr.bf16.mxu0 %v2382
        %3275 = vmatmul.mubr.bf16.gmra.mrb[0].mxu0 %v2381
        %v3276 = vpop.f32.mrb[0].mxu0
        %v3277 = vadd.f32 %v3236, %v3276
        %v3278 = vpop.f32.mrb[0].mxu0
        %v3279 = vadd.f32 %v3238, %v3278
        %v3280 = vpop.f32.mrb[0].mxu0
        %v3281 = vpop.f32.mrb[0].mxu0
        %3282 = vdwg.mxu0
        %3283 = vmatprep.subr.bf16.mxu0 %v3058
        %3284 = vmatpush1.bf16.msra.mxu0 %v3057
        %3285 = vmatprep.subr.bf16.mxu0 %v3061
        %3286 = vmatpush1.bf16.msra.mxu0 %v3060
        %3287 = vmatprep.subr.bf16.mxu0 %v3064
        %3288 = vmatpush1.bf16.msra.mxu0 %v3063
        %3289 = vmatprep.subr.bf16.mxu0 %v3067
        %3290 = vmatpush1.bf16.msra.mxu0 %v3066
        %3291 = vmatprep.subr.bf16.mxu0 %v3070
        %3292 = vmatpush1.bf16.msra.mxu0 %v3069
        %3293 = vmatprep.subr.bf16.mxu0 %v3073
        %3294 = vmatpush1.bf16.msra.mxu0 %v3072
        %3295 = vmatprep.subr.bf16.mxu0 %v3076
        %3296 = vmatpush1.bf16.msra.mxu0 %v3075
        %3297 = vmatprep.subr.bf16.mxu0 %v3079
        %3298 = vmatpush1.bf16.msra.mxu0 %v3078
        %3299 = vmatprep.subr.bf16.mxu0 0
        %3300 = vmatpush1.bf16.msra.mxu0 0
        %3301 = vmatprep.subr.bf16.mxu0 0
        %3302 = vmatpush1.bf16.msra.mxu0 0
        %3303 = vmatprep.subr.bf16.mxu0 0
        %3304 = vmatpush1.bf16.msra.mxu0 0
        %3305 = vmatprep.subr.bf16.mxu0 0
        %3306 = vmatpush1.bf16.msra.mxu0 0
        %3307 = vmatprep.subr.bf16.mxu0 0
        %3308 = vmatpush1.bf16.msra.mxu0 0
        %3309 = vmatprep.subr.bf16.mxu0 0
        %3310 = vmatpush1.bf16.msra.mxu0 0
        %3311 = vmatprep.subr.bf16.mxu0 0
        %3312 = vmatpush1.bf16.msra.mxu0 0
        %3313 = vmatprep.subr.bf16.mxu0 0
        %3314 = vmatpush1.bf16.msra.mxu0 0
        %3315 = vmatprep.mubr.bf16.mxu0 0
        %3316 = vmatmul.mubr.bf16.gmra.mrb[0].mxu0 %v2383
        %v3317 = vpop.f32.mrb[0].mxu0
        %v3318 = vadd.f32 %v3277, %v3317
        %v3319 = vpop.f32.mrb[0].mxu0
        %v3320 = vadd.f32 %v3279, %v3319
        %v3321 = vpop.f32.mrb[0].mxu0
        %v3322 = vpop.f32.mrb[0].mxu0
        %3323 = vdwg.mxu0
        %3324 = vmatprep.subr.bf16.mxu0 0
        %3325 = vmatpush1.bf16.msra.mxu0 %v2963
        %3326 = vmatprep.subr.bf16.mxu0 0
        %3327 = vmatpush1.bf16.msra.mxu0 %v2966
        %3328 = vmatprep.subr.bf16.mxu0 0
        %3329 = vmatpush1.bf16.msra.mxu0 %v2969
        %3330 = vmatprep.subr.bf16.mxu0 0
        %3331 = vmatpush1.bf16.msra.mxu0 %v2972
        %3332 = vmatprep.subr.bf16.mxu0 0
        %3333 = vmatpush1.bf16.msra.mxu0 %v2975
        %3334 = vmatprep.subr.bf16.mxu0 0
        %3335 = vmatpush1.bf16.msra.mxu0 %v2978
        %3336 = vmatprep.subr.bf16.mxu0 0
        %3337 = vmatpush1.bf16.msra.mxu0 %v2981
        %3338 = vmatprep.subr.bf16.mxu0 0
        %3339 = vmatpush1.bf16.msra.mxu0 %v2984
        %3340 = vmatprep.subr.bf16.mxu0 0
        %3341 = vmatpush1.bf16.msra.mxu0 %v2987
        %3342 = vmatprep.subr.bf16.mxu0 0
        %3343 = vmatpush1.bf16.msra.mxu0 %v2990
        %3344 = vmatprep.subr.bf16.mxu0 0
        %3345 = vmatpush1.bf16.msra.mxu0 %v2993
        %3346 = vmatprep.subr.bf16.mxu0 0
        %3347 = vmatpush1.bf16.msra.mxu0 %v2996
        %3348 = vmatprep.subr.bf16.mxu0 0
        %3349 = vmatpush1.bf16.msra.mxu0 %v2999
        %3350 = vmatprep.subr.bf16.mxu0 0
        %3351 = vmatpush1.bf16.msra.mxu0 %v3002
        %3352 = vmatprep.subr.bf16.mxu0 0
        %3353 = vmatpush1.bf16.msra.mxu0 %v3005
        %3354 = vmatprep.subr.bf16.mxu0 0
        %3355 = vmatpush1.bf16.msra.mxu0 %v3008
        %3356 = vmatprep.mubr.bf16.mxu0 %v2380
        %3357 = vmatmul.mubr.bf16.gmra.mrb[0].mxu0 %v2379
        %v3358 = vpop.f32.mrb[0].mxu0
        %v3359 = vadd.f32 %v2557, %v3358
        %v3360 = vpop.f32.mrb[0].mxu0
        %v3361 = vpop.f32.mrb[0].mxu0
        %v3362 = vpop.f32.mrb[0].mxu0
        %3363 = vdwg.mxu0
        %3364 = vmatprep.subr.bf16.mxu0 0
        %3365 = vmatpush1.bf16.msra.mxu0 %v3011
        %3366 = vmatprep.subr.bf16.mxu0 0
        %3367 = vmatpush1.bf16.msra.mxu0 %v3014
        %3368 = vmatprep.subr.bf16.mxu0 0
        %3369 = vmatpush1.bf16.msra.mxu0 %v3017
        %3370 = vmatprep.subr.bf16.mxu0 0
        %3371 = vmatpush1.bf16.msra.mxu0 %v3020
        %3372 = vmatprep.subr.bf16.mxu0 0
        %3373 = vmatpush1.bf16.msra.mxu0 %v3023
        %3374 = vmatprep.subr.bf16.mxu0 0
        %3375 = vmatpush1.bf16.msra.mxu0 %v3026
        %3376 = vmatprep.subr.bf16.mxu0 0
        %3377 = vmatpush1.bf16.msra.mxu0 %v3029
        %3378 = vmatprep.subr.bf16.mxu0 0
        %3379 = vmatpush1.bf16.msra.mxu0 %v3032
        %3380 = vmatprep.subr.bf16.mxu0 0
        %3381 = vmatpush1.bf16.msra.mxu0 %v3035
        %3382 = vmatprep.subr.bf16.mxu0 0
        %3383 = vmatpush1.bf16.msra.mxu0 %v3038
        %3384 = vmatprep.subr.bf16.mxu0 0
        %3385 = vmatpush1.bf16.msra.mxu0 %v3041
        %3386 = vmatprep.subr.bf16.mxu0 0
        %3387 = vmatpush1.bf16.msra.mxu0 %v3044
        %3388 = vmatprep.subr.bf16.mxu0 0
        %3389 = vmatpush1.bf16.msra.mxu0 %v3047
        %3390 = vmatprep.subr.bf16.mxu0 0
        %3391 = vmatpush1.bf16.msra.mxu0 %v3050
        %3392 = vmatprep.subr.bf16.mxu0 0
        %3393 = vmatpush1.bf16.msra.mxu0 %v3053
        %3394 = vmatprep.subr.bf16.mxu0 0
        %3395 = vmatpush1.bf16.msra.mxu0 %v3056
        %3396 = vmatprep.mubr.bf16.mxu0 %v2382
        %3397 = vmatmul.mubr.bf16.gmra.mrb[0].mxu0 %v2381
        %v3398 = vpop.f32.mrb[0].mxu0
        %v3399 = vadd.f32 %v3359, %v3398
        %v3400 = vpop.f32.mrb[0].mxu0
        %v3401 = vpop.f32.mrb[0].mxu0
        %v3402 = vpop.f32.mrb[0].mxu0
        %3403 = vdwg.mxu0
        %3404 = vmatprep.subr.bf16.mxu0 0
        %3405 = vmatpush1.bf16.msra.mxu0 %v3059
        %3406 = vmatprep.subr.bf16.mxu0 0
        %3407 = vmatpush1.bf16.msra.mxu0 %v3062
        %3408 = vmatprep.subr.bf16.mxu0 0
        %3409 = vmatpush1.bf16.msra.mxu0 %v3065
        %3410 = vmatprep.subr.bf16.mxu0 0
        %3411 = vmatpush1.bf16.msra.mxu0 %v3068
        %3412 = vmatprep.subr.bf16.mxu0 0
        %3413 = vmatpush1.bf16.msra.mxu0 %v3071
        %3414 = vmatprep.subr.bf16.mxu0 0
        %3415 = vmatpush1.bf16.msra.mxu0 %v3074
        %3416 = vmatprep.subr.bf16.mxu0 0
        %3417 = vmatpush1.bf16.msra.mxu0 %v3077
        %3418 = vmatprep.subr.bf16.mxu0 0
        %3419 = vmatpush1.bf16.msra.mxu0 %v3080
        %3420 = vmatprep.subr.bf16.mxu0 0
        %3421 = vmatpush1.bf16.msra.mxu0 0
        %3422 = vmatprep.subr.bf16.mxu0 0
        %3423 = vmatpush1.bf16.msra.mxu0 0
        %3424 = vmatprep.subr.bf16.mxu0 0
        %3425 = vmatpush1.bf16.msra.mxu0 0
        %3426 = vmatprep.subr.bf16.mxu0 0
        %3427 = vmatpush1.bf16.msra.mxu0 0
        %3428 = vmatprep.subr.bf16.mxu0 0
        %3429 = vmatpush1.bf16.msra.mxu0 0
        %3430 = vmatprep.subr.bf16.mxu0 0
        %3431 = vmatpush1.bf16.msra.mxu0 0
        %3432 = vmatprep.subr.bf16.mxu0 0
        %3433 = vmatpush1.bf16.msra.mxu0 0
        %3434 = vmatprep.subr.bf16.mxu0 0
        %3435 = vmatpush1.bf16.msra.mxu0 0
        %3436 = vmatprep.mubr.bf16.mxu0 0
        %3437 = vmatmul.mubr.bf16.gmra.mrb[0].mxu0 %v2383
        %v3438 = vpop.f32.mrb[0].mxu0
        %v3439 = vadd.f32 %v3399, %v3438
        %v3440 = vpop.f32.mrb[0].mxu0
        %v3441 = vpop.f32.mrb[0].mxu0
        %v3442 = vpop.f32.mrb[0].mxu0
        %3443 = vdwg.mxu0
        %v3444 = vmax.f32 %v3318, 0.0
        %v3445 = vmax.f32 %v3320, 0.0
        %v3446 = vmax.f32 %v3439, 0.0
        %v3447 = vpack.c.bf16 %v3444, %v3444
        %v3448 = vpack.c.bf16 %v3445, %v3445
        %v3449 = vpack.c.bf16 %v3446, %v3446
        %v3450 = vld [vmem:[%s9] sm:$0xff]
        %v3451 = vld [vmem:[%s9 + $0x8] sm:$0xff]
        %v3452 = vld [vmem:[%s9 + $0x10] sm:$0xff]
        %v3453 = vld [vmem:[%s9 + $0x18] sm:$0xff]
        %v3454 = vld [vmem:[%s9 + $0x20] sm:$0xff]
        %v3455 = vld [vmem:[%s9 + $0x28] sm:$0xff]
        %v3456 = vld [vmem:[%s9 + $0x30] sm:$0xff]
        %v3457 = vld [vmem:[%s9 + $0x38] sm:$0xff]
        %v3458 = vld [vmem:[%s9 + $0x40] sm:$0xff]
        %v3459 = vld [vmem:[%s9 + $0x48] sm:$0xff]
        %v3460 = vld [vmem:[%s9 + $0x50] sm:$0xff]
        %v3461 = vld [vmem:[%s9 + $0x58] sm:$0xff]
        %v3462 = vld [vmem:[%s9 + $0x60] sm:$0xff]
        %v3463 = vld [vmem:[%s9 + $0x68] sm:$0xff]
        %v3464 = vld [vmem:[%s9 + $0x70] sm:$0xff]
        %v3465 = vld [vmem:[%s9 + $0x78] sm:$0xff]
        %v3466 = vld [vmem:[%s9 + $0x80] sm:$0xff]
        %v3467 = vld [vmem:[%s9 + $0x88] sm:$0xff]
        %v3468 = vld [vmem:[%s9 + $0x90] sm:$0xff]
        %v3469 = vld [vmem:[%s9 + $0x98] sm:$0xff]
        %v3470 = vld [vmem:[%s9 + $0xa0] sm:$0xff]
        %v3471 = vld [vmem:[%s9 + $0xa8] sm:$0xff]
        %v3472 = vld [vmem:[%s9 + $0xb0] sm:$0xff]
        %v3473 = vld [vmem:[%s9 + $0xb8] sm:$0xff]
        %v3474 = vld [vmem:[%s9 + $0xc0] sm:$0xff]
        %v3475 = vld [vmem:[%s9 + $0xc8] sm:$0xff]
        %v3476 = vld [vmem:[%s9 + $0xd0] sm:$0xff]
        %v3477 = vld [vmem:[%s9 + $0xd8] sm:$0xff]
        %v3478 = vld [vmem:[%s9 + $0xe0] sm:$0xff]
        %v3479 = vld [vmem:[%s9 + $0xe8] sm:$0xff]
        %v3480 = vld [vmem:[%s9 + $0xf0] sm:$0xff]
        %v3481 = vld [vmem:[%s9 + $0xf8] sm:$0xff]
        %v3482 = vld [vmem:[%s9 + $0x100] sm:$0xff]
        %v3483 = vld [vmem:[%s9 + $0x108] sm:$0xff]
        %v3484 = vld [vmem:[%s9 + $0x110] sm:$0xff]
        %v3485 = vld [vmem:[%s9 + $0x118] sm:$0xff]
        %v3486 = vld [vmem:[%s9 + $0x120] sm:$0xff]
        %v3487 = vld [vmem:[%s9 + $0x128] sm:$0xff]
        %v3488 = vld [vmem:[%s9 + $0x130] sm:$0xff]
        %v3489 = vld [vmem:[%s9 + $0x138] sm:$0xff]
        %v3490 = vld [vmem:[%s9 + $0x140] sm:$0xff]
        %v3491 = vld [vmem:[%s9 + $0x148] sm:$0xff]
        %v3492 = vld [vmem:[%s9 + $0x150] sm:$0xff]
        %v3493 = vld [vmem:[%s9 + $0x158] sm:$0xff]
        %v3494 = vld [vmem:[%s9 + $0x160] sm:$0xff]
        %v3495 = vld [vmem:[%s9 + $0x168] sm:$0xff]
        %v3496 = vld [vmem:[%s9 + $0x170] sm:$0xff]
        %v3497 = vld [vmem:[%s9 + $0x178] sm:$0xff]
        %v3498 = vld [vmem:[%s9 + $0x180] sm:$0xff]
        %v3499 = vld [vmem:[%s9 + $0x188] sm:$0xff]
        %v3500 = vld [vmem:[%s9 + $0x190] sm:$0xff]
        %v3501 = vld [vmem:[%s9 + $0x198] sm:$0xff]
        %v3502 = vld [vmem:[%s9 + $0x1a0] sm:$0xff]
        %v3503 = vld [vmem:[%s9 + $0x1a8] sm:$0xff]
        %v3504 = vld [vmem:[%s9 + $0x1b0] sm:$0xff]
        %v3505 = vld [vmem:[%s9 + $0x1b8] sm:$0xff]
        %v3506 = vld [vmem:[%s9 + $0x1c0] sm:$0xff]
        %v3507 = vld [vmem:[%s9 + $0x1c8] sm:$0xff]
        %v3508 = vld [vmem:[%s9 + $0x1d0] sm:$0xff]
        %v3509 = vld [vmem:[%s9 + $0x1d8] sm:$0xff]
        %v3510 = vld [vmem:[%s9 + $0x1e0] sm:$0xff]
        %v3511 = vld [vmem:[%s9 + $0x1e8] sm:$0xff]
        %v3512 = vld [vmem:[%s9 + $0x1f0] sm:$0xff]
        %v3513 = vld [vmem:[%s9 + $0x1f8] sm:$0xff]
        %v3514 = vld [vmem:[%s9 + $0x200] sm:$0xff]
        %v3515 = vld [vmem:[%s9 + $0x208] sm:$0xff]
        %v3516 = vld [vmem:[%s9 + $0x210] sm:$0xff]
        %v3517 = vld [vmem:[%s9 + $0x218] sm:$0xff]
        %v3518 = vld [vmem:[%s9 + $0x220] sm:$0xff]
        %v3519 = vld [vmem:[%s9 + $0x228] sm:$0xff]
        %v3520 = vld [vmem:[%s9 + $0x230] sm:$0xff]
        %v3521 = vld [vmem:[%s9 + $0x238] sm:$0xff]
        %v3522 = vld [vmem:[%s9 + $0x240] sm:$0xff]
        %v3523 = vld [vmem:[%s9 + $0x248] sm:$0xff]
        %v3524 = vld [vmem:[%s9 + $0x250] sm:$0xff]
        %v3525 = vld [vmem:[%s9 + $0x258] sm:$0xff]
        %v3526 = vld [vmem:[%s9 + $0x260] sm:$0xff]
        %v3527 = vld [vmem:[%s9 + $0x268] sm:$0xff]
        %v3528 = vld [vmem:[%s9 + $0x270] sm:$0xff]
        %v3529 = vld [vmem:[%s9 + $0x278] sm:$0xff]
        %v3530 = vld [vmem:[%s9 + $0x280] sm:$0xff]
        %v3531 = vld [vmem:[%s9 + $0x288] sm:$0xff]
        %v3532 = vld [vmem:[%s9 + $0x290] sm:$0xff]
        %v3533 = vld [vmem:[%s9 + $0x298] sm:$0xff]
        %v3534 = vld [vmem:[%s9 + $0x2a0] sm:$0xff]
        %v3535 = vld [vmem:[%s9 + $0x2a8] sm:$0xff]
        %v3536 = vld [vmem:[%s9 + $0x2b0] sm:$0xff]
        %v3537 = vld [vmem:[%s9 + $0x2b8] sm:$0xff]
        %v3538 = vld [vmem:[%s9 + $0x2c0] sm:$0xff]
        %v3539 = vld [vmem:[%s9 + $0x2c8] sm:$0xff]
        %v3540 = vld [vmem:[%s9 + $0x2d0] sm:$0xff]
        %v3541 = vld [vmem:[%s9 + $0x2d8] sm:$0xff]
        %v3542 = vld [vmem:[%s9 + $0x2e0] sm:$0xff]
        %v3543 = vld [vmem:[%s9 + $0x2e8] sm:$0xff]
        %v3544 = vld [vmem:[%s9 + $0x2f0] sm:$0xff]
        %v3545 = vld [vmem:[%s9 + $0x2f8] sm:$0xff]
        %v3546 = vld [vmem:[%s9 + $0x300] sm:$0xff]
        %v3547 = vld [vmem:[%s9 + $0x308] sm:$0xff]
        %v3548 = vld [vmem:[%s9 + $0x310] sm:$0xff]
        %v3549 = vld [vmem:[%s9 + $0x318] sm:$0xff]
        %v3550 = vld [vmem:[%s9 + $0x320] sm:$0xff]
        %v3551 = vld [vmem:[%s9 + $0x328] sm:$0xff]
        %v3552 = vld [vmem:[%s9 + $0x330] sm:$0xff]
        %v3553 = vld [vmem:[%s9 + $0x338] sm:$0xff]
        %v3554 = vld [vmem:[%s9 + $0x340] sm:$0xff]
        %v3555 = vld [vmem:[%s9 + $0x348] sm:$0xff]
        %v3556 = vld [vmem:[%s9 + $0x350] sm:$0xff]
        %v3557 = vld [vmem:[%s9 + $0x358] sm:$0xff]
        %v3558 = vld [vmem:[%s9 + $0x360] sm:$0xff]
        %v3559 = vld [vmem:[%s9 + $0x368] sm:$0xff]
        %v3560 = vld [vmem:[%s9 + $0x370] sm:$0xff]
        %v3561 = vld [vmem:[%s9 + $0x378] sm:$0xff]
        %v3562 = vld [vmem:[%s9 + $0x380] sm:$0xff]
        %v3563 = vld [vmem:[%s9 + $0x388] sm:$0xff]
        %v3564 = vld [vmem:[%s9 + $0x390] sm:$0xff]
        %v3565 = vld [vmem:[%s9 + $0x398] sm:$0xff]
        %v3566 = vld [vmem:[%s9 + $0x3a0] sm:$0xff]
        %v3567 = vld [vmem:[%s9 + $0x3a8] sm:$0xff]
        %v3568 = vld [vmem:[%s9 + $0x3b0] sm:$0xff]
        %v3569 = vld [vmem:[%s9 + $0x3b8] sm:$0xff]
        %v3570 = vld [vmem:[%s9 + $0x3c0] sm:$0xff]
        %v3571 = vld [vmem:[%s9 + $0x3c8] sm:$0xff]
        %v3572 = vld [vmem:[%s9 + $0x3d0] sm:$0xff]
        %v3573 = vld [vmem:[%s9 + $0x3d8] sm:$0xff]
        %v3574 = vld [vmem:[%s9 + $0x3e0] sm:$0xff]
        %v3575 = vld [vmem:[%s9 + $0x3e8] sm:$0xff]
        %v3576 = vld [vmem:[%s9 + $0x3f0] sm:$0xff]
        %v3577 = vld [vmem:[%s9 + $0x3f8] sm:$0xff]
        %v3578 = vld [vmem:[%s9 + $0x400] sm:$0xff]
        %v3579 = vld [vmem:[%s9 + $0x408] sm:$0xff]
        %v3580 = vld [vmem:[%s9 + $0x410] sm:$0xff]
        %v3581 = vld [vmem:[%s9 + $0x418] sm:$0xff]
        %v3582 = vld [vmem:[%s9 + $0x420] sm:$0xff]
        %v3583 = vld [vmem:[%s9 + $0x428] sm:$0xff]
        %v3584 = vld [vmem:[%s9 + $0x430] sm:$0xff]
        %v3585 = vld [vmem:[%s9 + $0x438] sm:$0xff]
        %v3586 = vld [vmem:[%s9 + $0x440] sm:$0xff]
        %v3587 = vld [vmem:[%s9 + $0x448] sm:$0xff]
        %v3588 = vld [vmem:[%s9 + $0x450] sm:$0xff]
        %v3589 = vld [vmem:[%s9 + $0x458] sm:$0xff]
        %v3590 = vld [vmem:[%s9 + $0x460] sm:$0xff]
        %v3591 = vld [vmem:[%s9 + $0x468] sm:$0xff]
        %v3592 = vld [vmem:[%s9 + $0x470] sm:$0xff]
        %v3593 = vld [vmem:[%s9 + $0x478] sm:$0xff]
        %v3594 = vld [vmem:[%s9 + $0x480] sm:$0xff]
        %v3595 = vld [vmem:[%s9 + $0x488] sm:$0xff]
        %v3596 = vld [vmem:[%s9 + $0x490] sm:$0xff]
        %v3597 = vld [vmem:[%s9 + $0x498] sm:$0xff]
        %v3598 = vld [vmem:[%s9 + $0x4a0] sm:$0xff]
        %v3599 = vld [vmem:[%s9 + $0x4a8] sm:$0xff]
        %v3600 = vld [vmem:[%s9 + $0x4b0] sm:$0xff]
        %v3601 = vld [vmem:[%s9 + $0x4b8] sm:$0xff]
        %v3602 = vld [vmem:[%s9 + $0x4c0] sm:$0xff]
        %v3603 = vld [vmem:[%s9 + $0x4c8] sm:$0xff]
        %v3604 = vld [vmem:[%s9 + $0x4d0] sm:$0xff]
        %v3605 = vld [vmem:[%s9 + $0x4d8] sm:$0xff]
        %v3606 = vld [vmem:[%s9 + $0x4e0] sm:$0xff]
        %v3607 = vld [vmem:[%s9 + $0x4e8] sm:$0xff]
        %v3608 = vld [vmem:[%s9 + $0x4f0] sm:$0xff]
        %v3609 = vld [vmem:[%s9 + $0x4f8] sm:$0xff]
        %v3610 = vld [vmem:[%s10] sm:$0xff]
        %v3612 = vlaneseq
        %v3613 = vshrl.u32 %v3612, 7
        %v3614 = vsub.s32 0, %v3613
        %v3615 = vrot.slane %v3610, %v3614
        %v3616 = vlaneseq
        %v3617 = vshrl.u32 %v3616, 7
        %v3618 = vsub.s32 1, %v3617
        %v3619 = vrot.slane %v3610, %v3618
        %v3620 = vlaneseq
        %v3621 = vshrl.u32 %v3620, 7
        %v3622 = vsub.s32 2, %v3621
        %v3623 = vrot.slane %v3610, %v3622
        %v3624 = vlaneseq
        %v3625 = vshrl.u32 %v3624, 7
        %v3626 = vsub.s32 3, %v3625
        %v3627 = vrot.slane %v3610, %v3626
        %v3628 = vlaneseq
        %v3629 = vshrl.u32 %v3628, 7
        %v3630 = vsub.s32 4, %v3629
        %v3631 = vrot.slane %v3610, %v3630
        %v3632 = vlaneseq
        %v3633 = vshrl.u32 %v3632, 7
        %v3634 = vsub.s32 5, %v3633
        %v3635 = vrot.slane %v3610, %v3634
        %v3636 = vlaneseq
        %v3637 = vshrl.u32 %v3636, 7
        %v3638 = vsub.s32 6, %v3637
        %v3639 = vrot.slane %v3610, %v3638
        %v3640 = vlaneseq
        %v3641 = vshrl.u32 %v3640, 7
        %v3642 = vsub.s32 7, %v3641
        %v3643 = vrot.slane %v3610, %v3642
        %v3812 = vunpack.c.l.b16 %v3450
        %v3813 = vunpack.c.h.b16 %v3450
        %v3814 = vunpack.c.l.b16 %v3451
        %v3815 = vunpack.c.h.b16 %v3451
        %v3816 = vunpack.c.l.b16 %v3452
        %v3817 = vunpack.c.h.b16 %v3452
        %v3818 = vunpack.c.l.b16 %v3453
        %v3819 = vunpack.c.h.b16 %v3453
        %v3820 = vunpack.c.l.b16 %v3454
        %v3821 = vunpack.c.h.b16 %v3454
        %v3822 = vunpack.c.l.b16 %v3455
        %v3823 = vunpack.c.h.b16 %v3455
        %v3824 = vunpack.c.l.b16 %v3456
        %v3825 = vunpack.c.h.b16 %v3456
        %v3826 = vunpack.c.l.b16 %v3457
        %v3827 = vunpack.c.h.b16 %v3457
        %v3828 = vunpack.c.l.b16 %v3458
        %v3829 = vunpack.c.h.b16 %v3458
        %v3830 = vunpack.c.l.b16 %v3459
        %v3831 = vunpack.c.h.b16 %v3459
        %v3832 = vunpack.c.l.b16 %v3460
        %v3833 = vunpack.c.h.b16 %v3460
        %v3834 = vunpack.c.l.b16 %v3461
        %v3835 = vunpack.c.h.b16 %v3461
        %v3836 = vunpack.c.l.b16 %v3462
        %v3837 = vunpack.c.h.b16 %v3462
        %v3838 = vunpack.c.l.b16 %v3463
        %v3839 = vunpack.c.h.b16 %v3463
        %v3840 = vunpack.c.l.b16 %v3464
        %v3841 = vunpack.c.h.b16 %v3464
        %v3842 = vunpack.c.l.b16 %v3465
        %v3843 = vunpack.c.h.b16 %v3465
        %v3844 = vunpack.c.l.b16 %v3466
        %v3845 = vunpack.c.h.b16 %v3466
        %v3846 = vunpack.c.l.b16 %v3467
        %v3847 = vunpack.c.h.b16 %v3467
        %v3848 = vunpack.c.l.b16 %v3468
        %v3849 = vunpack.c.h.b16 %v3468
        %v3850 = vunpack.c.l.b16 %v3469
        %v3851 = vunpack.c.h.b16 %v3469
        %v3852 = vunpack.c.l.b16 %v3470
        %v3853 = vunpack.c.h.b16 %v3470
        %v3854 = vunpack.c.l.b16 %v3471
        %v3855 = vunpack.c.h.b16 %v3471
        %v3856 = vunpack.c.l.b16 %v3472
        %v3857 = vunpack.c.h.b16 %v3472
        %v3858 = vunpack.c.l.b16 %v3473
        %v3859 = vunpack.c.h.b16 %v3473
        %v3860 = vunpack.c.l.b16 %v3474
        %v3861 = vunpack.c.h.b16 %v3474
        %v3862 = vunpack.c.l.b16 %v3475
        %v3863 = vunpack.c.h.b16 %v3475
        %v3864 = vunpack.c.l.b16 %v3476
        %v3865 = vunpack.c.h.b16 %v3476
        %v3866 = vunpack.c.l.b16 %v3477
        %v3867 = vunpack.c.h.b16 %v3477
        %v3868 = vunpack.c.l.b16 %v3478
        %v3869 = vunpack.c.h.b16 %v3478
        %v3870 = vunpack.c.l.b16 %v3479
        %v3871 = vunpack.c.h.b16 %v3479
        %v3872 = vunpack.c.l.b16 %v3480
        %v3873 = vunpack.c.h.b16 %v3480
        %v3874 = vunpack.c.l.b16 %v3481
        %v3875 = vunpack.c.h.b16 %v3481
        %v3876 = vunpack.c.l.b16 %v3482
        %v3877 = vunpack.c.h.b16 %v3482
        %v3878 = vunpack.c.l.b16 %v3483
        %v3879 = vunpack.c.h.b16 %v3483
        %v3880 = vunpack.c.l.b16 %v3484
        %v3881 = vunpack.c.h.b16 %v3484
        %v3882 = vunpack.c.l.b16 %v3485
        %v3883 = vunpack.c.h.b16 %v3485
        %v3884 = vunpack.c.l.b16 %v3486
        %v3885 = vunpack.c.h.b16 %v3486
        %v3886 = vunpack.c.l.b16 %v3487
        %v3887 = vunpack.c.h.b16 %v3487
        %v3888 = vunpack.c.l.b16 %v3488
        %v3889 = vunpack.c.h.b16 %v3488
        %v3890 = vunpack.c.l.b16 %v3489
        %v3891 = vunpack.c.h.b16 %v3489
        %v3892 = vunpack.c.l.b16 %v3490
        %v3893 = vunpack.c.h.b16 %v3490
        %v3894 = vunpack.c.l.b16 %v3491
        %v3895 = vunpack.c.h.b16 %v3491
        %v3896 = vunpack.c.l.b16 %v3492
        %v3897 = vunpack.c.h.b16 %v3492
        %v3898 = vunpack.c.l.b16 %v3493
        %v3899 = vunpack.c.h.b16 %v3493
        %v3900 = vunpack.c.l.b16 %v3494
        %v3901 = vunpack.c.h.b16 %v3494
        %v3902 = vunpack.c.l.b16 %v3495
        %v3903 = vunpack.c.h.b16 %v3495
        %v3904 = vunpack.c.l.b16 %v3496
        %v3905 = vunpack.c.h.b16 %v3496
        %v3906 = vunpack.c.l.b16 %v3497
        %v3907 = vunpack.c.h.b16 %v3497
        %v3908 = vunpack.c.l.b16 %v3498
        %v3909 = vunpack.c.h.b16 %v3498
        %v3910 = vunpack.c.l.b16 %v3499
        %v3911 = vunpack.c.h.b16 %v3499
        %v3912 = vunpack.c.l.b16 %v3500
        %v3913 = vunpack.c.h.b16 %v3500
        %v3914 = vunpack.c.l.b16 %v3501
        %v3915 = vunpack.c.h.b16 %v3501
        %v3916 = vunpack.c.l.b16 %v3502
        %v3917 = vunpack.c.h.b16 %v3502
        %v3918 = vunpack.c.l.b16 %v3503
        %v3919 = vunpack.c.h.b16 %v3503
        %v3920 = vunpack.c.l.b16 %v3504
        %v3921 = vunpack.c.h.b16 %v3504
        %v3922 = vunpack.c.l.b16 %v3505
        %v3923 = vunpack.c.h.b16 %v3505
        %v3924 = vunpack.c.l.b16 %v3506
        %v3925 = vunpack.c.h.b16 %v3506
        %v3926 = vunpack.c.l.b16 %v3507
        %v3927 = vunpack.c.h.b16 %v3507
        %v3928 = vunpack.c.l.b16 %v3508
        %v3929 = vunpack.c.h.b16 %v3508
        %v3930 = vunpack.c.l.b16 %v3509
        %v3931 = vunpack.c.h.b16 %v3509
        %v3932 = vunpack.c.l.b16 %v3510
        %v3933 = vunpack.c.h.b16 %v3510
        %v3934 = vunpack.c.l.b16 %v3511
        %v3935 = vunpack.c.h.b16 %v3511
        %v3936 = vunpack.c.l.b16 %v3512
        %v3937 = vunpack.c.h.b16 %v3512
        %v3938 = vunpack.c.l.b16 %v3513
        %v3939 = vunpack.c.h.b16 %v3513
        %v3940 = vunpack.c.l.b16 %v3514
        %v3941 = vunpack.c.h.b16 %v3514
        %v3942 = vunpack.c.l.b16 %v3515
        %v3943 = vunpack.c.h.b16 %v3515
        %v3944 = vunpack.c.l.b16 %v3516
        %v3945 = vunpack.c.h.b16 %v3516
        %v3946 = vunpack.c.l.b16 %v3517
        %v3947 = vunpack.c.h.b16 %v3517
        %v3948 = vunpack.c.l.b16 %v3518
        %v3949 = vunpack.c.h.b16 %v3518
        %v3950 = vunpack.c.l.b16 %v3519
        %v3951 = vunpack.c.h.b16 %v3519
        %v3952 = vunpack.c.l.b16 %v3520
        %v3953 = vunpack.c.h.b16 %v3520
        %v3954 = vunpack.c.l.b16 %v3521
        %v3955 = vunpack.c.h.b16 %v3521
        %v3956 = vunpack.c.l.b16 %v3522
        %v3957 = vunpack.c.h.b16 %v3522
        %v3958 = vunpack.c.l.b16 %v3523
        %v3959 = vunpack.c.h.b16 %v3523
        %v3960 = vunpack.c.l.b16 %v3524
        %v3961 = vunpack.c.h.b16 %v3524
        %v3962 = vunpack.c.l.b16 %v3525
        %v3963 = vunpack.c.h.b16 %v3525
        %v3964 = vunpack.c.l.b16 %v3526
        %v3965 = vunpack.c.h.b16 %v3526
        %v3966 = vunpack.c.l.b16 %v3527
        %v3967 = vunpack.c.h.b16 %v3527
        %v3968 = vunpack.c.l.b16 %v3528
        %v3969 = vunpack.c.h.b16 %v3528
        %v3970 = vunpack.c.l.b16 %v3529
        %v3971 = vunpack.c.h.b16 %v3529
        %v3972 = vunpack.c.l.b16 %v3530
        %v3973 = vunpack.c.h.b16 %v3530
        %v3974 = vunpack.c.l.b16 %v3531
        %v3975 = vunpack.c.h.b16 %v3531
        %v3976 = vunpack.c.l.b16 %v3532
        %v3977 = vunpack.c.h.b16 %v3532
        %v3978 = vunpack.c.l.b16 %v3533
        %v3979 = vunpack.c.h.b16 %v3533
        %v3980 = vunpack.c.l.b16 %v3534
        %v3981 = vunpack.c.h.b16 %v3534
        %v3982 = vunpack.c.l.b16 %v3535
        %v3983 = vunpack.c.h.b16 %v3535
        %v3984 = vunpack.c.l.b16 %v3536
        %v3985 = vunpack.c.h.b16 %v3536
        %v3986 = vunpack.c.l.b16 %v3537
        %v3987 = vunpack.c.h.b16 %v3537
        %v3988 = vunpack.c.l.b16 %v3538
        %v3989 = vunpack.c.h.b16 %v3538
        %v3990 = vunpack.c.l.b16 %v3539
        %v3991 = vunpack.c.h.b16 %v3539
        %v3992 = vunpack.c.l.b16 %v3540
        %v3993 = vunpack.c.h.b16 %v3540
        %v3994 = vunpack.c.l.b16 %v3541
        %v3995 = vunpack.c.h.b16 %v3541
        %v3996 = vunpack.c.l.b16 %v3542
        %v3997 = vunpack.c.h.b16 %v3542
        %v3998 = vunpack.c.l.b16 %v3543
        %v3999 = vunpack.c.h.b16 %v3543
        %v4000 = vunpack.c.l.b16 %v3544
        %v4001 = vunpack.c.h.b16 %v3544
        %v4002 = vunpack.c.l.b16 %v3545
        %v4003 = vunpack.c.h.b16 %v3545
        %v4004 = vunpack.c.l.b16 %v3546
        %v4005 = vunpack.c.h.b16 %v3546
        %v4006 = vunpack.c.l.b16 %v3547
        %v4007 = vunpack.c.h.b16 %v3547
        %v4008 = vunpack.c.l.b16 %v3548
        %v4009 = vunpack.c.h.b16 %v3548
        %v4010 = vunpack.c.l.b16 %v3549
        %v4011 = vunpack.c.h.b16 %v3549
        %v4012 = vunpack.c.l.b16 %v3550
        %v4013 = vunpack.c.h.b16 %v3550
        %v4014 = vunpack.c.l.b16 %v3551
        %v4015 = vunpack.c.h.b16 %v3551
        %v4016 = vunpack.c.l.b16 %v3552
        %v4017 = vunpack.c.h.b16 %v3552
        %v4018 = vunpack.c.l.b16 %v3553
        %v4019 = vunpack.c.h.b16 %v3553
        %v4020 = vunpack.c.l.b16 %v3554
        %v4021 = vunpack.c.h.b16 %v3554
        %v4022 = vunpack.c.l.b16 %v3555
        %v4023 = vunpack.c.h.b16 %v3555
        %v4024 = vunpack.c.l.b16 %v3556
        %v4025 = vunpack.c.h.b16 %v3556
        %v4026 = vunpack.c.l.b16 %v3557
        %v4027 = vunpack.c.h.b16 %v3557
        %v4028 = vunpack.c.l.b16 %v3558
        %v4029 = vunpack.c.h.b16 %v3558
        %v4030 = vunpack.c.l.b16 %v3559
        %v4031 = vunpack.c.h.b16 %v3559
        %v4032 = vunpack.c.l.b16 %v3560
        %v4033 = vunpack.c.h.b16 %v3560
        %v4034 = vunpack.c.l.b16 %v3561
        %v4035 = vunpack.c.h.b16 %v3561
        %v4036 = vunpack.c.l.b16 %v3562
        %v4037 = vunpack.c.h.b16 %v3562
        %v4038 = vunpack.c.l.b16 %v3563
        %v4039 = vunpack.c.h.b16 %v3563
        %v4040 = vunpack.c.l.b16 %v3564
        %v4041 = vunpack.c.h.b16 %v3564
        %v4042 = vunpack.c.l.b16 %v3565
        %v4043 = vunpack.c.h.b16 %v3565
        %v4044 = vunpack.c.l.b16 %v3566
        %v4045 = vunpack.c.h.b16 %v3566
        %v4046 = vunpack.c.l.b16 %v3567
        %v4047 = vunpack.c.h.b16 %v3567
        %v4048 = vunpack.c.l.b16 %v3568
        %v4049 = vunpack.c.h.b16 %v3568
        %v4050 = vunpack.c.l.b16 %v3569
        %v4051 = vunpack.c.h.b16 %v3569
        %v4052 = vunpack.c.l.b16 %v3570
        %v4053 = vunpack.c.h.b16 %v3570
        %v4054 = vunpack.c.l.b16 %v3571
        %v4055 = vunpack.c.h.b16 %v3571
        %v4056 = vunpack.c.l.b16 %v3572
        %v4057 = vunpack.c.h.b16 %v3572
        %v4058 = vunpack.c.l.b16 %v3573
        %v4059 = vunpack.c.h.b16 %v3573
        %v4060 = vunpack.c.l.b16 %v3574
        %v4061 = vunpack.c.h.b16 %v3574
        %v4062 = vunpack.c.l.b16 %v3575
        %v4063 = vunpack.c.h.b16 %v3575
        %v4064 = vunpack.c.l.b16 %v3576
        %v4065 = vunpack.c.h.b16 %v3576
        %v4066 = vunpack.c.l.b16 %v3577
        %v4067 = vunpack.c.h.b16 %v3577
        %v4068 = vunpack.c.l.b16 %v3578
        %v4069 = vunpack.c.h.b16 %v3578
        %v4070 = vunpack.c.l.b16 %v3579
        %v4071 = vunpack.c.h.b16 %v3579
        %v4072 = vunpack.c.l.b16 %v3580
        %v4073 = vunpack.c.h.b16 %v3580
        %v4074 = vunpack.c.l.b16 %v3581
        %v4075 = vunpack.c.h.b16 %v3581
        %v4076 = vunpack.c.l.b16 %v3582
        %v4077 = vunpack.c.h.b16 %v3582
        %v4078 = vunpack.c.l.b16 %v3583
        %v4079 = vunpack.c.h.b16 %v3583
        %v4080 = vunpack.c.l.b16 %v3584
        %v4081 = vunpack.c.h.b16 %v3584
        %v4082 = vunpack.c.l.b16 %v3585
        %v4083 = vunpack.c.h.b16 %v3585
        %v4084 = vunpack.c.l.b16 %v3586
        %v4085 = vunpack.c.h.b16 %v3586
        %v4086 = vunpack.c.l.b16 %v3587
        %v4087 = vunpack.c.h.b16 %v3587
        %v4088 = vunpack.c.l.b16 %v3588
        %v4089 = vunpack.c.h.b16 %v3588
        %v4090 = vunpack.c.l.b16 %v3589
        %v4091 = vunpack.c.h.b16 %v3589
        %v4092 = vunpack.c.l.b16 %v3590
        %v4093 = vunpack.c.h.b16 %v3590
        %v4094 = vunpack.c.l.b16 %v3591
        %v4095 = vunpack.c.h.b16 %v3591
        %v4096 = vunpack.c.l.b16 %v3592
        %v4097 = vunpack.c.h.b16 %v3592
        %v4098 = vunpack.c.l.b16 %v3593
        %v4099 = vunpack.c.h.b16 %v3593
        %v4100 = vunpack.c.l.b16 %v3594
        %v4101 = vunpack.c.h.b16 %v3594
        %v4102 = vunpack.c.l.b16 %v3595
        %v4103 = vunpack.c.h.b16 %v3595
        %v4104 = vunpack.c.l.b16 %v3596
        %v4105 = vunpack.c.h.b16 %v3596
        %v4106 = vunpack.c.l.b16 %v3597
        %v4107 = vunpack.c.h.b16 %v3597
        %v4108 = vunpack.c.l.b16 %v3598
        %v4109 = vunpack.c.h.b16 %v3598
        %v4110 = vunpack.c.l.b16 %v3599
        %v4111 = vunpack.c.h.b16 %v3599
        %v4112 = vunpack.c.l.b16 %v3600
        %v4113 = vunpack.c.h.b16 %v3600
        %v4114 = vunpack.c.l.b16 %v3601
        %v4115 = vunpack.c.h.b16 %v3601
        %v4116 = vunpack.c.l.b16 %v3602
        %v4117 = vunpack.c.h.b16 %v3602
        %v4118 = vunpack.c.l.b16 %v3603
        %v4119 = vunpack.c.h.b16 %v3603
        %v4120 = vunpack.c.l.b16 %v3604
        %v4121 = vunpack.c.h.b16 %v3604
        %v4122 = vunpack.c.l.b16 %v3605
        %v4123 = vunpack.c.h.b16 %v3605
        %v4124 = vunpack.c.l.b16 %v3606
        %v4125 = vunpack.c.h.b16 %v3606
        %v4126 = vunpack.c.l.b16 %v3607
        %v4127 = vunpack.c.h.b16 %v3607
        %v4128 = vunpack.c.l.b16 %v3608
        %v4129 = vunpack.c.h.b16 %v3608
        %v4130 = vunpack.c.l.b16 %v3609
        %v4131 = vunpack.c.h.b16 %v3609
        %v4132 = vpack.c.b16 %v3820, %v3812
        %v4133 = vpack.c.b16 %v3821, %v3813
        %v4134 = vpack.c.b16 %v3822, %v3814
        %v4135 = vpack.c.b16 %v3823, %v3815
        %v4136 = vpack.c.b16 %v3824, %v3816
        %v4137 = vpack.c.b16 %v3825, %v3817
        %v4138 = vpack.c.b16 %v3826, %v3818
        %v4139 = vpack.c.b16 %v3827, %v3819
        %v4140 = vpack.c.b16 %v3836, %v3828
        %v4141 = vpack.c.b16 %v3837, %v3829
        %v4142 = vpack.c.b16 %v3838, %v3830
        %v4143 = vpack.c.b16 %v3839, %v3831
        %v4144 = vpack.c.b16 %v3840, %v3832
        %v4145 = vpack.c.b16 %v3841, %v3833
        %v4146 = vpack.c.b16 %v3842, %v3834
        %v4147 = vpack.c.b16 %v3843, %v3835
        %v4148 = vpack.c.b16 %v3852, %v3844
        %v4149 = vpack.c.b16 %v3853, %v3845
        %v4150 = vpack.c.b16 %v3854, %v3846
        %v4151 = vpack.c.b16 %v3855, %v3847
        %v4152 = vpack.c.b16 %v3856, %v3848
        %v4153 = vpack.c.b16 %v3857, %v3849
        %v4154 = vpack.c.b16 %v3858, %v3850
        %v4155 = vpack.c.b16 %v3859, %v3851
        %v4156 = vpack.c.b16 %v3868, %v3860
        %v4157 = vpack.c.b16 %v3869, %v3861
        %v4158 = vpack.c.b16 %v3870, %v3862
        %v4159 = vpack.c.b16 %v3871, %v3863
        %v4160 = vpack.c.b16 %v3872, %v3864
        %v4161 = vpack.c.b16 %v3873, %v3865
        %v4162 = vpack.c.b16 %v3874, %v3866
        %v4163 = vpack.c.b16 %v3875, %v3867
        %v4164 = vpack.c.b16 %v3884, %v3876
        %v4165 = vpack.c.b16 %v3885, %v3877
        %v4166 = vpack.c.b16 %v3886, %v3878
        %v4167 = vpack.c.b16 %v3887, %v3879
        %v4168 = vpack.c.b16 %v3888, %v3880
        %v4169 = vpack.c.b16 %v3889, %v3881
        %v4170 = vpack.c.b16 %v3890, %v3882
        %v4171 = vpack.c.b16 %v3891, %v3883
        %v4172 = vpack.c.b16 %v3900, %v3892
        %v4173 = vpack.c.b16 %v3901, %v3893
        %v4174 = vpack.c.b16 %v3902, %v3894
        %v4175 = vpack.c.b16 %v3903, %v3895
        %v4176 = vpack.c.b16 %v3904, %v3896
        %v4177 = vpack.c.b16 %v3905, %v3897
        %v4178 = vpack.c.b16 %v3906, %v3898
        %v4179 = vpack.c.b16 %v3907, %v3899
        %v4180 = vpack.c.b16 %v3916, %v3908
        %v4181 = vpack.c.b16 %v3917, %v3909
        %v4182 = vpack.c.b16 %v3918, %v3910
        %v4183 = vpack.c.b16 %v3919, %v3911
        %v4184 = vpack.c.b16 %v3920, %v3912
        %v4185 = vpack.c.b16 %v3921, %v3913
        %v4186 = vpack.c.b16 %v3922, %v3914
        %v4187 = vpack.c.b16 %v3923, %v3915
        %v4188 = vpack.c.b16 %v3932, %v3924
        %v4189 = vpack.c.b16 %v3933, %v3925
        %v4190 = vpack.c.b16 %v3934, %v3926
        %v4191 = vpack.c.b16 %v3935, %v3927
        %v4192 = vpack.c.b16 %v3936, %v3928
        %v4193 = vpack.c.b16 %v3937, %v3929
        %v4194 = vpack.c.b16 %v3938, %v3930
        %v4195 = vpack.c.b16 %v3939, %v3931
        %v4196 = vpack.c.b16 %v3948, %v3940
        %v4197 = vpack.c.b16 %v3949, %v3941
        %v4198 = vpack.c.b16 %v3950, %v3942
        %v4199 = vpack.c.b16 %v3951, %v3943
        %v4200 = vpack.c.b16 %v3952, %v3944
        %v4201 = vpack.c.b16 %v3953, %v3945
        %v4202 = vpack.c.b16 %v3954, %v3946
        %v4203 = vpack.c.b16 %v3955, %v3947
        %v4204 = vpack.c.b16 %v3964, %v3956
        %v4205 = vpack.c.b16 %v3965, %v3957
        %v4206 = vpack.c.b16 %v3966, %v3958
        %v4207 = vpack.c.b16 %v3967, %v3959
        %v4208 = vpack.c.b16 %v3968, %v3960
        %v4209 = vpack.c.b16 %v3969, %v3961
        %v4210 = vpack.c.b16 %v3970, %v3962
        %v4211 = vpack.c.b16 %v3971, %v3963
        %v4212 = vpack.c.b16 %v3980, %v3972
        %v4213 = vpack.c.b16 %v3981, %v3973
        %v4214 = vpack.c.b16 %v3982, %v3974
        %v4215 = vpack.c.b16 %v3983, %v3975
        %v4216 = vpack.c.b16 %v3984, %v3976
        %v4217 = vpack.c.b16 %v3985, %v3977
        %v4218 = vpack.c.b16 %v3986, %v3978
        %v4219 = vpack.c.b16 %v3987, %v3979
        %v4220 = vpack.c.b16 %v3996, %v3988
        %v4221 = vpack.c.b16 %v3997, %v3989
        %v4222 = vpack.c.b16 %v3998, %v3990
        %v4223 = vpack.c.b16 %v3999, %v3991
        %v4224 = vpack.c.b16 %v4000, %v3992
        %v4225 = vpack.c.b16 %v4001, %v3993
        %v4226 = vpack.c.b16 %v4002, %v3994
        %v4227 = vpack.c.b16 %v4003, %v3995
        %v4228 = vpack.c.b16 %v4012, %v4004
        %v4229 = vpack.c.b16 %v4013, %v4005
        %v4230 = vpack.c.b16 %v4014, %v4006
        %v4231 = vpack.c.b16 %v4015, %v4007
        %v4232 = vpack.c.b16 %v4016, %v4008
        %v4233 = vpack.c.b16 %v4017, %v4009
        %v4234 = vpack.c.b16 %v4018, %v4010
        %v4235 = vpack.c.b16 %v4019, %v4011
        %v4236 = vpack.c.b16 %v4028, %v4020
        %v4237 = vpack.c.b16 %v4029, %v4021
        %v4238 = vpack.c.b16 %v4030, %v4022
        %v4239 = vpack.c.b16 %v4031, %v4023
        %v4240 = vpack.c.b16 %v4032, %v4024
        %v4241 = vpack.c.b16 %v4033, %v4025
        %v4242 = vpack.c.b16 %v4034, %v4026
        %v4243 = vpack.c.b16 %v4035, %v4027
        %v4244 = vpack.c.b16 %v4044, %v4036
        %v4245 = vpack.c.b16 %v4045, %v4037
        %v4246 = vpack.c.b16 %v4046, %v4038
        %v4247 = vpack.c.b16 %v4047, %v4039
        %v4248 = vpack.c.b16 %v4048, %v4040
        %v4249 = vpack.c.b16 %v4049, %v4041
        %v4250 = vpack.c.b16 %v4050, %v4042
        %v4251 = vpack.c.b16 %v4051, %v4043
        %v4252 = vpack.c.b16 %v4060, %v4052
        %v4253 = vpack.c.b16 %v4061, %v4053
        %v4254 = vpack.c.b16 %v4062, %v4054
        %v4255 = vpack.c.b16 %v4063, %v4055
        %v4256 = vpack.c.b16 %v4064, %v4056
        %v4257 = vpack.c.b16 %v4065, %v4057
        %v4258 = vpack.c.b16 %v4066, %v4058
        %v4259 = vpack.c.b16 %v4067, %v4059
        %v4260 = vpack.c.b16 %v4076, %v4068
        %v4261 = vpack.c.b16 %v4077, %v4069
        %v4262 = vpack.c.b16 %v4078, %v4070
        %v4263 = vpack.c.b16 %v4079, %v4071
        %v4264 = vpack.c.b16 %v4080, %v4072
        %v4265 = vpack.c.b16 %v4081, %v4073
        %v4266 = vpack.c.b16 %v4082, %v4074
        %v4267 = vpack.c.b16 %v4083, %v4075
        %v4268 = vpack.c.b16 %v4092, %v4084
        %v4269 = vpack.c.b16 %v4093, %v4085
        %v4270 = vpack.c.b16 %v4094, %v4086
        %v4271 = vpack.c.b16 %v4095, %v4087
        %v4272 = vpack.c.b16 %v4096, %v4088
        %v4273 = vpack.c.b16 %v4097, %v4089
        %v4274 = vpack.c.b16 %v4098, %v4090
        %v4275 = vpack.c.b16 %v4099, %v4091
        %v4276 = vpack.c.b16 %v4108, %v4100
        %v4277 = vpack.c.b16 %v4109, %v4101
        %v4278 = vpack.c.b16 %v4110, %v4102
        %v4279 = vpack.c.b16 %v4111, %v4103
        %v4280 = vpack.c.b16 %v4112, %v4104
        %v4281 = vpack.c.b16 %v4113, %v4105
        %v4282 = vpack.c.b16 %v4114, %v4106
        %v4283 = vpack.c.b16 %v4115, %v4107
        %v4284 = vpack.c.b16 %v4124, %v4116
        %v4285 = vpack.c.b16 %v4125, %v4117
        %v4286 = vpack.c.b16 %v4126, %v4118
        %v4287 = vpack.c.b16 %v4127, %v4119
        %v4288 = vpack.c.b16 %v4128, %v4120
        %v4289 = vpack.c.b16 %v4129, %v4121
        %v4290 = vpack.c.b16 %v4130, %v4122
        %v4291 = vpack.c.b16 %v4131, %v4123
        %vm4452 = vcmask 523264
        %v4454 = vsel %vm4452, %v3449, 0
        %4456 = vmatprep.subr.bf16.mxu0 %v4133
        %4457 = vmatpush1.bf16.msra.mxu0 %v4132
        %4458 = vmatprep.subr.bf16.mxu0 %v4141
        %4459 = vmatpush1.bf16.msra.mxu0 %v4140
        %4460 = vmatprep.subr.bf16.mxu0 %v4149
        %4461 = vmatpush1.bf16.msra.mxu0 %v4148
        %4462 = vmatprep.subr.bf16.mxu0 %v4157
        %4463 = vmatpush1.bf16.msra.mxu0 %v4156
        %4464 = vmatprep.subr.bf16.mxu0 %v4165
        %4465 = vmatpush1.bf16.msra.mxu0 %v4164
        %4466 = vmatprep.subr.bf16.mxu0 %v4173
        %4467 = vmatpush1.bf16.msra.mxu0 %v4172
        %4468 = vmatprep.subr.bf16.mxu0 %v4181
        %4469 = vmatpush1.bf16.msra.mxu0 %v4180
        %4470 = vmatprep.subr.bf16.mxu0 %v4189
        %4471 = vmatpush1.bf16.msra.mxu0 %v4188
        %4472 = vmatprep.subr.bf16.mxu0 %v4197
        %4473 = vmatpush1.bf16.msra.mxu0 %v4196
        %4474 = vmatprep.subr.bf16.mxu0 %v4205
        %4475 = vmatpush1.bf16.msra.mxu0 %v4204
        %4476 = vmatprep.subr.bf16.mxu0 %v4213
        %4477 = vmatpush1.bf16.msra.mxu0 %v4212
        %4478 = vmatprep.subr.bf16.mxu0 %v4221
        %4479 = vmatpush1.bf16.msra.mxu0 %v4220
        %4480 = vmatprep.subr.bf16.mxu0 %v4229
        %4481 = vmatpush1.bf16.msra.mxu0 %v4228
        %4482 = vmatprep.subr.bf16.mxu0 %v4237
        %4483 = vmatpush1.bf16.msra.mxu0 %v4236
        %4484 = vmatprep.subr.bf16.mxu0 %v4245
        %4485 = vmatpush1.bf16.msra.mxu0 %v4244
        %4486 = vmatprep.subr.bf16.mxu0 %v4253
        %4487 = vmatpush1.bf16.msra.mxu0 %v4252
        %4488 = vmatprep.mubr.bf16.mxu0 %v3448
        %4489 = vmatmul.mubr.bf16.gmra.mrb[0].mxu0 %v3447
        %v4490 = vpop.f32.mrb[0].mxu0
        %v4491 = vadd.f32 %v3615, %v4490
        %v4492 = vpop.f32.mrb[0].mxu0
        %v4493 = vadd.f32 %v3619, %v4492
        %v4494 = vpop.f32.mrb[0].mxu0
        %v4495 = vpop.f32.mrb[0].mxu0
        %4496 = vdwg.mxu0
        %4497 = vmatprep.subr.bf16.mxu0 %v4261
        %4498 = vmatpush1.bf16.msra.mxu0 %v4260
        %4499 = vmatprep.subr.bf16.mxu0 %v4269
        %4500 = vmatpush1.bf16.msra.mxu0 %v4268
        %4501 = vmatprep.subr.bf16.mxu0 %v4277
        %4502 = vmatpush1.bf16.msra.mxu0 %v4276
        %4503 = vmatprep.subr.bf16.mxu0 %v4285
        %4504 = vmatpush1.bf16.msra.mxu0 %v4284
        %4505 = vmatprep.subr.bf16.mxu0 0
        %4506 = vmatpush1.bf16.msra.mxu0 0
        %4507 = vmatprep.subr.bf16.mxu0 0
        %4508 = vmatpush1.bf16.msra.mxu0 0
        %4509 = vmatprep.subr.bf16.mxu0 0
        %4510 = vmatpush1.bf16.msra.mxu0 0
        %4511 = vmatprep.subr.bf16.mxu0 0
        %4512 = vmatpush1.bf16.msra.mxu0 0
        %4513 = vmatprep.subr.bf16.mxu0 0
        %4514 = vmatpush1.bf16.msra.mxu0 0
        %4515 = vmatprep.subr.bf16.mxu0 0
        %4516 = vmatpush1.bf16.msra.mxu0 0
        %4517 = vmatprep.subr.bf16.mxu0 0
        %4518 = vmatpush1.bf16.msra.mxu0 0
        %4519 = vmatprep.subr.bf16.mxu0 0
        %4520 = vmatpush1.bf16.msra.mxu0 0
        %4521 = vmatprep.subr.bf16.mxu0 0
        %4522 = vmatpush1.bf16.msra.mxu0 0
        %4523 = vmatprep.subr.bf16.mxu0 0
        %4524 = vmatpush1.bf16.msra.mxu0 0
        %4525 = vmatprep.subr.bf16.mxu0 0
        %4526 = vmatpush1.bf16.msra.mxu0 0
        %4527 = vmatprep.subr.bf16.mxu0 0
        %4528 = vmatpush1.bf16.msra.mxu0 0
        %4529 = vmatprep.mubr.bf16.mxu0 0
        %4530 = vmatmul.mubr.bf16.gmra.mrb[0].mxu0 %v4454
        %v4531 = vpop.f32.mrb[0].mxu0
        %v4532 = vadd.f32 %v4491, %v4531
        %v4533 = vpop.f32.mrb[0].mxu0
        %v4534 = vadd.f32 %v4493, %v4533
        %v4535 = vpop.f32.mrb[0].mxu0
        %v4536 = vpop.f32.mrb[0].mxu0
        %4537 = vdwg.mxu0
        %4538 = vmatprep.subr.bf16.mxu0 %v4135
        %4539 = vmatpush1.bf16.msra.mxu0 %v4134
        %4540 = vmatprep.subr.bf16.mxu0 %v4143
        %4541 = vmatpush1.bf16.msra.mxu0 %v4142
        %4542 = vmatprep.subr.bf16.mxu0 %v4151
        %4543 = vmatpush1.bf16.msra.mxu0 %v4150
        %4544 = vmatprep.subr.bf16.mxu0 %v4159
        %4545 = vmatpush1.bf16.msra.mxu0 %v4158
        %4546 = vmatprep.subr.bf16.mxu0 %v4167
        %4547 = vmatpush1.bf16.msra.mxu0 %v4166
        %4548 = vmatprep.subr.bf16.mxu0 %v4175
        %4549 = vmatpush1.bf16.msra.mxu0 %v4174
        %4550 = vmatprep.subr.bf16.mxu0 %v4183
        %4551 = vmatpush1.bf16.msra.mxu0 %v4182
        %4552 = vmatprep.subr.bf16.mxu0 %v4191
        %4553 = vmatpush1.bf16.msra.mxu0 %v4190
        %4554 = vmatprep.subr.bf16.mxu0 %v4199
        %4555 = vmatpush1.bf16.msra.mxu0 %v4198
        %4556 = vmatprep.subr.bf16.mxu0 %v4207
        %4557 = vmatpush1.bf16.msra.mxu0 %v4206
        %4558 = vmatprep.subr.bf16.mxu0 %v4215
        %4559 = vmatpush1.bf16.msra.mxu0 %v4214
        %4560 = vmatprep.subr.bf16.mxu0 %v4223
        %4561 = vmatpush1.bf16.msra.mxu0 %v4222
        %4562 = vmatprep.subr.bf16.mxu0 %v4231
        %4563 = vmatpush1.bf16.msra.mxu0 %v4230
        %4564 = vmatprep.subr.bf16.mxu0 %v4239
        %4565 = vmatpush1.bf16.msra.mxu0 %v4238
        %4566 = vmatprep.subr.bf16.mxu0 %v4247
        %4567 = vmatpush1.bf16.msra.mxu0 %v4246
        %4568 = vmatprep.subr.bf16.mxu0 %v4255
        %4569 = vmatpush1.bf16.msra.mxu0 %v4254
        %4570 = vmatprep.mubr.bf16.mxu0 %v3448
        %4571 = vmatmul.mubr.bf16.gmra.mrb[0].mxu0 %v3447
        %v4572 = vpop.f32.mrb[0].mxu0
        %v4573 = vadd.f32 %v3623, %v4572
        %v4574 = vpop.f32.mrb[0].mxu0
        %v4575 = vadd.f32 %v3627, %v4574
        %v4576 = vpop.f32.mrb[0].mxu0
        %v4577 = vpop.f32.mrb[0].mxu0
        %4578 = vdwg.mxu0
        %4579 = vmatprep.subr.bf16.mxu0 %v4263
        %4580 = vmatpush1.bf16.msra.mxu0 %v4262
        %4581 = vmatprep.subr.bf16.mxu0 %v4271
        %4582 = vmatpush1.bf16.msra.mxu0 %v4270
        %4583 = vmatprep.subr.bf16.mxu0 %v4279
        %4584 = vmatpush1.bf16.msra.mxu0 %v4278
        %4585 = vmatprep.subr.bf16.mxu0 %v4287
        %4586 = vmatpush1.bf16.msra.mxu0 %v4286
        %4587 = vmatprep.subr.bf16.mxu0 0
        %4588 = vmatpush1.bf16.msra.mxu0 0
        %4589 = vmatprep.subr.bf16.mxu0 0
        %4590 = vmatpush1.bf16.msra.mxu0 0
        %4591 = vmatprep.subr.bf16.mxu0 0
        %4592 = vmatpush1.bf16.msra.mxu0 0
        %4593 = vmatprep.subr.bf16.mxu0 0
        %4594 = vmatpush1.bf16.msra.mxu0 0
        %4595 = vmatprep.subr.bf16.mxu0 0
        %4596 = vmatpush1.bf16.msra.mxu0 0
        %4597 = vmatprep.subr.bf16.mxu0 0
        %4598 = vmatpush1.bf16.msra.mxu0 0
        %4599 = vmatprep.subr.bf16.mxu0 0
        %4600 = vmatpush1.bf16.msra.mxu0 0
        %4601 = vmatprep.subr.bf16.mxu0 0
        %4602 = vmatpush1.bf16.msra.mxu0 0
        %4603 = vmatprep.subr.bf16.mxu0 0
        %4604 = vmatpush1.bf16.msra.mxu0 0
        %4605 = vmatprep.subr.bf16.mxu0 0
        %4606 = vmatpush1.bf16.msra.mxu0 0
        %4607 = vmatprep.subr.bf16.mxu0 0
        %4608 = vmatpush1.bf16.msra.mxu0 0
        %4609 = vmatprep.subr.bf16.mxu0 0
        %4610 = vmatpush1.bf16.msra.mxu0 0
        %4611 = vmatprep.mubr.bf16.mxu0 0
        %4612 = vmatmul.mubr.bf16.gmra.mrb[0].mxu0 %v4454
        %v4613 = vpop.f32.mrb[0].mxu0
        %v4614 = vadd.f32 %v4573, %v4613
        %v4615 = vpop.f32.mrb[0].mxu0
        %v4616 = vadd.f32 %v4575, %v4615
        %v4617 = vpop.f32.mrb[0].mxu0
        %v4618 = vpop.f32.mrb[0].mxu0
        %4619 = vdwg.mxu0
        %4620 = vmatprep.subr.bf16.mxu0 %v4137
        %4621 = vmatpush1.bf16.msra.mxu0 %v4136
        %4622 = vmatprep.subr.bf16.mxu0 %v4145
        %4623 = vmatpush1.bf16.msra.mxu0 %v4144
        %4624 = vmatprep.subr.bf16.mxu0 %v4153
        %4625 = vmatpush1.bf16.msra.mxu0 %v4152
        %4626 = vmatprep.subr.bf16.mxu0 %v4161
        %4627 = vmatpush1.bf16.msra.mxu0 %v4160
        %4628 = vmatprep.subr.bf16.mxu0 %v4169
        %4629 = vmatpush1.bf16.msra.mxu0 %v4168
        %4630 = vmatprep.subr.bf16.mxu0 %v4177
        %4631 = vmatpush1.bf16.msra.mxu0 %v4176
        %4632 = vmatprep.subr.bf16.mxu0 %v4185
        %4633 = vmatpush1.bf16.msra.mxu0 %v4184
        %4634 = vmatprep.subr.bf16.mxu0 %v4193
        %4635 = vmatpush1.bf16.msra.mxu0 %v4192
        %4636 = vmatprep.subr.bf16.mxu0 %v4201
        %4637 = vmatpush1.bf16.msra.mxu0 %v4200
        %4638 = vmatprep.subr.bf16.mxu0 %v4209
        %4639 = vmatpush1.bf16.msra.mxu0 %v4208
        %4640 = vmatprep.subr.bf16.mxu0 %v4217
        %4641 = vmatpush1.bf16.msra.mxu0 %v4216
        %4642 = vmatprep.subr.bf16.mxu0 %v4225
        %4643 = vmatpush1.bf16.msra.mxu0 %v4224
        %4644 = vmatprep.subr.bf16.mxu0 %v4233
        %4645 = vmatpush1.bf16.msra.mxu0 %v4232
        %4646 = vmatprep.subr.bf16.mxu0 %v4241
        %4647 = vmatpush1.bf16.msra.mxu0 %v4240
        %4648 = vmatprep.subr.bf16.mxu0 %v4249
        %4649 = vmatpush1.bf16.msra.mxu0 %v4248
        %4650 = vmatprep.subr.bf16.mxu0 %v4257
        %4651 = vmatpush1.bf16.msra.mxu0 %v4256
        %4652 = vmatprep.mubr.bf16.mxu0 %v3448
        %4653 = vmatmul.mubr.bf16.gmra.mrb[0].mxu0 %v3447
        %v4654 = vpop.f32.mrb[0].mxu0
        %v4655 = vadd.f32 %v3631, %v4654
        %v4656 = vpop.f32.mrb[0].mxu0
        %v4657 = vadd.f32 %v3635, %v4656
        %v4658 = vpop.f32.mrb[0].mxu0
        %v4659 = vpop.f32.mrb[0].mxu0
        %4660 = vdwg.mxu0
        %4661 = vmatprep.subr.bf16.mxu0 %v4265
        %4662 = vmatpush1.bf16.msra.mxu0 %v4264
        %4663 = vmatprep.subr.bf16.mxu0 %v4273
        %4664 = vmatpush1.bf16.msra.mxu0 %v4272
        %4665 = vmatprep.subr.bf16.mxu0 %v4281
        %4666 = vmatpush1.bf16.msra.mxu0 %v4280
        %4667 = vmatprep.subr.bf16.mxu0 %v4289
        %4668 = vmatpush1.bf16.msra.mxu0 %v4288
        %4669 = vmatprep.subr.bf16.mxu0 0
        %4670 = vmatpush1.bf16.msra.mxu0 0
        %4671 = vmatprep.subr.bf16.mxu0 0
        %4672 = vmatpush1.bf16.msra.mxu0 0
        %4673 = vmatprep.subr.bf16.mxu0 0
        %4674 = vmatpush1.bf16.msra.mxu0 0
        %4675 = vmatprep.subr.bf16.mxu0 0
        %4676 = vmatpush1.bf16.msra.mxu0 0
        %4677 = vmatprep.subr.bf16.mxu0 0
        %4678 = vmatpush1.bf16.msra.mxu0 0
        %4679 = vmatprep.subr.bf16.mxu0 0
        %4680 = vmatpush1.bf16.msra.mxu0 0
        %4681 = vmatprep.subr.bf16.mxu0 0
        %4682 = vmatpush1.bf16.msra.mxu0 0
        %4683 = vmatprep.subr.bf16.mxu0 0
        %4684 = vmatpush1.bf16.msra.mxu0 0
        %4685 = vmatprep.subr.bf16.mxu0 0
        %4686 = vmatpush1.bf16.msra.mxu0 0
        %4687 = vmatprep.subr.bf16.mxu0 0
        %4688 = vmatpush1.bf16.msra.mxu0 0
        %4689 = vmatprep.subr.bf16.mxu0 0
        %4690 = vmatpush1.bf16.msra.mxu0 0
        %4691 = vmatprep.subr.bf16.mxu0 0
        %4692 = vmatpush1.bf16.msra.mxu0 0
        %4693 = vmatprep.mubr.bf16.mxu0 0
        %4694 = vmatmul.mubr.bf16.gmra.mrb[0].mxu0 %v4454
        %v4695 = vpop.f32.mrb[0].mxu0
        %v4696 = vadd.f32 %v4655, %v4695
        %v4697 = vpop.f32.mrb[0].mxu0
        %v4698 = vadd.f32 %v4657, %v4697
        %v4699 = vpop.f32.mrb[0].mxu0
        %v4700 = vpop.f32.mrb[0].mxu0
        %4701 = vdwg.mxu0
        %4702 = vmatprep.subr.bf16.mxu0 %v4139
        %4703 = vmatpush1.bf16.msra.mxu0 %v4138
        %4704 = vmatprep.subr.bf16.mxu0 %v4147
        %4705 = vmatpush1.bf16.msra.mxu0 %v4146
        %4706 = vmatprep.subr.bf16.mxu0 %v4155
        %4707 = vmatpush1.bf16.msra.mxu0 %v4154
        %4708 = vmatprep.subr.bf16.mxu0 %v4163
        %4709 = vmatpush1.bf16.msra.mxu0 %v4162
        %4710 = vmatprep.subr.bf16.mxu0 %v4171
        %4711 = vmatpush1.bf16.msra.mxu0 %v4170
        %4712 = vmatprep.subr.bf16.mxu0 %v4179
        %4713 = vmatpush1.bf16.msra.mxu0 %v4178
        %4714 = vmatprep.subr.bf16.mxu0 %v4187
        %4715 = vmatpush1.bf16.msra.mxu0 %v4186
        %4716 = vmatprep.subr.bf16.mxu0 %v4195
        %4717 = vmatpush1.bf16.msra.mxu0 %v4194
        %4718 = vmatprep.subr.bf16.mxu0 %v4203
        %4719 = vmatpush1.bf16.msra.mxu0 %v4202
        %4720 = vmatprep.subr.bf16.mxu0 %v4211
        %4721 = vmatpush1.bf16.msra.mxu0 %v4210
        %4722 = vmatprep.subr.bf16.mxu0 %v4219
        %4723 = vmatpush1.bf16.msra.mxu0 %v4218
        %4724 = vmatprep.subr.bf16.mxu0 %v4227
        %4725 = vmatpush1.bf16.msra.mxu0 %v4226
        %4726 = vmatprep.subr.bf16.mxu0 %v4235
        %4727 = vmatpush1.bf16.msra.mxu0 %v4234
        %4728 = vmatprep.subr.bf16.mxu0 %v4243
        %4729 = vmatpush1.bf16.msra.mxu0 %v4242
        %4730 = vmatprep.subr.bf16.mxu0 %v4251
        %4731 = vmatpush1.bf16.msra.mxu0 %v4250
        %4732 = vmatprep.subr.bf16.mxu0 %v4259
        %4733 = vmatpush1.bf16.msra.mxu0 %v4258
        %4734 = vmatprep.mubr.bf16.mxu0 %v3448
        %4735 = vmatmul.mubr.bf16.gmra.mrb[0].mxu0 %v3447
        %v4736 = vpop.f32.mrb[0].mxu0
        %v4737 = vadd.f32 %v3639, %v4736
        %v4738 = vpop.f32.mrb[0].mxu0
        %v4739 = vadd.f32 %v3643, %v4738
        %v4740 = vpop.f32.mrb[0].mxu0
        %v4741 = vpop.f32.mrb[0].mxu0
        %4742 = vdwg.mxu0
        %4743 = vmatprep.subr.bf16.mxu0 %v4267
        %4744 = vmatpush1.bf16.msra.mxu0 %v4266
        %4745 = vmatprep.subr.bf16.mxu0 %v4275
        %4746 = vmatpush1.bf16.msra.mxu0 %v4274
        %4747 = vmatprep.subr.bf16.mxu0 %v4283
        %4748 = vmatpush1.bf16.msra.mxu0 %v4282
        %4749 = vmatprep.subr.bf16.mxu0 %v4291
        %4750 = vmatpush1.bf16.msra.mxu0 %v4290
        %4751 = vmatprep.subr.bf16.mxu0 0
        %4752 = vmatpush1.bf16.msra.mxu0 0
        %4753 = vmatprep.subr.bf16.mxu0 0
        %4754 = vmatpush1.bf16.msra.mxu0 0
        %4755 = vmatprep.subr.bf16.mxu0 0
        %4756 = vmatpush1.bf16.msra.mxu0 0
        %4757 = vmatprep.subr.bf16.mxu0 0
        %4758 = vmatpush1.bf16.msra.mxu0 0
        %4759 = vmatprep.subr.bf16.mxu0 0
        %4760 = vmatpush1.bf16.msra.mxu0 0
        %4761 = vmatprep.subr.bf16.mxu0 0
        %4762 = vmatpush1.bf16.msra.mxu0 0
        %4763 = vmatprep.subr.bf16.mxu0 0
        %4764 = vmatpush1.bf16.msra.mxu0 0
        %4765 = vmatprep.subr.bf16.mxu0 0
        %4766 = vmatpush1.bf16.msra.mxu0 0
        %4767 = vmatprep.subr.bf16.mxu0 0
        %4768 = vmatpush1.bf16.msra.mxu0 0
        %4769 = vmatprep.subr.bf16.mxu0 0
        %4770 = vmatpush1.bf16.msra.mxu0 0
        %4771 = vmatprep.subr.bf16.mxu0 0
        %4772 = vmatpush1.bf16.msra.mxu0 0
        %4773 = vmatprep.subr.bf16.mxu0 0
        %4774 = vmatpush1.bf16.msra.mxu0 0
        %4775 = vmatprep.mubr.bf16.mxu0 0
        %4776 = vmatmul.mubr.bf16.gmra.mrb[0].mxu0 %v4454
        %v4777 = vpop.f32.mrb[0].mxu0
        %v4778 = vadd.f32 %v4737, %v4777
        %v4779 = vpop.f32.mrb[0].mxu0
        %v4780 = vadd.f32 %v4739, %v4779
        %v4781 = vpop.f32.mrb[0].mxu0
        %v4782 = vpop.f32.mrb[0].mxu0
        %4783 = vdwg.mxu0
        %v4784 = vmax.f32 %v4532, 0.0
        %v4785 = vmax.f32 %v4534, 0.0
        %v4786 = vmax.f32 %v4614, 0.0
        %v4787 = vmax.f32 %v4616, 0.0
        %v4788 = vmax.f32 %v4696, 0.0
        %v4789 = vmax.f32 %v4698, 0.0
        %v4790 = vmax.f32 %v4778, 0.0
        %v4791 = vmax.f32 %v4780, 0.0
        %s4792 = sld [smem:[#allocation2]]
        %v4793 = vstv %s4792
        %v4794 = vmul.f32 %v4784, %v4793
        %s4795 = sld [smem:[#allocation2 + $0x80]]
        %v4796 = vstv %s4795
        %v4797 = vmul.f32 %v4785, %v4796
        %v4798 = vadd.f32 %v4794, %v4797
        %s4799 = sld [smem:[#allocation2 + $0x100]]
        %v4800 = vstv %s4799
        %v4801 = vmul.f32 %v4786, %v4800
        %v4802 = vadd.f32 %v4798, %v4801
        %s4803 = sld [smem:[#allocation2 + $0x180]]
        %v4804 = vstv %s4803
        %v4805 = vmul.f32 %v4787, %v4804
        %v4806 = vadd.f32 %v4802, %v4805
        %s4807 = sld [smem:[#allocation2 + $0x200]]
        %v4808 = vstv %s4807
        %v4809 = vmul.f32 %v4788, %v4808
        %v4810 = vadd.f32 %v4806, %v4809
        %s4811 = sld [smem:[#allocation2 + $0x280]]
        %v4812 = vstv %s4811
        %v4813 = vmul.f32 %v4789, %v4812
        %v4814 = vadd.f32 %v4810, %v4813
        %s4815 = sld [smem:[#allocation2 + $0x300]]
        %v4816 = vstv %s4815
        %v4817 = vmul.f32 %v4790, %v4816
        %v4818 = vadd.f32 %v4814, %v4817
        %s4819 = sld [smem:[#allocation2 + $0x380]]
        %v4820 = vstv %s4819
        %v4821 = vmul.f32 %v4791, %v4820
        %v4822 = vadd.f32 %v4818, %v4821
        %s4823 = sld [smem:[#allocation2 + $0x400]]
        %v4824 = vstv %s4823
        %v4825 = vadd.f32 %v4822, %v4824
        %4826 = vst [vmem:[%s426] sm:$0xff] %v4825
        %s4827 = sld [smem:[#allocation2 + $0x1]]
        %v4828 = vstv %s4827
        %v4829 = vmul.f32 %v4784, %v4828
        %s4830 = sld [smem:[#allocation2 + $0x81]]
        %v4831 = vstv %s4830
        %v4832 = vmul.f32 %v4785, %v4831
        %v4833 = vadd.f32 %v4829, %v4832
        %s4834 = sld [smem:[#allocation2 + $0x101]]
        %v4835 = vstv %s4834
        %v4836 = vmul.f32 %v4786, %v4835
        %v4837 = vadd.f32 %v4833, %v4836
        %s4838 = sld [smem:[#allocation2 + $0x181]]
        %v4839 = vstv %s4838
        %v4840 = vmul.f32 %v4787, %v4839
        %v4841 = vadd.f32 %v4837, %v4840
        %s4842 = sld [smem:[#allocation2 + $0x201]]
        %v4843 = vstv %s4842
        %v4844 = vmul.f32 %v4788, %v4843
        %v4845 = vadd.f32 %v4841, %v4844
        %s4846 = sld [smem:[#allocation2 + $0x281]]
        %v4847 = vstv %s4846
        %v4848 = vmul.f32 %v4789, %v4847
        %v4849 = vadd.f32 %v4845, %v4848
        %s4850 = sld [smem:[#allocation2 + $0x301]]
        %v4851 = vstv %s4850
        %v4852 = vmul.f32 %v4790, %v4851
        %v4853 = vadd.f32 %v4849, %v4852
        %s4854 = sld [smem:[#allocation2 + $0x381]]
        %v4855 = vstv %s4854
        %v4856 = vmul.f32 %v4791, %v4855
        %v4857 = vadd.f32 %v4853, %v4856
        %s4858 = sld [smem:[#allocation2 + $0x401]]
        %v4859 = vstv %s4858
        %v4860 = vadd.f32 %v4857, %v4859
        %4861 = vst [vmem:[%s426 + $0x8] sm:$0xff] %v4860
        %s4862 = sld [smem:[#allocation2 + $0x2]]
        %v4863 = vstv %s4862
        %v4864 = vmul.f32 %v4784, %v4863
        %s4865 = sld [smem:[#allocation2 + $0x82]]
        %v4866 = vstv %s4865
        %v4867 = vmul.f32 %v4785, %v4866
        %v4868 = vadd.f32 %v4864, %v4867
        %s4869 = sld [smem:[#allocation2 + $0x102]]
        %v4870 = vstv %s4869
        %v4871 = vmul.f32 %v4786, %v4870
        %v4872 = vadd.f32 %v4868, %v4871
        %s4873 = sld [smem:[#allocation2 + $0x182]]
        %v4874 = vstv %s4873
        %v4875 = vmul.f32 %v4787, %v4874
        %v4876 = vadd.f32 %v4872, %v4875
        %s4877 = sld [smem:[#allocation2 + $0x202]]
        %v4878 = vstv %s4877
        %v4879 = vmul.f32 %v4788, %v4878
        %v4880 = vadd.f32 %v4876, %v4879
        %s4881 = sld [smem:[#allocation2 + $0x282]]
        %v4882 = vstv %s4881
        %v4883 = vmul.f32 %v4789, %v4882
        %v4884 = vadd.f32 %v4880, %v4883
        %s4885 = sld [smem:[#allocation2 + $0x302]]
        %v4886 = vstv %s4885
        %v4887 = vmul.f32 %v4790, %v4886
        %v4888 = vadd.f32 %v4884, %v4887
        %s4889 = sld [smem:[#allocation2 + $0x382]]
        %v4890 = vstv %s4889
        %v4891 = vmul.f32 %v4791, %v4890
        %v4892 = vadd.f32 %v4888, %v4891
        %s4893 = sld [smem:[#allocation2 + $0x402]]
        %v4894 = vstv %s4893
        %v4895 = vadd.f32 %v4892, %v4894
        %4896 = vst [vmem:[%s426 + $0x10] sm:$0xff] %v4895
        %s4897 = sld [smem:[#allocation2 + $0x3]]
        %v4898 = vstv %s4897
        %v4899 = vmul.f32 %v4784, %v4898
        %s4900 = sld [smem:[#allocation2 + $0x83]]
        %v4901 = vstv %s4900
        %v4902 = vmul.f32 %v4785, %v4901
        %v4903 = vadd.f32 %v4899, %v4902
        %s4904 = sld [smem:[#allocation2 + $0x103]]
        %v4905 = vstv %s4904
        %v4906 = vmul.f32 %v4786, %v4905
        %v4907 = vadd.f32 %v4903, %v4906
        %s4908 = sld [smem:[#allocation2 + $0x183]]
        %v4909 = vstv %s4908
        %v4910 = vmul.f32 %v4787, %v4909
        %v4911 = vadd.f32 %v4907, %v4910
        %s4912 = sld [smem:[#allocation2 + $0x203]]
        %v4913 = vstv %s4912
        %v4914 = vmul.f32 %v4788, %v4913
        %v4915 = vadd.f32 %v4911, %v4914
        %s4916 = sld [smem:[#allocation2 + $0x283]]
        %v4917 = vstv %s4916
        %v4918 = vmul.f32 %v4789, %v4917
        %v4919 = vadd.f32 %v4915, %v4918
        %s4920 = sld [smem:[#allocation2 + $0x303]]
        %v4921 = vstv %s4920
        %v4922 = vmul.f32 %v4790, %v4921
        %v4923 = vadd.f32 %v4919, %v4922
        %s4924 = sld [smem:[#allocation2 + $0x383]]
        %v4925 = vstv %s4924
        %v4926 = vmul.f32 %v4791, %v4925
        %v4927 = vadd.f32 %v4923, %v4926
        %s4928 = sld [smem:[#allocation2 + $0x403]]
        %v4929 = vstv %s4928
        %v4930 = vadd.f32 %v4927, %v4929
        %4931 = vst [vmem:[%s426 + $0x18] sm:$0xff] %v4930
        %s4932 = sld [smem:[#allocation2 + $0x4]]
        %v4933 = vstv %s4932
        %v4934 = vmul.f32 %v4784, %v4933
        %s4935 = sld [smem:[#allocation2 + $0x84]]
        %v4936 = vstv %s4935
        %v4937 = vmul.f32 %v4785, %v4936
        %v4938 = vadd.f32 %v4934, %v4937
        %s4939 = sld [smem:[#allocation2 + $0x104]]
        %v4940 = vstv %s4939
        %v4941 = vmul.f32 %v4786, %v4940
        %v4942 = vadd.f32 %v4938, %v4941
        %s4943 = sld [smem:[#allocation2 + $0x184]]
        %v4944 = vstv %s4943
        %v4945 = vmul.f32 %v4787, %v4944
        %v4946 = vadd.f32 %v4942, %v4945
        %s4947 = sld [smem:[#allocation2 + $0x204]]
        %v4948 = vstv %s4947
        %v4949 = vmul.f32 %v4788, %v4948
        %v4950 = vadd.f32 %v4946, %v4949
        %s4951 = sld [smem:[#allocation2 + $0x284]]
        %v4952 = vstv %s4951
        %v4953 = vmul.f32 %v4789, %v4952
        %v4954 = vadd.f32 %v4950, %v4953
        %s4955 = sld [smem:[#allocation2 + $0x304]]
        %v4956 = vstv %s4955
        %v4957 = vmul.f32 %v4790, %v4956
        %v4958 = vadd.f32 %v4954, %v4957
        %s4959 = sld [smem:[#allocation2 + $0x384]]
        %v4960 = vstv %s4959
        %v4961 = vmul.f32 %v4791, %v4960
        %v4962 = vadd.f32 %v4958, %v4961
        %s4963 = sld [smem:[#allocation2 + $0x404]]
        %v4964 = vstv %s4963
        %v4965 = vadd.f32 %v4962, %v4964
        %4966 = vst [vmem:[%s426 + $0x20] sm:$0xff] %v4965
        %s4967 = sld [smem:[#allocation2 + $0x5]]
        %v4968 = vstv %s4967
        %v4969 = vmul.f32 %v4784, %v4968
        %s4970 = sld [smem:[#allocation2 + $0x85]]
        %v4971 = vstv %s4970
        %v4972 = vmul.f32 %v4785, %v4971
        %v4973 = vadd.f32 %v4969, %v4972
        %s4974 = sld [smem:[#allocation2 + $0x105]]
        %v4975 = vstv %s4974
        %v4976 = vmul.f32 %v4786, %v4975
        %v4977 = vadd.f32 %v4973, %v4976
        %s4978 = sld [smem:[#allocation2 + $0x185]]
        %v4979 = vstv %s4978
        %v4980 = vmul.f32 %v4787, %v4979
        %v4981 = vadd.f32 %v4977, %v4980
        %s4982 = sld [smem:[#allocation2 + $0x205]]
        %v4983 = vstv %s4982
        %v4984 = vmul.f32 %v4788, %v4983
        %v4985 = vadd.f32 %v4981, %v4984
        %s4986 = sld [smem:[#allocation2 + $0x285]]
        %v4987 = vstv %s4986
        %v4988 = vmul.f32 %v4789, %v4987
        %v4989 = vadd.f32 %v4985, %v4988
        %s4990 = sld [smem:[#allocation2 + $0x305]]
        %v4991 = vstv %s4990
        %v4992 = vmul.f32 %v4790, %v4991
        %v4993 = vadd.f32 %v4989, %v4992
        %s4994 = sld [smem:[#allocation2 + $0x385]]
        %v4995 = vstv %s4994
        %v4996 = vmul.f32 %v4791, %v4995
        %v4997 = vadd.f32 %v4993, %v4996
        %s4998 = sld [smem:[#allocation2 + $0x405]]
        %v4999 = vstv %s4998
        %v5000 = vadd.f32 %v4997, %v4999
        %5001 = vst [vmem:[%s426 + $0x28] sm:$0xff] %v5000
        %s5002 = sld [smem:[#allocation2 + $0x6]]
        %v5003 = vstv %s5002
        %v5004 = vmul.f32 %v4784, %v5003
        %s5005 = sld [smem:[#allocation2 + $0x86]]
        %v5006 = vstv %s5005
        %v5007 = vmul.f32 %v4785, %v5006
        %v5008 = vadd.f32 %v5004, %v5007
        %s5009 = sld [smem:[#allocation2 + $0x106]]
        %v5010 = vstv %s5009
        %v5011 = vmul.f32 %v4786, %v5010
        %v5012 = vadd.f32 %v5008, %v5011
        %s5013 = sld [smem:[#allocation2 + $0x186]]
        %v5014 = vstv %s5013
        %v5015 = vmul.f32 %v4787, %v5014
        %v5016 = vadd.f32 %v5012, %v5015
        %s5017 = sld [smem:[#allocation2 + $0x206]]
        %v5018 = vstv %s5017
        %v5019 = vmul.f32 %v4788, %v5018
        %v5020 = vadd.f32 %v5016, %v5019
        %s5021 = sld [smem:[#allocation2 + $0x286]]
        %v5022 = vstv %s5021
        %v5023 = vmul.f32 %v4789, %v5022
        %v5024 = vadd.f32 %v5020, %v5023
        %s5025 = sld [smem:[#allocation2 + $0x306]]
        %v5026 = vstv %s5025
        %v5027 = vmul.f32 %v4790, %v5026
        %v5028 = vadd.f32 %v5024, %v5027
        %s5029 = sld [smem:[#allocation2 + $0x386]]
        %v5030 = vstv %s5029
        %v5031 = vmul.f32 %v4791, %v5030
        %v5032 = vadd.f32 %v5028, %v5031
        %s5033 = sld [smem:[#allocation2 + $0x406]]
        %v5034 = vstv %s5033
        %v5035 = vadd.f32 %v5032, %v5034
        %5036 = vst [vmem:[%s426 + $0x30] sm:$0xff] %v5035
        %s5037 = sld [smem:[#allocation2 + $0x7]]
        %v5038 = vstv %s5037
        %v5039 = vmul.f32 %v4784, %v5038
        %s5040 = sld [smem:[#allocation2 + $0x87]]
        %v5041 = vstv %s5040
        %v5042 = vmul.f32 %v4785, %v5041
        %v5043 = vadd.f32 %v5039, %v5042
        %s5044 = sld [smem:[#allocation2 + $0x107]]
        %v5045 = vstv %s5044
        %v5046 = vmul.f32 %v4786, %v5045
        %v5047 = vadd.f32 %v5043, %v5046
        %s5048 = sld [smem:[#allocation2 + $0x187]]
        %v5049 = vstv %s5048
        %v5050 = vmul.f32 %v4787, %v5049
        %v5051 = vadd.f32 %v5047, %v5050
        %s5052 = sld [smem:[#allocation2 + $0x207]]
        %v5053 = vstv %s5052
        %v5054 = vmul.f32 %v4788, %v5053
        %v5055 = vadd.f32 %v5051, %v5054
        %s5056 = sld [smem:[#allocation2 + $0x287]]
        %v5057 = vstv %s5056
        %v5058 = vmul.f32 %v4789, %v5057
        %v5059 = vadd.f32 %v5055, %v5058
        %s5060 = sld [smem:[#allocation2 + $0x307]]
        %v5061 = vstv %s5060
        %v5062 = vmul.f32 %v4790, %v5061
        %v5063 = vadd.f32 %v5059, %v5062
        %s5064 = sld [smem:[#allocation2 + $0x387]]
        %v5065 = vstv %s5064
        %v5066 = vmul.f32 %v4791, %v5065
        %v5067 = vadd.f32 %v5063, %v5066
        %s5068 = sld [smem:[#allocation2 + $0x407]]
        %v5069 = vstv %s5068
        %v5070 = vadd.f32 %v5067, %v5069
        %5071 = vst [vmem:[%s426 + $0x38] sm:$0xff] %v5070
        %s5072 = sld [smem:[#allocation2 + $0x8]]
        %v5073 = vstv %s5072
        %v5074 = vmul.f32 %v4784, %v5073
        %s5075 = sld [smem:[#allocation2 + $0x88]]
        %v5076 = vstv %s5075
        %v5077 = vmul.f32 %v4785, %v5076
        %v5078 = vadd.f32 %v5074, %v5077
        %s5079 = sld [smem:[#allocation2 + $0x108]]
        %v5080 = vstv %s5079
        %v5081 = vmul.f32 %v4786, %v5080
        %v5082 = vadd.f32 %v5078, %v5081
        %s5083 = sld [smem:[#allocation2 + $0x188]]
        %v5084 = vstv %s5083
        %v5085 = vmul.f32 %v4787, %v5084
        %v5086 = vadd.f32 %v5082, %v5085
        %s5087 = sld [smem:[#allocation2 + $0x208]]
        %v5088 = vstv %s5087
        %v5089 = vmul.f32 %v4788, %v5088
        %v5090 = vadd.f32 %v5086, %v5089
        %s5091 = sld [smem:[#allocation2 + $0x288]]
        %v5092 = vstv %s5091
        %v5093 = vmul.f32 %v4789, %v5092
        %v5094 = vadd.f32 %v5090, %v5093
        %s5095 = sld [smem:[#allocation2 + $0x308]]
        %v5096 = vstv %s5095
        %v5097 = vmul.f32 %v4790, %v5096
        %v5098 = vadd.f32 %v5094, %v5097
        %s5099 = sld [smem:[#allocation2 + $0x388]]
        %v5100 = vstv %s5099
        %v5101 = vmul.f32 %v4791, %v5100
        %v5102 = vadd.f32 %v5098, %v5101
        %s5103 = sld [smem:[#allocation2 + $0x408]]
        %v5104 = vstv %s5103
        %v5105 = vadd.f32 %v5102, %v5104
        %5106 = vst [vmem:[%s426 + $0x40] sm:$0xff] %v5105
        %s5107 = sld [smem:[#allocation2 + $0x9]]
        %v5108 = vstv %s5107
        %v5109 = vmul.f32 %v4784, %v5108
        %s5110 = sld [smem:[#allocation2 + $0x89]]
        %v5111 = vstv %s5110
        %v5112 = vmul.f32 %v4785, %v5111
        %v5113 = vadd.f32 %v5109, %v5112
        %s5114 = sld [smem:[#allocation2 + $0x109]]
        %v5115 = vstv %s5114
        %v5116 = vmul.f32 %v4786, %v5115
        %v5117 = vadd.f32 %v5113, %v5116
        %s5118 = sld [smem:[#allocation2 + $0x189]]
        %v5119 = vstv %s5118
        %v5120 = vmul.f32 %v4787, %v5119
        %v5121 = vadd.f32 %v5117, %v5120
        %s5122 = sld [smem:[#allocation2 + $0x209]]
        %v5123 = vstv %s5122
        %v5124 = vmul.f32 %v4788, %v5123
        %v5125 = vadd.f32 %v5121, %v5124
        %s5126 = sld [smem:[#allocation2 + $0x289]]
        %v5127 = vstv %s5126
        %v5128 = vmul.f32 %v4789, %v5127
        %v5129 = vadd.f32 %v5125, %v5128
        %s5130 = sld [smem:[#allocation2 + $0x309]]
        %v5131 = vstv %s5130
        %v5132 = vmul.f32 %v4790, %v5131
        %v5133 = vadd.f32 %v5129, %v5132
        %s5134 = sld [smem:[#allocation2 + $0x389]]
        %v5135 = vstv %s5134
        %v5136 = vmul.f32 %v4791, %v5135
        %v5137 = vadd.f32 %v5133, %v5136
        %s5138 = sld [smem:[#allocation2 + $0x409]]
        %v5139 = vstv %s5138
        %v5140 = vadd.f32 %v5137, %v5139
        %5141 = vst [vmem:[%s426 + $0x48] sm:$0xff] %v5140
        %s5142 = sld [smem:[#allocation2 + $0xa]]
        %v5143 = vstv %s5142
        %v5144 = vmul.f32 %v4784, %v5143
        %s5145 = sld [smem:[#allocation2 + $0x8a]]
        %v5146 = vstv %s5145
        %v5147 = vmul.f32 %v4785, %v5146
        %v5148 = vadd.f32 %v5144, %v5147
        %s5149 = sld [smem:[#allocation2 + $0x10a]]
        %v5150 = vstv %s5149
        %v5151 = vmul.f32 %v4786, %v5150
        %v5152 = vadd.f32 %v5148, %v5151
        %s5153 = sld [smem:[#allocation2 + $0x18a]]
        %v5154 = vstv %s5153
        %v5155 = vmul.f32 %v4787, %v5154
        %v5156 = vadd.f32 %v5152, %v5155
        %s5157 = sld [smem:[#allocation2 + $0x20a]]
        %v5158 = vstv %s5157
        %v5159 = vmul.f32 %v4788, %v5158
        %v5160 = vadd.f32 %v5156, %v5159
        %s5161 = sld [smem:[#allocation2 + $0x28a]]
        %v5162 = vstv %s5161
        %v5163 = vmul.f32 %v4789, %v5162
        %v5164 = vadd.f32 %v5160, %v5163
        %s5165 = sld [smem:[#allocation2 + $0x30a]]
        %v5166 = vstv %s5165
        %v5167 = vmul.f32 %v4790, %v5166
        %v5168 = vadd.f32 %v5164, %v5167
        %s5169 = sld [smem:[#allocation2 + $0x38a]]
        %v5170 = vstv %s5169
        %v5171 = vmul.f32 %v4791, %v5170
        %v5172 = vadd.f32 %v5168, %v5171
        %s5173 = sld [smem:[#allocation2 + $0x40a]]
        %v5174 = vstv %s5173
        %v5175 = vadd.f32 %v5172, %v5174
        %5176 = vst [vmem:[%s426 + $0x50] sm:$0xff] %v5175
        %s5177 = sld [smem:[#allocation2 + $0xb]]
        %v5178 = vstv %s5177
        %v5179 = vmul.f32 %v4784, %v5178
        %s5180 = sld [smem:[#allocation2 + $0x8b]]
        %v5181 = vstv %s5180
        %v5182 = vmul.f32 %v4785, %v5181
        %v5183 = vadd.f32 %v5179, %v5182
        %s5184 = sld [smem:[#allocation2 + $0x10b]]
        %v5185 = vstv %s5184
        %v5186 = vmul.f32 %v4786, %v5185
        %v5187 = vadd.f32 %v5183, %v5186
        %s5188 = sld [smem:[#allocation2 + $0x18b]]
        %v5189 = vstv %s5188
        %v5190 = vmul.f32 %v4787, %v5189
        %v5191 = vadd.f32 %v5187, %v5190
        %s5192 = sld [smem:[#allocation2 + $0x20b]]
        %v5193 = vstv %s5192
        %v5194 = vmul.f32 %v4788, %v5193
        %v5195 = vadd.f32 %v5191, %v5194
        %s5196 = sld [smem:[#allocation2 + $0x28b]]
        %v5197 = vstv %s5196
        %v5198 = vmul.f32 %v4789, %v5197
        %v5199 = vadd.f32 %v5195, %v5198
        %s5200 = sld [smem:[#allocation2 + $0x30b]]
        %v5201 = vstv %s5200
        %v5202 = vmul.f32 %v4790, %v5201
        %v5203 = vadd.f32 %v5199, %v5202
        %s5204 = sld [smem:[#allocation2 + $0x38b]]
        %v5205 = vstv %s5204
        %v5206 = vmul.f32 %v4791, %v5205
        %v5207 = vadd.f32 %v5203, %v5206
        %s5208 = sld [smem:[#allocation2 + $0x40b]]
        %v5209 = vstv %s5208
        %v5210 = vadd.f32 %v5207, %v5209
        %5211 = vst [vmem:[%s426 + $0x58] sm:$0xff] %v5210
        %s5212 = sld [smem:[#allocation2 + $0xc]]
        %v5213 = vstv %s5212
        %v5214 = vmul.f32 %v4784, %v5213
        %s5215 = sld [smem:[#allocation2 + $0x8c]]
        %v5216 = vstv %s5215
        %v5217 = vmul.f32 %v4785, %v5216
        %v5218 = vadd.f32 %v5214, %v5217
        %s5219 = sld [smem:[#allocation2 + $0x10c]]
        %v5220 = vstv %s5219
        %v5221 = vmul.f32 %v4786, %v5220
        %v5222 = vadd.f32 %v5218, %v5221
        %s5223 = sld [smem:[#allocation2 + $0x18c]]
        %v5224 = vstv %s5223
        %v5225 = vmul.f32 %v4787, %v5224
        %v5226 = vadd.f32 %v5222, %v5225
        %s5227 = sld [smem:[#allocation2 + $0x20c]]
        %v5228 = vstv %s5227
        %v5229 = vmul.f32 %v4788, %v5228
        %v5230 = vadd.f32 %v5226, %v5229
        %s5231 = sld [smem:[#allocation2 + $0x28c]]
        %v5232 = vstv %s5231
        %v5233 = vmul.f32 %v4789, %v5232
        %v5234 = vadd.f32 %v5230, %v5233
        %s5235 = sld [smem:[#allocation2 + $0x30c]]
        %v5236 = vstv %s5235
        %v5237 = vmul.f32 %v4790, %v5236
        %v5238 = vadd.f32 %v5234, %v5237
        %s5239 = sld [smem:[#allocation2 + $0x38c]]
        %v5240 = vstv %s5239
        %v5241 = vmul.f32 %v4791, %v5240
        %v5242 = vadd.f32 %v5238, %v5241
        %s5243 = sld [smem:[#allocation2 + $0x40c]]
        %v5244 = vstv %s5243
        %v5245 = vadd.f32 %v5242, %v5244
        %5246 = vst [vmem:[%s426 + $0x60] sm:$0xff] %v5245
        %s5247 = sld [smem:[#allocation2 + $0xd]]
        %v5248 = vstv %s5247
        %v5249 = vmul.f32 %v4784, %v5248
        %s5250 = sld [smem:[#allocation2 + $0x8d]]
        %v5251 = vstv %s5250
        %v5252 = vmul.f32 %v4785, %v5251
        %v5253 = vadd.f32 %v5249, %v5252
        %s5254 = sld [smem:[#allocation2 + $0x10d]]
        %v5255 = vstv %s5254
        %v5256 = vmul.f32 %v4786, %v5255
        %v5257 = vadd.f32 %v5253, %v5256
        %s5258 = sld [smem:[#allocation2 + $0x18d]]
        %v5259 = vstv %s5258
        %v5260 = vmul.f32 %v4787, %v5259
        %v5261 = vadd.f32 %v5257, %v5260
        %s5262 = sld [smem:[#allocation2 + $0x20d]]
        %v5263 = vstv %s5262
        %v5264 = vmul.f32 %v4788, %v5263
        %v5265 = vadd.f32 %v5261, %v5264
        %s5266 = sld [smem:[#allocation2 + $0x28d]]
        %v5267 = vstv %s5266
        %v5268 = vmul.f32 %v4789, %v5267
        %v5269 = vadd.f32 %v5265, %v5268
        %s5270 = sld [smem:[#allocation2 + $0x30d]]
        %v5271 = vstv %s5270
        %v5272 = vmul.f32 %v4790, %v5271
        %v5273 = vadd.f32 %v5269, %v5272
        %s5274 = sld [smem:[#allocation2 + $0x38d]]
        %v5275 = vstv %s5274
        %v5276 = vmul.f32 %v4791, %v5275
        %v5277 = vadd.f32 %v5273, %v5276
        %s5278 = sld [smem:[#allocation2 + $0x40d]]
        %v5279 = vstv %s5278
        %v5280 = vadd.f32 %v5277, %v5279
        %5281 = vst [vmem:[%s426 + $0x68] sm:$0xff] %v5280
        %s5282 = sld [smem:[#allocation2 + $0xe]]
        %v5283 = vstv %s5282
        %v5284 = vmul.f32 %v4784, %v5283
        %s5285 = sld [smem:[#allocation2 + $0x8e]]
        %v5286 = vstv %s5285
        %v5287 = vmul.f32 %v4785, %v5286
        %v5288 = vadd.f32 %v5284, %v5287
        %s5289 = sld [smem:[#allocation2 + $0x10e]]
        %v5290 = vstv %s5289
        %v5291 = vmul.f32 %v4786, %v5290
        %v5292 = vadd.f32 %v5288, %v5291
        %s5293 = sld [smem:[#allocation2 + $0x18e]]
        %v5294 = vstv %s5293
        %v5295 = vmul.f32 %v4787, %v5294
        %v5296 = vadd.f32 %v5292, %v5295
        %s5297 = sld [smem:[#allocation2 + $0x20e]]
        %v5298 = vstv %s5297
        %v5299 = vmul.f32 %v4788, %v5298
        %v5300 = vadd.f32 %v5296, %v5299
        %s5301 = sld [smem:[#allocation2 + $0x28e]]
        %v5302 = vstv %s5301
        %v5303 = vmul.f32 %v4789, %v5302
        %v5304 = vadd.f32 %v5300, %v5303
        %s5305 = sld [smem:[#allocation2 + $0x30e]]
        %v5306 = vstv %s5305
        %v5307 = vmul.f32 %v4790, %v5306
        %v5308 = vadd.f32 %v5304, %v5307
        %s5309 = sld [smem:[#allocation2 + $0x38e]]
        %v5310 = vstv %s5309
        %v5311 = vmul.f32 %v4791, %v5310
        %v5312 = vadd.f32 %v5308, %v5311
        %s5313 = sld [smem:[#allocation2 + $0x40e]]
        %v5314 = vstv %s5313
        %v5315 = vadd.f32 %v5312, %v5314
        %5316 = vst [vmem:[%s426 + $0x70] sm:$0xff] %v5315
        %s5317 = sld [smem:[#allocation2 + $0xf]]
        %v5318 = vstv %s5317
        %v5319 = vmul.f32 %v4784, %v5318
        %s5320 = sld [smem:[#allocation2 + $0x8f]]
        %v5321 = vstv %s5320
        %v5322 = vmul.f32 %v4785, %v5321
        %v5323 = vadd.f32 %v5319, %v5322
        %s5324 = sld [smem:[#allocation2 + $0x10f]]
        %v5325 = vstv %s5324
        %v5326 = vmul.f32 %v4786, %v5325
        %v5327 = vadd.f32 %v5323, %v5326
        %s5328 = sld [smem:[#allocation2 + $0x18f]]
        %v5329 = vstv %s5328
        %v5330 = vmul.f32 %v4787, %v5329
        %v5331 = vadd.f32 %v5327, %v5330
        %s5332 = sld [smem:[#allocation2 + $0x20f]]
        %v5333 = vstv %s5332
        %v5334 = vmul.f32 %v4788, %v5333
        %v5335 = vadd.f32 %v5331, %v5334
        %s5336 = sld [smem:[#allocation2 + $0x28f]]
        %v5337 = vstv %s5336
        %v5338 = vmul.f32 %v4789, %v5337
        %v5339 = vadd.f32 %v5335, %v5338
        %s5340 = sld [smem:[#allocation2 + $0x30f]]
        %v5341 = vstv %s5340
        %v5342 = vmul.f32 %v4790, %v5341
        %v5343 = vadd.f32 %v5339, %v5342
        %s5344 = sld [smem:[#allocation2 + $0x38f]]
        %v5345 = vstv %s5344
        %v5346 = vmul.f32 %v4791, %v5345
        %v5347 = vadd.f32 %v5343, %v5346
        %s5348 = sld [smem:[#allocation2 + $0x40f]]
        %v5349 = vstv %s5348
        %v5350 = vadd.f32 %v5347, %v5349
        %5351 = vst [vmem:[%s426 + $0x78] sm:$0xff] %v5350
        %s5352 = sld [smem:[#allocation2 + $0x10]]
        %v5353 = vstv %s5352
        %v5354 = vmul.f32 %v4784, %v5353
        %s5355 = sld [smem:[#allocation2 + $0x90]]
        %v5356 = vstv %s5355
        %v5357 = vmul.f32 %v4785, %v5356
        %v5358 = vadd.f32 %v5354, %v5357
        %s5359 = sld [smem:[#allocation2 + $0x110]]
        %v5360 = vstv %s5359
        %v5361 = vmul.f32 %v4786, %v5360
        %v5362 = vadd.f32 %v5358, %v5361
        %s5363 = sld [smem:[#allocation2 + $0x190]]
        %v5364 = vstv %s5363
        %v5365 = vmul.f32 %v4787, %v5364
        %v5366 = vadd.f32 %v5362, %v5365
        %s5367 = sld [smem:[#allocation2 + $0x210]]
        %v5368 = vstv %s5367
        %v5369 = vmul.f32 %v4788, %v5368
        %v5370 = vadd.f32 %v5366, %v5369
        %s5371 = sld [smem:[#allocation2 + $0x290]]
        %v5372 = vstv %s5371
        %v5373 = vmul.f32 %v4789, %v5372
        %v5374 = vadd.f32 %v5370, %v5373
        %s5375 = sld [smem:[#allocation2 + $0x310]]
        %v5376 = vstv %s5375
        %v5377 = vmul.f32 %v4790, %v5376
        %v5378 = vadd.f32 %v5374, %v5377
        %s5379 = sld [smem:[#allocation2 + $0x390]]
        %v5380 = vstv %s5379
        %v5381 = vmul.f32 %v4791, %v5380
        %v5382 = vadd.f32 %v5378, %v5381
        %s5383 = sld [smem:[#allocation2 + $0x410]]
        %v5384 = vstv %s5383
        %v5385 = vadd.f32 %v5382, %v5384
        %5386 = vst [vmem:[%s426 + $0x80] sm:$0xff] %v5385
        %s5387 = sld [smem:[#allocation2 + $0x11]]
        %v5388 = vstv %s5387
        %v5389 = vmul.f32 %v4784, %v5388
        %s5390 = sld [smem:[#allocation2 + $0x91]]
        %v5391 = vstv %s5390
        %v5392 = vmul.f32 %v4785, %v5391
        %v5393 = vadd.f32 %v5389, %v5392
        %s5394 = sld [smem:[#allocation2 + $0x111]]
        %v5395 = vstv %s5394
        %v5396 = vmul.f32 %v4786, %v5395
        %v5397 = vadd.f32 %v5393, %v5396
        %s5398 = sld [smem:[#allocation2 + $0x191]]
        %v5399 = vstv %s5398
        %v5400 = vmul.f32 %v4787, %v5399
        %v5401 = vadd.f32 %v5397, %v5400
        %s5402 = sld [smem:[#allocation2 + $0x211]]
        %v5403 = vstv %s5402
        %v5404 = vmul.f32 %v4788, %v5403
        %v5405 = vadd.f32 %v5401, %v5404
        %s5406 = sld [smem:[#allocation2 + $0x291]]
        %v5407 = vstv %s5406
        %v5408 = vmul.f32 %v4789, %v5407
        %v5409 = vadd.f32 %v5405, %v5408
        %s5410 = sld [smem:[#allocation2 + $0x311]]
        %v5411 = vstv %s5410
        %v5412 = vmul.f32 %v4790, %v5411
        %v5413 = vadd.f32 %v5409, %v5412
        %s5414 = sld [smem:[#allocation2 + $0x391]]
        %v5415 = vstv %s5414
        %v5416 = vmul.f32 %v4791, %v5415
        %v5417 = vadd.f32 %v5413, %v5416
        %s5418 = sld [smem:[#allocation2 + $0x411]]
        %v5419 = vstv %s5418
        %v5420 = vadd.f32 %v5417, %v5419
        %5421 = vst [vmem:[%s426 + $0x88] sm:$0xff] %v5420
        %s5422 = sld [smem:[#allocation2 + $0x12]]
        %v5423 = vstv %s5422
        %v5424 = vmul.f32 %v4784, %v5423
        %s5425 = sld [smem:[#allocation2 + $0x92]]
        %v5426 = vstv %s5425
        %v5427 = vmul.f32 %v4785, %v5426
        %v5428 = vadd.f32 %v5424, %v5427
        %s5429 = sld [smem:[#allocation2 + $0x112]]
        %v5430 = vstv %s5429
        %v5431 = vmul.f32 %v4786, %v5430
        %v5432 = vadd.f32 %v5428, %v5431
        %s5433 = sld [smem:[#allocation2 + $0x192]]
        %v5434 = vstv %s5433
        %v5435 = vmul.f32 %v4787, %v5434
        %v5436 = vadd.f32 %v5432, %v5435
        %s5437 = sld [smem:[#allocation2 + $0x212]]
        %v5438 = vstv %s5437
        %v5439 = vmul.f32 %v4788, %v5438
        %v5440 = vadd.f32 %v5436, %v5439
        %s5441 = sld [smem:[#allocation2 + $0x292]]
        %v5442 = vstv %s5441
        %v5443 = vmul.f32 %v4789, %v5442
        %v5444 = vadd.f32 %v5440, %v5443
        %s5445 = sld [smem:[#allocation2 + $0x312]]
        %v5446 = vstv %s5445
        %v5447 = vmul.f32 %v4790, %v5446
        %v5448 = vadd.f32 %v5444, %v5447
        %s5449 = sld [smem:[#allocation2 + $0x392]]
        %v5450 = vstv %s5449
        %v5451 = vmul.f32 %v4791, %v5450
        %v5452 = vadd.f32 %v5448, %v5451
        %s5453 = sld [smem:[#allocation2 + $0x412]]
        %v5454 = vstv %s5453
        %v5455 = vadd.f32 %v5452, %v5454
        %5456 = vst [vmem:[%s426 + $0x90] sm:$0xff] %v5455
        %s5457 = sld [smem:[#allocation2 + $0x13]]
        %v5458 = vstv %s5457
        %v5459 = vmul.f32 %v4784, %v5458
        %s5460 = sld [smem:[#allocation2 + $0x93]]
        %v5461 = vstv %s5460
        %v5462 = vmul.f32 %v4785, %v5461
        %v5463 = vadd.f32 %v5459, %v5462
        %s5464 = sld [smem:[#allocation2 + $0x113]]
        %v5465 = vstv %s5464
        %v5466 = vmul.f32 %v4786, %v5465
        %v5467 = vadd.f32 %v5463, %v5466
        %s5468 = sld [smem:[#allocation2 + $0x193]]
        %v5469 = vstv %s5468
        %v5470 = vmul.f32 %v4787, %v5469
        %v5471 = vadd.f32 %v5467, %v5470
        %s5472 = sld [smem:[#allocation2 + $0x213]]
        %v5473 = vstv %s5472
        %v5474 = vmul.f32 %v4788, %v5473
        %v5475 = vadd.f32 %v5471, %v5474
        %s5476 = sld [smem:[#allocation2 + $0x293]]
        %v5477 = vstv %s5476
        %v5478 = vmul.f32 %v4789, %v5477
        %v5479 = vadd.f32 %v5475, %v5478
        %s5480 = sld [smem:[#allocation2 + $0x313]]
        %v5481 = vstv %s5480
        %v5482 = vmul.f32 %v4790, %v5481
        %v5483 = vadd.f32 %v5479, %v5482
        %s5484 = sld [smem:[#allocation2 + $0x393]]
        %v5485 = vstv %s5484
        %v5486 = vmul.f32 %v4791, %v5485
        %v5487 = vadd.f32 %v5483, %v5486
        %s5488 = sld [smem:[#allocation2 + $0x413]]
        %v5489 = vstv %s5488
        %v5490 = vadd.f32 %v5487, %v5489
        %5491 = vst [vmem:[%s426 + $0x98] sm:$0xff] %v5490
        %s5492 = sld [smem:[#allocation2 + $0x14]]
        %v5493 = vstv %s5492
        %v5494 = vmul.f32 %v4784, %v5493
        %s5495 = sld [smem:[#allocation2 + $0x94]]
        %v5496 = vstv %s5495
        %v5497 = vmul.f32 %v4785, %v5496
        %v5498 = vadd.f32 %v5494, %v5497
        %s5499 = sld [smem:[#allocation2 + $0x114]]
        %v5500 = vstv %s5499
        %v5501 = vmul.f32 %v4786, %v5500
        %v5502 = vadd.f32 %v5498, %v5501
        %s5503 = sld [smem:[#allocation2 + $0x194]]
        %v5504 = vstv %s5503
        %v5505 = vmul.f32 %v4787, %v5504
        %v5506 = vadd.f32 %v5502, %v5505
        %s5507 = sld [smem:[#allocation2 + $0x214]]
        %v5508 = vstv %s5507
        %v5509 = vmul.f32 %v4788, %v5508
        %v5510 = vadd.f32 %v5506, %v5509
        %s5511 = sld [smem:[#allocation2 + $0x294]]
        %v5512 = vstv %s5511
        %v5513 = vmul.f32 %v4789, %v5512
        %v5514 = vadd.f32 %v5510, %v5513
        %s5515 = sld [smem:[#allocation2 + $0x314]]
        %v5516 = vstv %s5515
        %v5517 = vmul.f32 %v4790, %v5516
        %v5518 = vadd.f32 %v5514, %v5517
        %s5519 = sld [smem:[#allocation2 + $0x394]]
        %v5520 = vstv %s5519
        %v5521 = vmul.f32 %v4791, %v5520
        %v5522 = vadd.f32 %v5518, %v5521
        %s5523 = sld [smem:[#allocation2 + $0x414]]
        %v5524 = vstv %s5523
        %v5525 = vadd.f32 %v5522, %v5524
        %5526 = vst [vmem:[%s426 + $0xa0] sm:$0xff] %v5525
        %s5527 = sld [smem:[#allocation2 + $0x15]]
        %v5528 = vstv %s5527
        %v5529 = vmul.f32 %v4784, %v5528
        %s5530 = sld [smem:[#allocation2 + $0x95]]
        %v5531 = vstv %s5530
        %v5532 = vmul.f32 %v4785, %v5531
        %v5533 = vadd.f32 %v5529, %v5532
        %s5534 = sld [smem:[#allocation2 + $0x115]]
        %v5535 = vstv %s5534
        %v5536 = vmul.f32 %v4786, %v5535
        %v5537 = vadd.f32 %v5533, %v5536
        %s5538 = sld [smem:[#allocation2 + $0x195]]
        %v5539 = vstv %s5538
        %v5540 = vmul.f32 %v4787, %v5539
        %v5541 = vadd.f32 %v5537, %v5540
        %s5542 = sld [smem:[#allocation2 + $0x215]]
        %v5543 = vstv %s5542
        %v5544 = vmul.f32 %v4788, %v5543
        %v5545 = vadd.f32 %v5541, %v5544
        %s5546 = sld [smem:[#allocation2 + $0x295]]
        %v5547 = vstv %s5546
        %v5548 = vmul.f32 %v4789, %v5547
        %v5549 = vadd.f32 %v5545, %v5548
        %s5550 = sld [smem:[#allocation2 + $0x315]]
        %v5551 = vstv %s5550
        %v5552 = vmul.f32 %v4790, %v5551
        %v5553 = vadd.f32 %v5549, %v5552
        %s5554 = sld [smem:[#allocation2 + $0x395]]
        %v5555 = vstv %s5554
        %v5556 = vmul.f32 %v4791, %v5555
        %v5557 = vadd.f32 %v5553, %v5556
        %s5558 = sld [smem:[#allocation2 + $0x415]]
        %v5559 = vstv %s5558
        %v5560 = vadd.f32 %v5557, %v5559
        %5561 = vst [vmem:[%s426 + $0xa8] sm:$0xff] %v5560
        %s5562 = sld [smem:[#allocation2 + $0x16]]
        %v5563 = vstv %s5562
        %v5564 = vmul.f32 %v4784, %v5563
        %s5565 = sld [smem:[#allocation2 + $0x96]]
        %v5566 = vstv %s5565
        %v5567 = vmul.f32 %v4785, %v5566
        %v5568 = vadd.f32 %v5564, %v5567
        %s5569 = sld [smem:[#allocation2 + $0x116]]
        %v5570 = vstv %s5569
        %v5571 = vmul.f32 %v4786, %v5570
        %v5572 = vadd.f32 %v5568, %v5571
        %s5573 = sld [smem:[#allocation2 + $0x196]]
        %v5574 = vstv %s5573
        %v5575 = vmul.f32 %v4787, %v5574
        %v5576 = vadd.f32 %v5572, %v5575
        %s5577 = sld [smem:[#allocation2 + $0x216]]
        %v5578 = vstv %s5577
        %v5579 = vmul.f32 %v4788, %v5578
        %v5580 = vadd.f32 %v5576, %v5579
        %s5581 = sld [smem:[#allocation2 + $0x296]]
        %v5582 = vstv %s5581
        %v5583 = vmul.f32 %v4789, %v5582
        %v5584 = vadd.f32 %v5580, %v5583
        %s5585 = sld [smem:[#allocation2 + $0x316]]
        %v5586 = vstv %s5585
        %v5587 = vmul.f32 %v4790, %v5586
        %v5588 = vadd.f32 %v5584, %v5587
        %s5589 = sld [smem:[#allocation2 + $0x396]]
        %v5590 = vstv %s5589
        %v5591 = vmul.f32 %v4791, %v5590
        %v5592 = vadd.f32 %v5588, %v5591
        %s5593 = sld [smem:[#allocation2 + $0x416]]
        %v5594 = vstv %s5593
        %v5595 = vadd.f32 %v5592, %v5594
        %5596 = vst [vmem:[%s426 + $0xb0] sm:$0xff] %v5595
        %s5597 = sld [smem:[#allocation2 + $0x17]]
        %v5598 = vstv %s5597
        %v5599 = vmul.f32 %v4784, %v5598
        %s5600 = sld [smem:[#allocation2 + $0x97]]
        %v5601 = vstv %s5600
        %v5602 = vmul.f32 %v4785, %v5601
        %v5603 = vadd.f32 %v5599, %v5602
        %s5604 = sld [smem:[#allocation2 + $0x117]]
        %v5605 = vstv %s5604
        %v5606 = vmul.f32 %v4786, %v5605
        %v5607 = vadd.f32 %v5603, %v5606
        %s5608 = sld [smem:[#allocation2 + $0x197]]
        %v5609 = vstv %s5608
        %v5610 = vmul.f32 %v4787, %v5609
        %v5611 = vadd.f32 %v5607, %v5610
        %s5612 = sld [smem:[#allocation2 + $0x217]]
        %v5613 = vstv %s5612
        %v5614 = vmul.f32 %v4788, %v5613
        %v5615 = vadd.f32 %v5611, %v5614
        %s5616 = sld [smem:[#allocation2 + $0x297]]
        %v5617 = vstv %s5616
        %v5618 = vmul.f32 %v4789, %v5617
        %v5619 = vadd.f32 %v5615, %v5618
        %s5620 = sld [smem:[#allocation2 + $0x317]]
        %v5621 = vstv %s5620
        %v5622 = vmul.f32 %v4790, %v5621
        %v5623 = vadd.f32 %v5619, %v5622
        %s5624 = sld [smem:[#allocation2 + $0x397]]
        %v5625 = vstv %s5624
        %v5626 = vmul.f32 %v4791, %v5625
        %v5627 = vadd.f32 %v5623, %v5626
        %s5628 = sld [smem:[#allocation2 + $0x417]]
        %v5629 = vstv %s5628
        %v5630 = vadd.f32 %v5627, %v5629
        %5631 = vst [vmem:[%s426 + $0xb8] sm:$0xff] %v5630
        %s5632 = sld [smem:[#allocation2 + $0x18]]
        %v5633 = vstv %s5632
        %v5634 = vmul.f32 %v4784, %v5633
        %s5635 = sld [smem:[#allocation2 + $0x98]]
        %v5636 = vstv %s5635
        %v5637 = vmul.f32 %v4785, %v5636
        %v5638 = vadd.f32 %v5634, %v5637
        %s5639 = sld [smem:[#allocation2 + $0x118]]
        %v5640 = vstv %s5639
        %v5641 = vmul.f32 %v4786, %v5640
        %v5642 = vadd.f32 %v5638, %v5641
        %s5643 = sld [smem:[#allocation2 + $0x198]]
        %v5644 = vstv %s5643
        %v5645 = vmul.f32 %v4787, %v5644
        %v5646 = vadd.f32 %v5642, %v5645
        %s5647 = sld [smem:[#allocation2 + $0x218]]
        %v5648 = vstv %s5647
        %v5649 = vmul.f32 %v4788, %v5648
        %v5650 = vadd.f32 %v5646, %v5649
        %s5651 = sld [smem:[#allocation2 + $0x298]]
        %v5652 = vstv %s5651
        %v5653 = vmul.f32 %v4789, %v5652
        %v5654 = vadd.f32 %v5650, %v5653
        %s5655 = sld [smem:[#allocation2 + $0x318]]
        %v5656 = vstv %s5655
        %v5657 = vmul.f32 %v4790, %v5656
        %v5658 = vadd.f32 %v5654, %v5657
        %s5659 = sld [smem:[#allocation2 + $0x398]]
        %v5660 = vstv %s5659
        %v5661 = vmul.f32 %v4791, %v5660
        %v5662 = vadd.f32 %v5658, %v5661
        %s5663 = sld [smem:[#allocation2 + $0x418]]
        %v5664 = vstv %s5663
        %v5665 = vadd.f32 %v5662, %v5664
        %5666 = vst [vmem:[%s426 + $0xc0] sm:$0xff] %v5665
        %s5667 = sld [smem:[#allocation2 + $0x19]]
        %v5668 = vstv %s5667
        %v5669 = vmul.f32 %v4784, %v5668
        %s5670 = sld [smem:[#allocation2 + $0x99]]
        %v5671 = vstv %s5670
        %v5672 = vmul.f32 %v4785, %v5671
        %v5673 = vadd.f32 %v5669, %v5672
        %s5674 = sld [smem:[#allocation2 + $0x119]]
        %v5675 = vstv %s5674
        %v5676 = vmul.f32 %v4786, %v5675
        %v5677 = vadd.f32 %v5673, %v5676
        %s5678 = sld [smem:[#allocation2 + $0x199]]
        %v5679 = vstv %s5678
        %v5680 = vmul.f32 %v4787, %v5679
        %v5681 = vadd.f32 %v5677, %v5680
        %s5682 = sld [smem:[#allocation2 + $0x219]]
        %v5683 = vstv %s5682
        %v5684 = vmul.f32 %v4788, %v5683
        %v5685 = vadd.f32 %v5681, %v5684
        %s5686 = sld [smem:[#allocation2 + $0x299]]
        %v5687 = vstv %s5686
        %v5688 = vmul.f32 %v4789, %v5687
        %v5689 = vadd.f32 %v5685, %v5688
        %s5690 = sld [smem:[#allocation2 + $0x319]]
        %v5691 = vstv %s5690
        %v5692 = vmul.f32 %v4790, %v5691
        %v5693 = vadd.f32 %v5689, %v5692
        %s5694 = sld [smem:[#allocation2 + $0x399]]
        %v5695 = vstv %s5694
        %v5696 = vmul.f32 %v4791, %v5695
        %v5697 = vadd.f32 %v5693, %v5696
        %s5698 = sld [smem:[#allocation2 + $0x419]]
        %v5699 = vstv %s5698
        %v5700 = vadd.f32 %v5697, %v5699
        %5701 = vst [vmem:[%s426 + $0xc8] sm:$0xff] %v5700
        %s5702 = sld [smem:[#allocation2 + $0x1a]]
        %v5703 = vstv %s5702
        %v5704 = vmul.f32 %v4784, %v5703
        %s5705 = sld [smem:[#allocation2 + $0x9a]]
        %v5706 = vstv %s5705
        %v5707 = vmul.f32 %v4785, %v5706
        %v5708 = vadd.f32 %v5704, %v5707
        %s5709 = sld [smem:[#allocation2 + $0x11a]]
        %v5710 = vstv %s5709
        %v5711 = vmul.f32 %v4786, %v5710
        %v5712 = vadd.f32 %v5708, %v5711
        %s5713 = sld [smem:[#allocation2 + $0x19a]]
        %v5714 = vstv %s5713
        %v5715 = vmul.f32 %v4787, %v5714
        %v5716 = vadd.f32 %v5712, %v5715
        %s5717 = sld [smem:[#allocation2 + $0x21a]]
        %v5718 = vstv %s5717
        %v5719 = vmul.f32 %v4788, %v5718
        %v5720 = vadd.f32 %v5716, %v5719
        %s5721 = sld [smem:[#allocation2 + $0x29a]]
        %v5722 = vstv %s5721
        %v5723 = vmul.f32 %v4789, %v5722
        %v5724 = vadd.f32 %v5720, %v5723
        %s5725 = sld [smem:[#allocation2 + $0x31a]]
        %v5726 = vstv %s5725
        %v5727 = vmul.f32 %v4790, %v5726
        %v5728 = vadd.f32 %v5724, %v5727
        %s5729 = sld [smem:[#allocation2 + $0x39a]]
        %v5730 = vstv %s5729
        %v5731 = vmul.f32 %v4791, %v5730
        %v5732 = vadd.f32 %v5728, %v5731
        %s5733 = sld [smem:[#allocation2 + $0x41a]]
        %v5734 = vstv %s5733
        %v5735 = vadd.f32 %v5732, %v5734
        %5736 = vst [vmem:[%s426 + $0xd0] sm:$0xff] %v5735
        %s5737 = sld [smem:[#allocation2 + $0x1b]]
        %v5738 = vstv %s5737
        %v5739 = vmul.f32 %v4784, %v5738
        %s5740 = sld [smem:[#allocation2 + $0x9b]]
        %v5741 = vstv %s5740
        %v5742 = vmul.f32 %v4785, %v5741
        %v5743 = vadd.f32 %v5739, %v5742
        %s5744 = sld [smem:[#allocation2 + $0x11b]]
        %v5745 = vstv %s5744
        %v5746 = vmul.f32 %v4786, %v5745
        %v5747 = vadd.f32 %v5743, %v5746
        %s5748 = sld [smem:[#allocation2 + $0x19b]]
        %v5749 = vstv %s5748
        %v5750 = vmul.f32 %v4787, %v5749
        %v5751 = vadd.f32 %v5747, %v5750
        %s5752 = sld [smem:[#allocation2 + $0x21b]]
        %v5753 = vstv %s5752
        %v5754 = vmul.f32 %v4788, %v5753
        %v5755 = vadd.f32 %v5751, %v5754
        %s5756 = sld [smem:[#allocation2 + $0x29b]]
        %v5757 = vstv %s5756
        %v5758 = vmul.f32 %v4789, %v5757
        %v5759 = vadd.f32 %v5755, %v5758
        %s5760 = sld [smem:[#allocation2 + $0x31b]]
        %v5761 = vstv %s5760
        %v5762 = vmul.f32 %v4790, %v5761
        %v5763 = vadd.f32 %v5759, %v5762
        %s5764 = sld [smem:[#allocation2 + $0x39b]]
        %v5765 = vstv %s5764
        %v5766 = vmul.f32 %v4791, %v5765
        %v5767 = vadd.f32 %v5763, %v5766
        %s5768 = sld [smem:[#allocation2 + $0x41b]]
        %v5769 = vstv %s5768
        %v5770 = vadd.f32 %v5767, %v5769
        %5771 = vst [vmem:[%s426 + $0xd8] sm:$0xff] %v5770
        %s5772 = sld [smem:[#allocation2 + $0x1c]]
        %v5773 = vstv %s5772
        %v5774 = vmul.f32 %v4784, %v5773
        %s5775 = sld [smem:[#allocation2 + $0x9c]]
        %v5776 = vstv %s5775
        %v5777 = vmul.f32 %v4785, %v5776
        %v5778 = vadd.f32 %v5774, %v5777
        %s5779 = sld [smem:[#allocation2 + $0x11c]]
        %v5780 = vstv %s5779
        %v5781 = vmul.f32 %v4786, %v5780
        %v5782 = vadd.f32 %v5778, %v5781
        %s5783 = sld [smem:[#allocation2 + $0x19c]]
        %v5784 = vstv %s5783
        %v5785 = vmul.f32 %v4787, %v5784
        %v5786 = vadd.f32 %v5782, %v5785
        %s5787 = sld [smem:[#allocation2 + $0x21c]]
        %v5788 = vstv %s5787
        %v5789 = vmul.f32 %v4788, %v5788
        %v5790 = vadd.f32 %v5786, %v5789
        %s5791 = sld [smem:[#allocation2 + $0x29c]]
        %v5792 = vstv %s5791
        %v5793 = vmul.f32 %v4789, %v5792
        %v5794 = vadd.f32 %v5790, %v5793
        %s5795 = sld [smem:[#allocation2 + $0x31c]]
        %v5796 = vstv %s5795
        %v5797 = vmul.f32 %v4790, %v5796
        %v5798 = vadd.f32 %v5794, %v5797
        %s5799 = sld [smem:[#allocation2 + $0x39c]]
        %v5800 = vstv %s5799
        %v5801 = vmul.f32 %v4791, %v5800
        %v5802 = vadd.f32 %v5798, %v5801
        %s5803 = sld [smem:[#allocation2 + $0x41c]]
        %v5804 = vstv %s5803
        %v5805 = vadd.f32 %v5802, %v5804
        %5806 = vst [vmem:[%s426 + $0xe0] sm:$0xff] %v5805
        %s5807 = sld [smem:[#allocation2 + $0x1d]]
        %v5808 = vstv %s5807
        %v5809 = vmul.f32 %v4784, %v5808
        %s5810 = sld [smem:[#allocation2 + $0x9d]]
        %v5811 = vstv %s5810
        %v5812 = vmul.f32 %v4785, %v5811
        %v5813 = vadd.f32 %v5809, %v5812
        %s5814 = sld [smem:[#allocation2 + $0x11d]]
        %v5815 = vstv %s5814
        %v5816 = vmul.f32 %v4786, %v5815
        %v5817 = vadd.f32 %v5813, %v5816
        %s5818 = sld [smem:[#allocation2 + $0x19d]]
        %v5819 = vstv %s5818
        %v5820 = vmul.f32 %v4787, %v5819
        %v5821 = vadd.f32 %v5817, %v5820
        %s5822 = sld [smem:[#allocation2 + $0x21d]]
        %v5823 = vstv %s5822
        %v5824 = vmul.f32 %v4788, %v5823
        %v5825 = vadd.f32 %v5821, %v5824
        %s5826 = sld [smem:[#allocation2 + $0x29d]]
        %v5827 = vstv %s5826
        %v5828 = vmul.f32 %v4789, %v5827
        %v5829 = vadd.f32 %v5825, %v5828
        %s5830 = sld [smem:[#allocation2 + $0x31d]]
        %v5831 = vstv %s5830
        %v5832 = vmul.f32 %v4790, %v5831
        %v5833 = vadd.f32 %v5829, %v5832
        %s5834 = sld [smem:[#allocation2 + $0x39d]]
        %v5835 = vstv %s5834
        %v5836 = vmul.f32 %v4791, %v5835
        %v5837 = vadd.f32 %v5833, %v5836
        %s5838 = sld [smem:[#allocation2 + $0x41d]]
        %v5839 = vstv %s5838
        %v5840 = vadd.f32 %v5837, %v5839
        %5841 = vst [vmem:[%s426 + $0xe8] sm:$0xff] %v5840
        %p5842 = scmp.lt.s32.totalorder %s24, 1
        %s5843 = scalar_select %p5842, %s24, 1
        %s5844 = smul.addr %s5843, 30
        %s5845 = smul.addr %s5844, 8
        %s5846 = scalar_lea.vmem %s12, %s5845
        // Predicated region
        $region73: #{forward.1} parent=67 // pred_check
          %p5847 = pneg %p299
        $region74: #{forward.1} parent=67 // pred_check_branch
          %5849 = sbr.rel (%p5847) target = $region76
        $region75: #{forward.1} parent=67 // pred_region
          _
        $region76: #{forward.1} parent=67 // pred_fallthru
          _
      $region68: #{forward.1} parent=5 // pred_fallthru
        _
      %p5850 = scmp.le.s32.totalorder 2, %s19
      // Predicated region
      $region77: #{forward.1} parent=5 // pred_check
        %p5851 = pneg %p5850
      $region78: #{forward.1} parent=5 // pred_check_branch
        %5853 = sbr.rel (%p5851) target = $region80
      $region79: #{forward.1} parent=5 // pred_region
        %s5854 = ssub.s32 %s19, 2
        // Predicated region
        $region81: #{forward.1} parent=79 // pred_check
          %p5855 = pneg %p305
        $region82: #{forward.1} parent=79 // pred_check_branch
          %5857 = sbr.rel (%p5855) target = $region84
        $region83: #{forward.1} parent=79 // pred_region
          %p5858 = scmp.lt.s32.totalorder %s25, 1
          %s5859 = scalar_select %p5858, %s25, 1
          %s5860 = smul.addr %s5859, 30
          %s5861 = smul.addr %s5860, 8
          %s5862 = scalar_lea.vmem %s12, %s5861
        $region84: #{forward.1} parent=79 // pred_fallthru
          _
      $region80: #{forward.1} parent=5 // pred_fallthru
        _
    $region6: #{forward.1} parent=1 // loop_footer
      %s23 = sadd.s32 1, %s19
    $region7: #{forward.1} parent=1 // loop_footer_branch
      %18 = sbr.rel target = $region3
    $region8: #{forward.1} parent=1 // loop_exit
      _
    %5863 = vsyncpa [#allocation3], 1
    %s5864 = scalar_lea.sflag [#allocation3], 1
    %5865 = vsyncpa %s5864, 1

</llo_original>
